<compile_context>
chip_gen: v6e
topology: v6e:2x2x1
jax: 0.10.0
libtpu: 0.0.40
codegen_flags: <defaults>
</compile_context>

<pallas_src>
import jax
import jax.numpy as jnp
from jax import lax
from jax.experimental import pallas as pl
from jax.experimental.pallas import tpu as pltpu


# ----------------------------- fused Pallas kernel -----------------------------

def _elan_fused_kernel(x_ref,
                       w12_ref, b12_ref,          # conv1|conv2 merged (BN scale folded in W)
                       w3_ref, b3_ref,            # conv3 im2col weights
                       wdw_ref, bdw_ref,          # conv4 depthwise 5x5
                       wpw_ref, bpw_ref,          # conv4 pointwise 1x1
                       wfc_ref, bfc_ref,          # channel-attention fc
                       w7a_ref, w7b_ref, b7_ref,  # conv7 rows split: [out1|out2] / [out3]
                       o_ref):
    # One grid step == one batch image; every intermediate stays in VMEM.
    _, H, W, C1 = x_ref.shape
    c_ = w3_ref.shape[1]
    C2 = o_ref.shape[3]
    M = H * W

    def silu(v):
        return v * jax.nn.sigmoid(v)

    def pad_hw(img, p):
        # Zero-pad spatial dims of an (H, W, C) value, VMEM-only (no HBM traffic).
        h, w, c = img.shape
        zr = jnp.zeros((p, w, c), jnp.float32)
        y = jnp.concatenate([zr, img, zr], axis=0)
        zc = jnp.zeros((h + 2 * p, p, c), jnp.float32)
        return jnp.concatenate([zc, y, zc], axis=1)

    x2d = x_ref[0].reshape(M, C1)

    # ---- conv1 | conv2 merged into a single matmul (one pass over x, BN scale pre-folded) ----
    y12 = silu(jnp.dot(x2d, w12_ref[...], preferred_element_type=jnp.float32)
               + b12_ref[...])                                   # (M, 2c_) = [out1 | out2]
    out2 = y12[:, c_:]                                           # (M, c_)

    # ---- conv3: 3x3 conv via in-VMEM im2col -> single K = 9*c_ matmul ----
    xp3 = pad_hw(out2.reshape(H, W, c_), 1)                      # (H+2, W+2, c_)
    patches = jnp.concatenate(
        [xp3[di:di + H, dj:dj + W, :].reshape(M, c_)
         for di in range(3) for dj in range(3)], axis=-1)        # (M, 9*c_), tap-major
    t3 = silu(jnp.dot(patches, w3_ref[...], preferred_element_type=jnp.float32)
              + b3_ref[...])                                     # (M, c_)

    # ---- conv4.conv_dw: depthwise 5x5 + BN(bias only) + SiLU (pure VPU FMA over 25 taps) ----
    xp5 = pad_hw(t3.reshape(H, W, c_), 2)                        # (H+4, W+4, c_)
    wdw = wdw_ref[...]                                           # (25, c_), scale pre-folded
    acc = jnp.zeros((H, W, c_), jnp.float32)
    for di in range(5):
        for dj in range(5):
            acc = acc + xp5[di:di + H, dj:dj + W, :] * wdw[di * 5 + dj]
    ydw = silu(acc + bdw_ref[...]).reshape(M, c_)

    # ---- conv4.conv_pw + SiLU, fused with DS skip (t3) and ELAN identity add (out2) ----
    out3 = silu(jnp.dot(ydw, wpw_ref[...], preferred_element_type=jnp.float32)
                + bpw_ref[...]) + t3 + out2                      # (M, c_)

    # ---- channel attention, folded into conv7's weight rows (the concat is never built) ----
    pooled = jnp.concatenate([jnp.mean(y12, axis=0, keepdims=True),
                              jnp.mean(out3, axis=0, keepdims=True)], axis=-1)   # (1, 3c_)
    att = jnp.dot(pooled, wfc_ref[...], preferred_element_type=jnp.float32) + bfc_ref[...]
    att = jnp.clip((att + 3.0) / 6.0, 0.0, 1.0)                  # hardsigmoid
    attc = att.reshape(3 * c_, 1)                                # per-input-channel scale column
    w7a = w7a_ref[...] * attc[:2 * c_]                           # rows for [out1 | out2]
    w7b = w7b_ref[...] * attc[2 * c_:]                           # rows for out3

    # ---- conv7: 1x1 + bias + SiLU as a split matmul over [out1|out2] and out3 ----
    y7 = (jnp.dot(y12, w7a, preferred_element_type=jnp.float32)
          + jnp.dot(out3, w7b, preferred_element_type=jnp.float32)
          + b7_ref[...])
    o_ref[0] = silu(y7).reshape(H, W, C2)


# ------------------------------- wrapper ----------------------------------

def elan_depth_s_forward(x_nchw, p):
    x = jnp.transpose(x_nchw, (0, 2, 3, 1)).astype(jnp.float32)   # NCHW -> NHWC
    N, H, W, C1 = x.shape
    c_ = p['w1'].shape[1]
    C2 = p['w7'].shape[1]

    # Fold BN scales into conv weights (per output channel); merge conv1/conv2 into one matmul.
    w12 = jnp.concatenate([p['w1'] * p['s1'], p['w2'] * p['s2']], axis=1)   # (C1, 2c_)
    b12 = jnp.concatenate([p['b1'], p['b2']]).reshape(1, 2 * c_)
    w3 = (p['w3'] * p['s3']).reshape(9 * c_, c_)     # tap-major rows (di*3+dj)*c_ + ci
    wdw = (p['wdw'] * p['sdw']).reshape(25, c_)      # tap-major rows di*5+dj
    wpw = p['wpw'] * p['spw']
    w7s = p['w7'] * p['s7']
    w7a, w7b = w7s[:2 * c_], w7s[2 * c_:]            # rows for [out1|out2] / out3

    full = lambda shape: pl.BlockSpec(shape, lambda n: (0,) * len(shape))

    out = pl.pallas_call(
        _elan_fused_kernel,
        out_shape=jax.ShapeDtypeStruct((N, H, W, C2), jnp.float32),
        grid=(N,),
        in_specs=[
            pl.BlockSpec((1, H, W, C1), lambda n: (n, 0, 0, 0)),   # x (one image per step)
            full((C1, 2 * c_)), full((1, 2 * c_)),                 # merged conv1|conv2
            full((9 * c_, c_)), full((1, c_)),                     # conv3 (im2col weights)
            full((25, c_)), full((1, c_)),                         # conv4 dw5x5
            full((c_, c_)), full((1, c_)),                         # conv4 pw1x1
            full((3 * c_, 3 * c_)), full((1, 3 * c_)),             # channel attention fc
            full((2 * c_, C2)), full((c_, C2)), full((1, C2)),     # conv7 (split rows) + bias
        ],
        out_specs=pl.BlockSpec((1, H, W, C2), lambda n: (n, 0, 0, 0)),
        compiler_params=pltpu.CompilerParams(
            dimension_semantics=("parallel",)),                    # batch sharded across TCs
    )(x, w12, b12,
      w3, p['b3'].reshape(1, c_),
      wdw, p['bdw'].reshape(1, c_),
      wpw, p['bpw'].reshape(1, c_),
      p['wfc'], p['bfc'].reshape(1, 3 * c_),
      w7a, w7b, p['b7'].reshape(1, C2))

    return jnp.transpose(out, (0, 3, 1, 2))                       # NHWC -> NCHW


# --------------------------- params (inference-folded BN) ------------------------------

def init_params(key, c1, c2, hidden_ratio=0.5):
    c_ = int(c2 * hidden_ratio)
    keys = iter(jax.random.split(key, 64))

    def nrm(shape, scale=0.2):
        return scale * jax.random.normal(next(keys), shape, jnp.float32)

    def bn(c, eps=1e-5):
        gamma = jax.random.uniform(next(keys), (c,), jnp.float32, 0.5, 1.5)
        beta = nrm((c,), 0.1)
        mean = nrm((c,), 0.1)
        var = jax.random.uniform(next(keys), (c,), jnp.float32, 0.5, 1.5)
        scale = gamma / jnp.sqrt(var + eps)
        bias = beta - mean * scale
        return scale, bias

    p = {}
    p['w1'] = nrm((c1, c_)); p['s1'], p['b1'] = bn(c_)
    p['w2'] = nrm((c1, c_)); p['s2'], p['b2'] = bn(c_)
    p['w3'] = nrm((3, 3, c_, c_)); p['s3'], p['b3'] = bn(c_)
    p['wdw'] = nrm((5, 5, c_)); p['sdw'], p['bdw'] = bn(c_)
    p['wpw'] = nrm((c_, c_)); p['spw'], p['bpw'] = bn(c_)
    p['wfc'] = nrm((3 * c_, 3 * c_)); p['bfc'] = nrm((3 * c_,), 0.1)
    p['w7'] = nrm((3 * c_, c2)); p['s7'], p['b7'] = bn(c2)
    return p


# ------------------------- pure-JAX reference -------------------------------

def ref_forward(x_nchw, p):
    x = jnp.transpose(x_nchw, (0, 2, 3, 1)).astype(jnp.float32)

    def bn_silu(y, s, b):
        y = y * s + b
        return y * jax.nn.sigmoid(y)

    def conv1x1(z, w):
        return jnp.einsum('nhwc,cd->nhwd', z, w)

    def conv3x3(z, w):
        return lax.conv_general_dilated(z, w, (1, 1), 'SAME',
                                        dimension_numbers=('NHWC', 'HWIO', 'NHWC'))

    def dwconv5(z, w):
        C = z.shape[-1]
        return lax.conv_general_dilated(z, w.reshape(5, 5, 1, C), (1, 1), 'SAME',
                                        dimension_numbers=('NHWC', 'HWIO', 'NHWC'),
                                        feature_group_count=C)

    out1 = bn_silu(conv1x1(x, p['w1']), p['s1'], p['b1'])
    out2 = bn_silu(conv1x1(x, p['w2']), p['s2'], p['b2'])
    t3 = bn_silu(conv3x3(out2, p['w3']), p['s3'], p['b3'])
    dw = bn_silu(dwconv5(t3, p['wdw']), p['sdw'], p['bdw'])
    pw = bn_silu(conv1x1(dw, p['wpw']), p['spw'], p['bpw'])
    out3 = pw + t3 + out2
    cat = jnp.concatenate([out1, out2, out3], axis=-1)
    pooled = jnp.mean(cat, axis=(1, 2), keepdims=True)
    att = jnp.einsum('nhwc,cd->nhwd', pooled, p['wfc']) + p['bfc']
    att = jnp.clip((att + 3.0) / 6.0, 0.0, 1.0)
    cat = cat * att
    out = bn_silu(conv1x1(cat, p['w7']), p['s7'], p['b7'])
    return jnp.transpose(out, (0, 3, 1, 2))


# --------------------------------- main -------------------------------------

if __name__ == "__main__":
    key = jax.random.PRNGKey(0)
    k_x, k_p = jax.random.split(key)

    N, C1, H, W = 2, 4, 16, 16
    C2 = 8  # -> c_ = 4, concat channels = 12

    x = jax.random.normal(k_x, (N, C1, H, W), jnp.float32)
    params = init_params(k_p, C1, C2)

    out = elan_depth_s_forward(x, params)
    out = jax.block_until_ready(out)

    assert out.shape == (N, C2, H, W), out.shape

    ref = ref_forward(x, params)
    max_err = float(jnp.max(jnp.abs(out - ref)))
    assert jnp.allclose(out, ref, rtol=2e-3, atol=2e-3), f"max abs err = {max_err}"

    print("KERNEL_OK")
</pallas_src>

<mosaic_0001>
module attributes {stable_mosaic.version = 11 : i64} {
  func.func @_elan_fused_kernel(%arg0: i32, %arg1: memref<1x16x16x4xf32, #tpu.memory_space<vmem>>, %arg2: memref<4x8xf32, #tpu.memory_space<vmem>>, %arg3: memref<1x8xf32, #tpu.memory_space<vmem>>, %arg4: memref<36x4xf32, #tpu.memory_space<vmem>>, %arg5: memref<1x4xf32, #tpu.memory_space<vmem>>, %arg6: memref<25x4xf32, #tpu.memory_space<vmem>>, %arg7: memref<1x4xf32, #tpu.memory_space<vmem>>, %arg8: memref<4x4xf32, #tpu.memory_space<vmem>>, %arg9: memref<1x4xf32, #tpu.memory_space<vmem>>, %arg10: memref<12x12xf32, #tpu.memory_space<vmem>>, %arg11: memref<1x12xf32, #tpu.memory_space<vmem>>, %arg12: memref<8x8xf32, #tpu.memory_space<vmem>>, %arg13: memref<4x8xf32, #tpu.memory_space<vmem>>, %arg14: memref<1x8xf32, #tpu.memory_space<vmem>>, %arg15: memref<1x16x16x8xf32, #tpu.memory_space<vmem>>) attributes {dimension_semantics = [#tpu.dimension_semantics<parallel>], iteration_bounds = array<i64: 2>, scalar_prefetch = 0 : i64, scratch_operands = 0 : i64, tpu.core_type = #tpu.core_type<tc>, window_params = [{transform_indices = @transform_0, window_bounds = array<i64: 1, 16, 16, 4>}, {pipeline_mode = #tpu.pipeline_mode<synchronous>, transform_indices = @transform_1, window_bounds = array<i64: 4, 8>}, {pipeline_mode = #tpu.pipeline_mode<synchronous>, transform_indices = @transform_2, window_bounds = array<i64: 1, 8>}, {pipeline_mode = #tpu.pipeline_mode<synchronous>, transform_indices = @transform_3, window_bounds = array<i64: 36, 4>}, {pipeline_mode = #tpu.pipeline_mode<synchronous>, transform_indices = @transform_4, window_bounds = array<i64: 1, 4>}, {pipeline_mode = #tpu.pipeline_mode<synchronous>, transform_indices = @transform_5, window_bounds = array<i64: 25, 4>}, {pipeline_mode = #tpu.pipeline_mode<synchronous>, transform_indices = @transform_6, window_bounds = array<i64: 1, 4>}, {pipeline_mode = #tpu.pipeline_mode<synchronous>, transform_indices = @transform_7, window_bounds = array<i64: 4, 4>}, {pipeline_mode = #tpu.pipeline_mode<synchronous>, transform_indices = @transform_8, window_bounds = array<i64: 1, 4>}, {pipeline_mode = #tpu.pipeline_mode<synchronous>, transform_indices = @transform_9, window_bounds = array<i64: 12, 12>}, {pipeline_mode = #tpu.pipeline_mode<synchronous>, transform_indices = @transform_10, window_bounds = array<i64: 1, 12>}, {pipeline_mode = #tpu.pipeline_mode<synchronous>, transform_indices = @transform_11, window_bounds = array<i64: 8, 8>}, {pipeline_mode = #tpu.pipeline_mode<synchronous>, transform_indices = @transform_12, window_bounds = array<i64: 4, 8>}, {pipeline_mode = #tpu.pipeline_mode<synchronous>, transform_indices = @transform_13, window_bounds = array<i64: 1, 8>}, {transform_indices = @transform_14, window_bounds = array<i64: 1, 16, 16, 8>}]} {
    %c0 = arith.constant 0 : index
    %c0_0 = arith.constant 0 : index
    %c0_1 = arith.constant 0 : index
    %c0_2 = arith.constant 0 : index
    %0 = vector.load %arg1[%c0, %c0_0, %c0_1, %c0_2] : memref<1x16x16x4xf32, #tpu.memory_space<vmem>>, vector<1x16x16x4xf32>
    %1 = vector.shape_cast %0 : vector<1x16x16x4xf32> to vector<16x16x4xf32>
    %2 = vector.shape_cast %1 : vector<16x16x4xf32> to vector<256x4xf32>
    %c0_3 = arith.constant 0 : index
    %c0_4 = arith.constant 0 : index
    %3 = vector.load %arg2[%c0_3, %c0_4] : memref<4x8xf32, #tpu.memory_space<vmem>>, vector<4x8xf32>
    %cst = arith.constant dense<0.000000e+00> : vector<256x8xf32>
    %4 = tpu.matmul %2, %3, %cst {dimension_numbers = #tpu.dot_dimension_numbers<[1], [0], [0], [1], [0, 0, 1, 1], [], []>} : vector<256x4xf32>, vector<4x8xf32>, vector<256x8xf32> -> vector<256x8xf32>
    %c0_5 = arith.constant 0 : index
    %c0_6 = arith.constant 0 : index
    %5 = vector.load %arg3[%c0_5, %c0_6] : memref<1x8xf32, #tpu.memory_space<vmem>>, vector<1x8xf32>
    %6 = vector.broadcast %5 : vector<1x8xf32> to vector<256x8xf32>
    %7 = arith.addf %4, %6 : vector<256x8xf32>
    %8 = arith.negf %7 : vector<256x8xf32>
    %9 = math.exp %8 : vector<256x8xf32>
    %cst_7 = arith.constant 1.000000e+00 : f32
    %10 = vector.broadcast %cst_7 : f32 to vector<256x8xf32>
    %11 = arith.addf %10, %9 : vector<256x8xf32>
    %12 = arith.divf %10, %11 : vector<256x8xf32>
    %13 = arith.mulf %7, %12 : vector<256x8xf32>
    %14 = vector.extract_strided_slice %13 {offsets = [0, 4], sizes = [256, 4], strides = [1, 1]} : vector<256x8xf32> to vector<256x4xf32>
    %15 = vector.shape_cast %14 : vector<256x4xf32> to vector<16x16x4xf32>
    %cst_8 = arith.constant 0.000000e+00 : f32
    %16 = vector.broadcast %cst_8 : f32 to vector<1x16x4xf32>
    %17 = tpu.concatenate %16, %15, %16 in 0 : vector<1x16x4xf32>, vector<16x16x4xf32>, vector<1x16x4xf32> -> vector<18x16x4xf32>
    %cst_9 = arith.constant 0.000000e+00 : f32
    %18 = vector.broadcast %cst_9 : f32 to vector<18x1x4xf32>
    %19 = tpu.concatenate %18, %17, %18 in 1 : vector<18x1x4xf32>, vector<18x16x4xf32>, vector<18x1x4xf32> -> vector<18x18x4xf32>
    %20 = vector.extract_strided_slice %19 {offsets = [0, 0, 0], sizes = [16, 16, 4], strides = [1, 1, 1]} : vector<18x18x4xf32> to vector<16x16x4xf32>
    %21 = vector.shape_cast %20 : vector<16x16x4xf32> to vector<256x4xf32>
    %22 = vector.extract_strided_slice %19 {offsets = [0, 1, 0], sizes = [16, 16, 4], strides = [1, 1, 1]} : vector<18x18x4xf32> to vector<16x16x4xf32>
    %23 = vector.shape_cast %22 : vector<16x16x4xf32> to vector<256x4xf32>
    %24 = vector.extract_strided_slice %19 {offsets = [0, 2, 0], sizes = [16, 16, 4], strides = [1, 1, 1]} : vector<18x18x4xf32> to vector<16x16x4xf32>
    %25 = vector.shape_cast %24 : vector<16x16x4xf32> to vector<256x4xf32>
    %26 = vector.extract_strided_slice %19 {offsets = [1, 0, 0], sizes = [16, 16, 4], strides = [1, 1, 1]} : vector<18x18x4xf32> to vector<16x16x4xf32>
    %27 = vector.shape_cast %26 : vector<16x16x4xf32> to vector<256x4xf32>
    %28 = vector.extract_strided_slice %19 {offsets = [1, 1, 0], sizes = [16, 16, 4], strides = [1, 1, 1]} : vector<18x18x4xf32> to vector<16x16x4xf32>
    %29 = vector.shape_cast %28 : vector<16x16x4xf32> to vector<256x4xf32>
    %30 = vector.extract_strided_slice %19 {offsets = [1, 2, 0], sizes = [16, 16, 4], strides = [1, 1, 1]} : vector<18x18x4xf32> to vector<16x16x4xf32>
    %31 = vector.shape_cast %30 : vector<16x16x4xf32> to vector<256x4xf32>
    %32 = vector.extract_strided_slice %19 {offsets = [2, 0, 0], sizes = [16, 16, 4], strides = [1, 1, 1]} : vector<18x18x4xf32> to vector<16x16x4xf32>
    %33 = vector.shape_cast %32 : vector<16x16x4xf32> to vector<256x4xf32>
    %34 = vector.extract_strided_slice %19 {offsets = [2, 1, 0], sizes = [16, 16, 4], strides = [1, 1, 1]} : vector<18x18x4xf32> to vector<16x16x4xf32>
    %35 = vector.shape_cast %34 : vector<16x16x4xf32> to vector<256x4xf32>
    %36 = vector.extract_strided_slice %19 {offsets = [2, 2, 0], sizes = [16, 16, 4], strides = [1, 1, 1]} : vector<18x18x4xf32> to vector<16x16x4xf32>
    %37 = vector.shape_cast %36 : vector<16x16x4xf32> to vector<256x4xf32>
    %38 = tpu.concatenate %21, %23, %25, %27, %29, %31, %33, %35, %37 in 1 : vector<256x4xf32>, vector<256x4xf32>, vector<256x4xf32>, vector<256x4xf32>, vector<256x4xf32>, vector<256x4xf32>, vector<256x4xf32>, vector<256x4xf32>, vector<256x4xf32> -> vector<256x36xf32>
    %c0_10 = arith.constant 0 : index
    %c0_11 = arith.constant 0 : index
    %39 = vector.load %arg4[%c0_10, %c0_11] : memref<36x4xf32, #tpu.memory_space<vmem>>, vector<36x4xf32>
    %cst_12 = arith.constant dense<0.000000e+00> : vector<256x4xf32>
    %40 = tpu.matmul %38, %39, %cst_12 {dimension_numbers = #tpu.dot_dimension_numbers<[1], [0], [0], [1], [0, 0, 1, 1], [], []>} : vector<256x36xf32>, vector<36x4xf32>, vector<256x4xf32> -> vector<256x4xf32>
    %c0_13 = arith.constant 0 : index
    %c0_14 = arith.constant 0 : index
    %41 = vector.load %arg5[%c0_13, %c0_14] : memref<1x4xf32, #tpu.memory_space<vmem>>, vector<1x4xf32>
    %42 = vector.broadcast %41 : vector<1x4xf32> to vector<256x4xf32>
    %43 = arith.addf %40, %42 : vector<256x4xf32>
    %44 = arith.negf %43 : vector<256x4xf32>
    %45 = math.exp %44 : vector<256x4xf32>
    %cst_15 = arith.constant 1.000000e+00 : f32
    %46 = vector.broadcast %cst_15 : f32 to vector<256x4xf32>
    %47 = arith.addf %46, %45 : vector<256x4xf32>
    %48 = arith.divf %46, %47 : vector<256x4xf32>
    %49 = arith.mulf %43, %48 : vector<256x4xf32>
    %50 = vector.shape_cast %49 : vector<256x4xf32> to vector<16x16x4xf32>
    %cst_16 = arith.constant 0.000000e+00 : f32
    %51 = vector.broadcast %cst_16 : f32 to vector<2x16x4xf32>
    %52 = tpu.concatenate %51, %50, %51 in 0 : vector<2x16x4xf32>, vector<16x16x4xf32>, vector<2x16x4xf32> -> vector<20x16x4xf32>
    %cst_17 = arith.constant 0.000000e+00 : f32
    %53 = vector.broadcast %cst_17 : f32 to vector<20x2x4xf32>
    %54 = tpu.concatenate %53, %52, %53 in 1 : vector<20x2x4xf32>, vector<20x16x4xf32>, vector<20x2x4xf32> -> vector<20x20x4xf32>
    %c0_18 = arith.constant 0 : index
    %c0_19 = arith.constant 0 : index
    %55 = vector.load %arg6[%c0_18, %c0_19] : memref<25x4xf32, #tpu.memory_space<vmem>>, vector<25x4xf32>
    %cst_20 = arith.constant 0.000000e+00 : f32
    %56 = vector.broadcast %cst_20 : f32 to vector<16x16x4xf32>
    %57 = vector.extract_strided_slice %54 {offsets = [0, 0, 0], sizes = [16, 16, 4], strides = [1, 1, 1]} : vector<20x20x4xf32> to vector<16x16x4xf32>
    %58 = vector.extract_strided_slice %55 {offsets = [0, 0], sizes = [1, 4], strides = [1, 1]} : vector<25x4xf32> to vector<1x4xf32>
    %59 = vector.shape_cast %58 : vector<1x4xf32> to vector<4xf32>
    %60 = vector.shape_cast %59 : vector<4xf32> to vector<1x1x4xf32>
    %61 = vector.broadcast %60 : vector<1x1x4xf32> to vector<16x16x4xf32>
    %62 = arith.mulf %57, %61 : vector<16x16x4xf32>
    %63 = arith.addf %56, %62 : vector<16x16x4xf32>
    %64 = vector.extract_strided_slice %54 {offsets = [0, 1, 0], sizes = [16, 16, 4], strides = [1, 1, 1]} : vector<20x20x4xf32> to vector<16x16x4xf32>
    %65 = vector.extract_strided_slice %55 {offsets = [1, 0], sizes = [1, 4], strides = [1, 1]} : vector<25x4xf32> to vector<1x4xf32>
    %66 = vector.shape_cast %65 : vector<1x4xf32> to vector<4xf32>
    %67 = vector.shape_cast %66 : vector<4xf32> to vector<1x1x4xf32>
    %68 = vector.broadcast %67 : vector<1x1x4xf32> to vector<16x16x4xf32>
    %69 = arith.mulf %64, %68 : vector<16x16x4xf32>
    %70 = arith.addf %63, %69 : vector<16x16x4xf32>
    %71 = vector.extract_strided_slice %54 {offsets = [0, 2, 0], sizes = [16, 16, 4], strides = [1, 1, 1]} : vector<20x20x4xf32> to vector<16x16x4xf32>
    %72 = vector.extract_strided_slice %55 {offsets = [2, 0], sizes = [1, 4], strides = [1, 1]} : vector<25x4xf32> to vector<1x4xf32>
    %73 = vector.shape_cast %72 : vector<1x4xf32> to vector<4xf32>
    %74 = vector.shape_cast %73 : vector<4xf32> to vector<1x1x4xf32>
    %75 = vector.broadcast %74 : vector<1x1x4xf32> to vector<16x16x4xf32>
    %76 = arith.mulf %71, %75 : vector<16x16x4xf32>
    %77 = arith.addf %70, %76 : vector<16x16x4xf32>
    %78 = vector.extract_strided_slice %54 {offsets = [0, 3, 0], sizes = [16, 16, 4], strides = [1, 1, 1]} : vector<20x20x4xf32> to vector<16x16x4xf32>
    %79 = vector.extract_strided_slice %55 {offsets = [3, 0], sizes = [1, 4], strides = [1, 1]} : vector<25x4xf32> to vector<1x4xf32>
    %80 = vector.shape_cast %79 : vector<1x4xf32> to vector<4xf32>
    %81 = vector.shape_cast %80 : vector<4xf32> to vector<1x1x4xf32>
    %82 = vector.broadcast %81 : vector<1x1x4xf32> to vector<16x16x4xf32>
    %83 = arith.mulf %78, %82 : vector<16x16x4xf32>
    %84 = arith.addf %77, %83 : vector<16x16x4xf32>
    %85 = vector.extract_strided_slice %54 {offsets = [0, 4, 0], sizes = [16, 16, 4], strides = [1, 1, 1]} : vector<20x20x4xf32> to vector<16x16x4xf32>
    %86 = vector.extract_strided_slice %55 {offsets = [4, 0], sizes = [1, 4], strides = [1, 1]} : vector<25x4xf32> to vector<1x4xf32>
    %87 = vector.shape_cast %86 : vector<1x4xf32> to vector<4xf32>
    %88 = vector.shape_cast %87 : vector<4xf32> to vector<1x1x4xf32>
    %89 = vector.broadcast %88 : vector<1x1x4xf32> to vector<16x16x4xf32>
    %90 = arith.mulf %85, %89 : vector<16x16x4xf32>
    %91 = arith.addf %84, %90 : vector<16x16x4xf32>
    %92 = vector.extract_strided_slice %54 {offsets = [1, 0, 0], sizes = [16, 16, 4], strides = [1, 1, 1]} : vector<20x20x4xf32> to vector<16x16x4xf32>
    %93 = vector.extract_strided_slice %55 {offsets = [5, 0], sizes = [1, 4], strides = [1, 1]} : vector<25x4xf32> to vector<1x4xf32>
    %94 = vector.shape_cast %93 : vector<1x4xf32> to vector<4xf32>
    %95 = vector.shape_cast %94 : vector<4xf32> to vector<1x1x4xf32>
    %96 = vector.broadcast %95 : vector<1x1x4xf32> to vector<16x16x4xf32>
    %97 = arith.mulf %92, %96 : vector<16x16x4xf32>
    %98 = arith.addf %91, %97 : vector<16x16x4xf32>
    %99 = vector.extract_strided_slice %54 {offsets = [1, 1, 0], sizes = [16, 16, 4], strides = [1, 1, 1]} : vector<20x20x4xf32> to vector<16x16x4xf32>
    %100 = vector.extract_strided_slice %55 {offsets = [6, 0], sizes = [1, 4], strides = [1, 1]} : vector<25x4xf32> to vector<1x4xf32>
    %101 = vector.shape_cast %100 : vector<1x4xf32> to vector<4xf32>
    %102 = vector.shape_cast %101 : vector<4xf32> to vector<1x1x4xf32>
    %103 = vector.broadcast %102 : vector<1x1x4xf32> to vector<16x16x4xf32>
    %104 = arith.mulf %99, %103 : vector<16x16x4xf32>
    %105 = arith.addf %98, %104 : vector<16x16x4xf32>
    %106 = vector.extract_strided_slice %54 {offsets = [1, 2, 0], sizes = [16, 16, 4], strides = [1, 1, 1]} : vector<20x20x4xf32> to vector<16x16x4xf32>
    %107 = vector.extract_strided_slice %55 {offsets = [7, 0], sizes = [1, 4], strides = [1, 1]} : vector<25x4xf32> to vector<1x4xf32>
    %108 = vector.shape_cast %107 : vector<1x4xf32> to vector<4xf32>
    %109 = vector.shape_cast %108 : vector<4xf32> to vector<1x1x4xf32>
    %110 = vector.broadcast %109 : vector<1x1x4xf32> to vector<16x16x4xf32>
    %111 = arith.mulf %106, %110 : vector<16x16x4xf32>
    %112 = arith.addf %105, %111 : vector<16x16x4xf32>
    %113 = vector.extract_strided_slice %54 {offsets = [1, 3, 0], sizes = [16, 16, 4], strides = [1, 1, 1]} : vector<20x20x4xf32> to vector<16x16x4xf32>
    %114 = vector.extract_strided_slice %55 {offsets = [8, 0], sizes = [1, 4], strides = [1, 1]} : vector<25x4xf32> to vector<1x4xf32>
    %115 = vector.shape_cast %114 : vector<1x4xf32> to vector<4xf32>
    %116 = vector.shape_cast %115 : vector<4xf32> to vector<1x1x4xf32>
    %117 = vector.broadcast %116 : vector<1x1x4xf32> to vector<16x16x4xf32>
    %118 = arith.mulf %113, %117 : vector<16x16x4xf32>
    %119 = arith.addf %112, %118 : vector<16x16x4xf32>
    %120 = vector.extract_strided_slice %54 {offsets = [1, 4, 0], sizes = [16, 16, 4], strides = [1, 1, 1]} : vector<20x20x4xf32> to vector<16x16x4xf32>
    %121 = vector.extract_strided_slice %55 {offsets = [9, 0], sizes = [1, 4], strides = [1, 1]} : vector<25x4xf32> to vector<1x4xf32>
    %122 = vector.shape_cast %121 : vector<1x4xf32> to vector<4xf32>
    %123 = vector.shape_cast %122 : vector<4xf32> to vector<1x1x4xf32>
    %124 = vector.broadcast %123 : vector<1x1x4xf32> to vector<16x16x4xf32>
    %125 = arith.mulf %120, %124 : vector<16x16x4xf32>
    %126 = arith.addf %119, %125 : vector<16x16x4xf32>
    %127 = vector.extract_strided_slice %54 {offsets = [2, 0, 0], sizes = [16, 16, 4], strides = [1, 1, 1]} : vector<20x20x4xf32> to vector<16x16x4xf32>
    %128 = vector.extract_strided_slice %55 {offsets = [10, 0], sizes = [1, 4], strides = [1, 1]} : vector<25x4xf32> to vector<1x4xf32>
    %129 = vector.shape_cast %128 : vector<1x4xf32> to vector<4xf32>
    %130 = vector.shape_cast %129 : vector<4xf32> to vector<1x1x4xf32>
    %131 = vector.broadcast %130 : vector<1x1x4xf32> to vector<16x16x4xf32>
    %132 = arith.mulf %127, %131 : vector<16x16x4xf32>
    %133 = arith.addf %126, %132 : vector<16x16x4xf32>
    %134 = vector.extract_strided_slice %54 {offsets = [2, 1, 0], sizes = [16, 16, 4], strides = [1, 1, 1]} : vector<20x20x4xf32> to vector<16x16x4xf32>
    %135 = vector.extract_strided_slice %55 {offsets = [11, 0], sizes = [1, 4], strides = [1, 1]} : vector<25x4xf32> to vector<1x4xf32>
    %136 = vector.shape_cast %135 : vector<1x4xf32> to vector<4xf32>
    %137 = vector.shape_cast %136 : vector<4xf32> to vector<1x1x4xf32>
    %138 = vector.broadcast %137 : vector<1x1x4xf32> to vector<16x16x4xf32>
    %139 = arith.mulf %134, %138 : vector<16x16x4xf32>
    %140 = arith.addf %133, %139 : vector<16x16x4xf32>
    %141 = vector.extract_strided_slice %54 {offsets = [2, 2, 0], sizes = [16, 16, 4], strides = [1, 1, 1]} : vector<20x20x4xf32> to vector<16x16x4xf32>
    %142 = vector.extract_strided_slice %55 {offsets = [12, 0], sizes = [1, 4], strides = [1, 1]} : vector<25x4xf32> to vector<1x4xf32>
    %143 = vector.shape_cast %142 : vector<1x4xf32> to vector<4xf32>
    %144 = vector.shape_cast %143 : vector<4xf32> to vector<1x1x4xf32>
    %145 = vector.broadcast %144 : vector<1x1x4xf32> to vector<16x16x4xf32>
    %146 = arith.mulf %141, %145 : vector<16x16x4xf32>
    %147 = arith.addf %140, %146 : vector<16x16x4xf32>
    %148 = vector.extract_strided_slice %54 {offsets = [2, 3, 0], sizes = [16, 16, 4], strides = [1, 1, 1]} : vector<20x20x4xf32> to vector<16x16x4xf32>
    %149 = vector.extract_strided_slice %55 {offsets = [13, 0], sizes = [1, 4], strides = [1, 1]} : vector<25x4xf32> to vector<1x4xf32>
    %150 = vector.shape_cast %149 : vector<1x4xf32> to vector<4xf32>
    %151 = vector.shape_cast %150 : vector<4xf32> to vector<1x1x4xf32>
    %152 = vector.broadcast %151 : vector<1x1x4xf32> to vector<16x16x4xf32>
    %153 = arith.mulf %148, %152 : vector<16x16x4xf32>
    %154 = arith.addf %147, %153 : vector<16x16x4xf32>
    %155 = vector.extract_strided_slice %54 {offsets = [2, 4, 0], sizes = [16, 16, 4], strides = [1, 1, 1]} : vector<20x20x4xf32> to vector<16x16x4xf32>
    %156 = vector.extract_strided_slice %55 {offsets = [14, 0], sizes = [1, 4], strides = [1, 1]} : vector<25x4xf32> to vector<1x4xf32>
    %157 = vector.shape_cast %156 : vector<1x4xf32> to vector<4xf32>
    %158 = vector.shape_cast %157 : vector<4xf32> to vector<1x1x4xf32>
    %159 = vector.broadcast %158 : vector<1x1x4xf32> to vector<16x16x4xf32>
    %160 = arith.mulf %155, %159 : vector<16x16x4xf32>
    %161 = arith.addf %154, %160 : vector<16x16x4xf32>
    %162 = vector.extract_strided_slice %54 {offsets = [3, 0, 0], sizes = [16, 16, 4], strides = [1, 1, 1]} : vector<20x20x4xf32> to vector<16x16x4xf32>
    %163 = vector.extract_strided_slice %55 {offsets = [15, 0], sizes = [1, 4], strides = [1, 1]} : vector<25x4xf32> to vector<1x4xf32>
    %164 = vector.shape_cast %163 : vector<1x4xf32> to vector<4xf32>
    %165 = vector.shape_cast %164 : vector<4xf32> to vector<1x1x4xf32>
    %166 = vector.broadcast %165 : vector<1x1x4xf32> to vector<16x16x4xf32>
    %167 = arith.mulf %162, %166 : vector<16x16x4xf32>
    %168 = arith.addf %161, %167 : vector<16x16x4xf32>
    %169 = vector.extract_strided_slice %54 {offsets = [3, 1, 0], sizes = [16, 16, 4], strides = [1, 1, 1]} : vector<20x20x4xf32> to vector<16x16x4xf32>
    %170 = vector.extract_strided_slice %55 {offsets = [16, 0], sizes = [1, 4], strides = [1, 1]} : vector<25x4xf32> to vector<1x4xf32>
    %171 = vector.shape_cast %170 : vector<1x4xf32> to vector<4xf32>
    %172 = vector.shape_cast %171 : vector<4xf32> to vector<1x1x4xf32>
    %173 = vector.broadcast %172 : vector<1x1x4xf32> to vector<16x16x4xf32>
    %174 = arith.mulf %169, %173 : vector<16x16x4xf32>
    %175 = arith.addf %168, %174 : vector<16x16x4xf32>
    %176 = vector.extract_strided_slice %54 {offsets = [3, 2, 0], sizes = [16, 16, 4], strides = [1, 1, 1]} : vector<20x20x4xf32> to vector<16x16x4xf32>
    %177 = vector.extract_strided_slice %55 {offsets = [17, 0], sizes = [1, 4], strides = [1, 1]} : vector<25x4xf32> to vector<1x4xf32>
    %178 = vector.shape_cast %177 : vector<1x4xf32> to vector<4xf32>
    %179 = vector.shape_cast %178 : vector<4xf32> to vector<1x1x4xf32>
    %180 = vector.broadcast %179 : vector<1x1x4xf32> to vector<16x16x4xf32>
    %181 = arith.mulf %176, %180 : vector<16x16x4xf32>
    %182 = arith.addf %175, %181 : vector<16x16x4xf32>
    %183 = vector.extract_strided_slice %54 {offsets = [3, 3, 0], sizes = [16, 16, 4], strides = [1, 1, 1]} : vector<20x20x4xf32> to vector<16x16x4xf32>
    %184 = vector.extract_strided_slice %55 {offsets = [18, 0], sizes = [1, 4], strides = [1, 1]} : vector<25x4xf32> to vector<1x4xf32>
    %185 = vector.shape_cast %184 : vector<1x4xf32> to vector<4xf32>
    %186 = vector.shape_cast %185 : vector<4xf32> to vector<1x1x4xf32>
    %187 = vector.broadcast %186 : vector<1x1x4xf32> to vector<16x16x4xf32>
    %188 = arith.mulf %183, %187 : vector<16x16x4xf32>
    %189 = arith.addf %182, %188 : vector<16x16x4xf32>
    %190 = vector.extract_strided_slice %54 {offsets = [3, 4, 0], sizes = [16, 16, 4], strides = [1, 1, 1]} : vector<20x20x4xf32> to vector<16x16x4xf32>
    %191 = vector.extract_strided_slice %55 {offsets = [19, 0], sizes = [1, 4], strides = [1, 1]} : vector<25x4xf32> to vector<1x4xf32>
    %192 = vector.shape_cast %191 : vector<1x4xf32> to vector<4xf32>
    %193 = vector.shape_cast %192 : vector<4xf32> to vector<1x1x4xf32>
    %194 = vector.broadcast %193 : vector<1x1x4xf32> to vector<16x16x4xf32>
    %195 = arith.mulf %190, %194 : vector<16x16x4xf32>
    %196 = arith.addf %189, %195 : vector<16x16x4xf32>
    %197 = vector.extract_strided_slice %54 {offsets = [4, 0, 0], sizes = [16, 16, 4], strides = [1, 1, 1]} : vector<20x20x4xf32> to vector<16x16x4xf32>
    %198 = vector.extract_strided_slice %55 {offsets = [20, 0], sizes = [1, 4], strides = [1, 1]} : vector<25x4xf32> to vector<1x4xf32>
    %199 = vector.shape_cast %198 : vector<1x4xf32> to vector<4xf32>
    %200 = vector.shape_cast %199 : vector<4xf32> to vector<1x1x4xf32>
    %201 = vector.broadcast %200 : vector<1x1x4xf32> to vector<16x16x4xf32>
    %202 = arith.mulf %197, %201 : vector<16x16x4xf32>
    %203 = arith.addf %196, %202 : vector<16x16x4xf32>
    %204 = vector.extract_strided_slice %54 {offsets = [4, 1, 0], sizes = [16, 16, 4], strides = [1, 1, 1]} : vector<20x20x4xf32> to vector<16x16x4xf32>
    %205 = vector.extract_strided_slice %55 {offsets = [21, 0], sizes = [1, 4], strides = [1, 1]} : vector<25x4xf32> to vector<1x4xf32>
    %206 = vector.shape_cast %205 : vector<1x4xf32> to vector<4xf32>
    %207 = vector.shape_cast %206 : vector<4xf32> to vector<1x1x4xf32>
    %208 = vector.broadcast %207 : vector<1x1x4xf32> to vector<16x16x4xf32>
    %209 = arith.mulf %204, %208 : vector<16x16x4xf32>
    %210 = arith.addf %203, %209 : vector<16x16x4xf32>
    %211 = vector.extract_strided_slice %54 {offsets = [4, 2, 0], sizes = [16, 16, 4], strides = [1, 1, 1]} : vector<20x20x4xf32> to vector<16x16x4xf32>
    %212 = vector.extract_strided_slice %55 {offsets = [22, 0], sizes = [1, 4], strides = [1, 1]} : vector<25x4xf32> to vector<1x4xf32>
    %213 = vector.shape_cast %212 : vector<1x4xf32> to vector<4xf32>
    %214 = vector.shape_cast %213 : vector<4xf32> to vector<1x1x4xf32>
    %215 = vector.broadcast %214 : vector<1x1x4xf32> to vector<16x16x4xf32>
    %216 = arith.mulf %211, %215 : vector<16x16x4xf32>
    %217 = arith.addf %210, %216 : vector<16x16x4xf32>
    %218 = vector.extract_strided_slice %54 {offsets = [4, 3, 0], sizes = [16, 16, 4], strides = [1, 1, 1]} : vector<20x20x4xf32> to vector<16x16x4xf32>
    %219 = vector.extract_strided_slice %55 {offsets = [23, 0], sizes = [1, 4], strides = [1, 1]} : vector<25x4xf32> to vector<1x4xf32>
    %220 = vector.shape_cast %219 : vector<1x4xf32> to vector<4xf32>
    %221 = vector.shape_cast %220 : vector<4xf32> to vector<1x1x4xf32>
    %222 = vector.broadcast %221 : vector<1x1x4xf32> to vector<16x16x4xf32>
    %223 = arith.mulf %218, %222 : vector<16x16x4xf32>
    %224 = arith.addf %217, %223 : vector<16x16x4xf32>
    %225 = vector.extract_strided_slice %54 {offsets = [4, 4, 0], sizes = [16, 16, 4], strides = [1, 1, 1]} : vector<20x20x4xf32> to vector<16x16x4xf32>
    %226 = vector.extract_strided_slice %55 {offsets = [24, 0], sizes = [1, 4], strides = [1, 1]} : vector<25x4xf32> to vector<1x4xf32>
    %227 = vector.shape_cast %226 : vector<1x4xf32> to vector<4xf32>
    %228 = vector.shape_cast %227 : vector<4xf32> to vector<1x1x4xf32>
    %229 = vector.broadcast %228 : vector<1x1x4xf32> to vector<16x16x4xf32>
    %230 = arith.mulf %225, %229 : vector<16x16x4xf32>
    %231 = arith.addf %224, %230 : vector<16x16x4xf32>
    %c0_21 = arith.constant 0 : index
    %c0_22 = arith.constant 0 : index
    %232 = vector.load %arg7[%c0_21, %c0_22] : memref<1x4xf32, #tpu.memory_space<vmem>>, vector<1x4xf32>
    %233 = vector.shape_cast %232 : vector<1x4xf32> to vector<1x1x4xf32>
    %234 = vector.broadcast %233 : vector<1x1x4xf32> to vector<16x16x4xf32>
    %235 = arith.addf %231, %234 : vector<16x16x4xf32>
    %236 = arith.negf %235 : vector<16x16x4xf32>
    %237 = math.exp %236 : vector<16x16x4xf32>
    %cst_23 = arith.constant 1.000000e+00 : f32
    %238 = vector.broadcast %cst_23 : f32 to vector<16x16x4xf32>
    %239 = arith.addf %238, %237 : vector<16x16x4xf32>
    %240 = arith.divf %238, %239 : vector<16x16x4xf32>
    %241 = arith.mulf %235, %240 : vector<16x16x4xf32>
    %242 = vector.shape_cast %241 : vector<16x16x4xf32> to vector<256x4xf32>
    %c0_24 = arith.constant 0 : index
    %c0_25 = arith.constant 0 : index
    %243 = vector.load %arg8[%c0_24, %c0_25] : memref<4x4xf32, #tpu.memory_space<vmem>>, vector<4x4xf32>
    %cst_26 = arith.constant dense<0.000000e+00> : vector<256x4xf32>
    %244 = tpu.matmul %242, %243, %cst_26 {dimension_numbers = #tpu.dot_dimension_numbers<[1], [0], [0], [1], [0, 0, 1, 1], [], []>} : vector<256x4xf32>, vector<4x4xf32>, vector<256x4xf32> -> vector<256x4xf32>
    %c0_27 = arith.constant 0 : index
    %c0_28 = arith.constant 0 : index
    %245 = vector.load %arg9[%c0_27, %c0_28] : memref<1x4xf32, #tpu.memory_space<vmem>>, vector<1x4xf32>
    %246 = vector.broadcast %245 : vector<1x4xf32> to vector<256x4xf32>
    %247 = arith.addf %244, %246 : vector<256x4xf32>
    %248 = arith.negf %247 : vector<256x4xf32>
    %249 = math.exp %248 : vector<256x4xf32>
    %cst_29 = arith.constant 1.000000e+00 : f32
    %250 = vector.broadcast %cst_29 : f32 to vector<256x4xf32>
    %251 = arith.addf %250, %249 : vector<256x4xf32>
    %252 = arith.divf %250, %251 : vector<256x4xf32>
    %253 = arith.mulf %247, %252 : vector<256x4xf32>
    %254 = arith.addf %253, %49 : vector<256x4xf32>
    %255 = arith.addf %254, %14 : vector<256x4xf32>
    %cst_30 = arith.constant dense<0.000000e+00> : vector<8xf32>
    %256 = vector.multi_reduction <add>, %13, %cst_30 [0] : vector<256x8xf32> to vector<8xf32>
    %257 = vector.shape_cast %256 : vector<8xf32> to vector<1x8xf32>
    %cst_31 = arith.constant 2.560000e+02 : f32
    %258 = vector.broadcast %cst_31 : f32 to vector<1x8xf32>
    %259 = arith.divf %257, %258 : vector<1x8xf32>
    %cst_32 = arith.constant dense<0.000000e+00> : vector<4xf32>
    %260 = vector.multi_reduction <add>, %255, %cst_32 [0] : vector<256x4xf32> to vector<4xf32>
    %261 = vector.shape_cast %260 : vector<4xf32> to vector<1x4xf32>
    %cst_33 = arith.constant 2.560000e+02 : f32
    %262 = vector.broadcast %cst_33 : f32 to vector<1x4xf32>
    %263 = arith.divf %261, %262 : vector<1x4xf32>
    %264 = tpu.concatenate %259, %263 in 1 : vector<1x8xf32>, vector<1x4xf32> -> vector<1x12xf32>
    %c0_34 = arith.constant 0 : index
    %c0_35 = arith.constant 0 : index
    %265 = vector.load %arg10[%c0_34, %c0_35] : memref<12x12xf32, #tpu.memory_space<vmem>>, vector<12x12xf32>
    %cst_36 = arith.constant dense<0.000000e+00> : vector<1x12xf32>
    %266 = tpu.matmul %264, %265, %cst_36 {dimension_numbers = #tpu.dot_dimension_numbers<[1], [0], [0], [1], [0, 0, 1, 1], [], []>} : vector<1x12xf32>, vector<12x12xf32>, vector<1x12xf32> -> vector<1x12xf32>
    %c0_37 = arith.constant 0 : index
    %c0_38 = arith.constant 0 : index
    %267 = vector.load %arg11[%c0_37, %c0_38] : memref<1x12xf32, #tpu.memory_space<vmem>>, vector<1x12xf32>
    %268 = arith.addf %266, %267 : vector<1x12xf32>
    %cst_39 = arith.constant 3.000000e+00 : f32
    %269 = vector.broadcast %cst_39 : f32 to vector<1x12xf32>
    %270 = arith.addf %268, %269 : vector<1x12xf32>
    %cst_40 = arith.constant 6.000000e+00 : f32
    %271 = vector.broadcast %cst_40 : f32 to vector<1x12xf32>
    %272 = arith.divf %270, %271 : vector<1x12xf32>
    %cst_41 = arith.constant 0.000000e+00 : f32
    %cst_42 = arith.constant 1.000000e+00 : f32
    %273 = vector.broadcast %cst_41 : f32 to vector<1x12xf32>
    %274 = arith.maximumf %273, %272 : vector<1x12xf32>
    %275 = vector.broadcast %cst_42 : f32 to vector<1x12xf32>
    %276 = arith.minimumf %275, %274 : vector<1x12xf32>
    %277 = vector.shape_cast %276 : vector<1x12xf32> to vector<12x1xf32>
    %c0_43 = arith.constant 0 : index
    %c0_44 = arith.constant 0 : index
    %278 = vector.load %arg12[%c0_43, %c0_44] : memref<8x8xf32, #tpu.memory_space<vmem>>, vector<8x8xf32>
    %279 = vector.extract_strided_slice %277 {offsets = [0, 0], sizes = [8, 1], strides = [1, 1]} : vector<12x1xf32> to vector<8x1xf32>
    %280 = vector.broadcast %279 : vector<8x1xf32> to vector<8x8xf32>
    %281 = arith.mulf %278, %280 : vector<8x8xf32>
    %c0_45 = arith.constant 0 : index
    %c0_46 = arith.constant 0 : index
    %282 = vector.load %arg13[%c0_45, %c0_46] : memref<4x8xf32, #tpu.memory_space<vmem>>, vector<4x8xf32>
    %283 = vector.extract_strided_slice %277 {offsets = [8, 0], sizes = [4, 1], strides = [1, 1]} : vector<12x1xf32> to vector<4x1xf32>
    %284 = vector.broadcast %283 : vector<4x1xf32> to vector<4x8xf32>
    %285 = arith.mulf %282, %284 : vector<4x8xf32>
    %cst_47 = arith.constant dense<0.000000e+00> : vector<256x8xf32>
    %286 = tpu.matmul %13, %281, %cst_47 {dimension_numbers = #tpu.dot_dimension_numbers<[1], [0], [0], [1], [0, 0, 1, 1], [], []>} : vector<256x8xf32>, vector<8x8xf32>, vector<256x8xf32> -> vector<256x8xf32>
    %cst_48 = arith.constant dense<0.000000e+00> : vector<256x8xf32>
    %287 = tpu.matmul %255, %285, %cst_48 {dimension_numbers = #tpu.dot_dimension_numbers<[1], [0], [0], [1], [0, 0, 1, 1], [], []>} : vector<256x4xf32>, vector<4x8xf32>, vector<256x8xf32> -> vector<256x8xf32>
    %288 = arith.addf %286, %287 : vector<256x8xf32>
    %c0_49 = arith.constant 0 : index
    %c0_50 = arith.constant 0 : index
    %289 = vector.load %arg14[%c0_49, %c0_50] : memref<1x8xf32, #tpu.memory_space<vmem>>, vector<1x8xf32>
    %290 = vector.broadcast %289 : vector<1x8xf32> to vector<256x8xf32>
    %291 = arith.addf %288, %290 : vector<256x8xf32>
    %292 = arith.negf %291 : vector<256x8xf32>
    %293 = math.exp %292 : vector<256x8xf32>
    %cst_51 = arith.constant 1.000000e+00 : f32
    %294 = vector.broadcast %cst_51 : f32 to vector<256x8xf32>
    %295 = arith.addf %294, %293 : vector<256x8xf32>
    %296 = arith.divf %294, %295 : vector<256x8xf32>
    %297 = arith.mulf %291, %296 : vector<256x8xf32>
    %298 = vector.shape_cast %297 : vector<256x8xf32> to vector<16x16x8xf32>
    %c0_52 = arith.constant 0 : index
    %c0_53 = arith.constant 0 : index
    %c0_54 = arith.constant 0 : index
    %c0_55 = arith.constant 0 : index
    %299 = vector.load %arg15[%c0_52, %c0_53, %c0_54, %c0_55] : memref<1x16x16x8xf32, #tpu.memory_space<vmem>>, vector<1x16x16x8xf32>
    %300 = vector.shape_cast %299 : vector<1x16x16x8xf32> to vector<16x16x8xf32>
    %301 = vector.shape_cast %298 : vector<16x16x8xf32> to vector<1x16x16x8xf32>
    tpu.vector_store %arg15[%c0_52, %c0_53, %c0_54, %c0_55], %301 {strides = array<i32>} : memref<1x16x16x8xf32, #tpu.memory_space<vmem>>, vector<1x16x16x8xf32>,
    return
  }
  func.func @transform_0(%arg0: i32) -> (i32, i32, i32, i32) {
    %c0_i32 = arith.constant 0 : i32
    %c0_i32_0 = arith.constant 0 : i32
    %c0_i32_1 = arith.constant 0 : i32
    %c0_i32_2 = arith.constant 0 : i32
    return %arg0, %c0_i32, %c0_i32_0, %c0_i32_1 : i32, i32, i32, i32
  }
  func.func @transform_1(%arg0: i32) -> (i32, i32) {
    %c0_i32 = arith.constant 0 : i32
    %c0_i32_0 = arith.constant 0 : i32
    %c0_i32_1 = arith.constant 0 : i32
    return %c0_i32, %c0_i32_0 : i32, i32
  }
  func.func @transform_2(%arg0: i32) -> (i32, i32) {
    %c0_i32 = arith.constant 0 : i32
    %c0_i32_0 = arith.constant 0 : i32
    %c0_i32_1 = arith.constant 0 : i32
    return %c0_i32, %c0_i32_0 : i32, i32
  }
  func.func @transform_3(%arg0: i32) -> (i32, i32) {
    %c0_i32 = arith.constant 0 : i32
    %c0_i32_0 = arith.constant 0 : i32
    %c0_i32_1 = arith.constant 0 : i32
    return %c0_i32, %c0_i32_0 : i32, i32
  }
  func.func @transform_4(%arg0: i32) -> (i32, i32) {
    %c0_i32 = arith.constant 0 : i32
    %c0_i32_0 = arith.constant 0 : i32
    %c0_i32_1 = arith.constant 0 : i32
    return %c0_i32, %c0_i32_0 : i32, i32
  }
  func.func @transform_5(%arg0: i32) -> (i32, i32) {
    %c0_i32 = arith.constant 0 : i32
    %c0_i32_0 = arith.constant 0 : i32
    %c0_i32_1 = arith.constant 0 : i32
    return %c0_i32, %c0_i32_0 : i32, i32
  }
  func.func @transform_6(%arg0: i32) -> (i32, i32) {
    %c0_i32 = arith.constant 0 : i32
    %c0_i32_0 = arith.constant 0 : i32
    %c0_i32_1 = arith.constant 0 : i32
    return %c0_i32, %c0_i32_0 : i32, i32
  }
  func.func @transform_7(%arg0: i32) -> (i32, i32) {
    %c0_i32 = arith.constant 0 : i32
    %c0_i32_0 = arith.constant 0 : i32
    %c0_i32_1 = arith.constant 0 : i32
    return %c0_i32, %c0_i32_0 : i32, i32
  }
  func.func @transform_8(%arg0: i32) -> (i32, i32) {
    %c0_i32 = arith.constant 0 : i32
    %c0_i32_0 = arith.constant 0 : i32
    %c0_i32_1 = arith.constant 0 : i32
    return %c0_i32, %c0_i32_0 : i32, i32
  }
  func.func @transform_9(%arg0: i32) -> (i32, i32) {
    %c0_i32 = arith.constant 0 : i32
    %c0_i32_0 = arith.constant 0 : i32
    %c0_i32_1 = arith.constant 0 : i32
    return %c0_i32, %c0_i32_0 : i32, i32
  }
  func.func @transform_10(%arg0: i32) -> (i32, i32) {
    %c0_i32 = arith.constant 0 : i32
    %c0_i32_0 = arith.constant 0 : i32
    %c0_i32_1 = arith.constant 0 : i32
    return %c0_i32, %c0_i32_0 : i32, i32
  }
  func.func @transform_11(%arg0: i32) -> (i32, i32) {
    %c0_i32 = arith.constant 0 : i32
    %c0_i32_0 = arith.constant 0 : i32
    %c0_i32_1 = arith.constant 0 : i32
    return %c0_i32, %c0_i32_0 : i32, i32
  }
  func.func @transform_12(%arg0: i32) -> (i32, i32) {
    %c0_i32 = arith.constant 0 : i32
    %c0_i32_0 = arith.constant 0 : i32
    %c0_i32_1 = arith.constant 0 : i32
    return %c0_i32, %c0_i32_0 : i32, i32
  }
  func.func @transform_13(%arg0: i32) -> (i32, i32) {
    %c0_i32 = arith.constant 0 : i32
    %c0_i32_0 = arith.constant 0 : i32
    %c0_i32_1 = arith.constant 0 : i32
    return %c0_i32, %c0_i32_0 : i32, i32
  }
  func.func @transform_14(%arg0: i32) -> (i32, i32, i32, i32) {
    %c0_i32 = arith.constant 0 : i32
    %c0_i32_0 = arith.constant 0 : i32
    %c0_i32_1 = arith.constant 0 : i32
    %c0_i32_2 = arith.constant 0 : i32
    return %arg0, %c0_i32, %c0_i32_0, %c0_i32_1 : i32, i32, i32, i32
  }
}

</mosaic_0001>

<llo_original>
// kernel: tpu_custom_call.1
$region0: #{tpu_custom_call.1}
  #allocation0 [shape = 'u32[]', space=smem, size = 0x4, offset = 0x4, fixed_abs, tag = 'smem constant byte address 0x4 - core index']
  #allocation1 [shape = 'u32[144,128]{1,0:T(1,128)}', space=vmem, size = 0x12000, scoped, tag = 'internal scratch']
  %s0 = inlined_call_operand.vmem [shape: f32[2,16,16,4], index: 0, kind: input, shape index: {}]
  %s1 = inlined_call_operand.vmem [shape: f32[4,8], index: 1, kind: input, shape index: {}]
  %s2 = inlined_call_operand.vmem [shape: f32[1,8], index: 2, kind: input, shape index: {}]
  %s3 = inlined_call_operand.vmem [shape: f32[36,4], index: 3, kind: input, shape index: {}]
  %s4 = inlined_call_operand.vmem [shape: f32[1,4], index: 4, kind: input, shape index: {}]
  %s5 = inlined_call_operand.vmem [shape: f32[25,4], index: 5, kind: input, shape index: {}]
  %s6 = inlined_call_operand.vmem [shape: f32[1,4], index: 6, kind: input, shape index: {}]
  %s7 = inlined_call_operand.vmem [shape: f32[4,4], index: 7, kind: input, shape index: {}]
  %s8 = inlined_call_operand.vmem [shape: f32[1,4], index: 8, kind: input, shape index: {}]
  %s9 = inlined_call_operand.vmem [shape: f32[12,12], index: 9, kind: input, shape index: {}]
  %s10 = inlined_call_operand.vmem [shape: f32[1,12], index: 10, kind: input, shape index: {}]
  %s11 = inlined_call_operand.vmem [shape: f32[8,8], index: 11, kind: input, shape index: {}]
  %s12 = inlined_call_operand.vmem [shape: f32[4,8], index: 12, kind: input, shape index: {}]
  %s13 = inlined_call_operand.vmem [shape: f32[1,8], index: 13, kind: input, shape index: {}]
  %s14 = inlined_call_operand.vmem [shape: f32[2,16,16,8], index: 14, kind: output, shape index: {}]
  %s15 = sld [smem:[#allocation0]]
  $region89: #{tpu_custom_call.1} parent=0
    _
  %s17 = ssub.s32 1, %s15
  %s18 = scalar_select 0, %s17, %s15
  loop: start=0, step=1, limit=4
  $region2: #{tpu_custom_call.1} parent=0 // loop_pre_header
    _
  $region3: #{tpu_custom_call.1} parent=0 // loop_header
    %s20 = sphi 0, %s24
    %p21 = scmp.ge.s32.totalorder %s20, 4
    %s30 = sphi 0, %s32
    %s33 = sphi 0, %s30
    %s34 = sphi 0, %s33
    %s50 = sphi 0, %s34
    %s54 = sphi 0, %s54
    %s56 = sphi 0, %s54
    %s57 = sphi 0, %s56
    %s71 = sphi 0, %s57
    %s75 = sphi 0, %s75
    %s77 = sphi 0, %s75
    %s78 = sphi 0, %s77
    %s92 = sphi 0, %s78
    %s96 = sphi 0, %s96
    %s98 = sphi 0, %s96
    %s99 = sphi 0, %s98
    %s113 = sphi 0, %s99
    %s117 = sphi 0, %s117
    %s119 = sphi 0, %s117
    %s120 = sphi 0, %s119
    %s134 = sphi 0, %s120
    %s138 = sphi 0, %s138
    %s140 = sphi 0, %s138
    %s141 = sphi 0, %s140
    %s155 = sphi 0, %s141
    %s159 = sphi 0, %s159
    %s161 = sphi 0, %s159
    %s162 = sphi 0, %s161
    %s176 = sphi 0, %s162
    %s180 = sphi 0, %s180
    %s182 = sphi 0, %s180
    %s183 = sphi 0, %s182
    %s197 = sphi 0, %s183
    %s201 = sphi 0, %s201
    %s203 = sphi 0, %s201
    %s204 = sphi 0, %s203
    %s218 = sphi 0, %s204
    %s222 = sphi 0, %s222
    %s224 = sphi 0, %s222
    %s225 = sphi 0, %s224
    %s239 = sphi 0, %s225
    %s243 = sphi 0, %s243
    %s245 = sphi 0, %s243
    %s246 = sphi 0, %s245
    %s260 = sphi 0, %s246
    %s264 = sphi 0, %s264
    %s266 = sphi 0, %s264
    %s267 = sphi 0, %s266
    %s281 = sphi 0, %s267
    %s285 = sphi 0, %s285
    %s287 = sphi 0, %s285
    %s288 = sphi 0, %s287
    %s302 = sphi 0, %s288
    %s306 = sphi 0, %s306
    %s308 = sphi 0, %s306
    %s309 = sphi 0, %s308
    %s323 = sphi 0, %s309
    %s329 = sphi 0, %s331
    %s332 = sphi 0, %s329
    %s333 = sphi 0, %s332
    %s349 = sphi 0, %s333
  $region4: #{tpu_custom_call.1} parent=0 // loop_header_branch
    %23 = sbr.rel (%p21) target = $region8
  $region5: #{tpu_custom_call.1} parent=0 // loop_body
    %s25 = ssub.s32 %s20, 1
    %s26 = ssub.s32 %s20, 2
    %s27 = sadd.s32 %s20, 1
    %s28 = ssub.s32 %s20, %s27
    %p29 = scmp.eq.s32.totalorder %s28, 0
    %s31 = sadd.s32 %s30, 1
    %s32 = scalar_select %p29, %s30, %s31
    %p35 = pneg %p29
    %p36 = scmp.eq.s32.totalorder %s20, 1
    %p37 = por %p35, %p36
    %p38 = scmp.ne.s32.totalorder %s30, %s33
    %p39 = scmp.eq.s32.totalorder %s20, 0
    %p40 = por %p38, %p39
    %p41 = scmp.ne.s32.totalorder %s30, %s33
    %p42 = scmp.eq.s32.totalorder %s25, 1
    %p43 = por %p41, %p42
    %p44 = scmp.ne.s32.totalorder %s33, %s34
    %p45 = scmp.eq.s32.totalorder %s25, 0
    %p46 = por %p44, %p45
    %p47 = scmp.ne.s32.totalorder %s33, %s34
    %p48 = scmp.eq.s32.totalorder %s26, 1
    %p49 = por %p47, %p48
    %p51 = scmp.ne.s32.totalorder %s34, %s50
    %p52 = scmp.eq.s32.totalorder %s26, 0
    %p53 = por %p51, %p52
    %s55 = sadd.s32 %s54, 1
    %p58 = scmp.eq.s32.totalorder %s20, 1
    %p59 = scmp.ne.s32.totalorder %s54, %s56
    %p60 = scmp.eq.s32.totalorder %s20, 0
    %p61 = por %p59, %p60
    %p62 = scmp.ne.s32.totalorder %s54, %s56
    %p63 = scmp.eq.s32.totalorder %s25, 1
    %p64 = por %p62, %p63
    %p65 = scmp.ne.s32.totalorder %s56, %s57
    %p66 = scmp.eq.s32.totalorder %s25, 0
    %p67 = por %p65, %p66
    %p68 = scmp.ne.s32.totalorder %s56, %s57
    %p69 = scmp.eq.s32.totalorder %s26, 1
    %p70 = por %p68, %p69
    %p72 = scmp.ne.s32.totalorder %s57, %s71
    %p73 = scmp.eq.s32.totalorder %s26, 0
    %p74 = por %p72, %p73
    %s76 = sadd.s32 %s75, 1
    %p79 = scmp.eq.s32.totalorder %s20, 1
    %p80 = scmp.ne.s32.totalorder %s75, %s77
    %p81 = scmp.eq.s32.totalorder %s20, 0
    %p82 = por %p80, %p81
    %p83 = scmp.ne.s32.totalorder %s75, %s77
    %p84 = scmp.eq.s32.totalorder %s25, 1
    %p85 = por %p83, %p84
    %p86 = scmp.ne.s32.totalorder %s77, %s78
    %p87 = scmp.eq.s32.totalorder %s25, 0
    %p88 = por %p86, %p87
    %p89 = scmp.ne.s32.totalorder %s77, %s78
    %p90 = scmp.eq.s32.totalorder %s26, 1
    %p91 = por %p89, %p90
    %p93 = scmp.ne.s32.totalorder %s78, %s92
    %p94 = scmp.eq.s32.totalorder %s26, 0
    %p95 = por %p93, %p94
    %s97 = sadd.s32 %s96, 1
    %p100 = scmp.eq.s32.totalorder %s20, 1
    %p101 = scmp.ne.s32.totalorder %s96, %s98
    %p102 = scmp.eq.s32.totalorder %s20, 0
    %p103 = por %p101, %p102
    %p104 = scmp.ne.s32.totalorder %s96, %s98
    %p105 = scmp.eq.s32.totalorder %s25, 1
    %p106 = por %p104, %p105
    %p107 = scmp.ne.s32.totalorder %s98, %s99
    %p108 = scmp.eq.s32.totalorder %s25, 0
    %p109 = por %p107, %p108
    %p110 = scmp.ne.s32.totalorder %s98, %s99
    %p111 = scmp.eq.s32.totalorder %s26, 1
    %p112 = por %p110, %p111
    %p114 = scmp.ne.s32.totalorder %s99, %s113
    %p115 = scmp.eq.s32.totalorder %s26, 0
    %p116 = por %p114, %p115
    %s118 = sadd.s32 %s117, 1
    %p121 = scmp.eq.s32.totalorder %s20, 1
    %p122 = scmp.ne.s32.totalorder %s117, %s119
    %p123 = scmp.eq.s32.totalorder %s20, 0
    %p124 = por %p122, %p123
    %p125 = scmp.ne.s32.totalorder %s117, %s119
    %p126 = scmp.eq.s32.totalorder %s25, 1
    %p127 = por %p125, %p126
    %p128 = scmp.ne.s32.totalorder %s119, %s120
    %p129 = scmp.eq.s32.totalorder %s25, 0
    %p130 = por %p128, %p129
    %p131 = scmp.ne.s32.totalorder %s119, %s120
    %p132 = scmp.eq.s32.totalorder %s26, 1
    %p133 = por %p131, %p132
    %p135 = scmp.ne.s32.totalorder %s120, %s134
    %p136 = scmp.eq.s32.totalorder %s26, 0
    %p137 = por %p135, %p136
    %s139 = sadd.s32 %s138, 1
    %p142 = scmp.eq.s32.totalorder %s20, 1
    %p143 = scmp.ne.s32.totalorder %s138, %s140
    %p144 = scmp.eq.s32.totalorder %s20, 0
    %p145 = por %p143, %p144
    %p146 = scmp.ne.s32.totalorder %s138, %s140
    %p147 = scmp.eq.s32.totalorder %s25, 1
    %p148 = por %p146, %p147
    %p149 = scmp.ne.s32.totalorder %s140, %s141
    %p150 = scmp.eq.s32.totalorder %s25, 0
    %p151 = por %p149, %p150
    %p152 = scmp.ne.s32.totalorder %s140, %s141
    %p153 = scmp.eq.s32.totalorder %s26, 1
    %p154 = por %p152, %p153
    %p156 = scmp.ne.s32.totalorder %s141, %s155
    %p157 = scmp.eq.s32.totalorder %s26, 0
    %p158 = por %p156, %p157
    %s160 = sadd.s32 %s159, 1
    %p163 = scmp.eq.s32.totalorder %s20, 1
    %p164 = scmp.ne.s32.totalorder %s159, %s161
    %p165 = scmp.eq.s32.totalorder %s20, 0
    %p166 = por %p164, %p165
    %p167 = scmp.ne.s32.totalorder %s159, %s161
    %p168 = scmp.eq.s32.totalorder %s25, 1
    %p169 = por %p167, %p168
    %p170 = scmp.ne.s32.totalorder %s161, %s162
    %p171 = scmp.eq.s32.totalorder %s25, 0
    %p172 = por %p170, %p171
    %p173 = scmp.ne.s32.totalorder %s161, %s162
    %p174 = scmp.eq.s32.totalorder %s26, 1
    %p175 = por %p173, %p174
    %p177 = scmp.ne.s32.totalorder %s162, %s176
    %p178 = scmp.eq.s32.totalorder %s26, 0
    %p179 = por %p177, %p178
    %s181 = sadd.s32 %s180, 1
    %p184 = scmp.eq.s32.totalorder %s20, 1
    %p185 = scmp.ne.s32.totalorder %s180, %s182
    %p186 = scmp.eq.s32.totalorder %s20, 0
    %p187 = por %p185, %p186
    %p188 = scmp.ne.s32.totalorder %s180, %s182
    %p189 = scmp.eq.s32.totalorder %s25, 1
    %p190 = por %p188, %p189
    %p191 = scmp.ne.s32.totalorder %s182, %s183
    %p192 = scmp.eq.s32.totalorder %s25, 0
    %p193 = por %p191, %p192
    %p194 = scmp.ne.s32.totalorder %s182, %s183
    %p195 = scmp.eq.s32.totalorder %s26, 1
    %p196 = por %p194, %p195
    %p198 = scmp.ne.s32.totalorder %s183, %s197
    %p199 = scmp.eq.s32.totalorder %s26, 0
    %p200 = por %p198, %p199
    %s202 = sadd.s32 %s201, 1
    %p205 = scmp.eq.s32.totalorder %s20, 1
    %p206 = scmp.ne.s32.totalorder %s201, %s203
    %p207 = scmp.eq.s32.totalorder %s20, 0
    %p208 = por %p206, %p207
    %p209 = scmp.ne.s32.totalorder %s201, %s203
    %p210 = scmp.eq.s32.totalorder %s25, 1
    %p211 = por %p209, %p210
    %p212 = scmp.ne.s32.totalorder %s203, %s204
    %p213 = scmp.eq.s32.totalorder %s25, 0
    %p214 = por %p212, %p213
    %p215 = scmp.ne.s32.totalorder %s203, %s204
    %p216 = scmp.eq.s32.totalorder %s26, 1
    %p217 = por %p215, %p216
    %p219 = scmp.ne.s32.totalorder %s204, %s218
    %p220 = scmp.eq.s32.totalorder %s26, 0
    %p221 = por %p219, %p220
    %s223 = sadd.s32 %s222, 1
    %p226 = scmp.eq.s32.totalorder %s20, 1
    %p227 = scmp.ne.s32.totalorder %s222, %s224
    %p228 = scmp.eq.s32.totalorder %s20, 0
    %p229 = por %p227, %p228
    %p230 = scmp.ne.s32.totalorder %s222, %s224
    %p231 = scmp.eq.s32.totalorder %s25, 1
    %p232 = por %p230, %p231
    %p233 = scmp.ne.s32.totalorder %s224, %s225
    %p234 = scmp.eq.s32.totalorder %s25, 0
    %p235 = por %p233, %p234
    %p236 = scmp.ne.s32.totalorder %s224, %s225
    %p237 = scmp.eq.s32.totalorder %s26, 1
    %p238 = por %p236, %p237
    %p240 = scmp.ne.s32.totalorder %s225, %s239
    %p241 = scmp.eq.s32.totalorder %s26, 0
    %p242 = por %p240, %p241
    %s244 = sadd.s32 %s243, 1
    %p247 = scmp.eq.s32.totalorder %s20, 1
    %p248 = scmp.ne.s32.totalorder %s243, %s245
    %p249 = scmp.eq.s32.totalorder %s20, 0
    %p250 = por %p248, %p249
    %p251 = scmp.ne.s32.totalorder %s243, %s245
    %p252 = scmp.eq.s32.totalorder %s25, 1
    %p253 = por %p251, %p252
    %p254 = scmp.ne.s32.totalorder %s245, %s246
    %p255 = scmp.eq.s32.totalorder %s25, 0
    %p256 = por %p254, %p255
    %p257 = scmp.ne.s32.totalorder %s245, %s246
    %p258 = scmp.eq.s32.totalorder %s26, 1
    %p259 = por %p257, %p258
    %p261 = scmp.ne.s32.totalorder %s246, %s260
    %p262 = scmp.eq.s32.totalorder %s26, 0
    %p263 = por %p261, %p262
    %s265 = sadd.s32 %s264, 1
    %p268 = scmp.eq.s32.totalorder %s20, 1
    %p269 = scmp.ne.s32.totalorder %s264, %s266
    %p270 = scmp.eq.s32.totalorder %s20, 0
    %p271 = por %p269, %p270
    %p272 = scmp.ne.s32.totalorder %s264, %s266
    %p273 = scmp.eq.s32.totalorder %s25, 1
    %p274 = por %p272, %p273
    %p275 = scmp.ne.s32.totalorder %s266, %s267
    %p276 = scmp.eq.s32.totalorder %s25, 0
    %p277 = por %p275, %p276
    %p278 = scmp.ne.s32.totalorder %s266, %s267
    %p279 = scmp.eq.s32.totalorder %s26, 1
    %p280 = por %p278, %p279
    %p282 = scmp.ne.s32.totalorder %s267, %s281
    %p283 = scmp.eq.s32.totalorder %s26, 0
    %p284 = por %p282, %p283
    %s286 = sadd.s32 %s285, 1
    %p289 = scmp.eq.s32.totalorder %s20, 1
    %p290 = scmp.ne.s32.totalorder %s285, %s287
    %p291 = scmp.eq.s32.totalorder %s20, 0
    %p292 = por %p290, %p291
    %p293 = scmp.ne.s32.totalorder %s285, %s287
    %p294 = scmp.eq.s32.totalorder %s25, 1
    %p295 = por %p293, %p294
    %p296 = scmp.ne.s32.totalorder %s287, %s288
    %p297 = scmp.eq.s32.totalorder %s25, 0
    %p298 = por %p296, %p297
    %p299 = scmp.ne.s32.totalorder %s287, %s288
    %p300 = scmp.eq.s32.totalorder %s26, 1
    %p301 = por %p299, %p300
    %p303 = scmp.ne.s32.totalorder %s288, %s302
    %p304 = scmp.eq.s32.totalorder %s26, 0
    %p305 = por %p303, %p304
    %s307 = sadd.s32 %s306, 1
    %p310 = scmp.eq.s32.totalorder %s20, 1
    %p311 = scmp.ne.s32.totalorder %s306, %s308
    %p312 = scmp.eq.s32.totalorder %s20, 0
    %p313 = por %p311, %p312
    %p314 = scmp.ne.s32.totalorder %s306, %s308
    %p315 = scmp.eq.s32.totalorder %s25, 1
    %p316 = por %p314, %p315
    %p317 = scmp.ne.s32.totalorder %s308, %s309
    %p318 = scmp.eq.s32.totalorder %s25, 0
    %p319 = por %p317, %p318
    %p320 = scmp.ne.s32.totalorder %s308, %s309
    %p321 = scmp.eq.s32.totalorder %s26, 1
    %p322 = por %p320, %p321
    %p324 = scmp.ne.s32.totalorder %s309, %s323
    %p325 = scmp.eq.s32.totalorder %s26, 0
    %p326 = por %p324, %p325
    %s327 = ssub.s32 %s20, %s27
    %p328 = scmp.eq.s32.totalorder %s327, 0
    %s330 = sadd.s32 %s329, 1
    %s331 = scalar_select %p328, %s329, %s330
    %p334 = pneg %p328
    %p335 = scmp.eq.s32.totalorder %s20, 1
    %p336 = por %p334, %p335
    %p337 = scmp.ne.s32.totalorder %s329, %s332
    %p338 = scmp.eq.s32.totalorder %s20, 0
    %p339 = por %p337, %p338
    %p340 = scmp.ne.s32.totalorder %s329, %s332
    %p341 = scmp.eq.s32.totalorder %s25, 1
    %p342 = por %p340, %p341
    %p343 = scmp.ne.s32.totalorder %s332, %s333
    %p344 = scmp.eq.s32.totalorder %s25, 0
    %p345 = por %p343, %p344
    %p346 = scmp.ne.s32.totalorder %s332, %s333
    %p347 = scmp.eq.s32.totalorder %s26, 1
    %p348 = por %p346, %p347
    %p350 = scmp.ne.s32.totalorder %s333, %s349
    %p351 = scmp.eq.s32.totalorder %s26, 0
    %p352 = por %p350, %p351
    %p353 = scmp.le.s32.totalorder 1, %s20
    %p354 = scmp.lt.s32.totalorder %s20, 3
    %p355 = pnand %p353, %p354
    %p356 = pneg %p355
    // Predicated region
    $region9: #{tpu_custom_call.1} parent=5 // pred_check
      _
    $region10: #{tpu_custom_call.1} parent=5 // pred_check_branch
      %358 = sbr.rel (%p355) target = $region12
    $region11: #{tpu_custom_call.1} parent=5 // pred_region
      %s359 = ssub.s32 %s20, 1
      // Predicated region
      $region13: #{tpu_custom_call.1} parent=11 // pred_check
        %p360 = pneg %p67
      $region14: #{tpu_custom_call.1} parent=11 // pred_check_branch
        %362 = sbr.rel (%p360) target = $region16
      $region15: #{tpu_custom_call.1} parent=11 // pred_region
        _
      $region16: #{tpu_custom_call.1} parent=11 // pred_fallthru
        _
      // Predicated region
      $region17: #{tpu_custom_call.1} parent=11 // pred_check
        %p363 = pneg %p88
      $region18: #{tpu_custom_call.1} parent=11 // pred_check_branch
        %365 = sbr.rel (%p363) target = $region20
      $region19: #{tpu_custom_call.1} parent=11 // pred_region
        _
      $region20: #{tpu_custom_call.1} parent=11 // pred_fallthru
        _
      // Predicated region
      $region21: #{tpu_custom_call.1} parent=11 // pred_check
        %p366 = pneg %p109
      $region22: #{tpu_custom_call.1} parent=11 // pred_check_branch
        %368 = sbr.rel (%p366) target = $region24
      $region23: #{tpu_custom_call.1} parent=11 // pred_region
        _
      $region24: #{tpu_custom_call.1} parent=11 // pred_fallthru
        _
      // Predicated region
      $region25: #{tpu_custom_call.1} parent=11 // pred_check
        %p369 = pneg %p130
      $region26: #{tpu_custom_call.1} parent=11 // pred_check_branch
        %371 = sbr.rel (%p369) target = $region28
      $region27: #{tpu_custom_call.1} parent=11 // pred_region
        _
      $region28: #{tpu_custom_call.1} parent=11 // pred_fallthru
        _
      // Predicated region
      $region29: #{tpu_custom_call.1} parent=11 // pred_check
        %p372 = pneg %p151
      $region30: #{tpu_custom_call.1} parent=11 // pred_check_branch
        %374 = sbr.rel (%p372) target = $region32
      $region31: #{tpu_custom_call.1} parent=11 // pred_region
        _
      $region32: #{tpu_custom_call.1} parent=11 // pred_fallthru
        _
      // Predicated region
      $region33: #{tpu_custom_call.1} parent=11 // pred_check
        %p375 = pneg %p172
      $region34: #{tpu_custom_call.1} parent=11 // pred_check_branch
        %377 = sbr.rel (%p375) target = $region36
      $region35: #{tpu_custom_call.1} parent=11 // pred_region
        _
      $region36: #{tpu_custom_call.1} parent=11 // pred_fallthru
        _
      // Predicated region
      $region37: #{tpu_custom_call.1} parent=11 // pred_check
        %p378 = pneg %p193
      $region38: #{tpu_custom_call.1} parent=11 // pred_check_branch
        %380 = sbr.rel (%p378) target = $region40
      $region39: #{tpu_custom_call.1} parent=11 // pred_region
        _
      $region40: #{tpu_custom_call.1} parent=11 // pred_fallthru
        _
      // Predicated region
      $region41: #{tpu_custom_call.1} parent=11 // pred_check
        %p381 = pneg %p214
      $region42: #{tpu_custom_call.1} parent=11 // pred_check_branch
        %383 = sbr.rel (%p381) target = $region44
      $region43: #{tpu_custom_call.1} parent=11 // pred_region
        _
      $region44: #{tpu_custom_call.1} parent=11 // pred_fallthru
        _
      // Predicated region
      $region45: #{tpu_custom_call.1} parent=11 // pred_check
        %p384 = pneg %p235
      $region46: #{tpu_custom_call.1} parent=11 // pred_check_branch
        %386 = sbr.rel (%p384) target = $region48
      $region47: #{tpu_custom_call.1} parent=11 // pred_region
        _
      $region48: #{tpu_custom_call.1} parent=11 // pred_fallthru
        _
      // Predicated region
      $region49: #{tpu_custom_call.1} parent=11 // pred_check
        %p387 = pneg %p256
      $region50: #{tpu_custom_call.1} parent=11 // pred_check_branch
        %389 = sbr.rel (%p387) target = $region52
      $region51: #{tpu_custom_call.1} parent=11 // pred_region
        _
      $region52: #{tpu_custom_call.1} parent=11 // pred_fallthru
        _
      // Predicated region
      $region53: #{tpu_custom_call.1} parent=11 // pred_check
        %p390 = pneg %p277
      $region54: #{tpu_custom_call.1} parent=11 // pred_check_branch
        %392 = sbr.rel (%p390) target = $region56
      $region55: #{tpu_custom_call.1} parent=11 // pred_region
        _
      $region56: #{tpu_custom_call.1} parent=11 // pred_fallthru
        _
      // Predicated region
      $region57: #{tpu_custom_call.1} parent=11 // pred_check
        %p393 = pneg %p298
      $region58: #{tpu_custom_call.1} parent=11 // pred_check_branch
        %395 = sbr.rel (%p393) target = $region60
      $region59: #{tpu_custom_call.1} parent=11 // pred_region
        _
      $region60: #{tpu_custom_call.1} parent=11 // pred_fallthru
        _
      // Predicated region
      $region61: #{tpu_custom_call.1} parent=11 // pred_check
        %p396 = pneg %p319
      $region62: #{tpu_custom_call.1} parent=11 // pred_check_branch
        %398 = sbr.rel (%p396) target = $region64
      $region63: #{tpu_custom_call.1} parent=11 // pred_region
        _
      $region64: #{tpu_custom_call.1} parent=11 // pred_fallthru
        _
    $region12: #{tpu_custom_call.1} parent=5 // pred_fallthru
      _
    %p399 = scmp.lt.s32.totalorder %s20, 2
    // Predicated region
    $region65: #{tpu_custom_call.1} parent=5 // pred_check
      %p400 = pneg %p399
    $region66: #{tpu_custom_call.1} parent=5 // pred_check_branch
      %402 = sbr.rel (%p400) target = $region68
    $region67: #{tpu_custom_call.1} parent=5 // pred_region
      // Predicated region
      $region69: #{tpu_custom_call.1} parent=67 // pred_check
        %p403 = pneg %p40
      $region70: #{tpu_custom_call.1} parent=67 // pred_check_branch
        %405 = sbr.rel (%p403) target = $region72
      $region71: #{tpu_custom_call.1} parent=67 // pred_region
        %p406 = scmp.lt.s32.totalorder %s20, 1
        %s407 = scalar_select %p406, %s20, 1
        %s408 = smul.addr %s407, 32
        %s409 = smul.addr %s408, 8
        %s410 = scalar_lea.vmem %s0, %s409
      $region72: #{tpu_custom_call.1} parent=67 // pred_fallthru
        _
    $region68: #{tpu_custom_call.1} parent=5 // pred_fallthru
      _
    %p411 = scmp.le.s32.totalorder 1, %s20
    %p412 = scmp.lt.s32.totalorder %s20, 3
    %p413 = pnand %p411, %p412
    %p414 = pneg %p413
    // Predicated region
    $region73: #{tpu_custom_call.1} parent=5 // pred_check
      _
    $region74: #{tpu_custom_call.1} parent=5 // pred_check_branch
      %416 = sbr.rel (%p413) target = $region76
    $region75: #{tpu_custom_call.1} parent=5 // pred_region
      %s417 = ssub.s32 %s20, 1
      %p418 = scmp.lt.s32.totalorder %s25, 1
      %s419 = scalar_select %p418, %s25, 1
      %s420 = smul.addr %s419, 32
      %s421 = smul.addr %s420, 8
      %s422 = scalar_lea.vmem %s0, %s421
      %p423 = pneg %p46
      %p424 = pneg %p43
      %p425 = pneg %p67
      %p426 = pneg %p64
      %p427 = pneg %p88
      %p428 = pneg %p85
      %p429 = pneg %p109
      %p430 = pneg %p106
      %p431 = pneg %p130
      %p432 = pneg %p127
      %p433 = pneg %p151
      %p434 = pneg %p148
      %p435 = pneg %p172
      %p436 = pneg %p169
      %p437 = pneg %p193
      %p438 = pneg %p190
      %p439 = pneg %p214
      %p440 = pneg %p211
      %p441 = pneg %p235
      %p442 = pneg %p232
      %p443 = pneg %p256
      %p444 = pneg %p253
      %p445 = pneg %p277
      %p446 = pneg %p274
      %p447 = pneg %p298
      %p448 = pneg %p295
      %p449 = pneg %p319
      %p450 = pneg %p316
      %p451 = pneg %p345
      %p452 = pneg %p342
      %p453 = scmp.lt.s32.totalorder %s25, 1
      %s454 = scalar_select %p453, %s25, 1
      %s455 = smul.addr %s454, 32
      %s456 = smul.addr %s455, 8
      %s457 = scalar_lea.vmem %s14, %s456
      %p458 = scmp.lt.s32.totalorder %s25, 1
      %s459 = scalar_select %p458, %s25, 1
      %s460 = smul.addr %s459, 32
      %s461 = smul.addr %s460, 8
      %s462 = scalar_lea.vmem %s0, %s461
      %p463 = scmp.lt.s32.totalorder %s25, 1
      %s464 = scalar_select %p463, %s25, 1
      %s465 = smul.addr %s464, 32
      %s466 = smul.addr %s465, 8
      %s467 = scalar_lea.vmem %s14, %s466
      %v468 = vld [vmem:[%s462] sm:$0xff]
      %v469 = vld [vmem:[%s462 + $0x8] sm:$0xff]
      %v470 = vld [vmem:[%s462 + $0x10] sm:$0xff]
      %v471 = vld [vmem:[%s462 + $0x18] sm:$0xff]
      %v472 = vld [vmem:[%s462 + $0x20] sm:$0xff]
      %v473 = vld [vmem:[%s462 + $0x28] sm:$0xff]
      %v474 = vld [vmem:[%s462 + $0x30] sm:$0xff]
      %v475 = vld [vmem:[%s462 + $0x38] sm:$0xff]
      %v476 = vld [vmem:[%s462 + $0x40] sm:$0xff]
      %v477 = vld [vmem:[%s462 + $0x48] sm:$0xff]
      %v478 = vld [vmem:[%s462 + $0x50] sm:$0xff]
      %v479 = vld [vmem:[%s462 + $0x58] sm:$0xff]
      %v480 = vld [vmem:[%s462 + $0x60] sm:$0xff]
      %v481 = vld [vmem:[%s462 + $0x68] sm:$0xff]
      %v482 = vld [vmem:[%s462 + $0x70] sm:$0xff]
      %v483 = vld [vmem:[%s462 + $0x78] sm:$0xff]
      %v484 = vld [vmem:[%s462 + $0x80] sm:$0xff]
      %v485 = vld [vmem:[%s462 + $0x88] sm:$0xff]
      %v486 = vld [vmem:[%s462 + $0x90] sm:$0xff]
      %v487 = vld [vmem:[%s462 + $0x98] sm:$0xff]
      %v488 = vld [vmem:[%s462 + $0xa0] sm:$0xff]
      %v489 = vld [vmem:[%s462 + $0xa8] sm:$0xff]
      %v490 = vld [vmem:[%s462 + $0xb0] sm:$0xff]
      %v491 = vld [vmem:[%s462 + $0xb8] sm:$0xff]
      %v492 = vld [vmem:[%s462 + $0xc0] sm:$0xff]
      %v493 = vld [vmem:[%s462 + $0xc8] sm:$0xff]
      %v494 = vld [vmem:[%s462 + $0xd0] sm:$0xff]
      %v495 = vld [vmem:[%s462 + $0xd8] sm:$0xff]
      %v496 = vld [vmem:[%s462 + $0xe0] sm:$0xff]
      %v497 = vld [vmem:[%s462 + $0xe8] sm:$0xff]
      %v498 = vld [vmem:[%s462 + $0xf0] sm:$0xff]
      %v499 = vld [vmem:[%s462 + $0xf8] sm:$0xff]
      %v500 = vld [vmem:[%s1] sm:$0xf]
      %v501 = vld [vmem:[%s2] sm:$0x1]
      %v503 = vlaneseq
      %v504 = vshrl.u32 %v503, 7
      %v505 = vsub.s32 0, %v504
      %v506 = vrot.slane %v501, %v505
      %vm508 = vcmask 31744
      %v510 = vsel %vm508, %v468, 0
      %v513 = vsel %vm508, %v469, 0
      %v516 = vsel %vm508, %v470, 0
      %v519 = vsel %vm508, %v471, 0
      %v522 = vsel %vm508, %v472, 0
      %v525 = vsel %vm508, %v473, 0
      %v528 = vsel %vm508, %v474, 0
      %v531 = vsel %vm508, %v475, 0
      %v534 = vsel %vm508, %v476, 0
      %v537 = vsel %vm508, %v477, 0
      %v540 = vsel %vm508, %v478, 0
      %v543 = vsel %vm508, %v479, 0
      %v546 = vsel %vm508, %v480, 0
      %v549 = vsel %vm508, %v481, 0
      %v552 = vsel %vm508, %v482, 0
      %v555 = vsel %vm508, %v483, 0
      %v558 = vsel %vm508, %v484, 0
      %v561 = vsel %vm508, %v485, 0
      %v564 = vsel %vm508, %v486, 0
      %v567 = vsel %vm508, %v487, 0
      %v570 = vsel %vm508, %v488, 0
      %v573 = vsel %vm508, %v489, 0
      %v576 = vsel %vm508, %v490, 0
      %v579 = vsel %vm508, %v491, 0
      %v582 = vsel %vm508, %v492, 0
      %v585 = vsel %vm508, %v493, 0
      %v588 = vsel %vm508, %v494, 0
      %v591 = vsel %vm508, %v495, 0
      %v594 = vsel %vm508, %v496, 0
      %v597 = vsel %vm508, %v497, 0
      %v600 = vsel %vm508, %v498, 0
      %v603 = vsel %vm508, %v499, 0
      %vm605 = vcmask 1043456
      %v607 = vsel %vm605, %v500, 0
      %609 = vmatprep.subr.mxu0 0.0
      %610 = vmatpush1.msra.mxu0 0.0
      %611 = vmatprep.subr.mxu0 0.0
      %612 = vmatpush1.msra.mxu0 0.0
      %613 = vmatprep.subr.mxu0 0.0
      %614 = vmatpush1.msra.mxu0 0.0
      %615 = vmatprep.subr.mxu0 0.0
      %616 = vmatpush1.msra.mxu0 0.0
      %617 = vmatprep.subr.mxu0 0.0
      %618 = vmatpush1.msra.mxu0 0.0
      %619 = vmatprep.subr.mxu0 0.0
      %620 = vmatpush1.msra.mxu0 0.0
      %621 = vmatprep.subr.mxu0 0.0
      %622 = vmatpush1.msra.mxu0 0.0
      %623 = vmatprep.subr.mxu0 0.0
      %624 = vmatpush1.msra.mxu0 0.0
      %625 = vmatprep.subr.mxu0 0.0
      %626 = vmatpush1.msra.mxu0 0.0
      %627 = vmatprep.subr.mxu0 0.0
      %628 = vmatpush1.msra.mxu0 0.0
      %629 = vmatprep.subr.mxu0 0.0
      %630 = vmatpush1.msra.mxu0 0.0
      %631 = vmatprep.subr.mxu0 0.0
      %632 = vmatpush1.msra.mxu0 0.0
      %633 = vmatprep.subr.mxu0 0.0
      %634 = vmatpush1.msra.mxu0 0.0
      %635 = vmatprep.subr.mxu0 0.0
      %636 = vmatpush1.msra.mxu0 0.0
      %637 = vmatprep.subr.mxu0 0.0
      %638 = vmatpush1.msra.mxu0 0.0
      %639 = vmatprep.subr.mxu0 0.0
      %640 = vmatpush1.msra.mxu0 %v607
      %641 = vmatprep.subr.mxu0 0.0
      %642 = vmatpush2.msra.mxu0 0.0
      %643 = vmatprep.subr.mxu0 0.0
      %644 = vmatpush2.msra.mxu0 0.0
      %645 = vmatprep.subr.mxu0 0.0
      %646 = vmatpush2.msra.mxu0 0.0
      %647 = vmatprep.subr.mxu0 0.0
      %648 = vmatpush2.msra.mxu0 0.0
      %649 = vmatprep.subr.mxu0 0.0
      %650 = vmatpush2.msra.mxu0 0.0
      %651 = vmatprep.subr.mxu0 0.0
      %652 = vmatpush2.msra.mxu0 0.0
      %653 = vmatprep.subr.mxu0 0.0
      %654 = vmatpush2.msra.mxu0 0.0
      %655 = vmatprep.subr.mxu0 0.0
      %656 = vmatpush2.msra.mxu0 0.0
      %657 = vmatprep.subr.mxu0 0.0
      %658 = vmatpush2.msra.mxu0 0.0
      %659 = vmatprep.subr.mxu0 0.0
      %660 = vmatpush2.msra.mxu0 0.0
      %661 = vmatprep.subr.mxu0 0.0
      %662 = vmatpush2.msra.mxu0 0.0
      %663 = vmatprep.subr.mxu0 0.0
      %664 = vmatpush2.msra.mxu0 0.0
      %665 = vmatprep.subr.mxu0 0.0
      %666 = vmatpush2.msra.mxu0 0.0
      %667 = vmatprep.subr.mxu0 0.0
      %668 = vmatpush2.msra.mxu0 0.0
      %669 = vmatprep.subr.mxu0 0.0
      %670 = vmatpush2.msra.mxu0 0.0
      %671 = vmatprep.subr.mxu0 0.0
      %672 = vmatpush2.msra.mxu0 0.0
      %673 = vmatprep.mubr.f32.mxu0 0.0
      %674 = vmatmul.mubr.f32.gmra.mxu0 %v510
      %v675 = vpop.f32.mrf.mxu0
      %v676 = vadd.f32 %v506, %v675
      %v677 = vpop.f32.mrf.mxu0
      %678 = vmatprep.mubr.f32.mxu0 0.0
      %679 = vmatmul.mubr.f32.gmra.mxu0 %v513
      %v680 = vpop.f32.mrf.mxu0
      %v681 = vadd.f32 %v506, %v680
      %v682 = vpop.f32.mrf.mxu0
      %683 = vmatprep.mubr.f32.mxu0 0.0
      %684 = vmatmul.mubr.f32.gmra.mxu0 %v516
      %v685 = vpop.f32.mrf.mxu0
      %v686 = vadd.f32 %v506, %v685
      %v687 = vpop.f32.mrf.mxu0
      %688 = vmatprep.mubr.f32.mxu0 0.0
      %689 = vmatmul.mubr.f32.gmra.mxu0 %v519
      %v690 = vpop.f32.mrf.mxu0
      %v691 = vadd.f32 %v506, %v690
      %v692 = vpop.f32.mrf.mxu0
      %693 = vmatprep.mubr.f32.mxu0 0.0
      %694 = vmatmul.mubr.f32.gmra.mxu0 %v522
      %v695 = vpop.f32.mrf.mxu0
      %v696 = vadd.f32 %v506, %v695
      %v697 = vpop.f32.mrf.mxu0
      %698 = vmatprep.mubr.f32.mxu0 0.0
      %699 = vmatmul.mubr.f32.gmra.mxu0 %v525
      %v700 = vpop.f32.mrf.mxu0
      %v701 = vadd.f32 %v506, %v700
      %v702 = vpop.f32.mrf.mxu0
      %703 = vmatprep.mubr.f32.mxu0 0.0
      %704 = vmatmul.mubr.f32.gmra.mxu0 %v528
      %v705 = vpop.f32.mrf.mxu0
      %v706 = vadd.f32 %v506, %v705
      %v707 = vpop.f32.mrf.mxu0
      %708 = vmatprep.mubr.f32.mxu0 0.0
      %709 = vmatmul.mubr.f32.gmra.mxu0 %v531
      %v710 = vpop.f32.mrf.mxu0
      %v711 = vadd.f32 %v506, %v710
      %v712 = vpop.f32.mrf.mxu0
      %713 = vmatprep.mubr.f32.mxu0 0.0
      %714 = vmatmul.mubr.f32.gmra.mxu0 %v534
      %v715 = vpop.f32.mrf.mxu0
      %v716 = vadd.f32 %v506, %v715
      %v717 = vpop.f32.mrf.mxu0
      %718 = vmatprep.mubr.f32.mxu0 0.0
      %719 = vmatmul.mubr.f32.gmra.mxu0 %v537
      %v720 = vpop.f32.mrf.mxu0
      %v721 = vadd.f32 %v506, %v720
      %v722 = vpop.f32.mrf.mxu0
      %723 = vmatprep.mubr.f32.mxu0 0.0
      %724 = vmatmul.mubr.f32.gmra.mxu0 %v540
      %v725 = vpop.f32.mrf.mxu0
      %v726 = vadd.f32 %v506, %v725
      %v727 = vpop.f32.mrf.mxu0
      %728 = vmatprep.mubr.f32.mxu0 0.0
      %729 = vmatmul.mubr.f32.gmra.mxu0 %v543
      %v730 = vpop.f32.mrf.mxu0
      %v731 = vadd.f32 %v506, %v730
      %v732 = vpop.f32.mrf.mxu0
      %733 = vmatprep.mubr.f32.mxu0 0.0
      %734 = vmatmul.mubr.f32.gmra.mxu0 %v546
      %v735 = vpop.f32.mrf.mxu0
      %v736 = vadd.f32 %v506, %v735
      %v737 = vpop.f32.mrf.mxu0
      %738 = vmatprep.mubr.f32.mxu0 0.0
      %739 = vmatmul.mubr.f32.gmra.mxu0 %v549
      %v740 = vpop.f32.mrf.mxu0
      %v741 = vadd.f32 %v506, %v740
      %v742 = vpop.f32.mrf.mxu0
      %743 = vmatprep.mubr.f32.mxu0 0.0
      %744 = vmatmul.mubr.f32.gmra.mxu0 %v552
      %v745 = vpop.f32.mrf.mxu0
      %v746 = vadd.f32 %v506, %v745
      %v747 = vpop.f32.mrf.mxu0
      %748 = vmatprep.mubr.f32.mxu0 0.0
      %749 = vmatmul.mubr.f32.gmra.mxu0 %v555
      %v750 = vpop.f32.mrf.mxu0
      %v751 = vadd.f32 %v506, %v750
      %v752 = vpop.f32.mrf.mxu0
      %753 = vmatprep.mubr.f32.mxu0 0.0
      %754 = vmatmul.mubr.f32.gmra.mxu0 %v558
      %v755 = vpop.f32.mrf.mxu0
      %v756 = vadd.f32 %v506, %v755
      %v757 = vpop.f32.mrf.mxu0
      %758 = vmatprep.mubr.f32.mxu0 0.0
      %759 = vmatmul.mubr.f32.gmra.mxu0 %v561
      %v760 = vpop.f32.mrf.mxu0
      %v761 = vadd.f32 %v506, %v760
      %v762 = vpop.f32.mrf.mxu0
      %763 = vmatprep.mubr.f32.mxu0 0.0
      %764 = vmatmul.mubr.f32.gmra.mxu0 %v564
      %v765 = vpop.f32.mrf.mxu0
      %v766 = vadd.f32 %v506, %v765
      %v767 = vpop.f32.mrf.mxu0
      %768 = vmatprep.mubr.f32.mxu0 0.0
      %769 = vmatmul.mubr.f32.gmra.mxu0 %v567
      %v770 = vpop.f32.mrf.mxu0
      %v771 = vadd.f32 %v506, %v770
      %v772 = vpop.f32.mrf.mxu0
      %773 = vmatprep.mubr.f32.mxu0 0.0
      %774 = vmatmul.mubr.f32.gmra.mxu0 %v570
      %v775 = vpop.f32.mrf.mxu0
      %v776 = vadd.f32 %v506, %v775
      %v777 = vpop.f32.mrf.mxu0
      %778 = vmatprep.mubr.f32.mxu0 0.0
      %779 = vmatmul.mubr.f32.gmra.mxu0 %v573
      %v780 = vpop.f32.mrf.mxu0
      %v781 = vadd.f32 %v506, %v780
      %v782 = vpop.f32.mrf.mxu0
      %783 = vmatprep.mubr.f32.mxu0 0.0
      %784 = vmatmul.mubr.f32.gmra.mxu0 %v576
      %v785 = vpop.f32.mrf.mxu0
      %v786 = vadd.f32 %v506, %v785
      %v787 = vpop.f32.mrf.mxu0
      %788 = vmatprep.mubr.f32.mxu0 0.0
      %789 = vmatmul.mubr.f32.gmra.mxu0 %v579
      %v790 = vpop.f32.mrf.mxu0
      %v791 = vadd.f32 %v506, %v790
      %v792 = vpop.f32.mrf.mxu0
      %793 = vmatprep.mubr.f32.mxu0 0.0
      %794 = vmatmul.mubr.f32.gmra.mxu0 %v582
      %v795 = vpop.f32.mrf.mxu0
      %v796 = vadd.f32 %v506, %v795
      %v797 = vpop.f32.mrf.mxu0
      %798 = vmatprep.mubr.f32.mxu0 0.0
      %799 = vmatmul.mubr.f32.gmra.mxu0 %v585
      %v800 = vpop.f32.mrf.mxu0
      %v801 = vadd.f32 %v506, %v800
      %v802 = vpop.f32.mrf.mxu0
      %803 = vmatprep.mubr.f32.mxu0 0.0
      %804 = vmatmul.mubr.f32.gmra.mxu0 %v588
      %v805 = vpop.f32.mrf.mxu0
      %v806 = vadd.f32 %v506, %v805
      %v807 = vpop.f32.mrf.mxu0
      %808 = vmatprep.mubr.f32.mxu0 0.0
      %809 = vmatmul.mubr.f32.gmra.mxu0 %v591
      %v810 = vpop.f32.mrf.mxu0
      %v811 = vadd.f32 %v506, %v810
      %v812 = vpop.f32.mrf.mxu0
      %813 = vmatprep.mubr.f32.mxu0 0.0
      %814 = vmatmul.mubr.f32.gmra.mxu0 %v594
      %v815 = vpop.f32.mrf.mxu0
      %v816 = vadd.f32 %v506, %v815
      %v817 = vpop.f32.mrf.mxu0
      %818 = vmatprep.mubr.f32.mxu0 0.0
      %819 = vmatmul.mubr.f32.gmra.mxu0 %v597
      %v820 = vpop.f32.mrf.mxu0
      %v821 = vadd.f32 %v506, %v820
      %v822 = vpop.f32.mrf.mxu0
      %823 = vmatprep.mubr.f32.mxu0 0.0
      %824 = vmatmul.mubr.f32.gmra.mxu0 %v600
      %v825 = vpop.f32.mrf.mxu0
      %v826 = vadd.f32 %v506, %v825
      %v827 = vpop.f32.mrf.mxu0
      %828 = vmatprep.mubr.f32.mxu0 0.0
      %829 = vmatmul.mubr.f32.gmra.mxu0 %v603
      %v830 = vpop.f32.mrf.mxu0
      %v831 = vadd.f32 %v506, %v830
      %v832 = vpop.f32.mrf.mxu0
      %833 = vdwg.mxu0
      %v834 = vxor.u32 %v676, 2147483648
      %v835 = vxor.u32 %v681, 2147483648
      %v836 = vxor.u32 %v686, 2147483648
      %v837 = vxor.u32 %v691, 2147483648
      %v838 = vxor.u32 %v696, 2147483648
      %v839 = vxor.u32 %v701, 2147483648
      %v840 = vxor.u32 %v706, 2147483648
      %v841 = vxor.u32 %v711, 2147483648
      %v842 = vxor.u32 %v716, 2147483648
      %v843 = vxor.u32 %v721, 2147483648
      %v844 = vxor.u32 %v726, 2147483648
      %v845 = vxor.u32 %v731, 2147483648
      %v846 = vxor.u32 %v736, 2147483648
      %v847 = vxor.u32 %v741, 2147483648
      %v848 = vxor.u32 %v746, 2147483648
      %v849 = vxor.u32 %v751, 2147483648
      %v850 = vxor.u32 %v756, 2147483648
      %v851 = vxor.u32 %v761, 2147483648
      %v852 = vxor.u32 %v766, 2147483648
      %v853 = vxor.u32 %v771, 2147483648
      %v854 = vxor.u32 %v776, 2147483648
      %v855 = vxor.u32 %v781, 2147483648
      %v856 = vxor.u32 %v786, 2147483648
      %v857 = vxor.u32 %v791, 2147483648
      %v858 = vxor.u32 %v796, 2147483648
      %v859 = vxor.u32 %v801, 2147483648
      %v860 = vxor.u32 %v806, 2147483648
      %v861 = vxor.u32 %v811, 2147483648
      %v862 = vxor.u32 %v816, 2147483648
      %v863 = vxor.u32 %v821, 2147483648
      %v864 = vxor.u32 %v826, 2147483648
      %v865 = vxor.u32 %v831, 2147483648
      %v866 = vmul.f32 %v834, 1.442695
      %v867 = vpow.pop %v866
      %v868 = vmul.f32 %v835, 1.442695
      %v869 = vpow.pop %v868
      %v870 = vmul.f32 %v836, 1.442695
      %v871 = vpow.pop %v870
      %v872 = vmul.f32 %v837, 1.442695
      %v873 = vpow.pop %v872
      %v874 = vmul.f32 %v838, 1.442695
      %v875 = vpow.pop %v874
      %v876 = vmul.f32 %v839, 1.442695
      %v877 = vpow.pop %v876
      %v878 = vmul.f32 %v840, 1.442695
      %v879 = vpow.pop %v878
      %v880 = vmul.f32 %v841, 1.442695
      %v881 = vpow.pop %v880
      %v882 = vmul.f32 %v842, 1.442695
      %v883 = vpow.pop %v882
      %v884 = vmul.f32 %v843, 1.442695
      %v885 = vpow.pop %v884
      %v886 = vmul.f32 %v844, 1.442695
      %v887 = vpow.pop %v886
      %v888 = vmul.f32 %v845, 1.442695
      %v889 = vpow.pop %v888
      %v890 = vmul.f32 %v846, 1.442695
      %v891 = vpow.pop %v890
      %v892 = vmul.f32 %v847, 1.442695
      %v893 = vpow.pop %v892
      %v894 = vmul.f32 %v848, 1.442695
      %v895 = vpow.pop %v894
      %v896 = vmul.f32 %v849, 1.442695
      %v897 = vpow.pop %v896
      %v898 = vmul.f32 %v850, 1.442695
      %v899 = vpow.pop %v898
      %v900 = vmul.f32 %v851, 1.442695
      %v901 = vpow.pop %v900
      %v902 = vmul.f32 %v852, 1.442695
      %v903 = vpow.pop %v902
      %v904 = vmul.f32 %v853, 1.442695
      %v905 = vpow.pop %v904
      %v906 = vmul.f32 %v854, 1.442695
      %v907 = vpow.pop %v906
      %v908 = vmul.f32 %v855, 1.442695
      %v909 = vpow.pop %v908
      %v910 = vmul.f32 %v856, 1.442695
      %v911 = vpow.pop %v910
      %v912 = vmul.f32 %v857, 1.442695
      %v913 = vpow.pop %v912
      %v914 = vmul.f32 %v858, 1.442695
      %v915 = vpow.pop %v914
      %v916 = vmul.f32 %v859, 1.442695
      %v917 = vpow.pop %v916
      %v918 = vmul.f32 %v860, 1.442695
      %v919 = vpow.pop %v918
      %v920 = vmul.f32 %v861, 1.442695
      %v921 = vpow.pop %v920
      %v922 = vmul.f32 %v862, 1.442695
      %v923 = vpow.pop %v922
      %v924 = vmul.f32 %v863, 1.442695
      %v925 = vpow.pop %v924
      %v926 = vmul.f32 %v864, 1.442695
      %v927 = vpow.pop %v926
      %v928 = vmul.f32 %v865, 1.442695
      %v929 = vpow.pop %v928
      %v930 = vadd.f32 %v867, 1.0
      %v931 = vadd.f32 %v869, 1.0
      %v932 = vadd.f32 %v871, 1.0
      %v933 = vadd.f32 %v873, 1.0
      %v934 = vadd.f32 %v875, 1.0
      %v935 = vadd.f32 %v877, 1.0
      %v936 = vadd.f32 %v879, 1.0
      %v937 = vadd.f32 %v881, 1.0
      %v938 = vadd.f32 %v883, 1.0
      %v939 = vadd.f32 %v885, 1.0
      %v940 = vadd.f32 %v887, 1.0
      %v941 = vadd.f32 %v889, 1.0
      %v942 = vadd.f32 %v891, 1.0
      %v943 = vadd.f32 %v893, 1.0
      %v944 = vadd.f32 %v895, 1.0
      %v945 = vadd.f32 %v897, 1.0
      %v946 = vadd.f32 %v899, 1.0
      %v947 = vadd.f32 %v901, 1.0
      %v948 = vadd.f32 %v903, 1.0
      %v949 = vadd.f32 %v905, 1.0
      %v950 = vadd.f32 %v907, 1.0
      %v951 = vadd.f32 %v909, 1.0
      %v952 = vadd.f32 %v911, 1.0
      %v953 = vadd.f32 %v913, 1.0
      %v954 = vadd.f32 %v915, 1.0
      %v955 = vadd.f32 %v917, 1.0
      %v956 = vadd.f32 %v919, 1.0
      %v957 = vadd.f32 %v921, 1.0
      %v958 = vadd.f32 %v923, 1.0
      %v959 = vadd.f32 %v925, 1.0
      %v960 = vadd.f32 %v927, 1.0
      %v961 = vadd.f32 %v929, 1.0
      %v962 = vrcp.pop %v930
      %v963 = vmul.f32 1.0, %v962
      %v964 = vrcp.pop %v931
      %v965 = vmul.f32 1.0, %v964
      %v966 = vrcp.pop %v932
      %v967 = vmul.f32 1.0, %v966
      %v968 = vrcp.pop %v933
      %v969 = vmul.f32 1.0, %v968
      %v970 = vrcp.pop %v934
      %v971 = vmul.f32 1.0, %v970
      %v972 = vrcp.pop %v935
      %v973 = vmul.f32 1.0, %v972
      %v974 = vrcp.pop %v936
      %v975 = vmul.f32 1.0, %v974
      %v976 = vrcp.pop %v937
      %v977 = vmul.f32 1.0, %v976
      %v978 = vrcp.pop %v938
      %v979 = vmul.f32 1.0, %v978
      %v980 = vrcp.pop %v939
      %v981 = vmul.f32 1.0, %v980
      %v982 = vrcp.pop %v940
      %v983 = vmul.f32 1.0, %v982
      %v984 = vrcp.pop %v941
      %v985 = vmul.f32 1.0, %v984
      %v986 = vrcp.pop %v942
      %v987 = vmul.f32 1.0, %v986
      %v988 = vrcp.pop %v943
      %v989 = vmul.f32 1.0, %v988
      %v990 = vrcp.pop %v944
      %v991 = vmul.f32 1.0, %v990
      %v992 = vrcp.pop %v945
      %v993 = vmul.f32 1.0, %v992
      %v994 = vrcp.pop %v946
      %v995 = vmul.f32 1.0, %v994
      %v996 = vrcp.pop %v947
      %v997 = vmul.f32 1.0, %v996
      %v998 = vrcp.pop %v948
      %v999 = vmul.f32 1.0, %v998
      %v1000 = vrcp.pop %v949
      %v1001 = vmul.f32 1.0, %v1000
      %v1002 = vrcp.pop %v950
      %v1003 = vmul.f32 1.0, %v1002
      %v1004 = vrcp.pop %v951
      %v1005 = vmul.f32 1.0, %v1004
      %v1006 = vrcp.pop %v952
      %v1007 = vmul.f32 1.0, %v1006
      %v1008 = vrcp.pop %v953
      %v1009 = vmul.f32 1.0, %v1008
      %v1010 = vrcp.pop %v954
      %v1011 = vmul.f32 1.0, %v1010
      %v1012 = vrcp.pop %v955
      %v1013 = vmul.f32 1.0, %v1012
      %v1014 = vrcp.pop %v956
      %v1015 = vmul.f32 1.0, %v1014
      %v1016 = vrcp.pop %v957
      %v1017 = vmul.f32 1.0, %v1016
      %v1018 = vrcp.pop %v958
      %v1019 = vmul.f32 1.0, %v1018
      %v1020 = vrcp.pop %v959
      %v1021 = vmul.f32 1.0, %v1020
      %v1022 = vrcp.pop %v960
      %v1023 = vmul.f32 1.0, %v1022
      %v1024 = vrcp.pop %v961
      %v1025 = vmul.f32 1.0, %v1024
      %v1026 = vmul.f32 %v676, %v963
      %v1027 = vmul.f32 %v681, %v965
      %v1028 = vmul.f32 %v686, %v967
      %v1029 = vmul.f32 %v691, %v969
      %v1030 = vmul.f32 %v696, %v971
      %v1031 = vmul.f32 %v701, %v973
      %v1032 = vmul.f32 %v706, %v975
      %v1033 = vmul.f32 %v711, %v977
      %v1034 = vmul.f32 %v716, %v979
      %v1035 = vmul.f32 %v721, %v981
      %v1036 = vmul.f32 %v726, %v983
      %v1037 = vmul.f32 %v731, %v985
      %v1038 = vmul.f32 %v736, %v987
      %v1039 = vmul.f32 %v741, %v989
      %v1040 = vmul.f32 %v746, %v991
      %v1041 = vmul.f32 %v751, %v993
      %v1042 = vmul.f32 %v756, %v995
      %v1043 = vmul.f32 %v761, %v997
      %v1044 = vmul.f32 %v766, %v999
      %v1045 = vmul.f32 %v771, %v1001
      %v1046 = vmul.f32 %v776, %v1003
      %v1047 = vmul.f32 %v781, %v1005
      %v1048 = vmul.f32 %v786, %v1007
      %v1049 = vmul.f32 %v791, %v1009
      %v1050 = vmul.f32 %v796, %v1011
      %v1051 = vmul.f32 %v801, %v1013
      %v1052 = vmul.f32 %v806, %v1015
      %v1053 = vmul.f32 %v811, %v1017
      %v1054 = vmul.f32 %v816, %v1019
      %v1055 = vmul.f32 %v821, %v1021
      %v1056 = vmul.f32 %v826, %v1023
      %v1057 = vmul.f32 %v831, %v1025
      %1090 = vrot.lane.b32.xlu0 %v1026, 124
      %v1091 = vpop.permute.xlu0 %1090
      %1092 = vrot.lane.b32.xlu0 %v1027, 124
      %v1093 = vpop.permute.xlu0 %1092
      %1094 = vrot.lane.b32.xlu0 %v1028, 124
      %v1095 = vpop.permute.xlu0 %1094
      %1096 = vrot.lane.b32.xlu0 %v1029, 124
      %v1097 = vpop.permute.xlu0 %1096
      %1098 = vrot.lane.b32.xlu0 %v1030, 124
      %v1099 = vpop.permute.xlu0 %1098
      %1100 = vrot.lane.b32.xlu0 %v1031, 124
      %v1101 = vpop.permute.xlu0 %1100
      %1102 = vrot.lane.b32.xlu0 %v1032, 124
      %v1103 = vpop.permute.xlu0 %1102
      %1104 = vrot.lane.b32.xlu0 %v1033, 124
      %v1105 = vpop.permute.xlu0 %1104
      %1106 = vrot.lane.b32.xlu0 %v1034, 124
      %v1107 = vpop.permute.xlu0 %1106
      %1108 = vrot.lane.b32.xlu0 %v1035, 124
      %v1109 = vpop.permute.xlu0 %1108
      %1110 = vrot.lane.b32.xlu0 %v1036, 124
      %v1111 = vpop.permute.xlu0 %1110
      %1112 = vrot.lane.b32.xlu0 %v1037, 124
      %v1113 = vpop.permute.xlu0 %1112
      %1114 = vrot.lane.b32.xlu0 %v1038, 124
      %v1115 = vpop.permute.xlu0 %1114
      %1116 = vrot.lane.b32.xlu0 %v1039, 124
      %v1117 = vpop.permute.xlu0 %1116
      %1118 = vrot.lane.b32.xlu0 %v1040, 124
      %v1119 = vpop.permute.xlu0 %1118
      %1120 = vrot.lane.b32.xlu0 %v1041, 124
      %v1121 = vpop.permute.xlu0 %1120
      %1122 = vrot.lane.b32.xlu0 %v1042, 124
      %v1123 = vpop.permute.xlu0 %1122
      %1124 = vrot.lane.b32.xlu0 %v1043, 124
      %v1125 = vpop.permute.xlu0 %1124
      %1126 = vrot.lane.b32.xlu0 %v1044, 124
      %v1127 = vpop.permute.xlu0 %1126
      %1128 = vrot.lane.b32.xlu0 %v1045, 124
      %v1129 = vpop.permute.xlu0 %1128
      %1130 = vrot.lane.b32.xlu0 %v1046, 124
      %v1131 = vpop.permute.xlu0 %1130
      %1132 = vrot.lane.b32.xlu0 %v1047, 124
      %v1133 = vpop.permute.xlu0 %1132
      %1134 = vrot.lane.b32.xlu0 %v1048, 124
      %v1135 = vpop.permute.xlu0 %1134
      %1136 = vrot.lane.b32.xlu0 %v1049, 124
      %v1137 = vpop.permute.xlu0 %1136
      %1138 = vrot.lane.b32.xlu0 %v1050, 124
      %v1139 = vpop.permute.xlu0 %1138
      %1140 = vrot.lane.b32.xlu0 %v1051, 124
      %v1141 = vpop.permute.xlu0 %1140
      %1142 = vrot.lane.b32.xlu0 %v1052, 124
      %v1143 = vpop.permute.xlu0 %1142
      %1144 = vrot.lane.b32.xlu0 %v1053, 124
      %v1145 = vpop.permute.xlu0 %1144
      %1146 = vrot.lane.b32.xlu0 %v1054, 124
      %v1147 = vpop.permute.xlu0 %1146
      %1148 = vrot.lane.b32.xlu0 %v1055, 124
      %v1149 = vpop.permute.xlu0 %1148
      %1150 = vrot.lane.b32.xlu0 %v1056, 124
      %v1151 = vpop.permute.xlu0 %1150
      %1152 = vrot.lane.b32.xlu0 %v1057, 124
      %v1153 = vpop.permute.xlu0 %1152
      %vm1155 = vcmask 1040384
      %v1156 = vrot.slane 0.0, 7
      %v1157 = vsel %vm1155, %v1156, %v1156
      %v1158 = vrot.slane %v1091, 7
      %v1159 = vrot.slane %v1093, 7
      %v1160 = vsel %vm1155, %v1158, %v1159
      %v1161 = vrot.slane %v1095, 7
      %v1162 = vrot.slane %v1097, 7
      %v1163 = vsel %vm1155, %v1161, %v1162
      %v1164 = vrot.slane %v1099, 7
      %v1165 = vrot.slane %v1101, 7
      %v1166 = vsel %vm1155, %v1164, %v1165
      %v1167 = vrot.slane %v1103, 7
      %v1168 = vrot.slane %v1105, 7
      %v1169 = vsel %vm1155, %v1167, %v1168
      %v1170 = vrot.slane %v1107, 7
      %v1171 = vrot.slane %v1109, 7
      %v1172 = vsel %vm1155, %v1170, %v1171
      %v1173 = vrot.slane %v1111, 7
      %v1174 = vrot.slane %v1113, 7
      %v1175 = vsel %vm1155, %v1173, %v1174
      %v1176 = vrot.slane %v1115, 7
      %v1177 = vrot.slane %v1117, 7
      %v1178 = vsel %vm1155, %v1176, %v1177
      %v1179 = vrot.slane %v1119, 7
      %v1180 = vrot.slane %v1121, 7
      %v1181 = vsel %vm1155, %v1179, %v1180
      %v1182 = vrot.slane %v1123, 7
      %v1183 = vrot.slane %v1125, 7
      %v1184 = vsel %vm1155, %v1182, %v1183
      %v1185 = vrot.slane %v1127, 7
      %v1186 = vrot.slane %v1129, 7
      %v1187 = vsel %vm1155, %v1185, %v1186
      %v1188 = vrot.slane %v1131, 7
      %v1189 = vrot.slane %v1133, 7
      %v1190 = vsel %vm1155, %v1188, %v1189
      %v1191 = vrot.slane %v1135, 7
      %v1192 = vrot.slane %v1137, 7
      %v1193 = vsel %vm1155, %v1191, %v1192
      %v1194 = vrot.slane %v1139, 7
      %v1195 = vrot.slane %v1141, 7
      %v1196 = vsel %vm1155, %v1194, %v1195
      %v1197 = vrot.slane %v1143, 7
      %v1198 = vrot.slane %v1145, 7
      %v1199 = vsel %vm1155, %v1197, %v1198
      %v1200 = vrot.slane %v1147, 7
      %v1201 = vrot.slane %v1149, 7
      %v1202 = vsel %vm1155, %v1200, %v1201
      %v1203 = vrot.slane %v1151, 7
      %v1204 = vrot.slane %v1153, 7
      %v1205 = vsel %vm1155, %v1203, %v1204
      %v1255 = vsel %vm1155, 0.0, %v1156
      %v1256 = vsel %vm1155, 0.0, %v1158
      %v1257 = vsel %vm1155, 0.0, %v1161
      %v1258 = vsel %vm1155, 0.0, %v1164
      %v1259 = vsel %vm1155, 0.0, %v1167
      %v1260 = vsel %vm1155, 0.0, %v1170
      %v1261 = vsel %vm1155, 0.0, %v1173
      %v1262 = vsel %vm1155, 0.0, %v1176
      %v1263 = vsel %vm1155, 0.0, %v1179
      %v1264 = vsel %vm1155, 0.0, %v1182
      %v1265 = vsel %vm1155, 0.0, %v1185
      %v1266 = vsel %vm1155, 0.0, %v1188
      %v1267 = vsel %vm1155, 0.0, %v1191
      %v1268 = vsel %vm1155, 0.0, %v1194
      %v1269 = vsel %vm1155, 0.0, %v1197
      %v1270 = vsel %vm1155, 0.0, %v1200
      %v1271 = vsel %vm1155, 0.0, %v1203
      %v1272 = vsel %vm1155, %v1156, 0.0
      %v1273 = vsel %vm1155, %v1159, 0.0
      %v1274 = vsel %vm1155, %v1162, 0.0
      %v1275 = vsel %vm1155, %v1165, 0.0
      %v1276 = vsel %vm1155, %v1168, 0.0
      %v1277 = vsel %vm1155, %v1171, 0.0
      %v1278 = vsel %vm1155, %v1174, 0.0
      %v1279 = vsel %vm1155, %v1177, 0.0
      %v1280 = vsel %vm1155, %v1180, 0.0
      %v1281 = vsel %vm1155, %v1183, 0.0
      %v1282 = vsel %vm1155, %v1186, 0.0
      %v1283 = vsel %vm1155, %v1189, 0.0
      %v1284 = vsel %vm1155, %v1192, 0.0
      %v1285 = vsel %vm1155, %v1195, 0.0
      %v1286 = vsel %vm1155, %v1198, 0.0
      %v1287 = vsel %vm1155, %v1201, 0.0
      %v1288 = vsel %vm1155, %v1204, 0.0
      %vm1321 = vcmask 1046528
      %v1322 = vrot.slane %v1255, 1
      %v1323 = vrot.slane %v1157, 1
      %v1324 = vsel %vm1321, %v1322, %v1323
      %v1325 = vrot.slane %v1272, 1
      %v1326 = vsel %vm1321, %v1323, %v1325
      %v1327 = vrot.slane %v1256, 1
      %v1328 = vrot.slane %v1160, 1
      %v1329 = vsel %vm1321, %v1327, %v1328
      %v1330 = vrot.slane %v1273, 1
      %v1331 = vsel %vm1321, %v1328, %v1330
      %v1332 = vrot.slane %v1257, 1
      %v1333 = vrot.slane %v1163, 1
      %v1334 = vsel %vm1321, %v1332, %v1333
      %v1335 = vrot.slane %v1274, 1
      %v1336 = vsel %vm1321, %v1333, %v1335
      %v1337 = vrot.slane %v1258, 1
      %v1338 = vrot.slane %v1166, 1
      %v1339 = vsel %vm1321, %v1337, %v1338
      %v1340 = vrot.slane %v1275, 1
      %v1341 = vsel %vm1321, %v1338, %v1340
      %v1342 = vrot.slane %v1259, 1
      %v1343 = vrot.slane %v1169, 1
      %v1344 = vsel %vm1321, %v1342, %v1343
      %v1345 = vrot.slane %v1276, 1
      %v1346 = vsel %vm1321, %v1343, %v1345
      %v1347 = vrot.slane %v1260, 1
      %v1348 = vrot.slane %v1172, 1
      %v1349 = vsel %vm1321, %v1347, %v1348
      %v1350 = vrot.slane %v1277, 1
      %v1351 = vsel %vm1321, %v1348, %v1350
      %v1352 = vrot.slane %v1261, 1
      %v1353 = vrot.slane %v1175, 1
      %v1354 = vsel %vm1321, %v1352, %v1353
      %v1355 = vrot.slane %v1278, 1
      %v1356 = vsel %vm1321, %v1353, %v1355
      %v1357 = vrot.slane %v1262, 1
      %v1358 = vrot.slane %v1178, 1
      %v1359 = vsel %vm1321, %v1357, %v1358
      %v1360 = vrot.slane %v1279, 1
      %v1361 = vsel %vm1321, %v1358, %v1360
      %v1362 = vrot.slane %v1263, 1
      %v1363 = vrot.slane %v1181, 1
      %v1364 = vsel %vm1321, %v1362, %v1363
      %v1365 = vrot.slane %v1280, 1
      %v1366 = vsel %vm1321, %v1363, %v1365
      %v1367 = vrot.slane %v1264, 1
      %v1368 = vrot.slane %v1184, 1
      %v1369 = vsel %vm1321, %v1367, %v1368
      %v1370 = vrot.slane %v1281, 1
      %v1371 = vsel %vm1321, %v1368, %v1370
      %v1372 = vrot.slane %v1265, 1
      %v1373 = vrot.slane %v1187, 1
      %v1374 = vsel %vm1321, %v1372, %v1373
      %v1375 = vrot.slane %v1282, 1
      %v1376 = vsel %vm1321, %v1373, %v1375
      %v1377 = vrot.slane %v1266, 1
      %v1378 = vrot.slane %v1190, 1
      %v1379 = vsel %vm1321, %v1377, %v1378
      %v1380 = vrot.slane %v1283, 1
      %v1381 = vsel %vm1321, %v1378, %v1380
      %v1382 = vrot.slane %v1267, 1
      %v1383 = vrot.slane %v1193, 1
      %v1384 = vsel %vm1321, %v1382, %v1383
      %v1385 = vrot.slane %v1284, 1
      %v1386 = vsel %vm1321, %v1383, %v1385
      %v1387 = vrot.slane %v1268, 1
      %v1388 = vrot.slane %v1196, 1
      %v1389 = vsel %vm1321, %v1387, %v1388
      %v1390 = vrot.slane %v1285, 1
      %v1391 = vsel %vm1321, %v1388, %v1390
      %v1392 = vrot.slane %v1269, 1
      %v1393 = vrot.slane %v1199, 1
      %v1394 = vsel %vm1321, %v1392, %v1393
      %v1395 = vrot.slane %v1286, 1
      %v1396 = vsel %vm1321, %v1393, %v1395
      %v1397 = vrot.slane %v1270, 1
      %v1398 = vrot.slane %v1202, 1
      %v1399 = vsel %vm1321, %v1397, %v1398
      %v1400 = vrot.slane %v1287, 1
      %v1401 = vsel %vm1321, %v1398, %v1400
      %vm1402 = vcmask 1045504
      %v1403 = vrot.slane %v1255, 2
      %v1404 = vrot.slane %v1157, 2
      %v1405 = vsel %vm1402, %v1403, %v1404
      %v1406 = vrot.slane %v1272, 2
      %v1407 = vsel %vm1402, %v1404, %v1406
      %v1408 = vrot.slane %v1256, 2
      %v1409 = vrot.slane %v1160, 2
      %v1410 = vsel %vm1402, %v1408, %v1409
      %v1411 = vrot.slane %v1273, 2
      %v1412 = vsel %vm1402, %v1409, %v1411
      %v1413 = vrot.slane %v1257, 2
      %v1414 = vrot.slane %v1163, 2
      %v1415 = vsel %vm1402, %v1413, %v1414
      %v1416 = vrot.slane %v1274, 2
      %v1417 = vsel %vm1402, %v1414, %v1416
      %v1418 = vrot.slane %v1258, 2
      %v1419 = vrot.slane %v1166, 2
      %v1420 = vsel %vm1402, %v1418, %v1419
      %v1421 = vrot.slane %v1275, 2
      %v1422 = vsel %vm1402, %v1419, %v1421
      %v1423 = vrot.slane %v1259, 2
      %v1424 = vrot.slane %v1169, 2
      %v1425 = vsel %vm1402, %v1423, %v1424
      %v1426 = vrot.slane %v1276, 2
      %v1427 = vsel %vm1402, %v1424, %v1426
      %v1428 = vrot.slane %v1260, 2
      %v1429 = vrot.slane %v1172, 2
      %v1430 = vsel %vm1402, %v1428, %v1429
      %v1431 = vrot.slane %v1277, 2
      %v1432 = vsel %vm1402, %v1429, %v1431
      %v1433 = vrot.slane %v1261, 2
      %v1434 = vrot.slane %v1175, 2
      %v1435 = vsel %vm1402, %v1433, %v1434
      %v1436 = vrot.slane %v1278, 2
      %v1437 = vsel %vm1402, %v1434, %v1436
      %v1438 = vrot.slane %v1262, 2
      %v1439 = vrot.slane %v1178, 2
      %v1440 = vsel %vm1402, %v1438, %v1439
      %v1441 = vrot.slane %v1279, 2
      %v1442 = vsel %vm1402, %v1439, %v1441
      %v1443 = vrot.slane %v1263, 2
      %v1444 = vrot.slane %v1181, 2
      %v1445 = vsel %vm1402, %v1443, %v1444
      %v1446 = vrot.slane %v1280, 2
      %v1447 = vsel %vm1402, %v1444, %v1446
      %v1448 = vrot.slane %v1264, 2
      %v1449 = vrot.slane %v1184, 2
      %v1450 = vsel %vm1402, %v1448, %v1449
      %v1451 = vrot.slane %v1281, 2
      %v1452 = vsel %vm1402, %v1449, %v1451
      %v1453 = vrot.slane %v1265, 2
      %v1454 = vrot.slane %v1187, 2
      %v1455 = vsel %vm1402, %v1453, %v1454
      %v1456 = vrot.slane %v1282, 2
      %v1457 = vsel %vm1402, %v1454, %v1456
      %v1458 = vrot.slane %v1266, 2
      %v1459 = vrot.slane %v1190, 2
      %v1460 = vsel %vm1402, %v1458, %v1459
      %v1461 = vrot.slane %v1283, 2
      %v1462 = vsel %vm1402, %v1459, %v1461
      %v1463 = vrot.slane %v1267, 2
      %v1464 = vrot.slane %v1193, 2
      %v1465 = vsel %vm1402, %v1463, %v1464
      %v1466 = vrot.slane %v1284, 2
      %v1467 = vsel %vm1402, %v1464, %v1466
      %v1468 = vrot.slane %v1268, 2
      %v1469 = vrot.slane %v1196, 2
      %v1470 = vsel %vm1402, %v1468, %v1469
      %v1471 = vrot.slane %v1285, 2
      %v1472 = vsel %vm1402, %v1469, %v1471
      %v1473 = vrot.slane %v1269, 2
      %v1474 = vrot.slane %v1199, 2
      %v1475 = vsel %vm1402, %v1473, %v1474
      %v1476 = vrot.slane %v1286, 2
      %v1477 = vsel %vm1402, %v1474, %v1476
      %v1478 = vrot.slane %v1270, 2
      %v1479 = vrot.slane %v1202, 2
      %v1480 = vsel %vm1402, %v1478, %v1479
      %v1481 = vrot.slane %v1287, 2
      %v1482 = vsel %vm1402, %v1479, %v1481
      %v1485 = vrot.slane %v1271, 1
      %v1486 = vrot.slane %v1205, 1
      %v1487 = vsel %vm1321, %v1485, %v1486
      %v1488 = vrot.slane %v1288, 1
      %v1489 = vsel %vm1321, %v1486, %v1488
      %v1490 = vrot.slane %v1271, 2
      %v1491 = vrot.slane %v1205, 2
      %v1492 = vsel %vm1402, %v1490, %v1491
      %v1493 = vrot.slane %v1288, 2
      %v1494 = vsel %vm1402, %v1491, %v1493
      %1495 = vrot.lane.b32.xlu0 %v1324, 4
      %v1496 = vpop.permute.xlu0 %1495
      %1497 = vrot.lane.b32.xlu0 %v1326, 4
      %v1498 = vpop.permute.xlu0 %1497
      %1499 = vrot.lane.b32.xlu0 %v1329, 4
      %v1500 = vpop.permute.xlu0 %1499
      %1501 = vrot.lane.b32.xlu0 %v1331, 4
      %v1502 = vpop.permute.xlu0 %1501
      %1503 = vrot.lane.b32.xlu0 %v1334, 4
      %v1504 = vpop.permute.xlu0 %1503
      %1505 = vrot.lane.b32.xlu0 %v1336, 4
      %v1506 = vpop.permute.xlu0 %1505
      %1507 = vrot.lane.b32.xlu0 %v1339, 4
      %v1508 = vpop.permute.xlu0 %1507
      %1509 = vrot.lane.b32.xlu0 %v1341, 4
      %v1510 = vpop.permute.xlu0 %1509
      %1511 = vrot.lane.b32.xlu0 %v1344, 4
      %v1512 = vpop.permute.xlu0 %1511
      %1513 = vrot.lane.b32.xlu0 %v1346, 4
      %v1514 = vpop.permute.xlu0 %1513
      %1515 = vrot.lane.b32.xlu0 %v1349, 4
      %v1516 = vpop.permute.xlu0 %1515
      %1517 = vrot.lane.b32.xlu0 %v1351, 4
      %v1518 = vpop.permute.xlu0 %1517
      %1519 = vrot.lane.b32.xlu0 %v1354, 4
      %v1520 = vpop.permute.xlu0 %1519
      %1521 = vrot.lane.b32.xlu0 %v1356, 4
      %v1522 = vpop.permute.xlu0 %1521
      %1523 = vrot.lane.b32.xlu0 %v1359, 4
      %v1524 = vpop.permute.xlu0 %1523
      %1525 = vrot.lane.b32.xlu0 %v1361, 4
      %v1526 = vpop.permute.xlu0 %1525
      %1527 = vrot.lane.b32.xlu0 %v1364, 4
      %v1528 = vpop.permute.xlu0 %1527
      %1529 = vrot.lane.b32.xlu0 %v1366, 4
      %v1530 = vpop.permute.xlu0 %1529
      %1531 = vrot.lane.b32.xlu0 %v1369, 4
      %v1532 = vpop.permute.xlu0 %1531
      %1533 = vrot.lane.b32.xlu0 %v1371, 4
      %v1534 = vpop.permute.xlu0 %1533
      %1535 = vrot.lane.b32.xlu0 %v1374, 4
      %v1536 = vpop.permute.xlu0 %1535
      %1537 = vrot.lane.b32.xlu0 %v1376, 4
      %v1538 = vpop.permute.xlu0 %1537
      %1539 = vrot.lane.b32.xlu0 %v1379, 4
      %v1540 = vpop.permute.xlu0 %1539
      %1541 = vrot.lane.b32.xlu0 %v1381, 4
      %v1542 = vpop.permute.xlu0 %1541
      %1543 = vrot.lane.b32.xlu0 %v1384, 4
      %v1544 = vpop.permute.xlu0 %1543
      %1545 = vrot.lane.b32.xlu0 %v1386, 4
      %v1546 = vpop.permute.xlu0 %1545
      %1547 = vrot.lane.b32.xlu0 %v1389, 4
      %v1548 = vpop.permute.xlu0 %1547
      %1549 = vrot.lane.b32.xlu0 %v1391, 4
      %v1550 = vpop.permute.xlu0 %1549
      %1551 = vrot.lane.b32.xlu0 %v1394, 4
      %v1552 = vpop.permute.xlu0 %1551
      %1553 = vrot.lane.b32.xlu0 %v1396, 4
      %v1554 = vpop.permute.xlu0 %1553
      %1555 = vrot.lane.b32.xlu0 %v1399, 4
      %v1556 = vpop.permute.xlu0 %1555
      %1557 = vrot.lane.b32.xlu0 %v1401, 4
      %v1558 = vpop.permute.xlu0 %1557
      %1591 = vrot.lane.b32.xlu0 %v1405, 8
      %v1592 = vpop.permute.xlu0 %1591
      %1593 = vrot.lane.b32.xlu0 %v1407, 8
      %v1594 = vpop.permute.xlu0 %1593
      %1595 = vrot.lane.b32.xlu0 %v1410, 8
      %v1596 = vpop.permute.xlu0 %1595
      %1597 = vrot.lane.b32.xlu0 %v1412, 8
      %v1598 = vpop.permute.xlu0 %1597
      %1599 = vrot.lane.b32.xlu0 %v1415, 8
      %v1600 = vpop.permute.xlu0 %1599
      %1601 = vrot.lane.b32.xlu0 %v1417, 8
      %v1602 = vpop.permute.xlu0 %1601
      %1603 = vrot.lane.b32.xlu0 %v1420, 8
      %v1604 = vpop.permute.xlu0 %1603
      %1605 = vrot.lane.b32.xlu0 %v1422, 8
      %v1606 = vpop.permute.xlu0 %1605
      %1607 = vrot.lane.b32.xlu0 %v1425, 8
      %v1608 = vpop.permute.xlu0 %1607
      %1609 = vrot.lane.b32.xlu0 %v1427, 8
      %v1610 = vpop.permute.xlu0 %1609
      %1611 = vrot.lane.b32.xlu0 %v1430, 8
      %v1612 = vpop.permute.xlu0 %1611
      %1613 = vrot.lane.b32.xlu0 %v1432, 8
      %v1614 = vpop.permute.xlu0 %1613
      %1615 = vrot.lane.b32.xlu0 %v1435, 8
      %v1616 = vpop.permute.xlu0 %1615
      %1617 = vrot.lane.b32.xlu0 %v1437, 8
      %v1618 = vpop.permute.xlu0 %1617
      %1619 = vrot.lane.b32.xlu0 %v1440, 8
      %v1620 = vpop.permute.xlu0 %1619
      %1621 = vrot.lane.b32.xlu0 %v1442, 8
      %v1622 = vpop.permute.xlu0 %1621
      %1623 = vrot.lane.b32.xlu0 %v1445, 8
      %v1624 = vpop.permute.xlu0 %1623
      %1625 = vrot.lane.b32.xlu0 %v1447, 8
      %v1626 = vpop.permute.xlu0 %1625
      %1627 = vrot.lane.b32.xlu0 %v1450, 8
      %v1628 = vpop.permute.xlu0 %1627
      %1629 = vrot.lane.b32.xlu0 %v1452, 8
      %v1630 = vpop.permute.xlu0 %1629
      %1631 = vrot.lane.b32.xlu0 %v1455, 8
      %v1632 = vpop.permute.xlu0 %1631
      %1633 = vrot.lane.b32.xlu0 %v1457, 8
      %v1634 = vpop.permute.xlu0 %1633
      %1635 = vrot.lane.b32.xlu0 %v1460, 8
      %v1636 = vpop.permute.xlu0 %1635
      %1637 = vrot.lane.b32.xlu0 %v1462, 8
      %v1638 = vpop.permute.xlu0 %1637
      %1639 = vrot.lane.b32.xlu0 %v1465, 8
      %v1640 = vpop.permute.xlu0 %1639
      %1641 = vrot.lane.b32.xlu0 %v1467, 8
      %v1642 = vpop.permute.xlu0 %1641
      %1643 = vrot.lane.b32.xlu0 %v1470, 8
      %v1644 = vpop.permute.xlu0 %1643
      %1645 = vrot.lane.b32.xlu0 %v1472, 8
      %v1646 = vpop.permute.xlu0 %1645
      %1647 = vrot.lane.b32.xlu0 %v1475, 8
      %v1648 = vpop.permute.xlu0 %1647
      %1649 = vrot.lane.b32.xlu0 %v1477, 8
      %v1650 = vpop.permute.xlu0 %1649
      %1651 = vrot.lane.b32.xlu0 %v1480, 8
      %v1652 = vpop.permute.xlu0 %1651
      %1653 = vrot.lane.b32.xlu0 %v1482, 8
      %v1654 = vpop.permute.xlu0 %1653
      %1687 = vrot.lane.b32.xlu0 %v1256, 12
      %v1688 = vpop.permute.xlu0 %1687
      %1689 = vrot.lane.b32.xlu0 %v1160, 12
      %v1690 = vpop.permute.xlu0 %1689
      %1691 = vrot.lane.b32.xlu0 %v1257, 12
      %v1692 = vpop.permute.xlu0 %1691
      %1693 = vrot.lane.b32.xlu0 %v1163, 12
      %v1694 = vpop.permute.xlu0 %1693
      %1695 = vrot.lane.b32.xlu0 %v1258, 12
      %v1696 = vpop.permute.xlu0 %1695
      %1697 = vrot.lane.b32.xlu0 %v1166, 12
      %v1698 = vpop.permute.xlu0 %1697
      %1699 = vrot.lane.b32.xlu0 %v1259, 12
      %v1700 = vpop.permute.xlu0 %1699
      %1701 = vrot.lane.b32.xlu0 %v1169, 12
      %v1702 = vpop.permute.xlu0 %1701
      %1703 = vrot.lane.b32.xlu0 %v1260, 12
      %v1704 = vpop.permute.xlu0 %1703
      %1705 = vrot.lane.b32.xlu0 %v1172, 12
      %v1706 = vpop.permute.xlu0 %1705
      %1707 = vrot.lane.b32.xlu0 %v1261, 12
      %v1708 = vpop.permute.xlu0 %1707
      %1709 = vrot.lane.b32.xlu0 %v1175, 12
      %v1710 = vpop.permute.xlu0 %1709
      %1711 = vrot.lane.b32.xlu0 %v1262, 12
      %v1712 = vpop.permute.xlu0 %1711
      %1713 = vrot.lane.b32.xlu0 %v1178, 12
      %v1714 = vpop.permute.xlu0 %1713
      %1715 = vrot.lane.b32.xlu0 %v1263, 12
      %v1716 = vpop.permute.xlu0 %1715
      %1717 = vrot.lane.b32.xlu0 %v1181, 12
      %v1718 = vpop.permute.xlu0 %1717
      %1719 = vrot.lane.b32.xlu0 %v1264, 12
      %v1720 = vpop.permute.xlu0 %1719
      %1721 = vrot.lane.b32.xlu0 %v1184, 12
      %v1722 = vpop.permute.xlu0 %1721
      %1723 = vrot.lane.b32.xlu0 %v1265, 12
      %v1724 = vpop.permute.xlu0 %1723
      %1725 = vrot.lane.b32.xlu0 %v1187, 12
      %v1726 = vpop.permute.xlu0 %1725
      %1727 = vrot.lane.b32.xlu0 %v1266, 12
      %v1728 = vpop.permute.xlu0 %1727
      %1729 = vrot.lane.b32.xlu0 %v1190, 12
      %v1730 = vpop.permute.xlu0 %1729
      %1731 = vrot.lane.b32.xlu0 %v1267, 12
      %v1732 = vpop.permute.xlu0 %1731
      %1733 = vrot.lane.b32.xlu0 %v1193, 12
      %v1734 = vpop.permute.xlu0 %1733
      %1735 = vrot.lane.b32.xlu0 %v1268, 12
      %v1736 = vpop.permute.xlu0 %1735
      %1737 = vrot.lane.b32.xlu0 %v1196, 12
      %v1738 = vpop.permute.xlu0 %1737
      %1739 = vrot.lane.b32.xlu0 %v1269, 12
      %v1740 = vpop.permute.xlu0 %1739
      %1741 = vrot.lane.b32.xlu0 %v1199, 12
      %v1742 = vpop.permute.xlu0 %1741
      %1743 = vrot.lane.b32.xlu0 %v1270, 12
      %v1744 = vpop.permute.xlu0 %1743
      %1745 = vrot.lane.b32.xlu0 %v1202, 12
      %v1746 = vpop.permute.xlu0 %1745
      %1747 = vrot.lane.b32.xlu0 %v1271, 12
      %v1748 = vpop.permute.xlu0 %1747
      %1749 = vrot.lane.b32.xlu0 %v1205, 12
      %v1750 = vpop.permute.xlu0 %1749
      %1783 = vrot.lane.b32.xlu0 %v1329, 16
      %v1784 = vpop.permute.xlu0 %1783
      %1785 = vrot.lane.b32.xlu0 %v1331, 16
      %v1786 = vpop.permute.xlu0 %1785
      %1787 = vrot.lane.b32.xlu0 %v1334, 16
      %v1788 = vpop.permute.xlu0 %1787
      %1789 = vrot.lane.b32.xlu0 %v1336, 16
      %v1790 = vpop.permute.xlu0 %1789
      %1791 = vrot.lane.b32.xlu0 %v1339, 16
      %v1792 = vpop.permute.xlu0 %1791
      %1793 = vrot.lane.b32.xlu0 %v1341, 16
      %v1794 = vpop.permute.xlu0 %1793
      %1795 = vrot.lane.b32.xlu0 %v1344, 16
      %v1796 = vpop.permute.xlu0 %1795
      %1797 = vrot.lane.b32.xlu0 %v1346, 16
      %v1798 = vpop.permute.xlu0 %1797
      %1799 = vrot.lane.b32.xlu0 %v1349, 16
      %v1800 = vpop.permute.xlu0 %1799
      %1801 = vrot.lane.b32.xlu0 %v1351, 16
      %v1802 = vpop.permute.xlu0 %1801
      %1803 = vrot.lane.b32.xlu0 %v1354, 16
      %v1804 = vpop.permute.xlu0 %1803
      %1805 = vrot.lane.b32.xlu0 %v1356, 16
      %v1806 = vpop.permute.xlu0 %1805
      %1807 = vrot.lane.b32.xlu0 %v1359, 16
      %v1808 = vpop.permute.xlu0 %1807
      %1809 = vrot.lane.b32.xlu0 %v1361, 16
      %v1810 = vpop.permute.xlu0 %1809
      %1811 = vrot.lane.b32.xlu0 %v1364, 16
      %v1812 = vpop.permute.xlu0 %1811
      %1813 = vrot.lane.b32.xlu0 %v1366, 16
      %v1814 = vpop.permute.xlu0 %1813
      %1815 = vrot.lane.b32.xlu0 %v1369, 16
      %v1816 = vpop.permute.xlu0 %1815
      %1817 = vrot.lane.b32.xlu0 %v1371, 16
      %v1818 = vpop.permute.xlu0 %1817
      %1819 = vrot.lane.b32.xlu0 %v1374, 16
      %v1820 = vpop.permute.xlu0 %1819
      %1821 = vrot.lane.b32.xlu0 %v1376, 16
      %v1822 = vpop.permute.xlu0 %1821
      %1823 = vrot.lane.b32.xlu0 %v1379, 16
      %v1824 = vpop.permute.xlu0 %1823
      %1825 = vrot.lane.b32.xlu0 %v1381, 16
      %v1826 = vpop.permute.xlu0 %1825
      %1827 = vrot.lane.b32.xlu0 %v1384, 16
      %v1828 = vpop.permute.xlu0 %1827
      %1829 = vrot.lane.b32.xlu0 %v1386, 16
      %v1830 = vpop.permute.xlu0 %1829
      %1831 = vrot.lane.b32.xlu0 %v1389, 16
      %v1832 = vpop.permute.xlu0 %1831
      %1833 = vrot.lane.b32.xlu0 %v1391, 16
      %v1834 = vpop.permute.xlu0 %1833
      %1835 = vrot.lane.b32.xlu0 %v1394, 16
      %v1836 = vpop.permute.xlu0 %1835
      %1837 = vrot.lane.b32.xlu0 %v1396, 16
      %v1838 = vpop.permute.xlu0 %1837
      %1839 = vrot.lane.b32.xlu0 %v1399, 16
      %v1840 = vpop.permute.xlu0 %1839
      %1841 = vrot.lane.b32.xlu0 %v1401, 16
      %v1842 = vpop.permute.xlu0 %1841
      %1843 = vrot.lane.b32.xlu0 %v1487, 16
      %v1844 = vpop.permute.xlu0 %1843
      %1845 = vrot.lane.b32.xlu0 %v1489, 16
      %v1846 = vpop.permute.xlu0 %1845
      %1879 = vrot.lane.b32.xlu0 %v1410, 20
      %v1880 = vpop.permute.xlu0 %1879
      %1881 = vrot.lane.b32.xlu0 %v1412, 20
      %v1882 = vpop.permute.xlu0 %1881
      %1883 = vrot.lane.b32.xlu0 %v1415, 20
      %v1884 = vpop.permute.xlu0 %1883
      %1885 = vrot.lane.b32.xlu0 %v1417, 20
      %v1886 = vpop.permute.xlu0 %1885
      %1887 = vrot.lane.b32.xlu0 %v1420, 20
      %v1888 = vpop.permute.xlu0 %1887
      %1889 = vrot.lane.b32.xlu0 %v1422, 20
      %v1890 = vpop.permute.xlu0 %1889
      %1891 = vrot.lane.b32.xlu0 %v1425, 20
      %v1892 = vpop.permute.xlu0 %1891
      %1893 = vrot.lane.b32.xlu0 %v1427, 20
      %v1894 = vpop.permute.xlu0 %1893
      %1895 = vrot.lane.b32.xlu0 %v1430, 20
      %v1896 = vpop.permute.xlu0 %1895
      %1897 = vrot.lane.b32.xlu0 %v1432, 20
      %v1898 = vpop.permute.xlu0 %1897
      %1899 = vrot.lane.b32.xlu0 %v1435, 20
      %v1900 = vpop.permute.xlu0 %1899
      %1901 = vrot.lane.b32.xlu0 %v1437, 20
      %v1902 = vpop.permute.xlu0 %1901
      %1903 = vrot.lane.b32.xlu0 %v1440, 20
      %v1904 = vpop.permute.xlu0 %1903
      %1905 = vrot.lane.b32.xlu0 %v1442, 20
      %v1906 = vpop.permute.xlu0 %1905
      %1907 = vrot.lane.b32.xlu0 %v1445, 20
      %v1908 = vpop.permute.xlu0 %1907
      %1909 = vrot.lane.b32.xlu0 %v1447, 20
      %v1910 = vpop.permute.xlu0 %1909
      %1911 = vrot.lane.b32.xlu0 %v1450, 20
      %v1912 = vpop.permute.xlu0 %1911
      %1913 = vrot.lane.b32.xlu0 %v1452, 20
      %v1914 = vpop.permute.xlu0 %1913
      %1915 = vrot.lane.b32.xlu0 %v1455, 20
      %v1916 = vpop.permute.xlu0 %1915
      %1917 = vrot.lane.b32.xlu0 %v1457, 20
      %v1918 = vpop.permute.xlu0 %1917
      %1919 = vrot.lane.b32.xlu0 %v1460, 20
      %v1920 = vpop.permute.xlu0 %1919
      %1921 = vrot.lane.b32.xlu0 %v1462, 20
      %v1922 = vpop.permute.xlu0 %1921
      %1923 = vrot.lane.b32.xlu0 %v1465, 20
      %v1924 = vpop.permute.xlu0 %1923
      %1925 = vrot.lane.b32.xlu0 %v1467, 20
      %v1926 = vpop.permute.xlu0 %1925
      %1927 = vrot.lane.b32.xlu0 %v1470, 20
      %v1928 = vpop.permute.xlu0 %1927
      %1929 = vrot.lane.b32.xlu0 %v1472, 20
      %v1930 = vpop.permute.xlu0 %1929
      %1931 = vrot.lane.b32.xlu0 %v1475, 20
      %v1932 = vpop.permute.xlu0 %1931
      %1933 = vrot.lane.b32.xlu0 %v1477, 20
      %v1934 = vpop.permute.xlu0 %1933
      %1935 = vrot.lane.b32.xlu0 %v1480, 20
      %v1936 = vpop.permute.xlu0 %1935
      %1937 = vrot.lane.b32.xlu0 %v1482, 20
      %v1938 = vpop.permute.xlu0 %1937
      %1939 = vrot.lane.b32.xlu0 %v1492, 20
      %v1940 = vpop.permute.xlu0 %1939
      %1941 = vrot.lane.b32.xlu0 %v1494, 20
      %v1942 = vpop.permute.xlu0 %1941
      %1975 = vrot.lane.b32.xlu0 %v1257, 24
      %v1976 = vpop.permute.xlu0 %1975
      %1977 = vrot.lane.b32.xlu0 %v1163, 24
      %v1978 = vpop.permute.xlu0 %1977
      %1979 = vrot.lane.b32.xlu0 %v1258, 24
      %v1980 = vpop.permute.xlu0 %1979
      %1981 = vrot.lane.b32.xlu0 %v1166, 24
      %v1982 = vpop.permute.xlu0 %1981
      %1983 = vrot.lane.b32.xlu0 %v1259, 24
      %v1984 = vpop.permute.xlu0 %1983
      %1985 = vrot.lane.b32.xlu0 %v1169, 24
      %v1986 = vpop.permute.xlu0 %1985
      %1987 = vrot.lane.b32.xlu0 %v1260, 24
      %v1988 = vpop.permute.xlu0 %1987
      %1989 = vrot.lane.b32.xlu0 %v1172, 24
      %v1990 = vpop.permute.xlu0 %1989
      %1991 = vrot.lane.b32.xlu0 %v1261, 24
      %v1992 = vpop.permute.xlu0 %1991
      %1993 = vrot.lane.b32.xlu0 %v1175, 24
      %v1994 = vpop.permute.xlu0 %1993
      %1995 = vrot.lane.b32.xlu0 %v1262, 24
      %v1996 = vpop.permute.xlu0 %1995
      %1997 = vrot.lane.b32.xlu0 %v1178, 24
      %v1998 = vpop.permute.xlu0 %1997
      %1999 = vrot.lane.b32.xlu0 %v1263, 24
      %v2000 = vpop.permute.xlu0 %1999
      %2001 = vrot.lane.b32.xlu0 %v1181, 24
      %v2002 = vpop.permute.xlu0 %2001
      %2003 = vrot.lane.b32.xlu0 %v1264, 24
      %v2004 = vpop.permute.xlu0 %2003
      %2005 = vrot.lane.b32.xlu0 %v1184, 24
      %v2006 = vpop.permute.xlu0 %2005
      %2007 = vrot.lane.b32.xlu0 %v1265, 24
      %v2008 = vpop.permute.xlu0 %2007
      %2009 = vrot.lane.b32.xlu0 %v1187, 24
      %v2010 = vpop.permute.xlu0 %2009
      %2011 = vrot.lane.b32.xlu0 %v1266, 24
      %v2012 = vpop.permute.xlu0 %2011
      %2013 = vrot.lane.b32.xlu0 %v1190, 24
      %v2014 = vpop.permute.xlu0 %2013
      %2015 = vrot.lane.b32.xlu0 %v1267, 24
      %v2016 = vpop.permute.xlu0 %2015
      %2017 = vrot.lane.b32.xlu0 %v1193, 24
      %v2018 = vpop.permute.xlu0 %2017
      %2019 = vrot.lane.b32.xlu0 %v1268, 24
      %v2020 = vpop.permute.xlu0 %2019
      %2021 = vrot.lane.b32.xlu0 %v1196, 24
      %v2022 = vpop.permute.xlu0 %2021
      %2023 = vrot.lane.b32.xlu0 %v1269, 24
      %v2024 = vpop.permute.xlu0 %2023
      %2025 = vrot.lane.b32.xlu0 %v1199, 24
      %v2026 = vpop.permute.xlu0 %2025
      %2027 = vrot.lane.b32.xlu0 %v1270, 24
      %v2028 = vpop.permute.xlu0 %2027
      %2029 = vrot.lane.b32.xlu0 %v1202, 24
      %v2030 = vpop.permute.xlu0 %2029
      %2031 = vrot.lane.b32.xlu0 %v1271, 24
      %v2032 = vpop.permute.xlu0 %2031
      %2033 = vrot.lane.b32.xlu0 %v1205, 24
      %v2034 = vpop.permute.xlu0 %2033
      %2035 = vrot.lane.b32.xlu0 %v1255, 24
      %v2036 = vpop.permute.xlu0 %2035
      %2037 = vrot.lane.b32.xlu0 %v1157, 24
      %v2038 = vpop.permute.xlu0 %2037
      %2071 = vrot.lane.b32.xlu0 %v1334, 28
      %v2072 = vpop.permute.xlu0 %2071
      %2073 = vrot.lane.b32.xlu0 %v1336, 28
      %v2074 = vpop.permute.xlu0 %2073
      %2075 = vrot.lane.b32.xlu0 %v1339, 28
      %v2076 = vpop.permute.xlu0 %2075
      %2077 = vrot.lane.b32.xlu0 %v1341, 28
      %v2078 = vpop.permute.xlu0 %2077
      %2079 = vrot.lane.b32.xlu0 %v1344, 28
      %v2080 = vpop.permute.xlu0 %2079
      %2081 = vrot.lane.b32.xlu0 %v1346, 28
      %v2082 = vpop.permute.xlu0 %2081
      %2083 = vrot.lane.b32.xlu0 %v1349, 28
      %v2084 = vpop.permute.xlu0 %2083
      %2085 = vrot.lane.b32.xlu0 %v1351, 28
      %v2086 = vpop.permute.xlu0 %2085
      %2087 = vrot.lane.b32.xlu0 %v1354, 28
      %v2088 = vpop.permute.xlu0 %2087
      %2089 = vrot.lane.b32.xlu0 %v1356, 28
      %v2090 = vpop.permute.xlu0 %2089
      %2091 = vrot.lane.b32.xlu0 %v1359, 28
      %v2092 = vpop.permute.xlu0 %2091
      %2093 = vrot.lane.b32.xlu0 %v1361, 28
      %v2094 = vpop.permute.xlu0 %2093
      %2095 = vrot.lane.b32.xlu0 %v1364, 28
      %v2096 = vpop.permute.xlu0 %2095
      %2097 = vrot.lane.b32.xlu0 %v1366, 28
      %v2098 = vpop.permute.xlu0 %2097
      %2099 = vrot.lane.b32.xlu0 %v1369, 28
      %v2100 = vpop.permute.xlu0 %2099
      %2101 = vrot.lane.b32.xlu0 %v1371, 28
      %v2102 = vpop.permute.xlu0 %2101
      %2103 = vrot.lane.b32.xlu0 %v1374, 28
      %v2104 = vpop.permute.xlu0 %2103
      %2105 = vrot.lane.b32.xlu0 %v1376, 28
      %v2106 = vpop.permute.xlu0 %2105
      %2107 = vrot.lane.b32.xlu0 %v1379, 28
      %v2108 = vpop.permute.xlu0 %2107
      %2109 = vrot.lane.b32.xlu0 %v1381, 28
      %v2110 = vpop.permute.xlu0 %2109
      %2111 = vrot.lane.b32.xlu0 %v1384, 28
      %v2112 = vpop.permute.xlu0 %2111
      %2113 = vrot.lane.b32.xlu0 %v1386, 28
      %v2114 = vpop.permute.xlu0 %2113
      %2115 = vrot.lane.b32.xlu0 %v1389, 28
      %v2116 = vpop.permute.xlu0 %2115
      %2117 = vrot.lane.b32.xlu0 %v1391, 28
      %v2118 = vpop.permute.xlu0 %2117
      %2119 = vrot.lane.b32.xlu0 %v1394, 28
      %v2120 = vpop.permute.xlu0 %2119
      %2121 = vrot.lane.b32.xlu0 %v1396, 28
      %v2122 = vpop.permute.xlu0 %2121
      %2123 = vrot.lane.b32.xlu0 %v1399, 28
      %v2124 = vpop.permute.xlu0 %2123
      %2125 = vrot.lane.b32.xlu0 %v1401, 28
      %v2126 = vpop.permute.xlu0 %2125
      %2127 = vrot.lane.b32.xlu0 %v1487, 28
      %v2128 = vpop.permute.xlu0 %2127
      %2129 = vrot.lane.b32.xlu0 %v1489, 28
      %v2130 = vpop.permute.xlu0 %2129
      %2131 = vrot.lane.b32.xlu0 %v1324, 28
      %v2132 = vpop.permute.xlu0 %2131
      %2133 = vrot.lane.b32.xlu0 %v1326, 28
      %v2134 = vpop.permute.xlu0 %2133
      %2167 = vrot.lane.b32.xlu0 %v1415, 32
      %v2168 = vpop.permute.xlu0 %2167
      %2169 = vrot.lane.b32.xlu0 %v1417, 32
      %v2170 = vpop.permute.xlu0 %2169
      %2171 = vrot.lane.b32.xlu0 %v1420, 32
      %v2172 = vpop.permute.xlu0 %2171
      %2173 = vrot.lane.b32.xlu0 %v1422, 32
      %v2174 = vpop.permute.xlu0 %2173
      %2175 = vrot.lane.b32.xlu0 %v1425, 32
      %v2176 = vpop.permute.xlu0 %2175
      %2177 = vrot.lane.b32.xlu0 %v1427, 32
      %v2178 = vpop.permute.xlu0 %2177
      %2179 = vrot.lane.b32.xlu0 %v1430, 32
      %v2180 = vpop.permute.xlu0 %2179
      %2181 = vrot.lane.b32.xlu0 %v1432, 32
      %v2182 = vpop.permute.xlu0 %2181
      %2183 = vrot.lane.b32.xlu0 %v1435, 32
      %v2184 = vpop.permute.xlu0 %2183
      %2185 = vrot.lane.b32.xlu0 %v1437, 32
      %v2186 = vpop.permute.xlu0 %2185
      %2187 = vrot.lane.b32.xlu0 %v1440, 32
      %v2188 = vpop.permute.xlu0 %2187
      %2189 = vrot.lane.b32.xlu0 %v1442, 32
      %v2190 = vpop.permute.xlu0 %2189
      %2191 = vrot.lane.b32.xlu0 %v1445, 32
      %v2192 = vpop.permute.xlu0 %2191
      %2193 = vrot.lane.b32.xlu0 %v1447, 32
      %v2194 = vpop.permute.xlu0 %2193
      %2195 = vrot.lane.b32.xlu0 %v1450, 32
      %v2196 = vpop.permute.xlu0 %2195
      %2197 = vrot.lane.b32.xlu0 %v1452, 32
      %v2198 = vpop.permute.xlu0 %2197
      %2199 = vrot.lane.b32.xlu0 %v1455, 32
      %v2200 = vpop.permute.xlu0 %2199
      %2201 = vrot.lane.b32.xlu0 %v1457, 32
      %v2202 = vpop.permute.xlu0 %2201
      %2203 = vrot.lane.b32.xlu0 %v1460, 32
      %v2204 = vpop.permute.xlu0 %2203
      %2205 = vrot.lane.b32.xlu0 %v1462, 32
      %v2206 = vpop.permute.xlu0 %2205
      %2207 = vrot.lane.b32.xlu0 %v1465, 32
      %v2208 = vpop.permute.xlu0 %2207
      %2209 = vrot.lane.b32.xlu0 %v1467, 32
      %v2210 = vpop.permute.xlu0 %2209
      %2211 = vrot.lane.b32.xlu0 %v1470, 32
      %v2212 = vpop.permute.xlu0 %2211
      %2213 = vrot.lane.b32.xlu0 %v1472, 32
      %v2214 = vpop.permute.xlu0 %2213
      %2215 = vrot.lane.b32.xlu0 %v1475, 32
      %v2216 = vpop.permute.xlu0 %2215
      %2217 = vrot.lane.b32.xlu0 %v1477, 32
      %v2218 = vpop.permute.xlu0 %2217
      %2219 = vrot.lane.b32.xlu0 %v1480, 32
      %v2220 = vpop.permute.xlu0 %2219
      %2221 = vrot.lane.b32.xlu0 %v1482, 32
      %v2222 = vpop.permute.xlu0 %2221
      %2223 = vrot.lane.b32.xlu0 %v1492, 32
      %v2224 = vpop.permute.xlu0 %2223
      %2225 = vrot.lane.b32.xlu0 %v1494, 32
      %v2226 = vpop.permute.xlu0 %2225
      %2227 = vrot.lane.b32.xlu0 %v1405, 32
      %v2228 = vpop.permute.xlu0 %2227
      %2229 = vrot.lane.b32.xlu0 %v1407, 32
      %v2230 = vpop.permute.xlu0 %2229
      %v2263 = vsel %vm508, %v1255, %v1496
      %v2264 = vsel %vm508, %v1157, %v1498
      %v2265 = vsel %vm508, %v1256, %v1500
      %v2266 = vsel %vm508, %v1160, %v1502
      %v2267 = vsel %vm508, %v1257, %v1504
      %v2268 = vsel %vm508, %v1163, %v1506
      %v2269 = vsel %vm508, %v1258, %v1508
      %v2270 = vsel %vm508, %v1166, %v1510
      %v2271 = vsel %vm508, %v1259, %v1512
      %v2272 = vsel %vm508, %v1169, %v1514
      %v2273 = vsel %vm508, %v1260, %v1516
      %v2274 = vsel %vm508, %v1172, %v1518
      %v2275 = vsel %vm508, %v1261, %v1520
      %v2276 = vsel %vm508, %v1175, %v1522
      %v2277 = vsel %vm508, %v1262, %v1524
      %v2278 = vsel %vm508, %v1178, %v1526
      %v2279 = vsel %vm508, %v1263, %v1528
      %v2280 = vsel %vm508, %v1181, %v1530
      %v2281 = vsel %vm508, %v1264, %v1532
      %v2282 = vsel %vm508, %v1184, %v1534
      %v2283 = vsel %vm508, %v1265, %v1536
      %v2284 = vsel %vm508, %v1187, %v1538
      %v2285 = vsel %vm508, %v1266, %v1540
      %v2286 = vsel %vm508, %v1190, %v1542
      %v2287 = vsel %vm508, %v1267, %v1544
      %v2288 = vsel %vm508, %v1193, %v1546
      %v2289 = vsel %vm508, %v1268, %v1548
      %v2290 = vsel %vm508, %v1196, %v1550
      %v2291 = vsel %vm508, %v1269, %v1552
      %v2292 = vsel %vm508, %v1199, %v1554
      %v2293 = vsel %vm508, %v1270, %v1556
      %v2294 = vsel %vm508, %v1202, %v1558
      %vm2295 = vcmask 64512
      %v2296 = vsel %vm2295, %v2263, %v1592
      %v2297 = vsel %vm2295, %v2264, %v1594
      %v2298 = vsel %vm2295, %v2265, %v1596
      %v2299 = vsel %vm2295, %v2266, %v1598
      %v2300 = vsel %vm2295, %v2267, %v1600
      %v2301 = vsel %vm2295, %v2268, %v1602
      %v2302 = vsel %vm2295, %v2269, %v1604
      %v2303 = vsel %vm2295, %v2270, %v1606
      %v2304 = vsel %vm2295, %v2271, %v1608
      %v2305 = vsel %vm2295, %v2272, %v1610
      %v2306 = vsel %vm2295, %v2273, %v1612
      %v2307 = vsel %vm2295, %v2274, %v1614
      %v2308 = vsel %vm2295, %v2275, %v1616
      %v2309 = vsel %vm2295, %v2276, %v1618
      %v2310 = vsel %vm2295, %v2277, %v1620
      %v2311 = vsel %vm2295, %v2278, %v1622
      %v2312 = vsel %vm2295, %v2279, %v1624
      %v2313 = vsel %vm2295, %v2280, %v1626
      %v2314 = vsel %vm2295, %v2281, %v1628
      %v2315 = vsel %vm2295, %v2282, %v1630
      %v2316 = vsel %vm2295, %v2283, %v1632
      %v2317 = vsel %vm2295, %v2284, %v1634
      %v2318 = vsel %vm2295, %v2285, %v1636
      %v2319 = vsel %vm2295, %v2286, %v1638
      %v2320 = vsel %vm2295, %v2287, %v1640
      %v2321 = vsel %vm2295, %v2288, %v1642
      %v2322 = vsel %vm2295, %v2289, %v1644
      %v2323 = vsel %vm2295, %v2290, %v1646
      %v2324 = vsel %vm2295, %v2291, %v1648
      %v2325 = vsel %vm2295, %v2292, %v1650
      %v2326 = vsel %vm2295, %v2293, %v1652
      %v2327 = vsel %vm2295, %v2294, %v1654
      %vm2328 = vcmask 97280
      %v2329 = vsel %vm2328, %v2296, %v1688
      %v2330 = vsel %vm2328, %v2297, %v1690
      %v2331 = vsel %vm2328, %v2298, %v1692
      %v2332 = vsel %vm2328, %v2299, %v1694
      %v2333 = vsel %vm2328, %v2300, %v1696
      %v2334 = vsel %vm2328, %v2301, %v1698
      %v2335 = vsel %vm2328, %v2302, %v1700
      %v2336 = vsel %vm2328, %v2303, %v1702
      %v2337 = vsel %vm2328, %v2304, %v1704
      %v2338 = vsel %vm2328, %v2305, %v1706
      %v2339 = vsel %vm2328, %v2306, %v1708
      %v2340 = vsel %vm2328, %v2307, %v1710
      %v2341 = vsel %vm2328, %v2308, %v1712
      %v2342 = vsel %vm2328, %v2309, %v1714
      %v2343 = vsel %vm2328, %v2310, %v1716
      %v2344 = vsel %vm2328, %v2311, %v1718
      %v2345 = vsel %vm2328, %v2312, %v1720
      %v2346 = vsel %vm2328, %v2313, %v1722
      %v2347 = vsel %vm2328, %v2314, %v1724
      %v2348 = vsel %vm2328, %v2315, %v1726
      %v2349 = vsel %vm2328, %v2316, %v1728
      %v2350 = vsel %vm2328, %v2317, %v1730
      %v2351 = vsel %vm2328, %v2318, %v1732
      %v2352 = vsel %vm2328, %v2319, %v1734
      %v2353 = vsel %vm2328, %v2320, %v1736
      %v2354 = vsel %vm2328, %v2321, %v1738
      %v2355 = vsel %vm2328, %v2322, %v1740
      %v2356 = vsel %vm2328, %v2323, %v1742
      %v2357 = vsel %vm2328, %v2324, %v1744
      %v2358 = vsel %vm2328, %v2325, %v1746
      %v2359 = vsel %vm2328, %v2326, %v1748
      %v2360 = vsel %vm2328, %v2327, %v1750
      %vm2361 = vcmask 130048
      %v2362 = vsel %vm2361, %v2329, %v1784
      %v2363 = vsel %vm2361, %v2330, %v1786
      %v2364 = vsel %vm2361, %v2331, %v1788
      %v2365 = vsel %vm2361, %v2332, %v1790
      %v2366 = vsel %vm2361, %v2333, %v1792
      %v2367 = vsel %vm2361, %v2334, %v1794
      %v2368 = vsel %vm2361, %v2335, %v1796
      %v2369 = vsel %vm2361, %v2336, %v1798
      %v2370 = vsel %vm2361, %v2337, %v1800
      %v2371 = vsel %vm2361, %v2338, %v1802
      %v2372 = vsel %vm2361, %v2339, %v1804
      %v2373 = vsel %vm2361, %v2340, %v1806
      %v2374 = vsel %vm2361, %v2341, %v1808
      %v2375 = vsel %vm2361, %v2342, %v1810
      %v2376 = vsel %vm2361, %v2343, %v1812
      %v2377 = vsel %vm2361, %v2344, %v1814
      %v2378 = vsel %vm2361, %v2345, %v1816
      %v2379 = vsel %vm2361, %v2346, %v1818
      %v2380 = vsel %vm2361, %v2347, %v1820
      %v2381 = vsel %vm2361, %v2348, %v1822
      %v2382 = vsel %vm2361, %v2349, %v1824
      %v2383 = vsel %vm2361, %v2350, %v1826
      %v2384 = vsel %vm2361, %v2351, %v1828
      %v2385 = vsel %vm2361, %v2352, %v1830
      %v2386 = vsel %vm2361, %v2353, %v1832
      %v2387 = vsel %vm2361, %v2354, %v1834
      %v2388 = vsel %vm2361, %v2355, %v1836
      %v2389 = vsel %vm2361, %v2356, %v1838
      %v2390 = vsel %vm2361, %v2357, %v1840
      %v2391 = vsel %vm2361, %v2358, %v1842
      %v2392 = vsel %vm2361, %v2359, %v1844
      %v2393 = vsel %vm2361, %v2360, %v1846
      %vm2394 = vcmask 162816
      %v2395 = vsel %vm2394, %v2362, %v1880
      %v2396 = vsel %vm2394, %v2363, %v1882
      %v2397 = vsel %vm2394, %v2364, %v1884
      %v2398 = vsel %vm2394, %v2365, %v1886
      %v2399 = vsel %vm2394, %v2366, %v1888
      %v2400 = vsel %vm2394, %v2367, %v1890
      %v2401 = vsel %vm2394, %v2368, %v1892
      %v2402 = vsel %vm2394, %v2369, %v1894
      %v2403 = vsel %vm2394, %v2370, %v1896
      %v2404 = vsel %vm2394, %v2371, %v1898
      %v2405 = vsel %vm2394, %v2372, %v1900
      %v2406 = vsel %vm2394, %v2373, %v1902
      %v2407 = vsel %vm2394, %v2374, %v1904
      %v2408 = vsel %vm2394, %v2375, %v1906
      %v2409 = vsel %vm2394, %v2376, %v1908
      %v2410 = vsel %vm2394, %v2377, %v1910
      %v2411 = vsel %vm2394, %v2378, %v1912
      %v2412 = vsel %vm2394, %v2379, %v1914
      %v2413 = vsel %vm2394, %v2380, %v1916
      %v2414 = vsel %vm2394, %v2381, %v1918
      %v2415 = vsel %vm2394, %v2382, %v1920
      %v2416 = vsel %vm2394, %v2383, %v1922
      %v2417 = vsel %vm2394, %v2384, %v1924
      %v2418 = vsel %vm2394, %v2385, %v1926
      %v2419 = vsel %vm2394, %v2386, %v1928
      %v2420 = vsel %vm2394, %v2387, %v1930
      %v2421 = vsel %vm2394, %v2388, %v1932
      %v2422 = vsel %vm2394, %v2389, %v1934
      %v2423 = vsel %vm2394, %v2390, %v1936
      %v2424 = vsel %vm2394, %v2391, %v1938
      %v2425 = vsel %vm2394, %v2392, %v1940
      %v2426 = vsel %vm2394, %v2393, %v1942
      %vm2427 = vcmask 195584
      %v2428 = vsel %vm2427, %v2395, %v1976
      %v2429 = vsel %vm2427, %v2396, %v1978
      %v2430 = vsel %vm2427, %v2397, %v1980
      %v2431 = vsel %vm2427, %v2398, %v1982
      %v2432 = vsel %vm2427, %v2399, %v1984
      %v2433 = vsel %vm2427, %v2400, %v1986
      %v2434 = vsel %vm2427, %v2401, %v1988
      %v2435 = vsel %vm2427, %v2402, %v1990
      %v2436 = vsel %vm2427, %v2403, %v1992
      %v2437 = vsel %vm2427, %v2404, %v1994
      %v2438 = vsel %vm2427, %v2405, %v1996
      %v2439 = vsel %vm2427, %v2406, %v1998
      %v2440 = vsel %vm2427, %v2407, %v2000
      %v2441 = vsel %vm2427, %v2408, %v2002
      %v2442 = vsel %vm2427, %v2409, %v2004
      %v2443 = vsel %vm2427, %v2410, %v2006
      %v2444 = vsel %vm2427, %v2411, %v2008
      %v2445 = vsel %vm2427, %v2412, %v2010
      %v2446 = vsel %vm2427, %v2413, %v2012
      %v2447 = vsel %vm2427, %v2414, %v2014
      %v2448 = vsel %vm2427, %v2415, %v2016
      %v2449 = vsel %vm2427, %v2416, %v2018
      %v2450 = vsel %vm2427, %v2417, %v2020
      %v2451 = vsel %vm2427, %v2418, %v2022
      %v2452 = vsel %vm2427, %v2419, %v2024
      %v2453 = vsel %vm2427, %v2420, %v2026
      %v2454 = vsel %vm2427, %v2421, %v2028
      %v2455 = vsel %vm2427, %v2422, %v2030
      %v2456 = vsel %vm2427, %v2423, %v2032
      %v2457 = vsel %vm2427, %v2424, %v2034
      %v2458 = vsel %vm2427, %v2425, %v2036
      %v2459 = vsel %vm2427, %v2426, %v2038
      %vm2460 = vcmask 228352
      %v2461 = vsel %vm2460, %v2428, %v2072
      %v2462 = vsel %vm2460, %v2429, %v2074
      %v2463 = vsel %vm2460, %v2430, %v2076
      %v2464 = vsel %vm2460, %v2431, %v2078
      %v2465 = vsel %vm2460, %v2432, %v2080
      %v2466 = vsel %vm2460, %v2433, %v2082
      %v2467 = vsel %vm2460, %v2434, %v2084
      %v2468 = vsel %vm2460, %v2435, %v2086
      %v2469 = vsel %vm2460, %v2436, %v2088
      %v2470 = vsel %vm2460, %v2437, %v2090
      %v2471 = vsel %vm2460, %v2438, %v2092
      %v2472 = vsel %vm2460, %v2439, %v2094
      %v2473 = vsel %vm2460, %v2440, %v2096
      %v2474 = vsel %vm2460, %v2441, %v2098
      %v2475 = vsel %vm2460, %v2442, %v2100
      %v2476 = vsel %vm2460, %v2443, %v2102
      %v2477 = vsel %vm2460, %v2444, %v2104
      %v2478 = vsel %vm2460, %v2445, %v2106
      %v2479 = vsel %vm2460, %v2446, %v2108
      %v2480 = vsel %vm2460, %v2447, %v2110
      %v2481 = vsel %vm2460, %v2448, %v2112
      %v2482 = vsel %vm2460, %v2449, %v2114
      %v2483 = vsel %vm2460, %v2450, %v2116
      %v2484 = vsel %vm2460, %v2451, %v2118
      %v2485 = vsel %vm2460, %v2452, %v2120
      %v2486 = vsel %vm2460, %v2453, %v2122
      %v2487 = vsel %vm2460, %v2454, %v2124
      %v2488 = vsel %vm2460, %v2455, %v2126
      %v2489 = vsel %vm2460, %v2456, %v2128
      %v2490 = vsel %vm2460, %v2457, %v2130
      %v2491 = vsel %vm2460, %v2458, %v2132
      %v2492 = vsel %vm2460, %v2459, %v2134
      %vm2493 = vcmask 261120
      %v2494 = vsel %vm2493, %v2461, %v2168
      %v2495 = vsel %vm2493, %v2462, %v2170
      %v2496 = vsel %vm2493, %v2463, %v2172
      %v2497 = vsel %vm2493, %v2464, %v2174
      %v2498 = vsel %vm2493, %v2465, %v2176
      %v2499 = vsel %vm2493, %v2466, %v2178
      %v2500 = vsel %vm2493, %v2467, %v2180
      %v2501 = vsel %vm2493, %v2468, %v2182
      %v2502 = vsel %vm2493, %v2469, %v2184
      %v2503 = vsel %vm2493, %v2470, %v2186
      %v2504 = vsel %vm2493, %v2471, %v2188
      %v2505 = vsel %vm2493, %v2472, %v2190
      %v2506 = vsel %vm2493, %v2473, %v2192
      %v2507 = vsel %vm2493, %v2474, %v2194
      %v2508 = vsel %vm2493, %v2475, %v2196
      %v2509 = vsel %vm2493, %v2476, %v2198
      %v2510 = vsel %vm2493, %v2477, %v2200
      %v2511 = vsel %vm2493, %v2478, %v2202
      %v2512 = vsel %vm2493, %v2479, %v2204
      %v2513 = vsel %vm2493, %v2480, %v2206
      %v2514 = vsel %vm2493, %v2481, %v2208
      %v2515 = vsel %vm2493, %v2482, %v2210
      %v2516 = vsel %vm2493, %v2483, %v2212
      %v2517 = vsel %vm2493, %v2484, %v2214
      %v2518 = vsel %vm2493, %v2485, %v2216
      %v2519 = vsel %vm2493, %v2486, %v2218
      %v2520 = vsel %vm2493, %v2487, %v2220
      %v2521 = vsel %vm2493, %v2488, %v2222
      %v2522 = vsel %vm2493, %v2489, %v2224
      %v2523 = vsel %vm2493, %v2490, %v2226
      %v2524 = vsel %vm2493, %v2491, %v2228
      %v2525 = vsel %vm2493, %v2492, %v2230
      %v2526 = vld [vmem:[%s3] sm:$0xff]
      %v2527 = vld [vmem:[%s3 + $0x8] sm:$0xff]
      %v2528 = vld [vmem:[%s3 + $0x10] sm:$0xff]
      %v2529 = vld [vmem:[%s3 + $0x18] sm:$0xff]
      %v2530 = vld [vmem:[%s3 + $0x20] sm:$0xf]
      %v2531 = vld [vmem:[%s4] sm:$0x1]
      %v2533 = vlaneseq
      %v2534 = vshrl.u32 %v2533, 7
      %v2535 = vsub.s32 0, %v2534
      %v2536 = vrot.slane %v2531, %v2535
      %vm2538 = vcmask 293888
      %v2540 = vsel %vm2538, %v2494, 0
      %v2543 = vsel %vm2538, %v2495, 0
      %v2546 = vsel %vm2538, %v2496, 0
      %v2549 = vsel %vm2538, %v2497, 0
      %v2552 = vsel %vm2538, %v2498, 0
      %v2555 = vsel %vm2538, %v2499, 0
      %v2558 = vsel %vm2538, %v2500, 0
      %v2561 = vsel %vm2538, %v2501, 0
      %v2564 = vsel %vm2538, %v2502, 0
      %v2567 = vsel %vm2538, %v2503, 0
      %v2570 = vsel %vm2538, %v2504, 0
      %v2573 = vsel %vm2538, %v2505, 0
      %v2576 = vsel %vm2538, %v2506, 0
      %v2579 = vsel %vm2538, %v2507, 0
      %v2582 = vsel %vm2538, %v2508, 0
      %v2585 = vsel %vm2538, %v2509, 0
      %v2588 = vsel %vm2538, %v2510, 0
      %v2591 = vsel %vm2538, %v2511, 0
      %v2594 = vsel %vm2538, %v2512, 0
      %v2597 = vsel %vm2538, %v2513, 0
      %v2600 = vsel %vm2538, %v2514, 0
      %v2603 = vsel %vm2538, %v2515, 0
      %v2606 = vsel %vm2538, %v2516, 0
      %v2609 = vsel %vm2538, %v2517, 0
      %v2612 = vsel %vm2538, %v2518, 0
      %v2615 = vsel %vm2538, %v2519, 0
      %v2618 = vsel %vm2538, %v2520, 0
      %v2621 = vsel %vm2538, %v2521, 0
      %v2624 = vsel %vm2538, %v2522, 0
      %v2627 = vsel %vm2538, %v2523, 0
      %v2630 = vsel %vm2538, %v2524, 0
      %v2633 = vsel %vm2538, %v2525, 0
      %v2636 = vsel %vm605, %v2530, 0
      %2638 = vmatprep.subr.mxu0 0.0
      %2639 = vmatpush1.msra.mxu0 0.0
      %2640 = vmatprep.subr.mxu0 0.0
      %2641 = vmatpush1.msra.mxu0 0.0
      %2642 = vmatprep.subr.mxu0 0.0
      %2643 = vmatpush1.msra.mxu0 0.0
      %2644 = vmatprep.subr.mxu0 0.0
      %2645 = vmatpush1.msra.mxu0 0.0
      %2646 = vmatprep.subr.mxu0 0.0
      %2647 = vmatpush1.msra.mxu0 0.0
      %2648 = vmatprep.subr.mxu0 0.0
      %2649 = vmatpush1.msra.mxu0 0.0
      %2650 = vmatprep.subr.mxu0 0.0
      %2651 = vmatpush1.msra.mxu0 0.0
      %2652 = vmatprep.subr.mxu0 0.0
      %2653 = vmatpush1.msra.mxu0 0.0
      %2654 = vmatprep.subr.mxu0 0.0
      %2655 = vmatpush1.msra.mxu0 0.0
      %2656 = vmatprep.subr.mxu0 0.0
      %2657 = vmatpush1.msra.mxu0 0.0
      %2658 = vmatprep.subr.mxu0 0.0
      %2659 = vmatpush1.msra.mxu0 0.0
      %2660 = vmatprep.subr.mxu0 0.0
      %2661 = vmatpush1.msra.mxu0 %v2636
      %2662 = vmatprep.subr.mxu0 0.0
      %2663 = vmatpush1.msra.mxu0 %v2529
      %2664 = vmatprep.subr.mxu0 0.0
      %2665 = vmatpush1.msra.mxu0 %v2528
      %2666 = vmatprep.subr.mxu0 0.0
      %2667 = vmatpush1.msra.mxu0 %v2527
      %2668 = vmatprep.subr.mxu0 0.0
      %2669 = vmatpush1.msra.mxu0 %v2526
      %2670 = vmatprep.subr.mxu0 0.0
      %2671 = vmatpush2.msra.mxu0 0.0
      %2672 = vmatprep.subr.mxu0 0.0
      %2673 = vmatpush2.msra.mxu0 0.0
      %2674 = vmatprep.subr.mxu0 0.0
      %2675 = vmatpush2.msra.mxu0 0.0
      %2676 = vmatprep.subr.mxu0 0.0
      %2677 = vmatpush2.msra.mxu0 0.0
      %2678 = vmatprep.subr.mxu0 0.0
      %2679 = vmatpush2.msra.mxu0 0.0
      %2680 = vmatprep.subr.mxu0 0.0
      %2681 = vmatpush2.msra.mxu0 0.0
      %2682 = vmatprep.subr.mxu0 0.0
      %2683 = vmatpush2.msra.mxu0 0.0
      %2684 = vmatprep.subr.mxu0 0.0
      %2685 = vmatpush2.msra.mxu0 0.0
      %2686 = vmatprep.subr.mxu0 0.0
      %2687 = vmatpush2.msra.mxu0 0.0
      %2688 = vmatprep.subr.mxu0 0.0
      %2689 = vmatpush2.msra.mxu0 0.0
      %2690 = vmatprep.subr.mxu0 0.0
      %2691 = vmatpush2.msra.mxu0 0.0
      %2692 = vmatprep.subr.mxu0 0.0
      %2693 = vmatpush2.msra.mxu0 0.0
      %2694 = vmatprep.subr.mxu0 0.0
      %2695 = vmatpush2.msra.mxu0 0.0
      %2696 = vmatprep.subr.mxu0 0.0
      %2697 = vmatpush2.msra.mxu0 0.0
      %2698 = vmatprep.subr.mxu0 0.0
      %2699 = vmatpush2.msra.mxu0 0.0
      %2700 = vmatprep.subr.mxu0 0.0
      %2701 = vmatpush2.msra.mxu0 0.0
      %2702 = vmatprep.mubr.f32.mxu0 0.0
      %2703 = vmatmul.mubr.f32.gmra.mxu0 %v2540
      %v2704 = vpop.f32.mrf.mxu0
      %v2705 = vadd.f32 %v2536, %v2704
      %v2706 = vpop.f32.mrf.mxu0
      %2707 = vmatprep.mubr.f32.mxu0 0.0
      %2708 = vmatmul.mubr.f32.gmra.mxu0 %v2543
      %v2709 = vpop.f32.mrf.mxu0
      %v2710 = vadd.f32 %v2536, %v2709
      %v2711 = vpop.f32.mrf.mxu0
      %2712 = vmatprep.mubr.f32.mxu0 0.0
      %2713 = vmatmul.mubr.f32.gmra.mxu0 %v2546
      %v2714 = vpop.f32.mrf.mxu0
      %v2715 = vadd.f32 %v2536, %v2714
      %v2716 = vpop.f32.mrf.mxu0
      %2717 = vmatprep.mubr.f32.mxu0 0.0
      %2718 = vmatmul.mubr.f32.gmra.mxu0 %v2549
      %v2719 = vpop.f32.mrf.mxu0
      %v2720 = vadd.f32 %v2536, %v2719
      %v2721 = vpop.f32.mrf.mxu0
      %2722 = vmatprep.mubr.f32.mxu0 0.0
      %2723 = vmatmul.mubr.f32.gmra.mxu0 %v2552
      %v2724 = vpop.f32.mrf.mxu0
      %v2725 = vadd.f32 %v2536, %v2724
      %v2726 = vpop.f32.mrf.mxu0
      %2727 = vmatprep.mubr.f32.mxu0 0.0
      %2728 = vmatmul.mubr.f32.gmra.mxu0 %v2555
      %v2729 = vpop.f32.mrf.mxu0
      %v2730 = vadd.f32 %v2536, %v2729
      %v2731 = vpop.f32.mrf.mxu0
      %2732 = vmatprep.mubr.f32.mxu0 0.0
      %2733 = vmatmul.mubr.f32.gmra.mxu0 %v2558
      %v2734 = vpop.f32.mrf.mxu0
      %v2735 = vadd.f32 %v2536, %v2734
      %v2736 = vpop.f32.mrf.mxu0
      %2737 = vmatprep.mubr.f32.mxu0 0.0
      %2738 = vmatmul.mubr.f32.gmra.mxu0 %v2561
      %v2739 = vpop.f32.mrf.mxu0
      %v2740 = vadd.f32 %v2536, %v2739
      %v2741 = vpop.f32.mrf.mxu0
      %2742 = vmatprep.mubr.f32.mxu0 0.0
      %2743 = vmatmul.mubr.f32.gmra.mxu0 %v2564
      %v2744 = vpop.f32.mrf.mxu0
      %v2745 = vadd.f32 %v2536, %v2744
      %v2746 = vpop.f32.mrf.mxu0
      %2747 = vmatprep.mubr.f32.mxu0 0.0
      %2748 = vmatmul.mubr.f32.gmra.mxu0 %v2567
      %v2749 = vpop.f32.mrf.mxu0
      %v2750 = vadd.f32 %v2536, %v2749
      %v2751 = vpop.f32.mrf.mxu0
      %2752 = vmatprep.mubr.f32.mxu0 0.0
      %2753 = vmatmul.mubr.f32.gmra.mxu0 %v2570
      %v2754 = vpop.f32.mrf.mxu0
      %v2755 = vadd.f32 %v2536, %v2754
      %v2756 = vpop.f32.mrf.mxu0
      %2757 = vmatprep.mubr.f32.mxu0 0.0
      %2758 = vmatmul.mubr.f32.gmra.mxu0 %v2573
      %v2759 = vpop.f32.mrf.mxu0
      %v2760 = vadd.f32 %v2536, %v2759
      %v2761 = vpop.f32.mrf.mxu0
      %2762 = vmatprep.mubr.f32.mxu0 0.0
      %2763 = vmatmul.mubr.f32.gmra.mxu0 %v2576
      %v2764 = vpop.f32.mrf.mxu0
      %v2765 = vadd.f32 %v2536, %v2764
      %v2766 = vpop.f32.mrf.mxu0
      %2767 = vmatprep.mubr.f32.mxu0 0.0
      %2768 = vmatmul.mubr.f32.gmra.mxu0 %v2579
      %v2769 = vpop.f32.mrf.mxu0
      %v2770 = vadd.f32 %v2536, %v2769
      %v2771 = vpop.f32.mrf.mxu0
      %2772 = vmatprep.mubr.f32.mxu0 0.0
      %2773 = vmatmul.mubr.f32.gmra.mxu0 %v2582
      %v2774 = vpop.f32.mrf.mxu0
      %v2775 = vadd.f32 %v2536, %v2774
      %v2776 = vpop.f32.mrf.mxu0
      %2777 = vmatprep.mubr.f32.mxu0 0.0
      %2778 = vmatmul.mubr.f32.gmra.mxu0 %v2585
      %v2779 = vpop.f32.mrf.mxu0
      %v2780 = vadd.f32 %v2536, %v2779
      %v2781 = vpop.f32.mrf.mxu0
      %2782 = vmatprep.mubr.f32.mxu0 0.0
      %2783 = vmatmul.mubr.f32.gmra.mxu0 %v2588
      %v2784 = vpop.f32.mrf.mxu0
      %v2785 = vadd.f32 %v2536, %v2784
      %v2786 = vpop.f32.mrf.mxu0
      %2787 = vmatprep.mubr.f32.mxu0 0.0
      %2788 = vmatmul.mubr.f32.gmra.mxu0 %v2591
      %v2789 = vpop.f32.mrf.mxu0
      %v2790 = vadd.f32 %v2536, %v2789
      %v2791 = vpop.f32.mrf.mxu0
      %2792 = vmatprep.mubr.f32.mxu0 0.0
      %2793 = vmatmul.mubr.f32.gmra.mxu0 %v2594
      %v2794 = vpop.f32.mrf.mxu0
      %v2795 = vadd.f32 %v2536, %v2794
      %v2796 = vpop.f32.mrf.mxu0
      %2797 = vmatprep.mubr.f32.mxu0 0.0
      %2798 = vmatmul.mubr.f32.gmra.mxu0 %v2597
      %v2799 = vpop.f32.mrf.mxu0
      %v2800 = vadd.f32 %v2536, %v2799
      %v2801 = vpop.f32.mrf.mxu0
      %2802 = vmatprep.mubr.f32.mxu0 0.0
      %2803 = vmatmul.mubr.f32.gmra.mxu0 %v2600
      %v2804 = vpop.f32.mrf.mxu0
      %v2805 = vadd.f32 %v2536, %v2804
      %v2806 = vpop.f32.mrf.mxu0
      %2807 = vmatprep.mubr.f32.mxu0 0.0
      %2808 = vmatmul.mubr.f32.gmra.mxu0 %v2603
      %v2809 = vpop.f32.mrf.mxu0
      %v2810 = vadd.f32 %v2536, %v2809
      %v2811 = vpop.f32.mrf.mxu0
      %2812 = vmatprep.mubr.f32.mxu0 0.0
      %2813 = vmatmul.mubr.f32.gmra.mxu0 %v2606
      %v2814 = vpop.f32.mrf.mxu0
      %v2815 = vadd.f32 %v2536, %v2814
      %v2816 = vpop.f32.mrf.mxu0
      %2817 = vmatprep.mubr.f32.mxu0 0.0
      %2818 = vmatmul.mubr.f32.gmra.mxu0 %v2609
      %v2819 = vpop.f32.mrf.mxu0
      %v2820 = vadd.f32 %v2536, %v2819
      %v2821 = vpop.f32.mrf.mxu0
      %2822 = vmatprep.mubr.f32.mxu0 0.0
      %2823 = vmatmul.mubr.f32.gmra.mxu0 %v2612
      %v2824 = vpop.f32.mrf.mxu0
      %v2825 = vadd.f32 %v2536, %v2824
      %v2826 = vpop.f32.mrf.mxu0
      %2827 = vmatprep.mubr.f32.mxu0 0.0
      %2828 = vmatmul.mubr.f32.gmra.mxu0 %v2615
      %v2829 = vpop.f32.mrf.mxu0
      %v2830 = vadd.f32 %v2536, %v2829
      %v2831 = vpop.f32.mrf.mxu0
      %2832 = vmatprep.mubr.f32.mxu0 0.0
      %2833 = vmatmul.mubr.f32.gmra.mxu0 %v2618
      %v2834 = vpop.f32.mrf.mxu0
      %v2835 = vadd.f32 %v2536, %v2834
      %v2836 = vpop.f32.mrf.mxu0
      %2837 = vmatprep.mubr.f32.mxu0 0.0
      %2838 = vmatmul.mubr.f32.gmra.mxu0 %v2621
      %v2839 = vpop.f32.mrf.mxu0
      %v2840 = vadd.f32 %v2536, %v2839
      %v2841 = vpop.f32.mrf.mxu0
      %2842 = vmatprep.mubr.f32.mxu0 0.0
      %2843 = vmatmul.mubr.f32.gmra.mxu0 %v2624
      %v2844 = vpop.f32.mrf.mxu0
      %v2845 = vadd.f32 %v2536, %v2844
      %v2846 = vpop.f32.mrf.mxu0
      %2847 = vmatprep.mubr.f32.mxu0 0.0
      %2848 = vmatmul.mubr.f32.gmra.mxu0 %v2627
      %v2849 = vpop.f32.mrf.mxu0
      %v2850 = vadd.f32 %v2536, %v2849
      %v2851 = vpop.f32.mrf.mxu0
      %2852 = vmatprep.mubr.f32.mxu0 0.0
      %2853 = vmatmul.mubr.f32.gmra.mxu0 %v2630
      %v2854 = vpop.f32.mrf.mxu0
      %v2855 = vadd.f32 %v2536, %v2854
      %v2856 = vpop.f32.mrf.mxu0
      %2857 = vmatprep.mubr.f32.mxu0 0.0
      %2858 = vmatmul.mubr.f32.gmra.mxu0 %v2633
      %v2859 = vpop.f32.mrf.mxu0
      %v2860 = vadd.f32 %v2536, %v2859
      %v2861 = vpop.f32.mrf.mxu0
      %2862 = vdwg.mxu0
      %v2863 = vxor.u32 %v2705, 2147483648
      %v2864 = vxor.u32 %v2710, 2147483648
      %v2865 = vxor.u32 %v2715, 2147483648
      %v2866 = vxor.u32 %v2720, 2147483648
      %v2867 = vxor.u32 %v2725, 2147483648
      %v2868 = vxor.u32 %v2730, 2147483648
      %v2869 = vxor.u32 %v2735, 2147483648
      %v2870 = vxor.u32 %v2740, 2147483648
      %v2871 = vxor.u32 %v2745, 2147483648
      %v2872 = vxor.u32 %v2750, 2147483648
      %v2873 = vxor.u32 %v2755, 2147483648
      %v2874 = vxor.u32 %v2760, 2147483648
      %v2875 = vxor.u32 %v2765, 2147483648
      %v2876 = vxor.u32 %v2770, 2147483648
      %v2877 = vxor.u32 %v2775, 2147483648
      %v2878 = vxor.u32 %v2780, 2147483648
      %v2879 = vxor.u32 %v2785, 2147483648
      %v2880 = vxor.u32 %v2790, 2147483648
      %v2881 = vxor.u32 %v2795, 2147483648
      %v2882 = vxor.u32 %v2800, 2147483648
      %v2883 = vxor.u32 %v2805, 2147483648
      %v2884 = vxor.u32 %v2810, 2147483648
      %v2885 = vxor.u32 %v2815, 2147483648
      %v2886 = vxor.u32 %v2820, 2147483648
      %v2887 = vxor.u32 %v2825, 2147483648
      %v2888 = vxor.u32 %v2830, 2147483648
      %v2889 = vxor.u32 %v2835, 2147483648
      %v2890 = vxor.u32 %v2840, 2147483648
      %v2891 = vxor.u32 %v2845, 2147483648
      %v2892 = vxor.u32 %v2850, 2147483648
      %v2893 = vxor.u32 %v2855, 2147483648
      %v2894 = vxor.u32 %v2860, 2147483648
      %v2895 = vmul.f32 %v2863, 1.442695
      %v2896 = vpow.pop %v2895
      %v2897 = vmul.f32 %v2864, 1.442695
      %v2898 = vpow.pop %v2897
      %v2899 = vmul.f32 %v2865, 1.442695
      %v2900 = vpow.pop %v2899
      %v2901 = vmul.f32 %v2866, 1.442695
      %v2902 = vpow.pop %v2901
      %v2903 = vmul.f32 %v2867, 1.442695
      %v2904 = vpow.pop %v2903
      %v2905 = vmul.f32 %v2868, 1.442695
      %v2906 = vpow.pop %v2905
      %v2907 = vmul.f32 %v2869, 1.442695
      %v2908 = vpow.pop %v2907
      %v2909 = vmul.f32 %v2870, 1.442695
      %v2910 = vpow.pop %v2909
      %v2911 = vmul.f32 %v2871, 1.442695
      %v2912 = vpow.pop %v2911
      %v2913 = vmul.f32 %v2872, 1.442695
      %v2914 = vpow.pop %v2913
      %v2915 = vmul.f32 %v2873, 1.442695
      %v2916 = vpow.pop %v2915
      %v2917 = vmul.f32 %v2874, 1.442695
      %v2918 = vpow.pop %v2917
      %v2919 = vmul.f32 %v2875, 1.442695
      %v2920 = vpow.pop %v2919
      %v2921 = vmul.f32 %v2876, 1.442695
      %v2922 = vpow.pop %v2921
      %v2923 = vmul.f32 %v2877, 1.442695
      %v2924 = vpow.pop %v2923
      %v2925 = vmul.f32 %v2878, 1.442695
      %v2926 = vpow.pop %v2925
      %v2927 = vmul.f32 %v2879, 1.442695
      %v2928 = vpow.pop %v2927
      %v2929 = vmul.f32 %v2880, 1.442695
      %v2930 = vpow.pop %v2929
      %v2931 = vmul.f32 %v2881, 1.442695
      %v2932 = vpow.pop %v2931
      %v2933 = vmul.f32 %v2882, 1.442695
      %v2934 = vpow.pop %v2933
      %v2935 = vmul.f32 %v2883, 1.442695
      %v2936 = vpow.pop %v2935
      %v2937 = vmul.f32 %v2884, 1.442695
      %v2938 = vpow.pop %v2937
      %v2939 = vmul.f32 %v2885, 1.442695
      %v2940 = vpow.pop %v2939
      %v2941 = vmul.f32 %v2886, 1.442695
      %v2942 = vpow.pop %v2941
      %v2943 = vmul.f32 %v2887, 1.442695
      %v2944 = vpow.pop %v2943
      %v2945 = vmul.f32 %v2888, 1.442695
      %v2946 = vpow.pop %v2945
      %v2947 = vmul.f32 %v2889, 1.442695
      %v2948 = vpow.pop %v2947
      %v2949 = vmul.f32 %v2890, 1.442695
      %v2950 = vpow.pop %v2949
      %v2951 = vmul.f32 %v2891, 1.442695
      %v2952 = vpow.pop %v2951
      %v2953 = vmul.f32 %v2892, 1.442695
      %v2954 = vpow.pop %v2953
      %v2955 = vmul.f32 %v2893, 1.442695
      %v2956 = vpow.pop %v2955
      %v2957 = vmul.f32 %v2894, 1.442695
      %v2958 = vpow.pop %v2957
      %v2959 = vadd.f32 %v2896, 1.0
      %v2960 = vadd.f32 %v2898, 1.0
      %v2961 = vadd.f32 %v2900, 1.0
      %v2962 = vadd.f32 %v2902, 1.0
      %v2963 = vadd.f32 %v2904, 1.0
      %v2964 = vadd.f32 %v2906, 1.0
      %v2965 = vadd.f32 %v2908, 1.0
      %v2966 = vadd.f32 %v2910, 1.0
      %v2967 = vadd.f32 %v2912, 1.0
      %v2968 = vadd.f32 %v2914, 1.0
      %v2969 = vadd.f32 %v2916, 1.0
      %v2970 = vadd.f32 %v2918, 1.0
      %v2971 = vadd.f32 %v2920, 1.0
      %v2972 = vadd.f32 %v2922, 1.0
      %v2973 = vadd.f32 %v2924, 1.0
      %v2974 = vadd.f32 %v2926, 1.0
      %v2975 = vadd.f32 %v2928, 1.0
      %v2976 = vadd.f32 %v2930, 1.0
      %v2977 = vadd.f32 %v2932, 1.0
      %v2978 = vadd.f32 %v2934, 1.0
      %v2979 = vadd.f32 %v2936, 1.0
      %v2980 = vadd.f32 %v2938, 1.0
      %v2981 = vadd.f32 %v2940, 1.0
      %v2982 = vadd.f32 %v2942, 1.0
      %v2983 = vadd.f32 %v2944, 1.0
      %v2984 = vadd.f32 %v2946, 1.0
      %v2985 = vadd.f32 %v2948, 1.0
      %v2986 = vadd.f32 %v2950, 1.0
      %v2987 = vadd.f32 %v2952, 1.0
      %v2988 = vadd.f32 %v2954, 1.0
      %v2989 = vadd.f32 %v2956, 1.0
      %v2990 = vadd.f32 %v2958, 1.0
      %v2991 = vrcp.pop %v2959
      %v2992 = vmul.f32 1.0, %v2991
      %v2993 = vrcp.pop %v2960
      %v2994 = vmul.f32 1.0, %v2993
      %v2995 = vrcp.pop %v2961
      %v2996 = vmul.f32 1.0, %v2995
      %v2997 = vrcp.pop %v2962
      %v2998 = vmul.f32 1.0, %v2997
      %v2999 = vrcp.pop %v2963
      %v3000 = vmul.f32 1.0, %v2999
      %v3001 = vrcp.pop %v2964
      %v3002 = vmul.f32 1.0, %v3001
      %v3003 = vrcp.pop %v2965
      %v3004 = vmul.f32 1.0, %v3003
      %v3005 = vrcp.pop %v2966
      %v3006 = vmul.f32 1.0, %v3005
      %v3007 = vrcp.pop %v2967
      %v3008 = vmul.f32 1.0, %v3007
      %v3009 = vrcp.pop %v2968
      %v3010 = vmul.f32 1.0, %v3009
      %v3011 = vrcp.pop %v2969
      %v3012 = vmul.f32 1.0, %v3011
      %v3013 = vrcp.pop %v2970
      %v3014 = vmul.f32 1.0, %v3013
      %v3015 = vrcp.pop %v2971
      %v3016 = vmul.f32 1.0, %v3015
      %v3017 = vrcp.pop %v2972
      %v3018 = vmul.f32 1.0, %v3017
      %v3019 = vrcp.pop %v2973
      %v3020 = vmul.f32 1.0, %v3019
      %v3021 = vrcp.pop %v2974
      %v3022 = vmul.f32 1.0, %v3021
      %v3023 = vrcp.pop %v2975
      %v3024 = vmul.f32 1.0, %v3023
      %v3025 = vrcp.pop %v2976
      %v3026 = vmul.f32 1.0, %v3025
      %v3027 = vrcp.pop %v2977
      %v3028 = vmul.f32 1.0, %v3027
      %v3029 = vrcp.pop %v2978
      %v3030 = vmul.f32 1.0, %v3029
      %v3031 = vrcp.pop %v2979
      %v3032 = vmul.f32 1.0, %v3031
      %v3033 = vrcp.pop %v2980
      %v3034 = vmul.f32 1.0, %v3033
      %v3035 = vrcp.pop %v2981
      %v3036 = vmul.f32 1.0, %v3035
      %v3037 = vrcp.pop %v2982
      %v3038 = vmul.f32 1.0, %v3037
      %v3039 = vrcp.pop %v2983
      %v3040 = vmul.f32 1.0, %v3039
      %v3041 = vrcp.pop %v2984
      %v3042 = vmul.f32 1.0, %v3041
      %v3043 = vrcp.pop %v2985
      %v3044 = vmul.f32 1.0, %v3043
      %v3045 = vrcp.pop %v2986
      %v3046 = vmul.f32 1.0, %v3045
      %v3047 = vrcp.pop %v2987
      %v3048 = vmul.f32 1.0, %v3047
      %v3049 = vrcp.pop %v2988
      %v3050 = vmul.f32 1.0, %v3049
      %v3051 = vrcp.pop %v2989
      %v3052 = vmul.f32 1.0, %v3051
      %v3053 = vrcp.pop %v2990
      %v3054 = vmul.f32 1.0, %v3053
      %v3055 = vmul.f32 %v2705, %v2992
      %v3056 = vmul.f32 %v2710, %v2994
      %v3057 = vmul.f32 %v2715, %v2996
      %v3058 = vmul.f32 %v2720, %v2998
      %v3059 = vmul.f32 %v2725, %v3000
      %v3060 = vmul.f32 %v2730, %v3002
      %v3061 = vmul.f32 %v2735, %v3004
      %v3062 = vmul.f32 %v2740, %v3006
      %v3063 = vmul.f32 %v2745, %v3008
      %v3064 = vmul.f32 %v2750, %v3010
      %v3065 = vmul.f32 %v2755, %v3012
      %v3066 = vmul.f32 %v2760, %v3014
      %v3067 = vmul.f32 %v2765, %v3016
      %v3068 = vmul.f32 %v2770, %v3018
      %v3069 = vmul.f32 %v2775, %v3020
      %v3070 = vmul.f32 %v2780, %v3022
      %v3071 = vmul.f32 %v2785, %v3024
      %v3072 = vmul.f32 %v2790, %v3026
      %v3073 = vmul.f32 %v2795, %v3028
      %v3074 = vmul.f32 %v2800, %v3030
      %v3075 = vmul.f32 %v2805, %v3032
      %v3076 = vmul.f32 %v2810, %v3034
      %v3077 = vmul.f32 %v2815, %v3036
      %v3078 = vmul.f32 %v2820, %v3038
      %v3079 = vmul.f32 %v2825, %v3040
      %v3080 = vmul.f32 %v2830, %v3042
      %v3081 = vmul.f32 %v2835, %v3044
      %v3082 = vmul.f32 %v2840, %v3046
      %v3083 = vmul.f32 %v2845, %v3048
      %v3084 = vmul.f32 %v2850, %v3050
      %v3085 = vmul.f32 %v2855, %v3052
      %v3086 = vmul.f32 %v2860, %v3054
      %vm3119 = vcmask 1041408
      %v3120 = vrot.slane 0.0, 6
      %v3121 = vsel %vm3119, %v3120, %v3120
      %v3122 = vrot.slane %v3055, 6
      %v3123 = vrot.slane %v3056, 6
      %v3124 = vsel %vm3119, %v3122, %v3123
      %v3125 = vrot.slane %v3057, 6
      %v3126 = vrot.slane %v3058, 6
      %v3127 = vsel %vm3119, %v3125, %v3126
      %v3128 = vrot.slane %v3059, 6
      %v3129 = vrot.slane %v3060, 6
      %v3130 = vsel %vm3119, %v3128, %v3129
      %v3131 = vrot.slane %v3061, 6
      %v3132 = vrot.slane %v3062, 6
      %v3133 = vsel %vm3119, %v3131, %v3132
      %v3134 = vrot.slane %v3063, 6
      %v3135 = vrot.slane %v3064, 6
      %v3136 = vsel %vm3119, %v3134, %v3135
      %v3137 = vrot.slane %v3065, 6
      %v3138 = vrot.slane %v3066, 6
      %v3139 = vsel %vm3119, %v3137, %v3138
      %v3140 = vrot.slane %v3067, 6
      %v3141 = vrot.slane %v3068, 6
      %v3142 = vsel %vm3119, %v3140, %v3141
      %v3143 = vrot.slane %v3069, 6
      %v3144 = vrot.slane %v3070, 6
      %v3145 = vsel %vm3119, %v3143, %v3144
      %v3146 = vrot.slane %v3071, 6
      %v3147 = vrot.slane %v3072, 6
      %v3148 = vsel %vm3119, %v3146, %v3147
      %v3149 = vrot.slane %v3073, 6
      %v3150 = vrot.slane %v3074, 6
      %v3151 = vsel %vm3119, %v3149, %v3150
      %v3152 = vrot.slane %v3075, 6
      %v3153 = vrot.slane %v3076, 6
      %v3154 = vsel %vm3119, %v3152, %v3153
      %v3155 = vrot.slane %v3077, 6
      %v3156 = vrot.slane %v3078, 6
      %v3157 = vsel %vm3119, %v3155, %v3156
      %v3158 = vrot.slane %v3079, 6
      %v3159 = vrot.slane %v3080, 6
      %v3160 = vsel %vm3119, %v3158, %v3159
      %v3161 = vrot.slane %v3081, 6
      %v3162 = vrot.slane %v3082, 6
      %v3163 = vsel %vm3119, %v3161, %v3162
      %v3164 = vrot.slane %v3083, 6
      %v3165 = vrot.slane %v3084, 6
      %v3166 = vsel %vm3119, %v3164, %v3165
      %v3167 = vrot.slane %v3085, 6
      %v3168 = vrot.slane %v3086, 6
      %v3169 = vsel %vm3119, %v3167, %v3168
      %v3220 = vsel %vm3119, 0.0, %v3120
      %v3221 = vsel %vm3119, 0.0, %v3122
      %v3222 = vsel %vm3119, 0.0, %v3125
      %v3223 = vsel %vm3119, 0.0, %v3128
      %v3224 = vsel %vm3119, 0.0, %v3131
      %v3225 = vsel %vm3119, 0.0, %v3134
      %v3226 = vsel %vm3119, 0.0, %v3137
      %v3227 = vsel %vm3119, 0.0, %v3140
      %v3228 = vsel %vm3119, 0.0, %v3143
      %v3229 = vsel %vm3119, 0.0, %v3146
      %v3230 = vsel %vm3119, 0.0, %v3149
      %v3231 = vsel %vm3119, 0.0, %v3152
      %v3232 = vsel %vm3119, 0.0, %v3155
      %v3233 = vsel %vm3119, 0.0, %v3158
      %v3234 = vsel %vm3119, 0.0, %v3161
      %v3235 = vsel %vm3119, 0.0, %v3164
      %v3236 = vsel %vm3119, 0.0, %v3167
      %v3237 = vsel %vm3119, %v3120, 0.0
      %v3238 = vsel %vm3119, %v3123, 0.0
      %v3239 = vsel %vm3119, %v3126, 0.0
      %v3240 = vsel %vm3119, %v3129, 0.0
      %v3241 = vsel %vm3119, %v3132, 0.0
      %v3242 = vsel %vm3119, %v3135, 0.0
      %v3243 = vsel %vm3119, %v3138, 0.0
      %v3244 = vsel %vm3119, %v3141, 0.0
      %v3245 = vsel %vm3119, %v3144, 0.0
      %v3246 = vsel %vm3119, %v3147, 0.0
      %v3247 = vsel %vm3119, %v3150, 0.0
      %v3248 = vsel %vm3119, %v3153, 0.0
      %v3249 = vsel %vm3119, %v3156, 0.0
      %v3250 = vsel %vm3119, %v3159, 0.0
      %v3251 = vsel %vm3119, %v3162, 0.0
      %v3252 = vsel %vm3119, %v3165, 0.0
      %v3253 = vsel %vm3119, %v3168, 0.0
      %v3254 = vld [vmem:[%s5] sm:$0xff]
      %v3255 = vld [vmem:[%s5 + $0x8] sm:$0xff]
      %v3256 = vld [vmem:[%s5 + $0x10] sm:$0xff]
      %v3257 = vld [vmem:[%s5 + $0x18] sm:$0x1]
      %v3258 = vlaneseq
      %v3259 = vshrl.u32 %v3258, 7
      %v3260 = vsub.s32 0, %v3259
      %v3261 = vrot.slane %v3254, %v3260
      %v3262 = vmul.f32 %v3220, %v3261
      %v3263 = vmul.f32 %v3121, %v3261
      %v3264 = vmul.f32 %v3221, %v3261
      %v3265 = vmul.f32 %v3124, %v3261
      %v3266 = vmul.f32 %v3222, %v3261
      %v3267 = vmul.f32 %v3127, %v3261
      %v3268 = vmul.f32 %v3223, %v3261
      %v3269 = vmul.f32 %v3130, %v3261
      %v3270 = vmul.f32 %v3224, %v3261
      %v3271 = vmul.f32 %v3133, %v3261
      %v3272 = vmul.f32 %v3225, %v3261
      %v3273 = vmul.f32 %v3136, %v3261
      %v3274 = vmul.f32 %v3226, %v3261
      %v3275 = vmul.f32 %v3139, %v3261
      %v3276 = vmul.f32 %v3227, %v3261
      %v3277 = vmul.f32 %v3142, %v3261
      %v3278 = vmul.f32 %v3228, %v3261
      %v3279 = vmul.f32 %v3145, %v3261
      %v3280 = vmul.f32 %v3229, %v3261
      %v3281 = vmul.f32 %v3148, %v3261
      %v3282 = vmul.f32 %v3230, %v3261
      %v3283 = vmul.f32 %v3151, %v3261
      %v3284 = vmul.f32 %v3231, %v3261
      %v3285 = vmul.f32 %v3154, %v3261
      %v3286 = vmul.f32 %v3232, %v3261
      %v3287 = vmul.f32 %v3157, %v3261
      %v3288 = vmul.f32 %v3233, %v3261
      %v3289 = vmul.f32 %v3160, %v3261
      %v3290 = vmul.f32 %v3234, %v3261
      %v3291 = vmul.f32 %v3163, %v3261
      %v3292 = vadd.f32 %v3262, 0.0
      %v3293 = vadd.f32 %v3263, 0.0
      %v3294 = vadd.f32 %v3264, 0.0
      %v3295 = vadd.f32 %v3265, 0.0
      %v3296 = vadd.f32 %v3266, 0.0
      %v3297 = vadd.f32 %v3267, 0.0
      %v3298 = vadd.f32 %v3268, 0.0
      %v3299 = vadd.f32 %v3269, 0.0
      %v3300 = vadd.f32 %v3270, 0.0
      %v3301 = vadd.f32 %v3271, 0.0
      %v3302 = vadd.f32 %v3272, 0.0
      %v3303 = vadd.f32 %v3273, 0.0
      %v3304 = vadd.f32 %v3274, 0.0
      %v3305 = vadd.f32 %v3275, 0.0
      %v3306 = vadd.f32 %v3276, 0.0
      %v3307 = vadd.f32 %v3277, 0.0
      %v3308 = vadd.f32 %v3278, 0.0
      %v3309 = vadd.f32 %v3279, 0.0
      %v3310 = vadd.f32 %v3280, 0.0
      %v3311 = vadd.f32 %v3281, 0.0
      %v3312 = vadd.f32 %v3282, 0.0
      %v3313 = vadd.f32 %v3283, 0.0
      %v3314 = vadd.f32 %v3284, 0.0
      %v3315 = vadd.f32 %v3285, 0.0
      %v3316 = vadd.f32 %v3286, 0.0
      %v3317 = vadd.f32 %v3287, 0.0
      %v3318 = vadd.f32 %v3288, 0.0
      %v3319 = vadd.f32 %v3289, 0.0
      %v3320 = vadd.f32 %v3290, 0.0
      %v3321 = vadd.f32 %v3291, 0.0
      %v3322 = vlaneseq
      %v3323 = vshrl.u32 %v3322, 7
      %v3324 = vsub.s32 1, %v3323
      %v3325 = vrot.slane %v3254, %v3324
      %v3326 = vmul.f32 %v3220, %v3325
      %v3327 = vmul.f32 %v3121, %v3325
      %v3328 = vmul.f32 %v3237, %v3325
      %v3329 = vmul.f32 %v3221, %v3325
      %v3330 = vmul.f32 %v3124, %v3325
      %v3331 = vmul.f32 %v3238, %v3325
      %v3332 = vmul.f32 %v3222, %v3325
      %v3333 = vmul.f32 %v3127, %v3325
      %v3334 = vmul.f32 %v3239, %v3325
      %v3335 = vmul.f32 %v3223, %v3325
      %v3336 = vmul.f32 %v3130, %v3325
      %v3337 = vmul.f32 %v3240, %v3325
      %v3338 = vmul.f32 %v3224, %v3325
      %v3339 = vmul.f32 %v3133, %v3325
      %v3340 = vmul.f32 %v3241, %v3325
      %v3341 = vmul.f32 %v3225, %v3325
      %v3342 = vmul.f32 %v3136, %v3325
      %v3343 = vmul.f32 %v3242, %v3325
      %v3344 = vmul.f32 %v3226, %v3325
      %v3345 = vmul.f32 %v3139, %v3325
      %v3346 = vmul.f32 %v3243, %v3325
      %v3347 = vmul.f32 %v3227, %v3325
      %v3348 = vmul.f32 %v3142, %v3325
      %v3349 = vmul.f32 %v3244, %v3325
      %v3350 = vmul.f32 %v3228, %v3325
      %v3351 = vmul.f32 %v3145, %v3325
      %v3352 = vmul.f32 %v3245, %v3325
      %v3353 = vmul.f32 %v3229, %v3325
      %v3354 = vmul.f32 %v3148, %v3325
      %v3355 = vmul.f32 %v3246, %v3325
      %v3356 = vmul.f32 %v3230, %v3325
      %v3357 = vmul.f32 %v3151, %v3325
      %v3358 = vmul.f32 %v3247, %v3325
      %v3359 = vmul.f32 %v3231, %v3325
      %v3360 = vmul.f32 %v3154, %v3325
      %v3361 = vmul.f32 %v3248, %v3325
      %v3362 = vmul.f32 %v3232, %v3325
      %v3363 = vmul.f32 %v3157, %v3325
      %v3364 = vmul.f32 %v3249, %v3325
      %v3365 = vmul.f32 %v3233, %v3325
      %v3366 = vmul.f32 %v3160, %v3325
      %v3367 = vmul.f32 %v3250, %v3325
      %v3368 = vmul.f32 %v3234, %v3325
      %v3369 = vmul.f32 %v3163, %v3325
      %v3370 = vmul.f32 %v3251, %v3325
      %v3416 = vrot.slane %v3326, 1
      %v3417 = vrot.slane %v3327, 1
      %v3418 = vsel %vm1321, %v3416, %v3417
      %v3419 = vrot.slane %v3328, 1
      %v3420 = vsel %vm1321, %v3417, %v3419
      %v3421 = vrot.slane %v3329, 1
      %v3422 = vrot.slane %v3330, 1
      %v3423 = vsel %vm1321, %v3421, %v3422
      %v3424 = vrot.slane %v3331, 1
      %v3425 = vsel %vm1321, %v3422, %v3424
      %v3426 = vrot.slane %v3332, 1
      %v3427 = vrot.slane %v3333, 1
      %v3428 = vsel %vm1321, %v3426, %v3427
      %v3429 = vrot.slane %v3334, 1
      %v3430 = vsel %vm1321, %v3427, %v3429
      %v3431 = vrot.slane %v3335, 1
      %v3432 = vrot.slane %v3336, 1
      %v3433 = vsel %vm1321, %v3431, %v3432
      %v3434 = vrot.slane %v3337, 1
      %v3435 = vsel %vm1321, %v3432, %v3434
      %v3436 = vrot.slane %v3338, 1
      %v3437 = vrot.slane %v3339, 1
      %v3438 = vsel %vm1321, %v3436, %v3437
      %v3439 = vrot.slane %v3340, 1
      %v3440 = vsel %vm1321, %v3437, %v3439
      %v3441 = vrot.slane %v3341, 1
      %v3442 = vrot.slane %v3342, 1
      %v3443 = vsel %vm1321, %v3441, %v3442
      %v3444 = vrot.slane %v3343, 1
      %v3445 = vsel %vm1321, %v3442, %v3444
      %v3446 = vrot.slane %v3344, 1
      %v3447 = vrot.slane %v3345, 1
      %v3448 = vsel %vm1321, %v3446, %v3447
      %v3449 = vrot.slane %v3346, 1
      %v3450 = vsel %vm1321, %v3447, %v3449
      %v3451 = vrot.slane %v3347, 1
      %v3452 = vrot.slane %v3348, 1
      %v3453 = vsel %vm1321, %v3451, %v3452
      %v3454 = vrot.slane %v3349, 1
      %v3455 = vsel %vm1321, %v3452, %v3454
      %v3456 = vrot.slane %v3350, 1
      %v3457 = vrot.slane %v3351, 1
      %v3458 = vsel %vm1321, %v3456, %v3457
      %v3459 = vrot.slane %v3352, 1
      %v3460 = vsel %vm1321, %v3457, %v3459
      %v3461 = vrot.slane %v3353, 1
      %v3462 = vrot.slane %v3354, 1
      %v3463 = vsel %vm1321, %v3461, %v3462
      %v3464 = vrot.slane %v3355, 1
      %v3465 = vsel %vm1321, %v3462, %v3464
      %v3466 = vrot.slane %v3356, 1
      %v3467 = vrot.slane %v3357, 1
      %v3468 = vsel %vm1321, %v3466, %v3467
      %v3469 = vrot.slane %v3358, 1
      %v3470 = vsel %vm1321, %v3467, %v3469
      %v3471 = vrot.slane %v3359, 1
      %v3472 = vrot.slane %v3360, 1
      %v3473 = vsel %vm1321, %v3471, %v3472
      %v3474 = vrot.slane %v3361, 1
      %v3475 = vsel %vm1321, %v3472, %v3474
      %v3476 = vrot.slane %v3362, 1
      %v3477 = vrot.slane %v3363, 1
      %v3478 = vsel %vm1321, %v3476, %v3477
      %v3479 = vrot.slane %v3364, 1
      %v3480 = vsel %vm1321, %v3477, %v3479
      %v3481 = vrot.slane %v3365, 1
      %v3482 = vrot.slane %v3366, 1
      %v3483 = vsel %vm1321, %v3481, %v3482
      %v3484 = vrot.slane %v3367, 1
      %v3485 = vsel %vm1321, %v3482, %v3484
      %v3486 = vrot.slane %v3368, 1
      %v3487 = vrot.slane %v3369, 1
      %v3488 = vsel %vm1321, %v3486, %v3487
      %v3489 = vrot.slane %v3370, 1
      %v3490 = vsel %vm1321, %v3487, %v3489
      %v3521 = vadd.f32 %v3292, %v3418
      %v3522 = vadd.f32 %v3293, %v3420
      %v3523 = vadd.f32 %v3294, %v3423
      %v3524 = vadd.f32 %v3295, %v3425
      %v3525 = vadd.f32 %v3296, %v3428
      %v3526 = vadd.f32 %v3297, %v3430
      %v3527 = vadd.f32 %v3298, %v3433
      %v3528 = vadd.f32 %v3299, %v3435
      %v3529 = vadd.f32 %v3300, %v3438
      %v3530 = vadd.f32 %v3301, %v3440
      %v3531 = vadd.f32 %v3302, %v3443
      %v3532 = vadd.f32 %v3303, %v3445
      %v3533 = vadd.f32 %v3304, %v3448
      %v3534 = vadd.f32 %v3305, %v3450
      %v3535 = vadd.f32 %v3306, %v3453
      %v3536 = vadd.f32 %v3307, %v3455
      %v3537 = vadd.f32 %v3308, %v3458
      %v3538 = vadd.f32 %v3309, %v3460
      %v3539 = vadd.f32 %v3310, %v3463
      %v3540 = vadd.f32 %v3311, %v3465
      %v3541 = vadd.f32 %v3312, %v3468
      %v3542 = vadd.f32 %v3313, %v3470
      %v3543 = vadd.f32 %v3314, %v3473
      %v3544 = vadd.f32 %v3315, %v3475
      %v3545 = vadd.f32 %v3316, %v3478
      %v3546 = vadd.f32 %v3317, %v3480
      %v3547 = vadd.f32 %v3318, %v3483
      %v3548 = vadd.f32 %v3319, %v3485
      %v3549 = vadd.f32 %v3320, %v3488
      %v3550 = vadd.f32 %v3321, %v3490
      %v3551 = vlaneseq
      %v3552 = vshrl.u32 %v3551, 7
      %v3553 = vsub.s32 2, %v3552
      %v3554 = vrot.slane %v3254, %v3553
      %v3555 = vmul.f32 %v3220, %v3554
      %v3556 = vmul.f32 %v3121, %v3554
      %v3557 = vmul.f32 %v3237, %v3554
      %v3558 = vmul.f32 %v3221, %v3554
      %v3559 = vmul.f32 %v3124, %v3554
      %v3560 = vmul.f32 %v3238, %v3554
      %v3561 = vmul.f32 %v3222, %v3554
      %v3562 = vmul.f32 %v3127, %v3554
      %v3563 = vmul.f32 %v3239, %v3554
      %v3564 = vmul.f32 %v3223, %v3554
      %v3565 = vmul.f32 %v3130, %v3554
      %v3566 = vmul.f32 %v3240, %v3554
      %v3567 = vmul.f32 %v3224, %v3554
      %v3568 = vmul.f32 %v3133, %v3554
      %v3569 = vmul.f32 %v3241, %v3554
      %v3570 = vmul.f32 %v3225, %v3554
      %v3571 = vmul.f32 %v3136, %v3554
      %v3572 = vmul.f32 %v3242, %v3554
      %v3573 = vmul.f32 %v3226, %v3554
      %v3574 = vmul.f32 %v3139, %v3554
      %v3575 = vmul.f32 %v3243, %v3554
      %v3576 = vmul.f32 %v3227, %v3554
      %v3577 = vmul.f32 %v3142, %v3554
      %v3578 = vmul.f32 %v3244, %v3554
      %v3579 = vmul.f32 %v3228, %v3554
      %v3580 = vmul.f32 %v3145, %v3554
      %v3581 = vmul.f32 %v3245, %v3554
      %v3582 = vmul.f32 %v3229, %v3554
      %v3583 = vmul.f32 %v3148, %v3554
      %v3584 = vmul.f32 %v3246, %v3554
      %v3585 = vmul.f32 %v3230, %v3554
      %v3586 = vmul.f32 %v3151, %v3554
      %v3587 = vmul.f32 %v3247, %v3554
      %v3588 = vmul.f32 %v3231, %v3554
      %v3589 = vmul.f32 %v3154, %v3554
      %v3590 = vmul.f32 %v3248, %v3554
      %v3591 = vmul.f32 %v3232, %v3554
      %v3592 = vmul.f32 %v3157, %v3554
      %v3593 = vmul.f32 %v3249, %v3554
      %v3594 = vmul.f32 %v3233, %v3554
      %v3595 = vmul.f32 %v3160, %v3554
      %v3596 = vmul.f32 %v3250, %v3554
      %v3597 = vmul.f32 %v3234, %v3554
      %v3598 = vmul.f32 %v3163, %v3554
      %v3599 = vmul.f32 %v3251, %v3554
      %v3645 = vrot.slane %v3555, 2
      %v3646 = vrot.slane %v3556, 2
      %v3647 = vsel %vm1402, %v3645, %v3646
      %v3648 = vrot.slane %v3557, 2
      %v3649 = vsel %vm1402, %v3646, %v3648
      %v3650 = vrot.slane %v3558, 2
      %v3651 = vrot.slane %v3559, 2
      %v3652 = vsel %vm1402, %v3650, %v3651
      %v3653 = vrot.slane %v3560, 2
      %v3654 = vsel %vm1402, %v3651, %v3653
      %v3655 = vrot.slane %v3561, 2
      %v3656 = vrot.slane %v3562, 2
      %v3657 = vsel %vm1402, %v3655, %v3656
      %v3658 = vrot.slane %v3563, 2
      %v3659 = vsel %vm1402, %v3656, %v3658
      %v3660 = vrot.slane %v3564, 2
      %v3661 = vrot.slane %v3565, 2
      %v3662 = vsel %vm1402, %v3660, %v3661
      %v3663 = vrot.slane %v3566, 2
      %v3664 = vsel %vm1402, %v3661, %v3663
      %v3665 = vrot.slane %v3567, 2
      %v3666 = vrot.slane %v3568, 2
      %v3667 = vsel %vm1402, %v3665, %v3666
      %v3668 = vrot.slane %v3569, 2
      %v3669 = vsel %vm1402, %v3666, %v3668
      %v3670 = vrot.slane %v3570, 2
      %v3671 = vrot.slane %v3571, 2
      %v3672 = vsel %vm1402, %v3670, %v3671
      %v3673 = vrot.slane %v3572, 2
      %v3674 = vsel %vm1402, %v3671, %v3673
      %v3675 = vrot.slane %v3573, 2
      %v3676 = vrot.slane %v3574, 2
      %v3677 = vsel %vm1402, %v3675, %v3676
      %v3678 = vrot.slane %v3575, 2
      %v3679 = vsel %vm1402, %v3676, %v3678
      %v3680 = vrot.slane %v3576, 2
      %v3681 = vrot.slane %v3577, 2
      %v3682 = vsel %vm1402, %v3680, %v3681
      %v3683 = vrot.slane %v3578, 2
      %v3684 = vsel %vm1402, %v3681, %v3683
      %v3685 = vrot.slane %v3579, 2
      %v3686 = vrot.slane %v3580, 2
      %v3687 = vsel %vm1402, %v3685, %v3686
      %v3688 = vrot.slane %v3581, 2
      %v3689 = vsel %vm1402, %v3686, %v3688
      %v3690 = vrot.slane %v3582, 2
      %v3691 = vrot.slane %v3583, 2
      %v3692 = vsel %vm1402, %v3690, %v3691
      %v3693 = vrot.slane %v3584, 2
      %v3694 = vsel %vm1402, %v3691, %v3693
      %v3695 = vrot.slane %v3585, 2
      %v3696 = vrot.slane %v3586, 2
      %v3697 = vsel %vm1402, %v3695, %v3696
      %v3698 = vrot.slane %v3587, 2
      %v3699 = vsel %vm1402, %v3696, %v3698
      %v3700 = vrot.slane %v3588, 2
      %v3701 = vrot.slane %v3589, 2
      %v3702 = vsel %vm1402, %v3700, %v3701
      %v3703 = vrot.slane %v3590, 2
      %v3704 = vsel %vm1402, %v3701, %v3703
      %v3705 = vrot.slane %v3591, 2
      %v3706 = vrot.slane %v3592, 2
      %v3707 = vsel %vm1402, %v3705, %v3706
      %v3708 = vrot.slane %v3593, 2
      %v3709 = vsel %vm1402, %v3706, %v3708
      %v3710 = vrot.slane %v3594, 2
      %v3711 = vrot.slane %v3595, 2
      %v3712 = vsel %vm1402, %v3710, %v3711
      %v3713 = vrot.slane %v3596, 2
      %v3714 = vsel %vm1402, %v3711, %v3713
      %v3715 = vrot.slane %v3597, 2
      %v3716 = vrot.slane %v3598, 2
      %v3717 = vsel %vm1402, %v3715, %v3716
      %v3718 = vrot.slane %v3599, 2
      %v3719 = vsel %vm1402, %v3716, %v3718
      %v3750 = vadd.f32 %v3521, %v3647
      %v3751 = vadd.f32 %v3522, %v3649
      %v3752 = vadd.f32 %v3523, %v3652
      %v3753 = vadd.f32 %v3524, %v3654
      %v3754 = vadd.f32 %v3525, %v3657
      %v3755 = vadd.f32 %v3526, %v3659
      %v3756 = vadd.f32 %v3527, %v3662
      %v3757 = vadd.f32 %v3528, %v3664
      %v3758 = vadd.f32 %v3529, %v3667
      %v3759 = vadd.f32 %v3530, %v3669
      %v3760 = vadd.f32 %v3531, %v3672
      %v3761 = vadd.f32 %v3532, %v3674
      %v3762 = vadd.f32 %v3533, %v3677
      %v3763 = vadd.f32 %v3534, %v3679
      %v3764 = vadd.f32 %v3535, %v3682
      %v3765 = vadd.f32 %v3536, %v3684
      %v3766 = vadd.f32 %v3537, %v3687
      %v3767 = vadd.f32 %v3538, %v3689
      %v3768 = vadd.f32 %v3539, %v3692
      %v3769 = vadd.f32 %v3540, %v3694
      %v3770 = vadd.f32 %v3541, %v3697
      %v3771 = vadd.f32 %v3542, %v3699
      %v3772 = vadd.f32 %v3543, %v3702
      %v3773 = vadd.f32 %v3544, %v3704
      %v3774 = vadd.f32 %v3545, %v3707
      %v3775 = vadd.f32 %v3546, %v3709
      %v3776 = vadd.f32 %v3547, %v3712
      %v3777 = vadd.f32 %v3548, %v3714
      %v3778 = vadd.f32 %v3549, %v3717
      %v3779 = vadd.f32 %v3550, %v3719
      %v3780 = vlaneseq
      %v3781 = vshrl.u32 %v3780, 7
      %v3782 = vsub.s32 3, %v3781
      %v3783 = vrot.slane %v3254, %v3782
      %v3784 = vmul.f32 %v3220, %v3783
      %v3785 = vmul.f32 %v3121, %v3783
      %v3786 = vmul.f32 %v3237, %v3783
      %v3787 = vmul.f32 %v3221, %v3783
      %v3788 = vmul.f32 %v3124, %v3783
      %v3789 = vmul.f32 %v3238, %v3783
      %v3790 = vmul.f32 %v3222, %v3783
      %v3791 = vmul.f32 %v3127, %v3783
      %v3792 = vmul.f32 %v3239, %v3783
      %v3793 = vmul.f32 %v3223, %v3783
      %v3794 = vmul.f32 %v3130, %v3783
      %v3795 = vmul.f32 %v3240, %v3783
      %v3796 = vmul.f32 %v3224, %v3783
      %v3797 = vmul.f32 %v3133, %v3783
      %v3798 = vmul.f32 %v3241, %v3783
      %v3799 = vmul.f32 %v3225, %v3783
      %v3800 = vmul.f32 %v3136, %v3783
      %v3801 = vmul.f32 %v3242, %v3783
      %v3802 = vmul.f32 %v3226, %v3783
      %v3803 = vmul.f32 %v3139, %v3783
      %v3804 = vmul.f32 %v3243, %v3783
      %v3805 = vmul.f32 %v3227, %v3783
      %v3806 = vmul.f32 %v3142, %v3783
      %v3807 = vmul.f32 %v3244, %v3783
      %v3808 = vmul.f32 %v3228, %v3783
      %v3809 = vmul.f32 %v3145, %v3783
      %v3810 = vmul.f32 %v3245, %v3783
      %v3811 = vmul.f32 %v3229, %v3783
      %v3812 = vmul.f32 %v3148, %v3783
      %v3813 = vmul.f32 %v3246, %v3783
      %v3814 = vmul.f32 %v3230, %v3783
      %v3815 = vmul.f32 %v3151, %v3783
      %v3816 = vmul.f32 %v3247, %v3783
      %v3817 = vmul.f32 %v3231, %v3783
      %v3818 = vmul.f32 %v3154, %v3783
      %v3819 = vmul.f32 %v3248, %v3783
      %v3820 = vmul.f32 %v3232, %v3783
      %v3821 = vmul.f32 %v3157, %v3783
      %v3822 = vmul.f32 %v3249, %v3783
      %v3823 = vmul.f32 %v3233, %v3783
      %v3824 = vmul.f32 %v3160, %v3783
      %v3825 = vmul.f32 %v3250, %v3783
      %v3826 = vmul.f32 %v3234, %v3783
      %v3827 = vmul.f32 %v3163, %v3783
      %v3828 = vmul.f32 %v3251, %v3783
      %vm3874 = vcmask 1044480
      %v3875 = vrot.slane %v3784, 3
      %v3876 = vrot.slane %v3785, 3
      %v3877 = vsel %vm3874, %v3875, %v3876
      %v3878 = vrot.slane %v3786, 3
      %v3879 = vsel %vm3874, %v3876, %v3878
      %v3880 = vrot.slane %v3787, 3
      %v3881 = vrot.slane %v3788, 3
      %v3882 = vsel %vm3874, %v3880, %v3881
      %v3883 = vrot.slane %v3789, 3
      %v3884 = vsel %vm3874, %v3881, %v3883
      %v3885 = vrot.slane %v3790, 3
      %v3886 = vrot.slane %v3791, 3
      %v3887 = vsel %vm3874, %v3885, %v3886
      %v3888 = vrot.slane %v3792, 3
      %v3889 = vsel %vm3874, %v3886, %v3888
      %v3890 = vrot.slane %v3793, 3
      %v3891 = vrot.slane %v3794, 3
      %v3892 = vsel %vm3874, %v3890, %v3891
      %v3893 = vrot.slane %v3795, 3
      %v3894 = vsel %vm3874, %v3891, %v3893
      %v3895 = vrot.slane %v3796, 3
      %v3896 = vrot.slane %v3797, 3
      %v3897 = vsel %vm3874, %v3895, %v3896
      %v3898 = vrot.slane %v3798, 3
      %v3899 = vsel %vm3874, %v3896, %v3898
      %v3900 = vrot.slane %v3799, 3
      %v3901 = vrot.slane %v3800, 3
      %v3902 = vsel %vm3874, %v3900, %v3901
      %v3903 = vrot.slane %v3801, 3
      %v3904 = vsel %vm3874, %v3901, %v3903
      %v3905 = vrot.slane %v3802, 3
      %v3906 = vrot.slane %v3803, 3
      %v3907 = vsel %vm3874, %v3905, %v3906
      %v3908 = vrot.slane %v3804, 3
      %v3909 = vsel %vm3874, %v3906, %v3908
      %v3910 = vrot.slane %v3805, 3
      %v3911 = vrot.slane %v3806, 3
      %v3912 = vsel %vm3874, %v3910, %v3911
      %v3913 = vrot.slane %v3807, 3
      %v3914 = vsel %vm3874, %v3911, %v3913
      %v3915 = vrot.slane %v3808, 3
      %v3916 = vrot.slane %v3809, 3
      %v3917 = vsel %vm3874, %v3915, %v3916
      %v3918 = vrot.slane %v3810, 3
      %v3919 = vsel %vm3874, %v3916, %v3918
      %v3920 = vrot.slane %v3811, 3
      %v3921 = vrot.slane %v3812, 3
      %v3922 = vsel %vm3874, %v3920, %v3921
      %v3923 = vrot.slane %v3813, 3
      %v3924 = vsel %vm3874, %v3921, %v3923
      %v3925 = vrot.slane %v3814, 3
      %v3926 = vrot.slane %v3815, 3
      %v3927 = vsel %vm3874, %v3925, %v3926
      %v3928 = vrot.slane %v3816, 3
      %v3929 = vsel %vm3874, %v3926, %v3928
      %v3930 = vrot.slane %v3817, 3
      %v3931 = vrot.slane %v3818, 3
      %v3932 = vsel %vm3874, %v3930, %v3931
      %v3933 = vrot.slane %v3819, 3
      %v3934 = vsel %vm3874, %v3931, %v3933
      %v3935 = vrot.slane %v3820, 3
      %v3936 = vrot.slane %v3821, 3
      %v3937 = vsel %vm3874, %v3935, %v3936
      %v3938 = vrot.slane %v3822, 3
      %v3939 = vsel %vm3874, %v3936, %v3938
      %v3940 = vrot.slane %v3823, 3
      %v3941 = vrot.slane %v3824, 3
      %v3942 = vsel %vm3874, %v3940, %v3941
      %v3943 = vrot.slane %v3825, 3
      %v3944 = vsel %vm3874, %v3941, %v3943
      %v3945 = vrot.slane %v3826, 3
      %v3946 = vrot.slane %v3827, 3
      %v3947 = vsel %vm3874, %v3945, %v3946
      %v3948 = vrot.slane %v3828, 3
      %v3949 = vsel %vm3874, %v3946, %v3948
      %v3980 = vadd.f32 %v3750, %v3877
      %v3981 = vadd.f32 %v3751, %v3879
      %v3982 = vadd.f32 %v3752, %v3882
      %v3983 = vadd.f32 %v3753, %v3884
      %v3984 = vadd.f32 %v3754, %v3887
      %v3985 = vadd.f32 %v3755, %v3889
      %v3986 = vadd.f32 %v3756, %v3892
      %v3987 = vadd.f32 %v3757, %v3894
      %v3988 = vadd.f32 %v3758, %v3897
      %v3989 = vadd.f32 %v3759, %v3899
      %v3990 = vadd.f32 %v3760, %v3902
      %v3991 = vadd.f32 %v3761, %v3904
      %v3992 = vadd.f32 %v3762, %v3907
      %v3993 = vadd.f32 %v3763, %v3909
      %v3994 = vadd.f32 %v3764, %v3912
      %v3995 = vadd.f32 %v3765, %v3914
      %v3996 = vadd.f32 %v3766, %v3917
      %v3997 = vadd.f32 %v3767, %v3919
      %v3998 = vadd.f32 %v3768, %v3922
      %v3999 = vadd.f32 %v3769, %v3924
      %v4000 = vadd.f32 %v3770, %v3927
      %v4001 = vadd.f32 %v3771, %v3929
      %v4002 = vadd.f32 %v3772, %v3932
      %v4003 = vadd.f32 %v3773, %v3934
      %v4004 = vadd.f32 %v3774, %v3937
      %v4005 = vadd.f32 %v3775, %v3939
      %v4006 = vadd.f32 %v3776, %v3942
      %v4007 = vadd.f32 %v3777, %v3944
      %v4008 = vadd.f32 %v3778, %v3947
      %v4009 = vadd.f32 %v3779, %v3949
      %v4010 = vlaneseq
      %v4011 = vshrl.u32 %v4010, 7
      %v4012 = vsub.s32 4, %v4011
      %v4013 = vrot.slane %v3254, %v4012
      %v4014 = vmul.f32 %v3220, %v4013
      %v4015 = vmul.f32 %v3121, %v4013
      %v4016 = vmul.f32 %v3237, %v4013
      %v4017 = vmul.f32 %v3221, %v4013
      %v4018 = vmul.f32 %v3124, %v4013
      %v4019 = vmul.f32 %v3238, %v4013
      %v4020 = vmul.f32 %v3222, %v4013
      %v4021 = vmul.f32 %v3127, %v4013
      %v4022 = vmul.f32 %v3239, %v4013
      %v4023 = vmul.f32 %v3223, %v4013
      %v4024 = vmul.f32 %v3130, %v4013
      %v4025 = vmul.f32 %v3240, %v4013
      %v4026 = vmul.f32 %v3224, %v4013
      %v4027 = vmul.f32 %v3133, %v4013
      %v4028 = vmul.f32 %v3241, %v4013
      %v4029 = vmul.f32 %v3225, %v4013
      %v4030 = vmul.f32 %v3136, %v4013
      %v4031 = vmul.f32 %v3242, %v4013
      %v4032 = vmul.f32 %v3226, %v4013
      %v4033 = vmul.f32 %v3139, %v4013
      %v4034 = vmul.f32 %v3243, %v4013
      %v4035 = vmul.f32 %v3227, %v4013
      %v4036 = vmul.f32 %v3142, %v4013
      %v4037 = vmul.f32 %v3244, %v4013
      %v4038 = vmul.f32 %v3228, %v4013
      %v4039 = vmul.f32 %v3145, %v4013
      %v4040 = vmul.f32 %v3245, %v4013
      %v4041 = vmul.f32 %v3229, %v4013
      %v4042 = vmul.f32 %v3148, %v4013
      %v4043 = vmul.f32 %v3246, %v4013
      %v4044 = vmul.f32 %v3230, %v4013
      %v4045 = vmul.f32 %v3151, %v4013
      %v4046 = vmul.f32 %v3247, %v4013
      %v4047 = vmul.f32 %v3231, %v4013
      %v4048 = vmul.f32 %v3154, %v4013
      %v4049 = vmul.f32 %v3248, %v4013
      %v4050 = vmul.f32 %v3232, %v4013
      %v4051 = vmul.f32 %v3157, %v4013
      %v4052 = vmul.f32 %v3249, %v4013
      %v4053 = vmul.f32 %v3233, %v4013
      %v4054 = vmul.f32 %v3160, %v4013
      %v4055 = vmul.f32 %v3250, %v4013
      %v4056 = vmul.f32 %v3234, %v4013
      %v4057 = vmul.f32 %v3163, %v4013
      %v4058 = vmul.f32 %v3251, %v4013
      %v4104 = vrot.slane %v4014, 4
      %v4105 = vrot.slane %v4015, 4
      %v4106 = vsel %vm605, %v4104, %v4105
      %v4107 = vrot.slane %v4016, 4
      %v4108 = vsel %vm605, %v4105, %v4107
      %v4109 = vrot.slane %v4017, 4
      %v4110 = vrot.slane %v4018, 4
      %v4111 = vsel %vm605, %v4109, %v4110
      %v4112 = vrot.slane %v4019, 4
      %v4113 = vsel %vm605, %v4110, %v4112
      %v4114 = vrot.slane %v4020, 4
      %v4115 = vrot.slane %v4021, 4
      %v4116 = vsel %vm605, %v4114, %v4115
      %v4117 = vrot.slane %v4022, 4
      %v4118 = vsel %vm605, %v4115, %v4117
      %v4119 = vrot.slane %v4023, 4
      %v4120 = vrot.slane %v4024, 4
      %v4121 = vsel %vm605, %v4119, %v4120
      %v4122 = vrot.slane %v4025, 4
      %v4123 = vsel %vm605, %v4120, %v4122
      %v4124 = vrot.slane %v4026, 4
      %v4125 = vrot.slane %v4027, 4
      %v4126 = vsel %vm605, %v4124, %v4125
      %v4127 = vrot.slane %v4028, 4
      %v4128 = vsel %vm605, %v4125, %v4127
      %v4129 = vrot.slane %v4029, 4
      %v4130 = vrot.slane %v4030, 4
      %v4131 = vsel %vm605, %v4129, %v4130
      %v4132 = vrot.slane %v4031, 4
      %v4133 = vsel %vm605, %v4130, %v4132
      %v4134 = vrot.slane %v4032, 4
      %v4135 = vrot.slane %v4033, 4
      %v4136 = vsel %vm605, %v4134, %v4135
      %v4137 = vrot.slane %v4034, 4
      %v4138 = vsel %vm605, %v4135, %v4137
      %v4139 = vrot.slane %v4035, 4
      %v4140 = vrot.slane %v4036, 4
      %v4141 = vsel %vm605, %v4139, %v4140
      %v4142 = vrot.slane %v4037, 4
      %v4143 = vsel %vm605, %v4140, %v4142
      %v4144 = vrot.slane %v4038, 4
      %v4145 = vrot.slane %v4039, 4
      %v4146 = vsel %vm605, %v4144, %v4145
      %v4147 = vrot.slane %v4040, 4
      %v4148 = vsel %vm605, %v4145, %v4147
      %v4149 = vrot.slane %v4041, 4
      %v4150 = vrot.slane %v4042, 4
      %v4151 = vsel %vm605, %v4149, %v4150
      %v4152 = vrot.slane %v4043, 4
      %v4153 = vsel %vm605, %v4150, %v4152
      %v4154 = vrot.slane %v4044, 4
      %v4155 = vrot.slane %v4045, 4
      %v4156 = vsel %vm605, %v4154, %v4155
      %v4157 = vrot.slane %v4046, 4
      %v4158 = vsel %vm605, %v4155, %v4157
      %v4159 = vrot.slane %v4047, 4
      %v4160 = vrot.slane %v4048, 4
      %v4161 = vsel %vm605, %v4159, %v4160
      %v4162 = vrot.slane %v4049, 4
      %v4163 = vsel %vm605, %v4160, %v4162
      %v4164 = vrot.slane %v4050, 4
      %v4165 = vrot.slane %v4051, 4
      %v4166 = vsel %vm605, %v4164, %v4165
      %v4167 = vrot.slane %v4052, 4
      %v4168 = vsel %vm605, %v4165, %v4167
      %v4169 = vrot.slane %v4053, 4
      %v4170 = vrot.slane %v4054, 4
      %v4171 = vsel %vm605, %v4169, %v4170
      %v4172 = vrot.slane %v4055, 4
      %v4173 = vsel %vm605, %v4170, %v4172
      %v4174 = vrot.slane %v4056, 4
      %v4175 = vrot.slane %v4057, 4
      %v4176 = vsel %vm605, %v4174, %v4175
      %v4177 = vrot.slane %v4058, 4
      %v4178 = vsel %vm605, %v4175, %v4177
      %v4209 = vadd.f32 %v3980, %v4106
      %v4210 = vadd.f32 %v3981, %v4108
      %v4211 = vadd.f32 %v3982, %v4111
      %v4212 = vadd.f32 %v3983, %v4113
      %v4213 = vadd.f32 %v3984, %v4116
      %v4214 = vadd.f32 %v3985, %v4118
      %v4215 = vadd.f32 %v3986, %v4121
      %v4216 = vadd.f32 %v3987, %v4123
      %v4217 = vadd.f32 %v3988, %v4126
      %v4218 = vadd.f32 %v3989, %v4128
      %v4219 = vadd.f32 %v3990, %v4131
      %v4220 = vadd.f32 %v3991, %v4133
      %v4221 = vadd.f32 %v3992, %v4136
      %v4222 = vadd.f32 %v3993, %v4138
      %v4223 = vadd.f32 %v3994, %v4141
      %v4224 = vadd.f32 %v3995, %v4143
      %v4225 = vadd.f32 %v3996, %v4146
      %v4226 = vadd.f32 %v3997, %v4148
      %v4227 = vadd.f32 %v3998, %v4151
      %v4228 = vadd.f32 %v3999, %v4153
      %v4229 = vadd.f32 %v4000, %v4156
      %v4230 = vadd.f32 %v4001, %v4158
      %v4231 = vadd.f32 %v4002, %v4161
      %v4232 = vadd.f32 %v4003, %v4163
      %v4233 = vadd.f32 %v4004, %v4166
      %v4234 = vadd.f32 %v4005, %v4168
      %v4235 = vadd.f32 %v4006, %v4171
      %v4236 = vadd.f32 %v4007, %v4173
      %v4237 = vadd.f32 %v4008, %v4176
      %v4238 = vadd.f32 %v4009, %v4178
      %v4239 = vlaneseq
      %v4240 = vshrl.u32 %v4239, 7
      %v4241 = vsub.s32 5, %v4240
      %v4242 = vrot.slane %v3254, %v4241
      %v4243 = vmul.f32 %v3220, %v4242
      %v4244 = vmul.f32 %v3121, %v4242
      %v4245 = vmul.f32 %v3221, %v4242
      %v4246 = vmul.f32 %v3124, %v4242
      %v4247 = vmul.f32 %v3222, %v4242
      %v4248 = vmul.f32 %v3127, %v4242
      %v4249 = vmul.f32 %v3223, %v4242
      %v4250 = vmul.f32 %v3130, %v4242
      %v4251 = vmul.f32 %v3224, %v4242
      %v4252 = vmul.f32 %v3133, %v4242
      %v4253 = vmul.f32 %v3225, %v4242
      %v4254 = vmul.f32 %v3136, %v4242
      %v4255 = vmul.f32 %v3226, %v4242
      %v4256 = vmul.f32 %v3139, %v4242
      %v4257 = vmul.f32 %v3227, %v4242
      %v4258 = vmul.f32 %v3142, %v4242
      %v4259 = vmul.f32 %v3228, %v4242
      %v4260 = vmul.f32 %v3145, %v4242
      %v4261 = vmul.f32 %v3229, %v4242
      %v4262 = vmul.f32 %v3148, %v4242
      %v4263 = vmul.f32 %v3230, %v4242
      %v4264 = vmul.f32 %v3151, %v4242
      %v4265 = vmul.f32 %v3231, %v4242
      %v4266 = vmul.f32 %v3154, %v4242
      %v4267 = vmul.f32 %v3232, %v4242
      %v4268 = vmul.f32 %v3157, %v4242
      %v4269 = vmul.f32 %v3233, %v4242
      %v4270 = vmul.f32 %v3160, %v4242
      %v4271 = vmul.f32 %v3234, %v4242
      %v4272 = vmul.f32 %v3163, %v4242
      %v4273 = vmul.f32 %v3235, %v4242
      %v4274 = vmul.f32 %v3166, %v4242
      %v4275 = vadd.f32 %v4209, %v4243
      %v4276 = vadd.f32 %v4210, %v4244
      %v4277 = vadd.f32 %v4209, %v4245
      %v4278 = vadd.f32 %v4210, %v4246
      %v4279 = vadd.f32 %v4211, %v4247
      %v4280 = vadd.f32 %v4212, %v4248
      %v4281 = vadd.f32 %v4213, %v4249
      %v4282 = vadd.f32 %v4214, %v4250
      %v4283 = vadd.f32 %v4215, %v4251
      %v4284 = vadd.f32 %v4216, %v4252
      %v4285 = vadd.f32 %v4217, %v4253
      %v4286 = vadd.f32 %v4218, %v4254
      %v4287 = vadd.f32 %v4219, %v4255
      %v4288 = vadd.f32 %v4220, %v4256
      %v4289 = vadd.f32 %v4221, %v4257
      %v4290 = vadd.f32 %v4222, %v4258
      %v4291 = vadd.f32 %v4223, %v4259
      %v4292 = vadd.f32 %v4224, %v4260
      %v4293 = vadd.f32 %v4225, %v4261
      %v4294 = vadd.f32 %v4226, %v4262
      %v4295 = vadd.f32 %v4227, %v4263
      %v4296 = vadd.f32 %v4228, %v4264
      %v4297 = vadd.f32 %v4229, %v4265
      %v4298 = vadd.f32 %v4230, %v4266
      %v4299 = vadd.f32 %v4231, %v4267
      %v4300 = vadd.f32 %v4232, %v4268
      %v4301 = vadd.f32 %v4233, %v4269
      %v4302 = vadd.f32 %v4234, %v4270
      %v4303 = vadd.f32 %v4235, %v4271
      %v4304 = vadd.f32 %v4236, %v4272
      %v4305 = vadd.f32 %v4237, %v4273
      %v4306 = vadd.f32 %v4238, %v4274
      %v4307 = vlaneseq
      %v4308 = vshrl.u32 %v4307, 7
      %v4309 = vsub.s32 6, %v4308
      %v4310 = vrot.slane %v3254, %v4309
      %v4311 = vmul.f32 %v3220, %v4310
      %v4312 = vmul.f32 %v3121, %v4310
      %v4313 = vmul.f32 %v3237, %v4310
      %v4314 = vmul.f32 %v3221, %v4310
      %v4315 = vmul.f32 %v3124, %v4310
      %v4316 = vmul.f32 %v3238, %v4310
      %v4317 = vmul.f32 %v3222, %v4310
      %v4318 = vmul.f32 %v3127, %v4310
      %v4319 = vmul.f32 %v3239, %v4310
      %v4320 = vmul.f32 %v3223, %v4310
      %v4321 = vmul.f32 %v3130, %v4310
      %v4322 = vmul.f32 %v3240, %v4310
      %v4323 = vmul.f32 %v3224, %v4310
      %v4324 = vmul.f32 %v3133, %v4310
      %v4325 = vmul.f32 %v3241, %v4310
      %v4326 = vmul.f32 %v3225, %v4310
      %v4327 = vmul.f32 %v3136, %v4310
      %v4328 = vmul.f32 %v3242, %v4310
      %v4329 = vmul.f32 %v3226, %v4310
      %v4330 = vmul.f32 %v3139, %v4310
      %v4331 = vmul.f32 %v3243, %v4310
      %v4332 = vmul.f32 %v3227, %v4310
      %v4333 = vmul.f32 %v3142, %v4310
      %v4334 = vmul.f32 %v3244, %v4310
      %v4335 = vmul.f32 %v3228, %v4310
      %v4336 = vmul.f32 %v3145, %v4310
      %v4337 = vmul.f32 %v3245, %v4310
      %v4338 = vmul.f32 %v3229, %v4310
      %v4339 = vmul.f32 %v3148, %v4310
      %v4340 = vmul.f32 %v3246, %v4310
      %v4341 = vmul.f32 %v3230, %v4310
      %v4342 = vmul.f32 %v3151, %v4310
      %v4343 = vmul.f32 %v3247, %v4310
      %v4344 = vmul.f32 %v3231, %v4310
      %v4345 = vmul.f32 %v3154, %v4310
      %v4346 = vmul.f32 %v3248, %v4310
      %v4347 = vmul.f32 %v3232, %v4310
      %v4348 = vmul.f32 %v3157, %v4310
      %v4349 = vmul.f32 %v3249, %v4310
      %v4350 = vmul.f32 %v3233, %v4310
      %v4351 = vmul.f32 %v3160, %v4310
      %v4352 = vmul.f32 %v3250, %v4310
      %v4353 = vmul.f32 %v3234, %v4310
      %v4354 = vmul.f32 %v3163, %v4310
      %v4355 = vmul.f32 %v3251, %v4310
      %v4356 = vmul.f32 %v3235, %v4310
      %v4357 = vmul.f32 %v3166, %v4310
      %v4358 = vmul.f32 %v3252, %v4310
      %v4407 = vrot.slane %v4311, 1
      %v4408 = vrot.slane %v4312, 1
      %v4409 = vsel %vm1321, %v4407, %v4408
      %v4410 = vrot.slane %v4313, 1
      %v4411 = vsel %vm1321, %v4408, %v4410
      %v4412 = vrot.slane %v4314, 1
      %v4413 = vrot.slane %v4315, 1
      %v4414 = vsel %vm1321, %v4412, %v4413
      %v4415 = vrot.slane %v4316, 1
      %v4416 = vsel %vm1321, %v4413, %v4415
      %v4417 = vrot.slane %v4317, 1
      %v4418 = vrot.slane %v4318, 1
      %v4419 = vsel %vm1321, %v4417, %v4418
      %v4420 = vrot.slane %v4319, 1
      %v4421 = vsel %vm1321, %v4418, %v4420
      %v4422 = vrot.slane %v4320, 1
      %v4423 = vrot.slane %v4321, 1
      %v4424 = vsel %vm1321, %v4422, %v4423
      %v4425 = vrot.slane %v4322, 1
      %v4426 = vsel %vm1321, %v4423, %v4425
      %v4427 = vrot.slane %v4323, 1
      %v4428 = vrot.slane %v4324, 1
      %v4429 = vsel %vm1321, %v4427, %v4428
      %v4430 = vrot.slane %v4325, 1
      %v4431 = vsel %vm1321, %v4428, %v4430
      %v4432 = vrot.slane %v4326, 1
      %v4433 = vrot.slane %v4327, 1
      %v4434 = vsel %vm1321, %v4432, %v4433
      %v4435 = vrot.slane %v4328, 1
      %v4436 = vsel %vm1321, %v4433, %v4435
      %v4437 = vrot.slane %v4329, 1
      %v4438 = vrot.slane %v4330, 1
      %v4439 = vsel %vm1321, %v4437, %v4438
      %v4440 = vrot.slane %v4331, 1
      %v4441 = vsel %vm1321, %v4438, %v4440
      %v4442 = vrot.slane %v4332, 1
      %v4443 = vrot.slane %v4333, 1
      %v4444 = vsel %vm1321, %v4442, %v4443
      %v4445 = vrot.slane %v4334, 1
      %v4446 = vsel %vm1321, %v4443, %v4445
      %v4447 = vrot.slane %v4335, 1
      %v4448 = vrot.slane %v4336, 1
      %v4449 = vsel %vm1321, %v4447, %v4448
      %v4450 = vrot.slane %v4337, 1
      %v4451 = vsel %vm1321, %v4448, %v4450
      %v4452 = vrot.slane %v4338, 1
      %v4453 = vrot.slane %v4339, 1
      %v4454 = vsel %vm1321, %v4452, %v4453
      %v4455 = vrot.slane %v4340, 1
      %v4456 = vsel %vm1321, %v4453, %v4455
      %v4457 = vrot.slane %v4341, 1
      %v4458 = vrot.slane %v4342, 1
      %v4459 = vsel %vm1321, %v4457, %v4458
      %v4460 = vrot.slane %v4343, 1
      %v4461 = vsel %vm1321, %v4458, %v4460
      %v4462 = vrot.slane %v4344, 1
      %v4463 = vrot.slane %v4345, 1
      %v4464 = vsel %vm1321, %v4462, %v4463
      %v4465 = vrot.slane %v4346, 1
      %v4466 = vsel %vm1321, %v4463, %v4465
      %v4467 = vrot.slane %v4347, 1
      %v4468 = vrot.slane %v4348, 1
      %v4469 = vsel %vm1321, %v4467, %v4468
      %v4470 = vrot.slane %v4349, 1
      %v4471 = vsel %vm1321, %v4468, %v4470
      %v4472 = vrot.slane %v4350, 1
      %v4473 = vrot.slane %v4351, 1
      %v4474 = vsel %vm1321, %v4472, %v4473
      %v4475 = vrot.slane %v4352, 1
      %v4476 = vsel %vm1321, %v4473, %v4475
      %v4477 = vrot.slane %v4353, 1
      %v4478 = vrot.slane %v4354, 1
      %v4479 = vsel %vm1321, %v4477, %v4478
      %v4480 = vrot.slane %v4355, 1
      %v4481 = vsel %vm1321, %v4478, %v4480
      %v4482 = vrot.slane %v4356, 1
      %v4483 = vrot.slane %v4357, 1
      %v4484 = vsel %vm1321, %v4482, %v4483
      %v4485 = vrot.slane %v4358, 1
      %v4486 = vsel %vm1321, %v4483, %v4485
      %v4519 = vadd.f32 %v4275, %v4409
      %v4520 = vadd.f32 %v4276, %v4411
      %v4521 = vadd.f32 %v4277, %v4414
      %v4522 = vadd.f32 %v4278, %v4416
      %v4523 = vadd.f32 %v4279, %v4419
      %v4524 = vadd.f32 %v4280, %v4421
      %v4525 = vadd.f32 %v4281, %v4424
      %v4526 = vadd.f32 %v4282, %v4426
      %v4527 = vadd.f32 %v4283, %v4429
      %v4528 = vadd.f32 %v4284, %v4431
      %v4529 = vadd.f32 %v4285, %v4434
      %v4530 = vadd.f32 %v4286, %v4436
      %v4531 = vadd.f32 %v4287, %v4439
      %v4532 = vadd.f32 %v4288, %v4441
      %v4533 = vadd.f32 %v4289, %v4444
      %v4534 = vadd.f32 %v4290, %v4446
      %v4535 = vadd.f32 %v4291, %v4449
      %v4536 = vadd.f32 %v4292, %v4451
      %v4537 = vadd.f32 %v4293, %v4454
      %v4538 = vadd.f32 %v4294, %v4456
      %v4539 = vadd.f32 %v4295, %v4459
      %v4540 = vadd.f32 %v4296, %v4461
      %v4541 = vadd.f32 %v4297, %v4464
      %v4542 = vadd.f32 %v4298, %v4466
      %v4543 = vadd.f32 %v4299, %v4469
      %v4544 = vadd.f32 %v4300, %v4471
      %v4545 = vadd.f32 %v4301, %v4474
      %v4546 = vadd.f32 %v4302, %v4476
      %v4547 = vadd.f32 %v4303, %v4479
      %v4548 = vadd.f32 %v4304, %v4481
      %v4549 = vadd.f32 %v4305, %v4484
      %v4550 = vadd.f32 %v4306, %v4486
      %v4551 = vlaneseq
      %v4552 = vshrl.u32 %v4551, 7
      %v4553 = vsub.s32 7, %v4552
      %v4554 = vrot.slane %v3254, %v4553
      %v4555 = vmul.f32 %v3220, %v4554
      %v4556 = vmul.f32 %v3121, %v4554
      %v4557 = vmul.f32 %v3237, %v4554
      %v4558 = vmul.f32 %v3221, %v4554
      %v4559 = vmul.f32 %v3124, %v4554
      %v4560 = vmul.f32 %v3238, %v4554
      %v4561 = vmul.f32 %v3222, %v4554
      %v4562 = vmul.f32 %v3127, %v4554
      %v4563 = vmul.f32 %v3239, %v4554
      %v4564 = vmul.f32 %v3223, %v4554
      %v4565 = vmul.f32 %v3130, %v4554
      %v4566 = vmul.f32 %v3240, %v4554
      %v4567 = vmul.f32 %v3224, %v4554
      %v4568 = vmul.f32 %v3133, %v4554
      %v4569 = vmul.f32 %v3241, %v4554
      %v4570 = vmul.f32 %v3225, %v4554
      %v4571 = vmul.f32 %v3136, %v4554
      %v4572 = vmul.f32 %v3242, %v4554
      %v4573 = vmul.f32 %v3226, %v4554
      %v4574 = vmul.f32 %v3139, %v4554
      %v4575 = vmul.f32 %v3243, %v4554
      %v4576 = vmul.f32 %v3227, %v4554
      %v4577 = vmul.f32 %v3142, %v4554
      %v4578 = vmul.f32 %v3244, %v4554
      %v4579 = vmul.f32 %v3228, %v4554
      %v4580 = vmul.f32 %v3145, %v4554
      %v4581 = vmul.f32 %v3245, %v4554
      %v4582 = vmul.f32 %v3229, %v4554
      %v4583 = vmul.f32 %v3148, %v4554
      %v4584 = vmul.f32 %v3246, %v4554
      %v4585 = vmul.f32 %v3230, %v4554
      %v4586 = vmul.f32 %v3151, %v4554
      %v4587 = vmul.f32 %v3247, %v4554
      %v4588 = vmul.f32 %v3231, %v4554
      %v4589 = vmul.f32 %v3154, %v4554
      %v4590 = vmul.f32 %v3248, %v4554
      %v4591 = vmul.f32 %v3232, %v4554
      %v4592 = vmul.f32 %v3157, %v4554
      %v4593 = vmul.f32 %v3249, %v4554
      %v4594 = vmul.f32 %v3233, %v4554
      %v4595 = vmul.f32 %v3160, %v4554
      %v4596 = vmul.f32 %v3250, %v4554
      %v4597 = vmul.f32 %v3234, %v4554
      %v4598 = vmul.f32 %v3163, %v4554
      %v4599 = vmul.f32 %v3251, %v4554
      %v4600 = vmul.f32 %v3235, %v4554
      %v4601 = vmul.f32 %v3166, %v4554
      %v4602 = vmul.f32 %v3252, %v4554
      %v4651 = vrot.slane %v4555, 2
      %v4652 = vrot.slane %v4556, 2
      %v4653 = vsel %vm1402, %v4651, %v4652
      %v4654 = vrot.slane %v4557, 2
      %v4655 = vsel %vm1402, %v4652, %v4654
      %v4656 = vrot.slane %v4558, 2
      %v4657 = vrot.slane %v4559, 2
      %v4658 = vsel %vm1402, %v4656, %v4657
      %v4659 = vrot.slane %v4560, 2
      %v4660 = vsel %vm1402, %v4657, %v4659
      %v4661 = vrot.slane %v4561, 2
      %v4662 = vrot.slane %v4562, 2
      %v4663 = vsel %vm1402, %v4661, %v4662
      %v4664 = vrot.slane %v4563, 2
      %v4665 = vsel %vm1402, %v4662, %v4664
      %v4666 = vrot.slane %v4564, 2
      %v4667 = vrot.slane %v4565, 2
      %v4668 = vsel %vm1402, %v4666, %v4667
      %v4669 = vrot.slane %v4566, 2
      %v4670 = vsel %vm1402, %v4667, %v4669
      %v4671 = vrot.slane %v4567, 2
      %v4672 = vrot.slane %v4568, 2
      %v4673 = vsel %vm1402, %v4671, %v4672
      %v4674 = vrot.slane %v4569, 2
      %v4675 = vsel %vm1402, %v4672, %v4674
      %v4676 = vrot.slane %v4570, 2
      %v4677 = vrot.slane %v4571, 2
      %v4678 = vsel %vm1402, %v4676, %v4677
      %v4679 = vrot.slane %v4572, 2
      %v4680 = vsel %vm1402, %v4677, %v4679
      %v4681 = vrot.slane %v4573, 2
      %v4682 = vrot.slane %v4574, 2
      %v4683 = vsel %vm1402, %v4681, %v4682
      %v4684 = vrot.slane %v4575, 2
      %v4685 = vsel %vm1402, %v4682, %v4684
      %v4686 = vrot.slane %v4576, 2
      %v4687 = vrot.slane %v4577, 2
      %v4688 = vsel %vm1402, %v4686, %v4687
      %v4689 = vrot.slane %v4578, 2
      %v4690 = vsel %vm1402, %v4687, %v4689
      %v4691 = vrot.slane %v4579, 2
      %v4692 = vrot.slane %v4580, 2
      %v4693 = vsel %vm1402, %v4691, %v4692
      %v4694 = vrot.slane %v4581, 2
      %v4695 = vsel %vm1402, %v4692, %v4694
      %v4696 = vrot.slane %v4582, 2
      %v4697 = vrot.slane %v4583, 2
      %v4698 = vsel %vm1402, %v4696, %v4697
      %v4699 = vrot.slane %v4584, 2
      %v4700 = vsel %vm1402, %v4697, %v4699
      %v4701 = vrot.slane %v4585, 2
      %v4702 = vrot.slane %v4586, 2
      %v4703 = vsel %vm1402, %v4701, %v4702
      %v4704 = vrot.slane %v4587, 2
      %v4705 = vsel %vm1402, %v4702, %v4704
      %v4706 = vrot.slane %v4588, 2
      %v4707 = vrot.slane %v4589, 2
      %v4708 = vsel %vm1402, %v4706, %v4707
      %v4709 = vrot.slane %v4590, 2
      %v4710 = vsel %vm1402, %v4707, %v4709
      %v4711 = vrot.slane %v4591, 2
      %v4712 = vrot.slane %v4592, 2
      %v4713 = vsel %vm1402, %v4711, %v4712
      %v4714 = vrot.slane %v4593, 2
      %v4715 = vsel %vm1402, %v4712, %v4714
      %v4716 = vrot.slane %v4594, 2
      %v4717 = vrot.slane %v4595, 2
      %v4718 = vsel %vm1402, %v4716, %v4717
      %v4719 = vrot.slane %v4596, 2
      %v4720 = vsel %vm1402, %v4717, %v4719
      %v4721 = vrot.slane %v4597, 2
      %v4722 = vrot.slane %v4598, 2
      %v4723 = vsel %vm1402, %v4721, %v4722
      %v4724 = vrot.slane %v4599, 2
      %v4725 = vsel %vm1402, %v4722, %v4724
      %v4726 = vrot.slane %v4600, 2
      %v4727 = vrot.slane %v4601, 2
      %v4728 = vsel %vm1402, %v4726, %v4727
      %v4729 = vrot.slane %v4602, 2
      %v4730 = vsel %vm1402, %v4727, %v4729
      %v4763 = vadd.f32 %v4519, %v4653
      %v4764 = vadd.f32 %v4520, %v4655
      %v4765 = vadd.f32 %v4521, %v4658
      %v4766 = vadd.f32 %v4522, %v4660
      %v4767 = vadd.f32 %v4523, %v4663
      %v4768 = vadd.f32 %v4524, %v4665
      %v4769 = vadd.f32 %v4525, %v4668
      %v4770 = vadd.f32 %v4526, %v4670
      %v4771 = vadd.f32 %v4527, %v4673
      %v4772 = vadd.f32 %v4528, %v4675
      %v4773 = vadd.f32 %v4529, %v4678
      %v4774 = vadd.f32 %v4530, %v4680
      %v4775 = vadd.f32 %v4531, %v4683
      %v4776 = vadd.f32 %v4532, %v4685
      %v4777 = vadd.f32 %v4533, %v4688
      %v4778 = vadd.f32 %v4534, %v4690
      %v4779 = vadd.f32 %v4535, %v4693
      %v4780 = vadd.f32 %v4536, %v4695
      %v4781 = vadd.f32 %v4537, %v4698
      %v4782 = vadd.f32 %v4538, %v4700
      %v4783 = vadd.f32 %v4539, %v4703
      %v4784 = vadd.f32 %v4540, %v4705
      %v4785 = vadd.f32 %v4541, %v4708
      %v4786 = vadd.f32 %v4542, %v4710
      %v4787 = vadd.f32 %v4543, %v4713
      %v4788 = vadd.f32 %v4544, %v4715
      %v4789 = vadd.f32 %v4545, %v4718
      %v4790 = vadd.f32 %v4546, %v4720
      %v4791 = vadd.f32 %v4547, %v4723
      %v4792 = vadd.f32 %v4548, %v4725
      %v4793 = vadd.f32 %v4549, %v4728
      %v4794 = vadd.f32 %v4550, %v4730
      %v4795 = vlaneseq
      %v4796 = vshrl.u32 %v4795, 7
      %v4797 = vsub.s32 0, %v4796
      %v4798 = vrot.slane %v3255, %v4797
      %v4799 = vmul.f32 %v3220, %v4798
      %v4800 = vmul.f32 %v3121, %v4798
      %v4801 = vmul.f32 %v3237, %v4798
      %v4802 = vmul.f32 %v3221, %v4798
      %v4803 = vmul.f32 %v3124, %v4798
      %v4804 = vmul.f32 %v3238, %v4798
      %v4805 = vmul.f32 %v3222, %v4798
      %v4806 = vmul.f32 %v3127, %v4798
      %v4807 = vmul.f32 %v3239, %v4798
      %v4808 = vmul.f32 %v3223, %v4798
      %v4809 = vmul.f32 %v3130, %v4798
      %v4810 = vmul.f32 %v3240, %v4798
      %v4811 = vmul.f32 %v3224, %v4798
      %v4812 = vmul.f32 %v3133, %v4798
      %v4813 = vmul.f32 %v3241, %v4798
      %v4814 = vmul.f32 %v3225, %v4798
      %v4815 = vmul.f32 %v3136, %v4798
      %v4816 = vmul.f32 %v3242, %v4798
      %v4817 = vmul.f32 %v3226, %v4798
      %v4818 = vmul.f32 %v3139, %v4798
      %v4819 = vmul.f32 %v3243, %v4798
      %v4820 = vmul.f32 %v3227, %v4798
      %v4821 = vmul.f32 %v3142, %v4798
      %v4822 = vmul.f32 %v3244, %v4798
      %v4823 = vmul.f32 %v3228, %v4798
      %v4824 = vmul.f32 %v3145, %v4798
      %v4825 = vmul.f32 %v3245, %v4798
      %v4826 = vmul.f32 %v3229, %v4798
      %v4827 = vmul.f32 %v3148, %v4798
      %v4828 = vmul.f32 %v3246, %v4798
      %v4829 = vmul.f32 %v3230, %v4798
      %v4830 = vmul.f32 %v3151, %v4798
      %v4831 = vmul.f32 %v3247, %v4798
      %v4832 = vmul.f32 %v3231, %v4798
      %v4833 = vmul.f32 %v3154, %v4798
      %v4834 = vmul.f32 %v3248, %v4798
      %v4835 = vmul.f32 %v3232, %v4798
      %v4836 = vmul.f32 %v3157, %v4798
      %v4837 = vmul.f32 %v3249, %v4798
      %v4838 = vmul.f32 %v3233, %v4798
      %v4839 = vmul.f32 %v3160, %v4798
      %v4840 = vmul.f32 %v3250, %v4798
      %v4841 = vmul.f32 %v3234, %v4798
      %v4842 = vmul.f32 %v3163, %v4798
      %v4843 = vmul.f32 %v3251, %v4798
      %v4844 = vmul.f32 %v3235, %v4798
      %v4845 = vmul.f32 %v3166, %v4798
      %v4846 = vmul.f32 %v3252, %v4798
      %v4895 = vrot.slane %v4799, 3
      %v4896 = vrot.slane %v4800, 3
      %v4897 = vsel %vm3874, %v4895, %v4896
      %v4898 = vrot.slane %v4801, 3
      %v4899 = vsel %vm3874, %v4896, %v4898
      %v4900 = vrot.slane %v4802, 3
      %v4901 = vrot.slane %v4803, 3
      %v4902 = vsel %vm3874, %v4900, %v4901
      %v4903 = vrot.slane %v4804, 3
      %v4904 = vsel %vm3874, %v4901, %v4903
      %v4905 = vrot.slane %v4805, 3
      %v4906 = vrot.slane %v4806, 3
      %v4907 = vsel %vm3874, %v4905, %v4906
      %v4908 = vrot.slane %v4807, 3
      %v4909 = vsel %vm3874, %v4906, %v4908
      %v4910 = vrot.slane %v4808, 3
      %v4911 = vrot.slane %v4809, 3
      %v4912 = vsel %vm3874, %v4910, %v4911
      %v4913 = vrot.slane %v4810, 3
      %v4914 = vsel %vm3874, %v4911, %v4913
      %v4915 = vrot.slane %v4811, 3
      %v4916 = vrot.slane %v4812, 3
      %v4917 = vsel %vm3874, %v4915, %v4916
      %v4918 = vrot.slane %v4813, 3
      %v4919 = vsel %vm3874, %v4916, %v4918
      %v4920 = vrot.slane %v4814, 3
      %v4921 = vrot.slane %v4815, 3
      %v4922 = vsel %vm3874, %v4920, %v4921
      %v4923 = vrot.slane %v4816, 3
      %v4924 = vsel %vm3874, %v4921, %v4923
      %v4925 = vrot.slane %v4817, 3
      %v4926 = vrot.slane %v4818, 3
      %v4927 = vsel %vm3874, %v4925, %v4926
      %v4928 = vrot.slane %v4819, 3
      %v4929 = vsel %vm3874, %v4926, %v4928
      %v4930 = vrot.slane %v4820, 3
      %v4931 = vrot.slane %v4821, 3
      %v4932 = vsel %vm3874, %v4930, %v4931
      %v4933 = vrot.slane %v4822, 3
      %v4934 = vsel %vm3874, %v4931, %v4933
      %v4935 = vrot.slane %v4823, 3
      %v4936 = vrot.slane %v4824, 3
      %v4937 = vsel %vm3874, %v4935, %v4936
      %v4938 = vrot.slane %v4825, 3
      %v4939 = vsel %vm3874, %v4936, %v4938
      %v4940 = vrot.slane %v4826, 3
      %v4941 = vrot.slane %v4827, 3
      %v4942 = vsel %vm3874, %v4940, %v4941
      %v4943 = vrot.slane %v4828, 3
      %v4944 = vsel %vm3874, %v4941, %v4943
      %v4945 = vrot.slane %v4829, 3
      %v4946 = vrot.slane %v4830, 3
      %v4947 = vsel %vm3874, %v4945, %v4946
      %v4948 = vrot.slane %v4831, 3
      %v4949 = vsel %vm3874, %v4946, %v4948
      %v4950 = vrot.slane %v4832, 3
      %v4951 = vrot.slane %v4833, 3
      %v4952 = vsel %vm3874, %v4950, %v4951
      %v4953 = vrot.slane %v4834, 3
      %v4954 = vsel %vm3874, %v4951, %v4953
      %v4955 = vrot.slane %v4835, 3
      %v4956 = vrot.slane %v4836, 3
      %v4957 = vsel %vm3874, %v4955, %v4956
      %v4958 = vrot.slane %v4837, 3
      %v4959 = vsel %vm3874, %v4956, %v4958
      %v4960 = vrot.slane %v4838, 3
      %v4961 = vrot.slane %v4839, 3
      %v4962 = vsel %vm3874, %v4960, %v4961
      %v4963 = vrot.slane %v4840, 3
      %v4964 = vsel %vm3874, %v4961, %v4963
      %v4965 = vrot.slane %v4841, 3
      %v4966 = vrot.slane %v4842, 3
      %v4967 = vsel %vm3874, %v4965, %v4966
      %v4968 = vrot.slane %v4843, 3
      %v4969 = vsel %vm3874, %v4966, %v4968
      %v4970 = vrot.slane %v4844, 3
      %v4971 = vrot.slane %v4845, 3
      %v4972 = vsel %vm3874, %v4970, %v4971
      %v4973 = vrot.slane %v4846, 3
      %v4974 = vsel %vm3874, %v4971, %v4973
      %v5007 = vadd.f32 %v4763, %v4897
      %v5008 = vadd.f32 %v4764, %v4899
      %v5009 = vadd.f32 %v4765, %v4902
      %v5010 = vadd.f32 %v4766, %v4904
      %v5011 = vadd.f32 %v4767, %v4907
      %v5012 = vadd.f32 %v4768, %v4909
      %v5013 = vadd.f32 %v4769, %v4912
      %v5014 = vadd.f32 %v4770, %v4914
      %v5015 = vadd.f32 %v4771, %v4917
      %v5016 = vadd.f32 %v4772, %v4919
      %v5017 = vadd.f32 %v4773, %v4922
      %v5018 = vadd.f32 %v4774, %v4924
      %v5019 = vadd.f32 %v4775, %v4927
      %v5020 = vadd.f32 %v4776, %v4929
      %v5021 = vadd.f32 %v4777, %v4932
      %v5022 = vadd.f32 %v4778, %v4934
      %v5023 = vadd.f32 %v4779, %v4937
      %v5024 = vadd.f32 %v4780, %v4939
      %v5025 = vadd.f32 %v4781, %v4942
      %v5026 = vadd.f32 %v4782, %v4944
      %v5027 = vadd.f32 %v4783, %v4947
      %v5028 = vadd.f32 %v4784, %v4949
      %v5029 = vadd.f32 %v4785, %v4952
      %v5030 = vadd.f32 %v4786, %v4954
      %v5031 = vadd.f32 %v4787, %v4957
      %v5032 = vadd.f32 %v4788, %v4959
      %v5033 = vadd.f32 %v4789, %v4962
      %v5034 = vadd.f32 %v4790, %v4964
      %v5035 = vadd.f32 %v4791, %v4967
      %v5036 = vadd.f32 %v4792, %v4969
      %v5037 = vadd.f32 %v4793, %v4972
      %v5038 = vadd.f32 %v4794, %v4974
      %v5039 = vlaneseq
      %v5040 = vshrl.u32 %v5039, 7
      %v5041 = vsub.s32 1, %v5040
      %v5042 = vrot.slane %v3255, %v5041
      %v5043 = vmul.f32 %v3220, %v5042
      %v5044 = vmul.f32 %v3121, %v5042
      %v5045 = vmul.f32 %v3237, %v5042
      %v5046 = vmul.f32 %v3221, %v5042
      %v5047 = vmul.f32 %v3124, %v5042
      %v5048 = vmul.f32 %v3238, %v5042
      %v5049 = vmul.f32 %v3222, %v5042
      %v5050 = vmul.f32 %v3127, %v5042
      %v5051 = vmul.f32 %v3239, %v5042
      %v5052 = vmul.f32 %v3223, %v5042
      %v5053 = vmul.f32 %v3130, %v5042
      %v5054 = vmul.f32 %v3240, %v5042
      %v5055 = vmul.f32 %v3224, %v5042
      %v5056 = vmul.f32 %v3133, %v5042
      %v5057 = vmul.f32 %v3241, %v5042
      %v5058 = vmul.f32 %v3225, %v5042
      %v5059 = vmul.f32 %v3136, %v5042
      %v5060 = vmul.f32 %v3242, %v5042
      %v5061 = vmul.f32 %v3226, %v5042
      %v5062 = vmul.f32 %v3139, %v5042
      %v5063 = vmul.f32 %v3243, %v5042
      %v5064 = vmul.f32 %v3227, %v5042
      %v5065 = vmul.f32 %v3142, %v5042
      %v5066 = vmul.f32 %v3244, %v5042
      %v5067 = vmul.f32 %v3228, %v5042
      %v5068 = vmul.f32 %v3145, %v5042
      %v5069 = vmul.f32 %v3245, %v5042
      %v5070 = vmul.f32 %v3229, %v5042
      %v5071 = vmul.f32 %v3148, %v5042
      %v5072 = vmul.f32 %v3246, %v5042
      %v5073 = vmul.f32 %v3230, %v5042
      %v5074 = vmul.f32 %v3151, %v5042
      %v5075 = vmul.f32 %v3247, %v5042
      %v5076 = vmul.f32 %v3231, %v5042
      %v5077 = vmul.f32 %v3154, %v5042
      %v5078 = vmul.f32 %v3248, %v5042
      %v5079 = vmul.f32 %v3232, %v5042
      %v5080 = vmul.f32 %v3157, %v5042
      %v5081 = vmul.f32 %v3249, %v5042
      %v5082 = vmul.f32 %v3233, %v5042
      %v5083 = vmul.f32 %v3160, %v5042
      %v5084 = vmul.f32 %v3250, %v5042
      %v5085 = vmul.f32 %v3234, %v5042
      %v5086 = vmul.f32 %v3163, %v5042
      %v5087 = vmul.f32 %v3251, %v5042
      %v5088 = vmul.f32 %v3235, %v5042
      %v5089 = vmul.f32 %v3166, %v5042
      %v5090 = vmul.f32 %v3252, %v5042
      %v5139 = vrot.slane %v5043, 4
      %v5140 = vrot.slane %v5044, 4
      %v5141 = vsel %vm605, %v5139, %v5140
      %v5142 = vrot.slane %v5045, 4
      %v5143 = vsel %vm605, %v5140, %v5142
      %v5144 = vrot.slane %v5046, 4
      %v5145 = vrot.slane %v5047, 4
      %v5146 = vsel %vm605, %v5144, %v5145
      %v5147 = vrot.slane %v5048, 4
      %v5148 = vsel %vm605, %v5145, %v5147
      %v5149 = vrot.slane %v5049, 4
      %v5150 = vrot.slane %v5050, 4
      %v5151 = vsel %vm605, %v5149, %v5150
      %v5152 = vrot.slane %v5051, 4
      %v5153 = vsel %vm605, %v5150, %v5152
      %v5154 = vrot.slane %v5052, 4
      %v5155 = vrot.slane %v5053, 4
      %v5156 = vsel %vm605, %v5154, %v5155
      %v5157 = vrot.slane %v5054, 4
      %v5158 = vsel %vm605, %v5155, %v5157
      %v5159 = vrot.slane %v5055, 4
      %v5160 = vrot.slane %v5056, 4
      %v5161 = vsel %vm605, %v5159, %v5160
      %v5162 = vrot.slane %v5057, 4
      %v5163 = vsel %vm605, %v5160, %v5162
      %v5164 = vrot.slane %v5058, 4
      %v5165 = vrot.slane %v5059, 4
      %v5166 = vsel %vm605, %v5164, %v5165
      %v5167 = vrot.slane %v5060, 4
      %v5168 = vsel %vm605, %v5165, %v5167
      %v5169 = vrot.slane %v5061, 4
      %v5170 = vrot.slane %v5062, 4
      %v5171 = vsel %vm605, %v5169, %v5170
      %v5172 = vrot.slane %v5063, 4
      %v5173 = vsel %vm605, %v5170, %v5172
      %v5174 = vrot.slane %v5064, 4
      %v5175 = vrot.slane %v5065, 4
      %v5176 = vsel %vm605, %v5174, %v5175
      %v5177 = vrot.slane %v5066, 4
      %v5178 = vsel %vm605, %v5175, %v5177
      %v5179 = vrot.slane %v5067, 4
      %v5180 = vrot.slane %v5068, 4
      %v5181 = vsel %vm605, %v5179, %v5180
      %v5182 = vrot.slane %v5069, 4
      %v5183 = vsel %vm605, %v5180, %v5182
      %v5184 = vrot.slane %v5070, 4
      %v5185 = vrot.slane %v5071, 4
      %v5186 = vsel %vm605, %v5184, %v5185
      %v5187 = vrot.slane %v5072, 4
      %v5188 = vsel %vm605, %v5185, %v5187
      %v5189 = vrot.slane %v5073, 4
      %v5190 = vrot.slane %v5074, 4
      %v5191 = vsel %vm605, %v5189, %v5190
      %v5192 = vrot.slane %v5075, 4
      %v5193 = vsel %vm605, %v5190, %v5192
      %v5194 = vrot.slane %v5076, 4
      %v5195 = vrot.slane %v5077, 4
      %v5196 = vsel %vm605, %v5194, %v5195
      %v5197 = vrot.slane %v5078, 4
      %v5198 = vsel %vm605, %v5195, %v5197
      %v5199 = vrot.slane %v5079, 4
      %v5200 = vrot.slane %v5080, 4
      %v5201 = vsel %vm605, %v5199, %v5200
      %v5202 = vrot.slane %v5081, 4
      %v5203 = vsel %vm605, %v5200, %v5202
      %v5204 = vrot.slane %v5082, 4
      %v5205 = vrot.slane %v5083, 4
      %v5206 = vsel %vm605, %v5204, %v5205
      %v5207 = vrot.slane %v5084, 4
      %v5208 = vsel %vm605, %v5205, %v5207
      %v5209 = vrot.slane %v5085, 4
      %v5210 = vrot.slane %v5086, 4
      %v5211 = vsel %vm605, %v5209, %v5210
      %v5212 = vrot.slane %v5087, 4
      %v5213 = vsel %vm605, %v5210, %v5212
      %v5214 = vrot.slane %v5088, 4
      %v5215 = vrot.slane %v5089, 4
      %v5216 = vsel %vm605, %v5214, %v5215
      %v5217 = vrot.slane %v5090, 4
      %v5218 = vsel %vm605, %v5215, %v5217
      %v5251 = vadd.f32 %v5007, %v5141
      %v5252 = vadd.f32 %v5008, %v5143
      %v5253 = vadd.f32 %v5009, %v5146
      %v5254 = vadd.f32 %v5010, %v5148
      %v5255 = vadd.f32 %v5011, %v5151
      %v5256 = vadd.f32 %v5012, %v5153
      %v5257 = vadd.f32 %v5013, %v5156
      %v5258 = vadd.f32 %v5014, %v5158
      %v5259 = vadd.f32 %v5015, %v5161
      %v5260 = vadd.f32 %v5016, %v5163
      %v5261 = vadd.f32 %v5017, %v5166
      %v5262 = vadd.f32 %v5018, %v5168
      %v5263 = vadd.f32 %v5019, %v5171
      %v5264 = vadd.f32 %v5020, %v5173
      %v5265 = vadd.f32 %v5021, %v5176
      %v5266 = vadd.f32 %v5022, %v5178
      %v5267 = vadd.f32 %v5023, %v5181
      %v5268 = vadd.f32 %v5024, %v5183
      %v5269 = vadd.f32 %v5025, %v5186
      %v5270 = vadd.f32 %v5026, %v5188
      %v5271 = vadd.f32 %v5027, %v5191
      %v5272 = vadd.f32 %v5028, %v5193
      %v5273 = vadd.f32 %v5029, %v5196
      %v5274 = vadd.f32 %v5030, %v5198
      %v5275 = vadd.f32 %v5031, %v5201
      %v5276 = vadd.f32 %v5032, %v5203
      %v5277 = vadd.f32 %v5033, %v5206
      %v5278 = vadd.f32 %v5034, %v5208
      %v5279 = vadd.f32 %v5035, %v5211
      %v5280 = vadd.f32 %v5036, %v5213
      %v5281 = vadd.f32 %v5037, %v5216
      %v5282 = vadd.f32 %v5038, %v5218
      %v5283 = vlaneseq
      %v5284 = vshrl.u32 %v5283, 7
      %v5285 = vsub.s32 2, %v5284
      %v5286 = vrot.slane %v3255, %v5285
      %v5287 = vmul.f32 %v3221, %v5286
      %v5288 = vmul.f32 %v3124, %v5286
      %v5289 = vmul.f32 %v3222, %v5286
      %v5290 = vmul.f32 %v3127, %v5286
      %v5291 = vmul.f32 %v3223, %v5286
      %v5292 = vmul.f32 %v3130, %v5286
      %v5293 = vmul.f32 %v3224, %v5286
      %v5294 = vmul.f32 %v3133, %v5286
      %v5295 = vmul.f32 %v3225, %v5286
      %v5296 = vmul.f32 %v3136, %v5286
      %v5297 = vmul.f32 %v3226, %v5286
      %v5298 = vmul.f32 %v3139, %v5286
      %v5299 = vmul.f32 %v3227, %v5286
      %v5300 = vmul.f32 %v3142, %v5286
      %v5301 = vmul.f32 %v3228, %v5286
      %v5302 = vmul.f32 %v3145, %v5286
      %v5303 = vmul.f32 %v3229, %v5286
      %v5304 = vmul.f32 %v3148, %v5286
      %v5305 = vmul.f32 %v3230, %v5286
      %v5306 = vmul.f32 %v3151, %v5286
      %v5307 = vmul.f32 %v3231, %v5286
      %v5308 = vmul.f32 %v3154, %v5286
      %v5309 = vmul.f32 %v3232, %v5286
      %v5310 = vmul.f32 %v3157, %v5286
      %v5311 = vmul.f32 %v3233, %v5286
      %v5312 = vmul.f32 %v3160, %v5286
      %v5313 = vmul.f32 %v3234, %v5286
      %v5314 = vmul.f32 %v3163, %v5286
      %v5315 = vmul.f32 %v3235, %v5286
      %v5316 = vmul.f32 %v3166, %v5286
      %v5317 = vmul.f32 %v3236, %v5286
      %v5318 = vmul.f32 %v3169, %v5286
      %v5319 = vadd.f32 %v5251, %v5287
      %v5320 = vadd.f32 %v5252, %v5288
      %v5321 = vadd.f32 %v5253, %v5289
      %v5322 = vadd.f32 %v5254, %v5290
      %v5323 = vadd.f32 %v5255, %v5291
      %v5324 = vadd.f32 %v5256, %v5292
      %v5325 = vadd.f32 %v5257, %v5293
      %v5326 = vadd.f32 %v5258, %v5294
      %v5327 = vadd.f32 %v5259, %v5295
      %v5328 = vadd.f32 %v5260, %v5296
      %v5329 = vadd.f32 %v5261, %v5297
      %v5330 = vadd.f32 %v5262, %v5298
      %v5331 = vadd.f32 %v5263, %v5299
      %v5332 = vadd.f32 %v5264, %v5300
      %v5333 = vadd.f32 %v5265, %v5301
      %v5334 = vadd.f32 %v5266, %v5302
      %v5335 = vadd.f32 %v5267, %v5303
      %v5336 = vadd.f32 %v5268, %v5304
      %v5337 = vadd.f32 %v5269, %v5305
      %v5338 = vadd.f32 %v5270, %v5306
      %v5339 = vadd.f32 %v5271, %v5307
      %v5340 = vadd.f32 %v5272, %v5308
      %v5341 = vadd.f32 %v5273, %v5309
      %v5342 = vadd.f32 %v5274, %v5310
      %v5343 = vadd.f32 %v5275, %v5311
      %v5344 = vadd.f32 %v5276, %v5312
      %v5345 = vadd.f32 %v5277, %v5313
      %v5346 = vadd.f32 %v5278, %v5314
      %v5347 = vadd.f32 %v5279, %v5315
      %v5348 = vadd.f32 %v5280, %v5316
      %v5349 = vadd.f32 %v5281, %v5317
      %v5350 = vadd.f32 %v5282, %v5318
      %v5351 = vlaneseq
      %v5352 = vshrl.u32 %v5351, 7
      %v5353 = vsub.s32 3, %v5352
      %v5354 = vrot.slane %v3255, %v5353
      %v5355 = vmul.f32 %v3221, %v5354
      %v5356 = vmul.f32 %v3124, %v5354
      %v5357 = vmul.f32 %v3238, %v5354
      %v5358 = vmul.f32 %v3222, %v5354
      %v5359 = vmul.f32 %v3127, %v5354
      %v5360 = vmul.f32 %v3239, %v5354
      %v5361 = vmul.f32 %v3223, %v5354
      %v5362 = vmul.f32 %v3130, %v5354
      %v5363 = vmul.f32 %v3240, %v5354
      %v5364 = vmul.f32 %v3224, %v5354
      %v5365 = vmul.f32 %v3133, %v5354
      %v5366 = vmul.f32 %v3241, %v5354
      %v5367 = vmul.f32 %v3225, %v5354
      %v5368 = vmul.f32 %v3136, %v5354
      %v5369 = vmul.f32 %v3242, %v5354
      %v5370 = vmul.f32 %v3226, %v5354
      %v5371 = vmul.f32 %v3139, %v5354
      %v5372 = vmul.f32 %v3243, %v5354
      %v5373 = vmul.f32 %v3227, %v5354
      %v5374 = vmul.f32 %v3142, %v5354
      %v5375 = vmul.f32 %v3244, %v5354
      %v5376 = vmul.f32 %v3228, %v5354
      %v5377 = vmul.f32 %v3145, %v5354
      %v5378 = vmul.f32 %v3245, %v5354
      %v5379 = vmul.f32 %v3229, %v5354
      %v5380 = vmul.f32 %v3148, %v5354
      %v5381 = vmul.f32 %v3246, %v5354
      %v5382 = vmul.f32 %v3230, %v5354
      %v5383 = vmul.f32 %v3151, %v5354
      %v5384 = vmul.f32 %v3247, %v5354
      %v5385 = vmul.f32 %v3231, %v5354
      %v5386 = vmul.f32 %v3154, %v5354
      %v5387 = vmul.f32 %v3248, %v5354
      %v5388 = vmul.f32 %v3232, %v5354
      %v5389 = vmul.f32 %v3157, %v5354
      %v5390 = vmul.f32 %v3249, %v5354
      %v5391 = vmul.f32 %v3233, %v5354
      %v5392 = vmul.f32 %v3160, %v5354
      %v5393 = vmul.f32 %v3250, %v5354
      %v5394 = vmul.f32 %v3234, %v5354
      %v5395 = vmul.f32 %v3163, %v5354
      %v5396 = vmul.f32 %v3251, %v5354
      %v5397 = vmul.f32 %v3235, %v5354
      %v5398 = vmul.f32 %v3166, %v5354
      %v5399 = vmul.f32 %v3252, %v5354
      %v5400 = vmul.f32 %v3236, %v5354
      %v5401 = vmul.f32 %v3169, %v5354
      %v5402 = vmul.f32 %v3253, %v5354
      %v5451 = vrot.slane %v5355, 1
      %v5452 = vrot.slane %v5356, 1
      %v5453 = vsel %vm1321, %v5451, %v5452
      %v5454 = vrot.slane %v5357, 1
      %v5455 = vsel %vm1321, %v5452, %v5454
      %v5456 = vrot.slane %v5358, 1
      %v5457 = vrot.slane %v5359, 1
      %v5458 = vsel %vm1321, %v5456, %v5457
      %v5459 = vrot.slane %v5360, 1
      %v5460 = vsel %vm1321, %v5457, %v5459
      %v5461 = vrot.slane %v5361, 1
      %v5462 = vrot.slane %v5362, 1
      %v5463 = vsel %vm1321, %v5461, %v5462
      %v5464 = vrot.slane %v5363, 1
      %v5465 = vsel %vm1321, %v5462, %v5464
      %v5466 = vrot.slane %v5364, 1
      %v5467 = vrot.slane %v5365, 1
      %v5468 = vsel %vm1321, %v5466, %v5467
      %v5469 = vrot.slane %v5366, 1
      %v5470 = vsel %vm1321, %v5467, %v5469
      %v5471 = vrot.slane %v5367, 1
      %v5472 = vrot.slane %v5368, 1
      %v5473 = vsel %vm1321, %v5471, %v5472
      %v5474 = vrot.slane %v5369, 1
      %v5475 = vsel %vm1321, %v5472, %v5474
      %v5476 = vrot.slane %v5370, 1
      %v5477 = vrot.slane %v5371, 1
      %v5478 = vsel %vm1321, %v5476, %v5477
      %v5479 = vrot.slane %v5372, 1
      %v5480 = vsel %vm1321, %v5477, %v5479
      %v5481 = vrot.slane %v5373, 1
      %v5482 = vrot.slane %v5374, 1
      %v5483 = vsel %vm1321, %v5481, %v5482
      %v5484 = vrot.slane %v5375, 1
      %v5485 = vsel %vm1321, %v5482, %v5484
      %v5486 = vrot.slane %v5376, 1
      %v5487 = vrot.slane %v5377, 1
      %v5488 = vsel %vm1321, %v5486, %v5487
      %v5489 = vrot.slane %v5378, 1
      %v5490 = vsel %vm1321, %v5487, %v5489
      %v5491 = vrot.slane %v5379, 1
      %v5492 = vrot.slane %v5380, 1
      %v5493 = vsel %vm1321, %v5491, %v5492
      %v5494 = vrot.slane %v5381, 1
      %v5495 = vsel %vm1321, %v5492, %v5494
      %v5496 = vrot.slane %v5382, 1
      %v5497 = vrot.slane %v5383, 1
      %v5498 = vsel %vm1321, %v5496, %v5497
      %v5499 = vrot.slane %v5384, 1
      %v5500 = vsel %vm1321, %v5497, %v5499
      %v5501 = vrot.slane %v5385, 1
      %v5502 = vrot.slane %v5386, 1
      %v5503 = vsel %vm1321, %v5501, %v5502
      %v5504 = vrot.slane %v5387, 1
      %v5505 = vsel %vm1321, %v5502, %v5504
      %v5506 = vrot.slane %v5388, 1
      %v5507 = vrot.slane %v5389, 1
      %v5508 = vsel %vm1321, %v5506, %v5507
      %v5509 = vrot.slane %v5390, 1
      %v5510 = vsel %vm1321, %v5507, %v5509
      %v5511 = vrot.slane %v5391, 1
      %v5512 = vrot.slane %v5392, 1
      %v5513 = vsel %vm1321, %v5511, %v5512
      %v5514 = vrot.slane %v5393, 1
      %v5515 = vsel %vm1321, %v5512, %v5514
      %v5516 = vrot.slane %v5394, 1
      %v5517 = vrot.slane %v5395, 1
      %v5518 = vsel %vm1321, %v5516, %v5517
      %v5519 = vrot.slane %v5396, 1
      %v5520 = vsel %vm1321, %v5517, %v5519
      %v5521 = vrot.slane %v5397, 1
      %v5522 = vrot.slane %v5398, 1
      %v5523 = vsel %vm1321, %v5521, %v5522
      %v5524 = vrot.slane %v5399, 1
      %v5525 = vsel %vm1321, %v5522, %v5524
      %v5526 = vrot.slane %v5400, 1
      %v5527 = vrot.slane %v5401, 1
      %v5528 = vsel %vm1321, %v5526, %v5527
      %v5529 = vrot.slane %v5402, 1
      %v5530 = vsel %vm1321, %v5527, %v5529
      %v5563 = vadd.f32 %v5319, %v5453
      %v5564 = vadd.f32 %v5320, %v5455
      %v5565 = vadd.f32 %v5321, %v5458
      %v5566 = vadd.f32 %v5322, %v5460
      %v5567 = vadd.f32 %v5323, %v5463
      %v5568 = vadd.f32 %v5324, %v5465
      %v5569 = vadd.f32 %v5325, %v5468
      %v5570 = vadd.f32 %v5326, %v5470
      %v5571 = vadd.f32 %v5327, %v5473
      %v5572 = vadd.f32 %v5328, %v5475
      %v5573 = vadd.f32 %v5329, %v5478
      %v5574 = vadd.f32 %v5330, %v5480
      %v5575 = vadd.f32 %v5331, %v5483
      %v5576 = vadd.f32 %v5332, %v5485
      %v5577 = vadd.f32 %v5333, %v5488
      %v5578 = vadd.f32 %v5334, %v5490
      %v5579 = vadd.f32 %v5335, %v5493
      %v5580 = vadd.f32 %v5336, %v5495
      %v5581 = vadd.f32 %v5337, %v5498
      %v5582 = vadd.f32 %v5338, %v5500
      %v5583 = vadd.f32 %v5339, %v5503
      %v5584 = vadd.f32 %v5340, %v5505
      %v5585 = vadd.f32 %v5341, %v5508
      %v5586 = vadd.f32 %v5342, %v5510
      %v5587 = vadd.f32 %v5343, %v5513
      %v5588 = vadd.f32 %v5344, %v5515
      %v5589 = vadd.f32 %v5345, %v5518
      %v5590 = vadd.f32 %v5346, %v5520
      %v5591 = vadd.f32 %v5347, %v5523
      %v5592 = vadd.f32 %v5348, %v5525
      %v5593 = vadd.f32 %v5349, %v5528
      %v5594 = vadd.f32 %v5350, %v5530
      %v5595 = vlaneseq
      %v5596 = vshrl.u32 %v5595, 7
      %v5597 = vsub.s32 4, %v5596
      %v5598 = vrot.slane %v3255, %v5597
      %v5599 = vmul.f32 %v3221, %v5598
      %v5600 = vmul.f32 %v3124, %v5598
      %v5601 = vmul.f32 %v3238, %v5598
      %v5602 = vmul.f32 %v3222, %v5598
      %v5603 = vmul.f32 %v3127, %v5598
      %v5604 = vmul.f32 %v3239, %v5598
      %v5605 = vmul.f32 %v3223, %v5598
      %v5606 = vmul.f32 %v3130, %v5598
      %v5607 = vmul.f32 %v3240, %v5598
      %v5608 = vmul.f32 %v3224, %v5598
      %v5609 = vmul.f32 %v3133, %v5598
      %v5610 = vmul.f32 %v3241, %v5598
      %v5611 = vmul.f32 %v3225, %v5598
      %v5612 = vmul.f32 %v3136, %v5598
      %v5613 = vmul.f32 %v3242, %v5598
      %v5614 = vmul.f32 %v3226, %v5598
      %v5615 = vmul.f32 %v3139, %v5598
      %v5616 = vmul.f32 %v3243, %v5598
      %v5617 = vmul.f32 %v3227, %v5598
      %v5618 = vmul.f32 %v3142, %v5598
      %v5619 = vmul.f32 %v3244, %v5598
      %v5620 = vmul.f32 %v3228, %v5598
      %v5621 = vmul.f32 %v3145, %v5598
      %v5622 = vmul.f32 %v3245, %v5598
      %v5623 = vmul.f32 %v3229, %v5598
      %v5624 = vmul.f32 %v3148, %v5598
      %v5625 = vmul.f32 %v3246, %v5598
      %v5626 = vmul.f32 %v3230, %v5598
      %v5627 = vmul.f32 %v3151, %v5598
      %v5628 = vmul.f32 %v3247, %v5598
      %v5629 = vmul.f32 %v3231, %v5598
      %v5630 = vmul.f32 %v3154, %v5598
      %v5631 = vmul.f32 %v3248, %v5598
      %v5632 = vmul.f32 %v3232, %v5598
      %v5633 = vmul.f32 %v3157, %v5598
      %v5634 = vmul.f32 %v3249, %v5598
      %v5635 = vmul.f32 %v3233, %v5598
      %v5636 = vmul.f32 %v3160, %v5598
      %v5637 = vmul.f32 %v3250, %v5598
      %v5638 = vmul.f32 %v3234, %v5598
      %v5639 = vmul.f32 %v3163, %v5598
      %v5640 = vmul.f32 %v3251, %v5598
      %v5641 = vmul.f32 %v3235, %v5598
      %v5642 = vmul.f32 %v3166, %v5598
      %v5643 = vmul.f32 %v3252, %v5598
      %v5644 = vmul.f32 %v3236, %v5598
      %v5645 = vmul.f32 %v3169, %v5598
      %v5646 = vmul.f32 %v3253, %v5598
      %v5695 = vrot.slane %v5599, 2
      %v5696 = vrot.slane %v5600, 2
      %v5697 = vsel %vm1402, %v5695, %v5696
      %v5698 = vrot.slane %v5601, 2
      %v5699 = vsel %vm1402, %v5696, %v5698
      %v5700 = vrot.slane %v5602, 2
      %v5701 = vrot.slane %v5603, 2
      %v5702 = vsel %vm1402, %v5700, %v5701
      %v5703 = vrot.slane %v5604, 2
      %v5704 = vsel %vm1402, %v5701, %v5703
      %v5705 = vrot.slane %v5605, 2
      %v5706 = vrot.slane %v5606, 2
      %v5707 = vsel %vm1402, %v5705, %v5706
      %v5708 = vrot.slane %v5607, 2
      %v5709 = vsel %vm1402, %v5706, %v5708
      %v5710 = vrot.slane %v5608, 2
      %v5711 = vrot.slane %v5609, 2
      %v5712 = vsel %vm1402, %v5710, %v5711
      %v5713 = vrot.slane %v5610, 2
      %v5714 = vsel %vm1402, %v5711, %v5713
      %v5715 = vrot.slane %v5611, 2
      %v5716 = vrot.slane %v5612, 2
      %v5717 = vsel %vm1402, %v5715, %v5716
      %v5718 = vrot.slane %v5613, 2
      %v5719 = vsel %vm1402, %v5716, %v5718
      %v5720 = vrot.slane %v5614, 2
      %v5721 = vrot.slane %v5615, 2
      %v5722 = vsel %vm1402, %v5720, %v5721
      %v5723 = vrot.slane %v5616, 2
      %v5724 = vsel %vm1402, %v5721, %v5723
      %v5725 = vrot.slane %v5617, 2
      %v5726 = vrot.slane %v5618, 2
      %v5727 = vsel %vm1402, %v5725, %v5726
      %v5728 = vrot.slane %v5619, 2
      %v5729 = vsel %vm1402, %v5726, %v5728
      %v5730 = vrot.slane %v5620, 2
      %v5731 = vrot.slane %v5621, 2
      %v5732 = vsel %vm1402, %v5730, %v5731
      %v5733 = vrot.slane %v5622, 2
      %v5734 = vsel %vm1402, %v5731, %v5733
      %v5735 = vrot.slane %v5623, 2
      %v5736 = vrot.slane %v5624, 2
      %v5737 = vsel %vm1402, %v5735, %v5736
      %v5738 = vrot.slane %v5625, 2
      %v5739 = vsel %vm1402, %v5736, %v5738
      %v5740 = vrot.slane %v5626, 2
      %v5741 = vrot.slane %v5627, 2
      %v5742 = vsel %vm1402, %v5740, %v5741
      %v5743 = vrot.slane %v5628, 2
      %v5744 = vsel %vm1402, %v5741, %v5743
      %v5745 = vrot.slane %v5629, 2
      %v5746 = vrot.slane %v5630, 2
      %v5747 = vsel %vm1402, %v5745, %v5746
      %v5748 = vrot.slane %v5631, 2
      %v5749 = vsel %vm1402, %v5746, %v5748
      %v5750 = vrot.slane %v5632, 2
      %v5751 = vrot.slane %v5633, 2
      %v5752 = vsel %vm1402, %v5750, %v5751
      %v5753 = vrot.slane %v5634, 2
      %v5754 = vsel %vm1402, %v5751, %v5753
      %v5755 = vrot.slane %v5635, 2
      %v5756 = vrot.slane %v5636, 2
      %v5757 = vsel %vm1402, %v5755, %v5756
      %v5758 = vrot.slane %v5637, 2
      %v5759 = vsel %vm1402, %v5756, %v5758
      %v5760 = vrot.slane %v5638, 2
      %v5761 = vrot.slane %v5639, 2
      %v5762 = vsel %vm1402, %v5760, %v5761
      %v5763 = vrot.slane %v5640, 2
      %v5764 = vsel %vm1402, %v5761, %v5763
      %v5765 = vrot.slane %v5641, 2
      %v5766 = vrot.slane %v5642, 2
      %v5767 = vsel %vm1402, %v5765, %v5766
      %v5768 = vrot.slane %v5643, 2
      %v5769 = vsel %vm1402, %v5766, %v5768
      %v5770 = vrot.slane %v5644, 2
      %v5771 = vrot.slane %v5645, 2
      %v5772 = vsel %vm1402, %v5770, %v5771
      %v5773 = vrot.slane %v5646, 2
      %v5774 = vsel %vm1402, %v5771, %v5773
      %v5807 = vadd.f32 %v5563, %v5697
      %v5808 = vadd.f32 %v5564, %v5699
      %v5809 = vadd.f32 %v5565, %v5702
      %v5810 = vadd.f32 %v5566, %v5704
      %v5811 = vadd.f32 %v5567, %v5707
      %v5812 = vadd.f32 %v5568, %v5709
      %v5813 = vadd.f32 %v5569, %v5712
      %v5814 = vadd.f32 %v5570, %v5714
      %v5815 = vadd.f32 %v5571, %v5717
      %v5816 = vadd.f32 %v5572, %v5719
      %v5817 = vadd.f32 %v5573, %v5722
      %v5818 = vadd.f32 %v5574, %v5724
      %v5819 = vadd.f32 %v5575, %v5727
      %v5820 = vadd.f32 %v5576, %v5729
      %v5821 = vadd.f32 %v5577, %v5732
      %v5822 = vadd.f32 %v5578, %v5734
      %v5823 = vadd.f32 %v5579, %v5737
      %v5824 = vadd.f32 %v5580, %v5739
      %v5825 = vadd.f32 %v5581, %v5742
      %v5826 = vadd.f32 %v5582, %v5744
      %v5827 = vadd.f32 %v5583, %v5747
      %v5828 = vadd.f32 %v5584, %v5749
      %v5829 = vadd.f32 %v5585, %v5752
      %v5830 = vadd.f32 %v5586, %v5754
      %v5831 = vadd.f32 %v5587, %v5757
      %v5832 = vadd.f32 %v5588, %v5759
      %v5833 = vadd.f32 %v5589, %v5762
      %v5834 = vadd.f32 %v5590, %v5764
      %v5835 = vadd.f32 %v5591, %v5767
      %v5836 = vadd.f32 %v5592, %v5769
      %v5837 = vadd.f32 %v5593, %v5772
      %v5838 = vadd.f32 %v5594, %v5774
      %v5839 = vlaneseq
      %v5840 = vshrl.u32 %v5839, 7
      %v5841 = vsub.s32 5, %v5840
      %v5842 = vrot.slane %v3255, %v5841
      %v5843 = vmul.f32 %v3221, %v5842
      %v5844 = vmul.f32 %v3124, %v5842
      %v5845 = vmul.f32 %v3238, %v5842
      %v5846 = vmul.f32 %v3222, %v5842
      %v5847 = vmul.f32 %v3127, %v5842
      %v5848 = vmul.f32 %v3239, %v5842
      %v5849 = vmul.f32 %v3223, %v5842
      %v5850 = vmul.f32 %v3130, %v5842
      %v5851 = vmul.f32 %v3240, %v5842
      %v5852 = vmul.f32 %v3224, %v5842
      %v5853 = vmul.f32 %v3133, %v5842
      %v5854 = vmul.f32 %v3241, %v5842
      %v5855 = vmul.f32 %v3225, %v5842
      %v5856 = vmul.f32 %v3136, %v5842
      %v5857 = vmul.f32 %v3242, %v5842
      %v5858 = vmul.f32 %v3226, %v5842
      %v5859 = vmul.f32 %v3139, %v5842
      %v5860 = vmul.f32 %v3243, %v5842
      %v5861 = vmul.f32 %v3227, %v5842
      %v5862 = vmul.f32 %v3142, %v5842
      %v5863 = vmul.f32 %v3244, %v5842
      %v5864 = vmul.f32 %v3228, %v5842
      %v5865 = vmul.f32 %v3145, %v5842
      %v5866 = vmul.f32 %v3245, %v5842
      %v5867 = vmul.f32 %v3229, %v5842
      %v5868 = vmul.f32 %v3148, %v5842
      %v5869 = vmul.f32 %v3246, %v5842
      %v5870 = vmul.f32 %v3230, %v5842
      %v5871 = vmul.f32 %v3151, %v5842
      %v5872 = vmul.f32 %v3247, %v5842
      %v5873 = vmul.f32 %v3231, %v5842
      %v5874 = vmul.f32 %v3154, %v5842
      %v5875 = vmul.f32 %v3248, %v5842
      %v5876 = vmul.f32 %v3232, %v5842
      %v5877 = vmul.f32 %v3157, %v5842
      %v5878 = vmul.f32 %v3249, %v5842
      %v5879 = vmul.f32 %v3233, %v5842
      %v5880 = vmul.f32 %v3160, %v5842
      %v5881 = vmul.f32 %v3250, %v5842
      %v5882 = vmul.f32 %v3234, %v5842
      %v5883 = vmul.f32 %v3163, %v5842
      %v5884 = vmul.f32 %v3251, %v5842
      %v5885 = vmul.f32 %v3235, %v5842
      %v5886 = vmul.f32 %v3166, %v5842
      %v5887 = vmul.f32 %v3252, %v5842
      %v5888 = vmul.f32 %v3236, %v5842
      %v5889 = vmul.f32 %v3169, %v5842
      %v5890 = vmul.f32 %v3253, %v5842
      %v5939 = vrot.slane %v5843, 3
      %v5940 = vrot.slane %v5844, 3
      %v5941 = vsel %vm3874, %v5939, %v5940
      %v5942 = vrot.slane %v5845, 3
      %v5943 = vsel %vm3874, %v5940, %v5942
      %v5944 = vrot.slane %v5846, 3
      %v5945 = vrot.slane %v5847, 3
      %v5946 = vsel %vm3874, %v5944, %v5945
      %v5947 = vrot.slane %v5848, 3
      %v5948 = vsel %vm3874, %v5945, %v5947
      %v5949 = vrot.slane %v5849, 3
      %v5950 = vrot.slane %v5850, 3
      %v5951 = vsel %vm3874, %v5949, %v5950
      %v5952 = vrot.slane %v5851, 3
      %v5953 = vsel %vm3874, %v5950, %v5952
      %v5954 = vrot.slane %v5852, 3
      %v5955 = vrot.slane %v5853, 3
      %v5956 = vsel %vm3874, %v5954, %v5955
      %v5957 = vrot.slane %v5854, 3
      %v5958 = vsel %vm3874, %v5955, %v5957
      %v5959 = vrot.slane %v5855, 3
      %v5960 = vrot.slane %v5856, 3
      %v5961 = vsel %vm3874, %v5959, %v5960
      %v5962 = vrot.slane %v5857, 3
      %v5963 = vsel %vm3874, %v5960, %v5962
      %v5964 = vrot.slane %v5858, 3
      %v5965 = vrot.slane %v5859, 3
      %v5966 = vsel %vm3874, %v5964, %v5965
      %v5967 = vrot.slane %v5860, 3
      %v5968 = vsel %vm3874, %v5965, %v5967
      %v5969 = vrot.slane %v5861, 3
      %v5970 = vrot.slane %v5862, 3
      %v5971 = vsel %vm3874, %v5969, %v5970
      %v5972 = vrot.slane %v5863, 3
      %v5973 = vsel %vm3874, %v5970, %v5972
      %v5974 = vrot.slane %v5864, 3
      %v5975 = vrot.slane %v5865, 3
      %v5976 = vsel %vm3874, %v5974, %v5975
      %v5977 = vrot.slane %v5866, 3
      %v5978 = vsel %vm3874, %v5975, %v5977
      %v5979 = vrot.slane %v5867, 3
      %v5980 = vrot.slane %v5868, 3
      %v5981 = vsel %vm3874, %v5979, %v5980
      %v5982 = vrot.slane %v5869, 3
      %v5983 = vsel %vm3874, %v5980, %v5982
      %v5984 = vrot.slane %v5870, 3
      %v5985 = vrot.slane %v5871, 3
      %v5986 = vsel %vm3874, %v5984, %v5985
      %v5987 = vrot.slane %v5872, 3
      %v5988 = vsel %vm3874, %v5985, %v5987
      %v5989 = vrot.slane %v5873, 3
      %v5990 = vrot.slane %v5874, 3
      %v5991 = vsel %vm3874, %v5989, %v5990
      %v5992 = vrot.slane %v5875, 3
      %v5993 = vsel %vm3874, %v5990, %v5992
      %v5994 = vrot.slane %v5876, 3
      %v5995 = vrot.slane %v5877, 3
      %v5996 = vsel %vm3874, %v5994, %v5995
      %v5997 = vrot.slane %v5878, 3
      %v5998 = vsel %vm3874, %v5995, %v5997
      %v5999 = vrot.slane %v5879, 3
      %v6000 = vrot.slane %v5880, 3
      %v6001 = vsel %vm3874, %v5999, %v6000
      %v6002 = vrot.slane %v5881, 3
      %v6003 = vsel %vm3874, %v6000, %v6002
      %v6004 = vrot.slane %v5882, 3
      %v6005 = vrot.slane %v5883, 3
      %v6006 = vsel %vm3874, %v6004, %v6005
      %v6007 = vrot.slane %v5884, 3
      %v6008 = vsel %vm3874, %v6005, %v6007
      %v6009 = vrot.slane %v5885, 3
      %v6010 = vrot.slane %v5886, 3
      %v6011 = vsel %vm3874, %v6009, %v6010
      %v6012 = vrot.slane %v5887, 3
      %v6013 = vsel %vm3874, %v6010, %v6012
      %v6014 = vrot.slane %v5888, 3
      %v6015 = vrot.slane %v5889, 3
      %v6016 = vsel %vm3874, %v6014, %v6015
      %v6017 = vrot.slane %v5890, 3
      %v6018 = vsel %vm3874, %v6015, %v6017
      %v6051 = vadd.f32 %v5807, %v5941
      %v6052 = vadd.f32 %v5808, %v5943
      %v6053 = vadd.f32 %v5809, %v5946
      %v6054 = vadd.f32 %v5810, %v5948
      %v6055 = vadd.f32 %v5811, %v5951
      %v6056 = vadd.f32 %v5812, %v5953
      %v6057 = vadd.f32 %v5813, %v5956
      %v6058 = vadd.f32 %v5814, %v5958
      %v6059 = vadd.f32 %v5815, %v5961
      %v6060 = vadd.f32 %v5816, %v5963
      %v6061 = vadd.f32 %v5817, %v5966
      %v6062 = vadd.f32 %v5818, %v5968
      %v6063 = vadd.f32 %v5819, %v5971
      %v6064 = vadd.f32 %v5820, %v5973
      %v6065 = vadd.f32 %v5821, %v5976
      %v6066 = vadd.f32 %v5822, %v5978
      %v6067 = vadd.f32 %v5823, %v5981
      %v6068 = vadd.f32 %v5824, %v5983
      %v6069 = vadd.f32 %v5825, %v5986
      %v6070 = vadd.f32 %v5826, %v5988
      %v6071 = vadd.f32 %v5827, %v5991
      %v6072 = vadd.f32 %v5828, %v5993
      %v6073 = vadd.f32 %v5829, %v5996
      %v6074 = vadd.f32 %v5830, %v5998
      %v6075 = vadd.f32 %v5831, %v6001
      %v6076 = vadd.f32 %v5832, %v6003
      %v6077 = vadd.f32 %v5833, %v6006
      %v6078 = vadd.f32 %v5834, %v6008
      %v6079 = vadd.f32 %v5835, %v6011
      %v6080 = vadd.f32 %v5836, %v6013
      %v6081 = vadd.f32 %v5837, %v6016
      %v6082 = vadd.f32 %v5838, %v6018
      %v6083 = vlaneseq
      %v6084 = vshrl.u32 %v6083, 7
      %v6085 = vsub.s32 6, %v6084
      %v6086 = vrot.slane %v3255, %v6085
      %v6087 = vmul.f32 %v3221, %v6086
      %v6088 = vmul.f32 %v3124, %v6086
      %v6089 = vmul.f32 %v3238, %v6086
      %v6090 = vmul.f32 %v3222, %v6086
      %v6091 = vmul.f32 %v3127, %v6086
      %v6092 = vmul.f32 %v3239, %v6086
      %v6093 = vmul.f32 %v3223, %v6086
      %v6094 = vmul.f32 %v3130, %v6086
      %v6095 = vmul.f32 %v3240, %v6086
      %v6096 = vmul.f32 %v3224, %v6086
      %v6097 = vmul.f32 %v3133, %v6086
      %v6098 = vmul.f32 %v3241, %v6086
      %v6099 = vmul.f32 %v3225, %v6086
      %v6100 = vmul.f32 %v3136, %v6086
      %v6101 = vmul.f32 %v3242, %v6086
      %v6102 = vmul.f32 %v3226, %v6086
      %v6103 = vmul.f32 %v3139, %v6086
      %v6104 = vmul.f32 %v3243, %v6086
      %v6105 = vmul.f32 %v3227, %v6086
      %v6106 = vmul.f32 %v3142, %v6086
      %v6107 = vmul.f32 %v3244, %v6086
      %v6108 = vmul.f32 %v3228, %v6086
      %v6109 = vmul.f32 %v3145, %v6086
      %v6110 = vmul.f32 %v3245, %v6086
      %v6111 = vmul.f32 %v3229, %v6086
      %v6112 = vmul.f32 %v3148, %v6086
      %v6113 = vmul.f32 %v3246, %v6086
      %v6114 = vmul.f32 %v3230, %v6086
      %v6115 = vmul.f32 %v3151, %v6086
      %v6116 = vmul.f32 %v3247, %v6086
      %v6117 = vmul.f32 %v3231, %v6086
      %v6118 = vmul.f32 %v3154, %v6086
      %v6119 = vmul.f32 %v3248, %v6086
      %v6120 = vmul.f32 %v3232, %v6086
      %v6121 = vmul.f32 %v3157, %v6086
      %v6122 = vmul.f32 %v3249, %v6086
      %v6123 = vmul.f32 %v3233, %v6086
      %v6124 = vmul.f32 %v3160, %v6086
      %v6125 = vmul.f32 %v3250, %v6086
      %v6126 = vmul.f32 %v3234, %v6086
      %v6127 = vmul.f32 %v3163, %v6086
      %v6128 = vmul.f32 %v3251, %v6086
      %v6129 = vmul.f32 %v3235, %v6086
      %v6130 = vmul.f32 %v3166, %v6086
      %v6131 = vmul.f32 %v3252, %v6086
      %v6132 = vmul.f32 %v3236, %v6086
      %v6133 = vmul.f32 %v3169, %v6086
      %v6134 = vmul.f32 %v3253, %v6086
      %v6183 = vrot.slane %v6087, 4
      %v6184 = vrot.slane %v6088, 4
      %v6185 = vsel %vm605, %v6183, %v6184
      %v6186 = vrot.slane %v6089, 4
      %v6187 = vsel %vm605, %v6184, %v6186
      %v6188 = vrot.slane %v6090, 4
      %v6189 = vrot.slane %v6091, 4
      %v6190 = vsel %vm605, %v6188, %v6189
      %v6191 = vrot.slane %v6092, 4
      %v6192 = vsel %vm605, %v6189, %v6191
      %v6193 = vrot.slane %v6093, 4
      %v6194 = vrot.slane %v6094, 4
      %v6195 = vsel %vm605, %v6193, %v6194
      %v6196 = vrot.slane %v6095, 4
      %v6197 = vsel %vm605, %v6194, %v6196
      %v6198 = vrot.slane %v6096, 4
      %v6199 = vrot.slane %v6097, 4
      %v6200 = vsel %vm605, %v6198, %v6199
      %v6201 = vrot.slane %v6098, 4
      %v6202 = vsel %vm605, %v6199, %v6201
      %v6203 = vrot.slane %v6099, 4
      %v6204 = vrot.slane %v6100, 4
      %v6205 = vsel %vm605, %v6203, %v6204
      %v6206 = vrot.slane %v6101, 4
      %v6207 = vsel %vm605, %v6204, %v6206
      %v6208 = vrot.slane %v6102, 4
      %v6209 = vrot.slane %v6103, 4
      %v6210 = vsel %vm605, %v6208, %v6209
      %v6211 = vrot.slane %v6104, 4
      %v6212 = vsel %vm605, %v6209, %v6211
      %v6213 = vrot.slane %v6105, 4
      %v6214 = vrot.slane %v6106, 4
      %v6215 = vsel %vm605, %v6213, %v6214
      %v6216 = vrot.slane %v6107, 4
      %v6217 = vsel %vm605, %v6214, %v6216
      %v6218 = vrot.slane %v6108, 4
      %v6219 = vrot.slane %v6109, 4
      %v6220 = vsel %vm605, %v6218, %v6219
      %v6221 = vrot.slane %v6110, 4
      %v6222 = vsel %vm605, %v6219, %v6221
      %v6223 = vrot.slane %v6111, 4
      %v6224 = vrot.slane %v6112, 4
      %v6225 = vsel %vm605, %v6223, %v6224
      %v6226 = vrot.slane %v6113, 4
      %v6227 = vsel %vm605, %v6224, %v6226
      %v6228 = vrot.slane %v6114, 4
      %v6229 = vrot.slane %v6115, 4
      %v6230 = vsel %vm605, %v6228, %v6229
      %v6231 = vrot.slane %v6116, 4
      %v6232 = vsel %vm605, %v6229, %v6231
      %v6233 = vrot.slane %v6117, 4
      %v6234 = vrot.slane %v6118, 4
      %v6235 = vsel %vm605, %v6233, %v6234
      %v6236 = vrot.slane %v6119, 4
      %v6237 = vsel %vm605, %v6234, %v6236
      %v6238 = vrot.slane %v6120, 4
      %v6239 = vrot.slane %v6121, 4
      %v6240 = vsel %vm605, %v6238, %v6239
      %v6241 = vrot.slane %v6122, 4
      %v6242 = vsel %vm605, %v6239, %v6241
      %v6243 = vrot.slane %v6123, 4
      %v6244 = vrot.slane %v6124, 4
      %v6245 = vsel %vm605, %v6243, %v6244
      %v6246 = vrot.slane %v6125, 4
      %v6247 = vsel %vm605, %v6244, %v6246
      %v6248 = vrot.slane %v6126, 4
      %v6249 = vrot.slane %v6127, 4
      %v6250 = vsel %vm605, %v6248, %v6249
      %v6251 = vrot.slane %v6128, 4
      %v6252 = vsel %vm605, %v6249, %v6251
      %v6253 = vrot.slane %v6129, 4
      %v6254 = vrot.slane %v6130, 4
      %v6255 = vsel %vm605, %v6253, %v6254
      %v6256 = vrot.slane %v6131, 4
      %v6257 = vsel %vm605, %v6254, %v6256
      %v6258 = vrot.slane %v6132, 4
      %v6259 = vrot.slane %v6133, 4
      %v6260 = vsel %vm605, %v6258, %v6259
      %v6261 = vrot.slane %v6134, 4
      %v6262 = vsel %vm605, %v6259, %v6261
      %v6295 = vadd.f32 %v6051, %v6185
      %v6296 = vadd.f32 %v6052, %v6187
      %v6297 = vadd.f32 %v6053, %v6190
      %v6298 = vadd.f32 %v6054, %v6192
      %v6299 = vadd.f32 %v6055, %v6195
      %v6300 = vadd.f32 %v6056, %v6197
      %v6301 = vadd.f32 %v6057, %v6200
      %v6302 = vadd.f32 %v6058, %v6202
      %v6303 = vadd.f32 %v6059, %v6205
      %v6304 = vadd.f32 %v6060, %v6207
      %v6305 = vadd.f32 %v6061, %v6210
      %v6306 = vadd.f32 %v6062, %v6212
      %v6307 = vadd.f32 %v6063, %v6215
      %v6308 = vadd.f32 %v6064, %v6217
      %v6309 = vadd.f32 %v6065, %v6220
      %v6310 = vadd.f32 %v6066, %v6222
      %v6311 = vadd.f32 %v6067, %v6225
      %v6312 = vadd.f32 %v6068, %v6227
      %v6313 = vadd.f32 %v6069, %v6230
      %v6314 = vadd.f32 %v6070, %v6232
      %v6315 = vadd.f32 %v6071, %v6235
      %v6316 = vadd.f32 %v6072, %v6237
      %v6317 = vadd.f32 %v6073, %v6240
      %v6318 = vadd.f32 %v6074, %v6242
      %v6319 = vadd.f32 %v6075, %v6245
      %v6320 = vadd.f32 %v6076, %v6247
      %v6321 = vadd.f32 %v6077, %v6250
      %v6322 = vadd.f32 %v6078, %v6252
      %v6323 = vadd.f32 %v6079, %v6255
      %v6324 = vadd.f32 %v6080, %v6257
      %v6325 = vadd.f32 %v6081, %v6260
      %v6326 = vadd.f32 %v6082, %v6262
      %v6327 = vlaneseq
      %v6328 = vshrl.u32 %v6327, 7
      %v6329 = vsub.s32 7, %v6328
      %v6330 = vrot.slane %v3255, %v6329
      %v6331 = vmul.f32 %v3222, %v6330
      %v6332 = vmul.f32 %v3127, %v6330
      %v6333 = vmul.f32 %v3223, %v6330
      %v6334 = vmul.f32 %v3130, %v6330
      %v6335 = vmul.f32 %v3224, %v6330
      %v6336 = vmul.f32 %v3133, %v6330
      %v6337 = vmul.f32 %v3225, %v6330
      %v6338 = vmul.f32 %v3136, %v6330
      %v6339 = vmul.f32 %v3226, %v6330
      %v6340 = vmul.f32 %v3139, %v6330
      %v6341 = vmul.f32 %v3227, %v6330
      %v6342 = vmul.f32 %v3142, %v6330
      %v6343 = vmul.f32 %v3228, %v6330
      %v6344 = vmul.f32 %v3145, %v6330
      %v6345 = vmul.f32 %v3229, %v6330
      %v6346 = vmul.f32 %v3148, %v6330
      %v6347 = vmul.f32 %v3230, %v6330
      %v6348 = vmul.f32 %v3151, %v6330
      %v6349 = vmul.f32 %v3231, %v6330
      %v6350 = vmul.f32 %v3154, %v6330
      %v6351 = vmul.f32 %v3232, %v6330
      %v6352 = vmul.f32 %v3157, %v6330
      %v6353 = vmul.f32 %v3233, %v6330
      %v6354 = vmul.f32 %v3160, %v6330
      %v6355 = vmul.f32 %v3234, %v6330
      %v6356 = vmul.f32 %v3163, %v6330
      %v6357 = vmul.f32 %v3235, %v6330
      %v6358 = vmul.f32 %v3166, %v6330
      %v6359 = vmul.f32 %v3236, %v6330
      %v6360 = vmul.f32 %v3169, %v6330
      %v6361 = vmul.f32 %v3220, %v6330
      %v6362 = vmul.f32 %v3121, %v6330
      %v6363 = vadd.f32 %v6295, %v6331
      %v6364 = vadd.f32 %v6296, %v6332
      %v6365 = vadd.f32 %v6297, %v6333
      %v6366 = vadd.f32 %v6298, %v6334
      %v6367 = vadd.f32 %v6299, %v6335
      %v6368 = vadd.f32 %v6300, %v6336
      %v6369 = vadd.f32 %v6301, %v6337
      %v6370 = vadd.f32 %v6302, %v6338
      %v6371 = vadd.f32 %v6303, %v6339
      %v6372 = vadd.f32 %v6304, %v6340
      %v6373 = vadd.f32 %v6305, %v6341
      %v6374 = vadd.f32 %v6306, %v6342
      %v6375 = vadd.f32 %v6307, %v6343
      %v6376 = vadd.f32 %v6308, %v6344
      %v6377 = vadd.f32 %v6309, %v6345
      %v6378 = vadd.f32 %v6310, %v6346
      %v6379 = vadd.f32 %v6311, %v6347
      %v6380 = vadd.f32 %v6312, %v6348
      %v6381 = vadd.f32 %v6313, %v6349
      %v6382 = vadd.f32 %v6314, %v6350
      %v6383 = vadd.f32 %v6315, %v6351
      %v6384 = vadd.f32 %v6316, %v6352
      %v6385 = vadd.f32 %v6317, %v6353
      %v6386 = vadd.f32 %v6318, %v6354
      %v6387 = vadd.f32 %v6319, %v6355
      %v6388 = vadd.f32 %v6320, %v6356
      %v6389 = vadd.f32 %v6321, %v6357
      %v6390 = vadd.f32 %v6322, %v6358
      %v6391 = vadd.f32 %v6323, %v6359
      %v6392 = vadd.f32 %v6324, %v6360
      %v6393 = vadd.f32 %v6325, %v6361
      %v6394 = vadd.f32 %v6326, %v6362
      %v6395 = vlaneseq
      %v6396 = vshrl.u32 %v6395, 7
      %v6397 = vsub.s32 0, %v6396
      %v6398 = vrot.slane %v3256, %v6397
      %v6399 = vmul.f32 %v3222, %v6398
      %v6400 = vmul.f32 %v3127, %v6398
      %v6401 = vmul.f32 %v3239, %v6398
      %v6402 = vmul.f32 %v3223, %v6398
      %v6403 = vmul.f32 %v3130, %v6398
      %v6404 = vmul.f32 %v3240, %v6398
      %v6405 = vmul.f32 %v3224, %v6398
      %v6406 = vmul.f32 %v3133, %v6398
      %v6407 = vmul.f32 %v3241, %v6398
      %v6408 = vmul.f32 %v3225, %v6398
      %v6409 = vmul.f32 %v3136, %v6398
      %v6410 = vmul.f32 %v3242, %v6398
      %v6411 = vmul.f32 %v3226, %v6398
      %v6412 = vmul.f32 %v3139, %v6398
      %v6413 = vmul.f32 %v3243, %v6398
      %v6414 = vmul.f32 %v3227, %v6398
      %v6415 = vmul.f32 %v3142, %v6398
      %v6416 = vmul.f32 %v3244, %v6398
      %v6417 = vmul.f32 %v3228, %v6398
      %v6418 = vmul.f32 %v3145, %v6398
      %v6419 = vmul.f32 %v3245, %v6398
      %v6420 = vmul.f32 %v3229, %v6398
      %v6421 = vmul.f32 %v3148, %v6398
      %v6422 = vmul.f32 %v3246, %v6398
      %v6423 = vmul.f32 %v3230, %v6398
      %v6424 = vmul.f32 %v3151, %v6398
      %v6425 = vmul.f32 %v3247, %v6398
      %v6426 = vmul.f32 %v3231, %v6398
      %v6427 = vmul.f32 %v3154, %v6398
      %v6428 = vmul.f32 %v3248, %v6398
      %v6429 = vmul.f32 %v3232, %v6398
      %v6430 = vmul.f32 %v3157, %v6398
      %v6431 = vmul.f32 %v3249, %v6398
      %v6432 = vmul.f32 %v3233, %v6398
      %v6433 = vmul.f32 %v3160, %v6398
      %v6434 = vmul.f32 %v3250, %v6398
      %v6435 = vmul.f32 %v3234, %v6398
      %v6436 = vmul.f32 %v3163, %v6398
      %v6437 = vmul.f32 %v3251, %v6398
      %v6438 = vmul.f32 %v3235, %v6398
      %v6439 = vmul.f32 %v3166, %v6398
      %v6440 = vmul.f32 %v3252, %v6398
      %v6441 = vmul.f32 %v3236, %v6398
      %v6442 = vmul.f32 %v3169, %v6398
      %v6443 = vmul.f32 %v3253, %v6398
      %v6444 = vmul.f32 %v3220, %v6398
      %v6445 = vmul.f32 %v3121, %v6398
      %v6446 = vmul.f32 %v3237, %v6398
      %v6495 = vrot.slane %v6399, 1
      %v6496 = vrot.slane %v6400, 1
      %v6497 = vsel %vm1321, %v6495, %v6496
      %v6498 = vrot.slane %v6401, 1
      %v6499 = vsel %vm1321, %v6496, %v6498
      %v6500 = vrot.slane %v6402, 1
      %v6501 = vrot.slane %v6403, 1
      %v6502 = vsel %vm1321, %v6500, %v6501
      %v6503 = vrot.slane %v6404, 1
      %v6504 = vsel %vm1321, %v6501, %v6503
      %v6505 = vrot.slane %v6405, 1
      %v6506 = vrot.slane %v6406, 1
      %v6507 = vsel %vm1321, %v6505, %v6506
      %v6508 = vrot.slane %v6407, 1
      %v6509 = vsel %vm1321, %v6506, %v6508
      %v6510 = vrot.slane %v6408, 1
      %v6511 = vrot.slane %v6409, 1
      %v6512 = vsel %vm1321, %v6510, %v6511
      %v6513 = vrot.slane %v6410, 1
      %v6514 = vsel %vm1321, %v6511, %v6513
      %v6515 = vrot.slane %v6411, 1
      %v6516 = vrot.slane %v6412, 1
      %v6517 = vsel %vm1321, %v6515, %v6516
      %v6518 = vrot.slane %v6413, 1
      %v6519 = vsel %vm1321, %v6516, %v6518
      %v6520 = vrot.slane %v6414, 1
      %v6521 = vrot.slane %v6415, 1
      %v6522 = vsel %vm1321, %v6520, %v6521
      %v6523 = vrot.slane %v6416, 1
      %v6524 = vsel %vm1321, %v6521, %v6523
      %v6525 = vrot.slane %v6417, 1
      %v6526 = vrot.slane %v6418, 1
      %v6527 = vsel %vm1321, %v6525, %v6526
      %v6528 = vrot.slane %v6419, 1
      %v6529 = vsel %vm1321, %v6526, %v6528
      %v6530 = vrot.slane %v6420, 1
      %v6531 = vrot.slane %v6421, 1
      %v6532 = vsel %vm1321, %v6530, %v6531
      %v6533 = vrot.slane %v6422, 1
      %v6534 = vsel %vm1321, %v6531, %v6533
      %v6535 = vrot.slane %v6423, 1
      %v6536 = vrot.slane %v6424, 1
      %v6537 = vsel %vm1321, %v6535, %v6536
      %v6538 = vrot.slane %v6425, 1
      %v6539 = vsel %vm1321, %v6536, %v6538
      %v6540 = vrot.slane %v6426, 1
      %v6541 = vrot.slane %v6427, 1
      %v6542 = vsel %vm1321, %v6540, %v6541
      %v6543 = vrot.slane %v6428, 1
      %v6544 = vsel %vm1321, %v6541, %v6543
      %v6545 = vrot.slane %v6429, 1
      %v6546 = vrot.slane %v6430, 1
      %v6547 = vsel %vm1321, %v6545, %v6546
      %v6548 = vrot.slane %v6431, 1
      %v6549 = vsel %vm1321, %v6546, %v6548
      %v6550 = vrot.slane %v6432, 1
      %v6551 = vrot.slane %v6433, 1
      %v6552 = vsel %vm1321, %v6550, %v6551
      %v6553 = vrot.slane %v6434, 1
      %v6554 = vsel %vm1321, %v6551, %v6553
      %v6555 = vrot.slane %v6435, 1
      %v6556 = vrot.slane %v6436, 1
      %v6557 = vsel %vm1321, %v6555, %v6556
      %v6558 = vrot.slane %v6437, 1
      %v6559 = vsel %vm1321, %v6556, %v6558
      %v6560 = vrot.slane %v6438, 1
      %v6561 = vrot.slane %v6439, 1
      %v6562 = vsel %vm1321, %v6560, %v6561
      %v6563 = vrot.slane %v6440, 1
      %v6564 = vsel %vm1321, %v6561, %v6563
      %v6565 = vrot.slane %v6441, 1
      %v6566 = vrot.slane %v6442, 1
      %v6567 = vsel %vm1321, %v6565, %v6566
      %v6568 = vrot.slane %v6443, 1
      %v6569 = vsel %vm1321, %v6566, %v6568
      %v6570 = vrot.slane %v6444, 1
      %v6571 = vrot.slane %v6445, 1
      %v6572 = vsel %vm1321, %v6570, %v6571
      %v6573 = vrot.slane %v6446, 1
      %v6574 = vsel %vm1321, %v6571, %v6573
      %v6607 = vadd.f32 %v6363, %v6497
      %v6608 = vadd.f32 %v6364, %v6499
      %v6609 = vadd.f32 %v6365, %v6502
      %v6610 = vadd.f32 %v6366, %v6504
      %v6611 = vadd.f32 %v6367, %v6507
      %v6612 = vadd.f32 %v6368, %v6509
      %v6613 = vadd.f32 %v6369, %v6512
      %v6614 = vadd.f32 %v6370, %v6514
      %v6615 = vadd.f32 %v6371, %v6517
      %v6616 = vadd.f32 %v6372, %v6519
      %v6617 = vadd.f32 %v6373, %v6522
      %v6618 = vadd.f32 %v6374, %v6524
      %v6619 = vadd.f32 %v6375, %v6527
      %v6620 = vadd.f32 %v6376, %v6529
      %v6621 = vadd.f32 %v6377, %v6532
      %v6622 = vadd.f32 %v6378, %v6534
      %v6623 = vadd.f32 %v6379, %v6537
      %v6624 = vadd.f32 %v6380, %v6539
      %v6625 = vadd.f32 %v6381, %v6542
      %v6626 = vadd.f32 %v6382, %v6544
      %v6627 = vadd.f32 %v6383, %v6547
      %v6628 = vadd.f32 %v6384, %v6549
      %v6629 = vadd.f32 %v6385, %v6552
      %v6630 = vadd.f32 %v6386, %v6554
      %v6631 = vadd.f32 %v6387, %v6557
      %v6632 = vadd.f32 %v6388, %v6559
      %v6633 = vadd.f32 %v6389, %v6562
      %v6634 = vadd.f32 %v6390, %v6564
      %v6635 = vadd.f32 %v6391, %v6567
      %v6636 = vadd.f32 %v6392, %v6569
      %v6637 = vadd.f32 %v6393, %v6572
      %v6638 = vadd.f32 %v6394, %v6574
      %v6639 = vlaneseq
      %v6640 = vshrl.u32 %v6639, 7
      %v6641 = vsub.s32 1, %v6640
      %v6642 = vrot.slane %v3256, %v6641
      %v6643 = vmul.f32 %v3222, %v6642
      %v6644 = vmul.f32 %v3127, %v6642
      %v6645 = vmul.f32 %v3239, %v6642
      %v6646 = vmul.f32 %v3223, %v6642
      %v6647 = vmul.f32 %v3130, %v6642
      %v6648 = vmul.f32 %v3240, %v6642
      %v6649 = vmul.f32 %v3224, %v6642
      %v6650 = vmul.f32 %v3133, %v6642
      %v6651 = vmul.f32 %v3241, %v6642
      %v6652 = vmul.f32 %v3225, %v6642
      %v6653 = vmul.f32 %v3136, %v6642
      %v6654 = vmul.f32 %v3242, %v6642
      %v6655 = vmul.f32 %v3226, %v6642
      %v6656 = vmul.f32 %v3139, %v6642
      %v6657 = vmul.f32 %v3243, %v6642
      %v6658 = vmul.f32 %v3227, %v6642
      %v6659 = vmul.f32 %v3142, %v6642
      %v6660 = vmul.f32 %v3244, %v6642
      %v6661 = vmul.f32 %v3228, %v6642
      %v6662 = vmul.f32 %v3145, %v6642
      %v6663 = vmul.f32 %v3245, %v6642
      %v6664 = vmul.f32 %v3229, %v6642
      %v6665 = vmul.f32 %v3148, %v6642
      %v6666 = vmul.f32 %v3246, %v6642
      %v6667 = vmul.f32 %v3230, %v6642
      %v6668 = vmul.f32 %v3151, %v6642
      %v6669 = vmul.f32 %v3247, %v6642
      %v6670 = vmul.f32 %v3231, %v6642
      %v6671 = vmul.f32 %v3154, %v6642
      %v6672 = vmul.f32 %v3248, %v6642
      %v6673 = vmul.f32 %v3232, %v6642
      %v6674 = vmul.f32 %v3157, %v6642
      %v6675 = vmul.f32 %v3249, %v6642
      %v6676 = vmul.f32 %v3233, %v6642
      %v6677 = vmul.f32 %v3160, %v6642
      %v6678 = vmul.f32 %v3250, %v6642
      %v6679 = vmul.f32 %v3234, %v6642
      %v6680 = vmul.f32 %v3163, %v6642
      %v6681 = vmul.f32 %v3251, %v6642
      %v6682 = vmul.f32 %v3235, %v6642
      %v6683 = vmul.f32 %v3166, %v6642
      %v6684 = vmul.f32 %v3252, %v6642
      %v6685 = vmul.f32 %v3236, %v6642
      %v6686 = vmul.f32 %v3169, %v6642
      %v6687 = vmul.f32 %v3253, %v6642
      %v6688 = vmul.f32 %v3220, %v6642
      %v6689 = vmul.f32 %v3121, %v6642
      %v6690 = vmul.f32 %v3237, %v6642
      %v6739 = vrot.slane %v6643, 2
      %v6740 = vrot.slane %v6644, 2
      %v6741 = vsel %vm1402, %v6739, %v6740
      %v6742 = vrot.slane %v6645, 2
      %v6743 = vsel %vm1402, %v6740, %v6742
      %v6744 = vrot.slane %v6646, 2
      %v6745 = vrot.slane %v6647, 2
      %v6746 = vsel %vm1402, %v6744, %v6745
      %v6747 = vrot.slane %v6648, 2
      %v6748 = vsel %vm1402, %v6745, %v6747
      %v6749 = vrot.slane %v6649, 2
      %v6750 = vrot.slane %v6650, 2
      %v6751 = vsel %vm1402, %v6749, %v6750
      %v6752 = vrot.slane %v6651, 2
      %v6753 = vsel %vm1402, %v6750, %v6752
      %v6754 = vrot.slane %v6652, 2
      %v6755 = vrot.slane %v6653, 2
      %v6756 = vsel %vm1402, %v6754, %v6755
      %v6757 = vrot.slane %v6654, 2
      %v6758 = vsel %vm1402, %v6755, %v6757
      %v6759 = vrot.slane %v6655, 2
      %v6760 = vrot.slane %v6656, 2
      %v6761 = vsel %vm1402, %v6759, %v6760
      %v6762 = vrot.slane %v6657, 2
      %v6763 = vsel %vm1402, %v6760, %v6762
      %v6764 = vrot.slane %v6658, 2
      %v6765 = vrot.slane %v6659, 2
      %v6766 = vsel %vm1402, %v6764, %v6765
      %v6767 = vrot.slane %v6660, 2
      %v6768 = vsel %vm1402, %v6765, %v6767
      %v6769 = vrot.slane %v6661, 2
      %v6770 = vrot.slane %v6662, 2
      %v6771 = vsel %vm1402, %v6769, %v6770
      %v6772 = vrot.slane %v6663, 2
      %v6773 = vsel %vm1402, %v6770, %v6772
      %v6774 = vrot.slane %v6664, 2
      %v6775 = vrot.slane %v6665, 2
      %v6776 = vsel %vm1402, %v6774, %v6775
      %v6777 = vrot.slane %v6666, 2
      %v6778 = vsel %vm1402, %v6775, %v6777
      %v6779 = vrot.slane %v6667, 2
      %v6780 = vrot.slane %v6668, 2
      %v6781 = vsel %vm1402, %v6779, %v6780
      %v6782 = vrot.slane %v6669, 2
      %v6783 = vsel %vm1402, %v6780, %v6782
      %v6784 = vrot.slane %v6670, 2
      %v6785 = vrot.slane %v6671, 2
      %v6786 = vsel %vm1402, %v6784, %v6785
      %v6787 = vrot.slane %v6672, 2
      %v6788 = vsel %vm1402, %v6785, %v6787
      %v6789 = vrot.slane %v6673, 2
      %v6790 = vrot.slane %v6674, 2
      %v6791 = vsel %vm1402, %v6789, %v6790
      %v6792 = vrot.slane %v6675, 2
      %v6793 = vsel %vm1402, %v6790, %v6792
      %v6794 = vrot.slane %v6676, 2
      %v6795 = vrot.slane %v6677, 2
      %v6796 = vsel %vm1402, %v6794, %v6795
      %v6797 = vrot.slane %v6678, 2
      %v6798 = vsel %vm1402, %v6795, %v6797
      %v6799 = vrot.slane %v6679, 2
      %v6800 = vrot.slane %v6680, 2
      %v6801 = vsel %vm1402, %v6799, %v6800
      %v6802 = vrot.slane %v6681, 2
      %v6803 = vsel %vm1402, %v6800, %v6802
      %v6804 = vrot.slane %v6682, 2
      %v6805 = vrot.slane %v6683, 2
      %v6806 = vsel %vm1402, %v6804, %v6805
      %v6807 = vrot.slane %v6684, 2
      %v6808 = vsel %vm1402, %v6805, %v6807
      %v6809 = vrot.slane %v6685, 2
      %v6810 = vrot.slane %v6686, 2
      %v6811 = vsel %vm1402, %v6809, %v6810
      %v6812 = vrot.slane %v6687, 2
      %v6813 = vsel %vm1402, %v6810, %v6812
      %v6814 = vrot.slane %v6688, 2
      %v6815 = vrot.slane %v6689, 2
      %v6816 = vsel %vm1402, %v6814, %v6815
      %v6817 = vrot.slane %v6690, 2
      %v6818 = vsel %vm1402, %v6815, %v6817
      %v6851 = vadd.f32 %v6607, %v6741
      %v6852 = vadd.f32 %v6608, %v6743
      %v6853 = vadd.f32 %v6609, %v6746
      %v6854 = vadd.f32 %v6610, %v6748
      %v6855 = vadd.f32 %v6611, %v6751
      %v6856 = vadd.f32 %v6612, %v6753
      %v6857 = vadd.f32 %v6613, %v6756
      %v6858 = vadd.f32 %v6614, %v6758
      %v6859 = vadd.f32 %v6615, %v6761
      %v6860 = vadd.f32 %v6616, %v6763
      %v6861 = vadd.f32 %v6617, %v6766
      %v6862 = vadd.f32 %v6618, %v6768
      %v6863 = vadd.f32 %v6619, %v6771
      %v6864 = vadd.f32 %v6620, %v6773
      %v6865 = vadd.f32 %v6621, %v6776
      %v6866 = vadd.f32 %v6622, %v6778
      %v6867 = vadd.f32 %v6623, %v6781
      %v6868 = vadd.f32 %v6624, %v6783
      %v6869 = vadd.f32 %v6625, %v6786
      %v6870 = vadd.f32 %v6626, %v6788
      %v6871 = vadd.f32 %v6627, %v6791
      %v6872 = vadd.f32 %v6628, %v6793
      %v6873 = vadd.f32 %v6629, %v6796
      %v6874 = vadd.f32 %v6630, %v6798
      %v6875 = vadd.f32 %v6631, %v6801
      %v6876 = vadd.f32 %v6632, %v6803
      %v6877 = vadd.f32 %v6633, %v6806
      %v6878 = vadd.f32 %v6634, %v6808
      %v6879 = vadd.f32 %v6635, %v6811
      %v6880 = vadd.f32 %v6636, %v6813
      %v6881 = vadd.f32 %v6637, %v6816
      %v6882 = vadd.f32 %v6638, %v6818
      %v6883 = vlaneseq
      %v6884 = vshrl.u32 %v6883, 7
      %v6885 = vsub.s32 2, %v6884
      %v6886 = vrot.slane %v3256, %v6885
      %v6887 = vmul.f32 %v3222, %v6886
      %v6888 = vmul.f32 %v3127, %v6886
      %v6889 = vmul.f32 %v3239, %v6886
      %v6890 = vmul.f32 %v3223, %v6886
      %v6891 = vmul.f32 %v3130, %v6886
      %v6892 = vmul.f32 %v3240, %v6886
      %v6893 = vmul.f32 %v3224, %v6886
      %v6894 = vmul.f32 %v3133, %v6886
      %v6895 = vmul.f32 %v3241, %v6886
      %v6896 = vmul.f32 %v3225, %v6886
      %v6897 = vmul.f32 %v3136, %v6886
      %v6898 = vmul.f32 %v3242, %v6886
      %v6899 = vmul.f32 %v3226, %v6886
      %v6900 = vmul.f32 %v3139, %v6886
      %v6901 = vmul.f32 %v3243, %v6886
      %v6902 = vmul.f32 %v3227, %v6886
      %v6903 = vmul.f32 %v3142, %v6886
      %v6904 = vmul.f32 %v3244, %v6886
      %v6905 = vmul.f32 %v3228, %v6886
      %v6906 = vmul.f32 %v3145, %v6886
      %v6907 = vmul.f32 %v3245, %v6886
      %v6908 = vmul.f32 %v3229, %v6886
      %v6909 = vmul.f32 %v3148, %v6886
      %v6910 = vmul.f32 %v3246, %v6886
      %v6911 = vmul.f32 %v3230, %v6886
      %v6912 = vmul.f32 %v3151, %v6886
      %v6913 = vmul.f32 %v3247, %v6886
      %v6914 = vmul.f32 %v3231, %v6886
      %v6915 = vmul.f32 %v3154, %v6886
      %v6916 = vmul.f32 %v3248, %v6886
      %v6917 = vmul.f32 %v3232, %v6886
      %v6918 = vmul.f32 %v3157, %v6886
      %v6919 = vmul.f32 %v3249, %v6886
      %v6920 = vmul.f32 %v3233, %v6886
      %v6921 = vmul.f32 %v3160, %v6886
      %v6922 = vmul.f32 %v3250, %v6886
      %v6923 = vmul.f32 %v3234, %v6886
      %v6924 = vmul.f32 %v3163, %v6886
      %v6925 = vmul.f32 %v3251, %v6886
      %v6926 = vmul.f32 %v3235, %v6886
      %v6927 = vmul.f32 %v3166, %v6886
      %v6928 = vmul.f32 %v3252, %v6886
      %v6929 = vmul.f32 %v3236, %v6886
      %v6930 = vmul.f32 %v3169, %v6886
      %v6931 = vmul.f32 %v3253, %v6886
      %v6932 = vmul.f32 %v3220, %v6886
      %v6933 = vmul.f32 %v3121, %v6886
      %v6934 = vmul.f32 %v3237, %v6886
      %v6983 = vrot.slane %v6887, 3
      %v6984 = vrot.slane %v6888, 3
      %v6985 = vsel %vm3874, %v6983, %v6984
      %v6986 = vrot.slane %v6889, 3
      %v6987 = vsel %vm3874, %v6984, %v6986
      %v6988 = vrot.slane %v6890, 3
      %v6989 = vrot.slane %v6891, 3
      %v6990 = vsel %vm3874, %v6988, %v6989
      %v6991 = vrot.slane %v6892, 3
      %v6992 = vsel %vm3874, %v6989, %v6991
      %v6993 = vrot.slane %v6893, 3
      %v6994 = vrot.slane %v6894, 3
      %v6995 = vsel %vm3874, %v6993, %v6994
      %v6996 = vrot.slane %v6895, 3
      %v6997 = vsel %vm3874, %v6994, %v6996
      %v6998 = vrot.slane %v6896, 3
      %v6999 = vrot.slane %v6897, 3
      %v7000 = vsel %vm3874, %v6998, %v6999
      %v7001 = vrot.slane %v6898, 3
      %v7002 = vsel %vm3874, %v6999, %v7001
      %v7003 = vrot.slane %v6899, 3
      %v7004 = vrot.slane %v6900, 3
      %v7005 = vsel %vm3874, %v7003, %v7004
      %v7006 = vrot.slane %v6901, 3
      %v7007 = vsel %vm3874, %v7004, %v7006
      %v7008 = vrot.slane %v6902, 3
      %v7009 = vrot.slane %v6903, 3
      %v7010 = vsel %vm3874, %v7008, %v7009
      %v7011 = vrot.slane %v6904, 3
      %v7012 = vsel %vm3874, %v7009, %v7011
      %v7013 = vrot.slane %v6905, 3
      %v7014 = vrot.slane %v6906, 3
      %v7015 = vsel %vm3874, %v7013, %v7014
      %v7016 = vrot.slane %v6907, 3
      %v7017 = vsel %vm3874, %v7014, %v7016
      %v7018 = vrot.slane %v6908, 3
      %v7019 = vrot.slane %v6909, 3
      %v7020 = vsel %vm3874, %v7018, %v7019
      %v7021 = vrot.slane %v6910, 3
      %v7022 = vsel %vm3874, %v7019, %v7021
      %v7023 = vrot.slane %v6911, 3
      %v7024 = vrot.slane %v6912, 3
      %v7025 = vsel %vm3874, %v7023, %v7024
      %v7026 = vrot.slane %v6913, 3
      %v7027 = vsel %vm3874, %v7024, %v7026
      %v7028 = vrot.slane %v6914, 3
      %v7029 = vrot.slane %v6915, 3
      %v7030 = vsel %vm3874, %v7028, %v7029
      %v7031 = vrot.slane %v6916, 3
      %v7032 = vsel %vm3874, %v7029, %v7031
      %v7033 = vrot.slane %v6917, 3
      %v7034 = vrot.slane %v6918, 3
      %v7035 = vsel %vm3874, %v7033, %v7034
      %v7036 = vrot.slane %v6919, 3
      %v7037 = vsel %vm3874, %v7034, %v7036
      %v7038 = vrot.slane %v6920, 3
      %v7039 = vrot.slane %v6921, 3
      %v7040 = vsel %vm3874, %v7038, %v7039
      %v7041 = vrot.slane %v6922, 3
      %v7042 = vsel %vm3874, %v7039, %v7041
      %v7043 = vrot.slane %v6923, 3
      %v7044 = vrot.slane %v6924, 3
      %v7045 = vsel %vm3874, %v7043, %v7044
      %v7046 = vrot.slane %v6925, 3
      %v7047 = vsel %vm3874, %v7044, %v7046
      %v7048 = vrot.slane %v6926, 3
      %v7049 = vrot.slane %v6927, 3
      %v7050 = vsel %vm3874, %v7048, %v7049
      %v7051 = vrot.slane %v6928, 3
      %v7052 = vsel %vm3874, %v7049, %v7051
      %v7053 = vrot.slane %v6929, 3
      %v7054 = vrot.slane %v6930, 3
      %v7055 = vsel %vm3874, %v7053, %v7054
      %v7056 = vrot.slane %v6931, 3
      %v7057 = vsel %vm3874, %v7054, %v7056
      %v7058 = vrot.slane %v6932, 3
      %v7059 = vrot.slane %v6933, 3
      %v7060 = vsel %vm3874, %v7058, %v7059
      %v7061 = vrot.slane %v6934, 3
      %v7062 = vsel %vm3874, %v7059, %v7061
      %v7095 = vadd.f32 %v6851, %v6985
      %v7096 = vadd.f32 %v6852, %v6987
      %v7097 = vadd.f32 %v6853, %v6990
      %v7098 = vadd.f32 %v6854, %v6992
      %v7099 = vadd.f32 %v6855, %v6995
      %v7100 = vadd.f32 %v6856, %v6997
      %v7101 = vadd.f32 %v6857, %v7000
      %v7102 = vadd.f32 %v6858, %v7002
      %v7103 = vadd.f32 %v6859, %v7005
      %v7104 = vadd.f32 %v6860, %v7007
      %v7105 = vadd.f32 %v6861, %v7010
      %v7106 = vadd.f32 %v6862, %v7012
      %v7107 = vadd.f32 %v6863, %v7015
      %v7108 = vadd.f32 %v6864, %v7017
      %v7109 = vadd.f32 %v6865, %v7020
      %v7110 = vadd.f32 %v6866, %v7022
      %v7111 = vadd.f32 %v6867, %v7025
      %v7112 = vadd.f32 %v6868, %v7027
      %v7113 = vadd.f32 %v6869, %v7030
      %v7114 = vadd.f32 %v6870, %v7032
      %v7115 = vadd.f32 %v6871, %v7035
      %v7116 = vadd.f32 %v6872, %v7037
      %v7117 = vadd.f32 %v6873, %v7040
      %v7118 = vadd.f32 %v6874, %v7042
      %v7119 = vadd.f32 %v6875, %v7045
      %v7120 = vadd.f32 %v6876, %v7047
      %v7121 = vadd.f32 %v6877, %v7050
      %v7122 = vadd.f32 %v6878, %v7052
      %v7123 = vadd.f32 %v6879, %v7055
      %v7124 = vadd.f32 %v6880, %v7057
      %v7125 = vadd.f32 %v6881, %v7060
      %v7126 = vadd.f32 %v6882, %v7062
      %v7127 = vlaneseq
      %v7128 = vshrl.u32 %v7127, 7
      %v7129 = vsub.s32 3, %v7128
      %v7130 = vrot.slane %v3256, %v7129
      %v7131 = vmul.f32 %v3222, %v7130
      %v7132 = vmul.f32 %v3127, %v7130
      %v7133 = vmul.f32 %v3239, %v7130
      %v7134 = vmul.f32 %v3223, %v7130
      %v7135 = vmul.f32 %v3130, %v7130
      %v7136 = vmul.f32 %v3240, %v7130
      %v7137 = vmul.f32 %v3224, %v7130
      %v7138 = vmul.f32 %v3133, %v7130
      %v7139 = vmul.f32 %v3241, %v7130
      %v7140 = vmul.f32 %v3225, %v7130
      %v7141 = vmul.f32 %v3136, %v7130
      %v7142 = vmul.f32 %v3242, %v7130
      %v7143 = vmul.f32 %v3226, %v7130
      %v7144 = vmul.f32 %v3139, %v7130
      %v7145 = vmul.f32 %v3243, %v7130
      %v7146 = vmul.f32 %v3227, %v7130
      %v7147 = vmul.f32 %v3142, %v7130
      %v7148 = vmul.f32 %v3244, %v7130
      %v7149 = vmul.f32 %v3228, %v7130
      %v7150 = vmul.f32 %v3145, %v7130
      %v7151 = vmul.f32 %v3245, %v7130
      %v7152 = vmul.f32 %v3229, %v7130
      %v7153 = vmul.f32 %v3148, %v7130
      %v7154 = vmul.f32 %v3246, %v7130
      %v7155 = vmul.f32 %v3230, %v7130
      %v7156 = vmul.f32 %v3151, %v7130
      %v7157 = vmul.f32 %v3247, %v7130
      %v7158 = vmul.f32 %v3231, %v7130
      %v7159 = vmul.f32 %v3154, %v7130
      %v7160 = vmul.f32 %v3248, %v7130
      %v7161 = vmul.f32 %v3232, %v7130
      %v7162 = vmul.f32 %v3157, %v7130
      %v7163 = vmul.f32 %v3249, %v7130
      %v7164 = vmul.f32 %v3233, %v7130
      %v7165 = vmul.f32 %v3160, %v7130
      %v7166 = vmul.f32 %v3250, %v7130
      %v7167 = vmul.f32 %v3234, %v7130
      %v7168 = vmul.f32 %v3163, %v7130
      %v7169 = vmul.f32 %v3251, %v7130
      %v7170 = vmul.f32 %v3235, %v7130
      %v7171 = vmul.f32 %v3166, %v7130
      %v7172 = vmul.f32 %v3252, %v7130
      %v7173 = vmul.f32 %v3236, %v7130
      %v7174 = vmul.f32 %v3169, %v7130
      %v7175 = vmul.f32 %v3253, %v7130
      %v7176 = vmul.f32 %v3220, %v7130
      %v7177 = vmul.f32 %v3121, %v7130
      %v7178 = vmul.f32 %v3237, %v7130
      %v7227 = vrot.slane %v7131, 4
      %v7228 = vrot.slane %v7132, 4
      %v7229 = vsel %vm605, %v7227, %v7228
      %v7230 = vrot.slane %v7133, 4
      %v7231 = vsel %vm605, %v7228, %v7230
      %v7232 = vrot.slane %v7134, 4
      %v7233 = vrot.slane %v7135, 4
      %v7234 = vsel %vm605, %v7232, %v7233
      %v7235 = vrot.slane %v7136, 4
      %v7236 = vsel %vm605, %v7233, %v7235
      %v7237 = vrot.slane %v7137, 4
      %v7238 = vrot.slane %v7138, 4
      %v7239 = vsel %vm605, %v7237, %v7238
      %v7240 = vrot.slane %v7139, 4
      %v7241 = vsel %vm605, %v7238, %v7240
      %v7242 = vrot.slane %v7140, 4
      %v7243 = vrot.slane %v7141, 4
      %v7244 = vsel %vm605, %v7242, %v7243
      %v7245 = vrot.slane %v7142, 4
      %v7246 = vsel %vm605, %v7243, %v7245
      %v7247 = vrot.slane %v7143, 4
      %v7248 = vrot.slane %v7144, 4
      %v7249 = vsel %vm605, %v7247, %v7248
      %v7250 = vrot.slane %v7145, 4
      %v7251 = vsel %vm605, %v7248, %v7250
      %v7252 = vrot.slane %v7146, 4
      %v7253 = vrot.slane %v7147, 4
      %v7254 = vsel %vm605, %v7252, %v7253
      %v7255 = vrot.slane %v7148, 4
      %v7256 = vsel %vm605, %v7253, %v7255
      %v7257 = vrot.slane %v7149, 4
      %v7258 = vrot.slane %v7150, 4
      %v7259 = vsel %vm605, %v7257, %v7258
      %v7260 = vrot.slane %v7151, 4
      %v7261 = vsel %vm605, %v7258, %v7260
      %v7262 = vrot.slane %v7152, 4
      %v7263 = vrot.slane %v7153, 4
      %v7264 = vsel %vm605, %v7262, %v7263
      %v7265 = vrot.slane %v7154, 4
      %v7266 = vsel %vm605, %v7263, %v7265
      %v7267 = vrot.slane %v7155, 4
      %v7268 = vrot.slane %v7156, 4
      %v7269 = vsel %vm605, %v7267, %v7268
      %v7270 = vrot.slane %v7157, 4
      %v7271 = vsel %vm605, %v7268, %v7270
      %v7272 = vrot.slane %v7158, 4
      %v7273 = vrot.slane %v7159, 4
      %v7274 = vsel %vm605, %v7272, %v7273
      %v7275 = vrot.slane %v7160, 4
      %v7276 = vsel %vm605, %v7273, %v7275
      %v7277 = vrot.slane %v7161, 4
      %v7278 = vrot.slane %v7162, 4
      %v7279 = vsel %vm605, %v7277, %v7278
      %v7280 = vrot.slane %v7163, 4
      %v7281 = vsel %vm605, %v7278, %v7280
      %v7282 = vrot.slane %v7164, 4
      %v7283 = vrot.slane %v7165, 4
      %v7284 = vsel %vm605, %v7282, %v7283
      %v7285 = vrot.slane %v7166, 4
      %v7286 = vsel %vm605, %v7283, %v7285
      %v7287 = vrot.slane %v7167, 4
      %v7288 = vrot.slane %v7168, 4
      %v7289 = vsel %vm605, %v7287, %v7288
      %v7290 = vrot.slane %v7169, 4
      %v7291 = vsel %vm605, %v7288, %v7290
      %v7292 = vrot.slane %v7170, 4
      %v7293 = vrot.slane %v7171, 4
      %v7294 = vsel %vm605, %v7292, %v7293
      %v7295 = vrot.slane %v7172, 4
      %v7296 = vsel %vm605, %v7293, %v7295
      %v7297 = vrot.slane %v7173, 4
      %v7298 = vrot.slane %v7174, 4
      %v7299 = vsel %vm605, %v7297, %v7298
      %v7300 = vrot.slane %v7175, 4
      %v7301 = vsel %vm605, %v7298, %v7300
      %v7302 = vrot.slane %v7176, 4
      %v7303 = vrot.slane %v7177, 4
      %v7304 = vsel %vm605, %v7302, %v7303
      %v7305 = vrot.slane %v7178, 4
      %v7306 = vsel %vm605, %v7303, %v7305
      %v7339 = vadd.f32 %v7095, %v7229
      %v7340 = vadd.f32 %v7096, %v7231
      %v7341 = vadd.f32 %v7097, %v7234
      %v7342 = vadd.f32 %v7098, %v7236
      %v7343 = vadd.f32 %v7099, %v7239
      %v7344 = vadd.f32 %v7100, %v7241
      %v7345 = vadd.f32 %v7101, %v7244
      %v7346 = vadd.f32 %v7102, %v7246
      %v7347 = vadd.f32 %v7103, %v7249
      %v7348 = vadd.f32 %v7104, %v7251
      %v7349 = vadd.f32 %v7105, %v7254
      %v7350 = vadd.f32 %v7106, %v7256
      %v7351 = vadd.f32 %v7107, %v7259
      %v7352 = vadd.f32 %v7108, %v7261
      %v7353 = vadd.f32 %v7109, %v7264
      %v7354 = vadd.f32 %v7110, %v7266
      %v7355 = vadd.f32 %v7111, %v7269
      %v7356 = vadd.f32 %v7112, %v7271
      %v7357 = vadd.f32 %v7113, %v7274
      %v7358 = vadd.f32 %v7114, %v7276
      %v7359 = vadd.f32 %v7115, %v7279
      %v7360 = vadd.f32 %v7116, %v7281
      %v7361 = vadd.f32 %v7117, %v7284
      %v7362 = vadd.f32 %v7118, %v7286
      %v7363 = vadd.f32 %v7119, %v7289
      %v7364 = vadd.f32 %v7120, %v7291
      %v7365 = vadd.f32 %v7121, %v7294
      %v7366 = vadd.f32 %v7122, %v7296
      %v7367 = vadd.f32 %v7123, %v7299
      %v7368 = vadd.f32 %v7124, %v7301
      %v7369 = vadd.f32 %v7125, %v7304
      %v7370 = vadd.f32 %v7126, %v7306
      %v7371 = vlaneseq
      %v7372 = vshrl.u32 %v7371, 7
      %v7373 = vsub.s32 4, %v7372
      %v7374 = vrot.slane %v3256, %v7373
      %v7375 = vmul.f32 %v3223, %v7374
      %v7376 = vmul.f32 %v3130, %v7374
      %v7377 = vmul.f32 %v3224, %v7374
      %v7378 = vmul.f32 %v3133, %v7374
      %v7379 = vmul.f32 %v3225, %v7374
      %v7380 = vmul.f32 %v3136, %v7374
      %v7381 = vmul.f32 %v3226, %v7374
      %v7382 = vmul.f32 %v3139, %v7374
      %v7383 = vmul.f32 %v3227, %v7374
      %v7384 = vmul.f32 %v3142, %v7374
      %v7385 = vmul.f32 %v3228, %v7374
      %v7386 = vmul.f32 %v3145, %v7374
      %v7387 = vmul.f32 %v3229, %v7374
      %v7388 = vmul.f32 %v3148, %v7374
      %v7389 = vmul.f32 %v3230, %v7374
      %v7390 = vmul.f32 %v3151, %v7374
      %v7391 = vmul.f32 %v3231, %v7374
      %v7392 = vmul.f32 %v3154, %v7374
      %v7393 = vmul.f32 %v3232, %v7374
      %v7394 = vmul.f32 %v3157, %v7374
      %v7395 = vmul.f32 %v3233, %v7374
      %v7396 = vmul.f32 %v3160, %v7374
      %v7397 = vmul.f32 %v3234, %v7374
      %v7398 = vmul.f32 %v3163, %v7374
      %v7399 = vmul.f32 %v3235, %v7374
      %v7400 = vmul.f32 %v3166, %v7374
      %v7401 = vmul.f32 %v3236, %v7374
      %v7402 = vmul.f32 %v3169, %v7374
      %v7403 = vmul.f32 %v3220, %v7374
      %v7404 = vmul.f32 %v3121, %v7374
      %v7405 = vadd.f32 %v7339, %v7375
      %v7406 = vadd.f32 %v7340, %v7376
      %v7407 = vadd.f32 %v7341, %v7377
      %v7408 = vadd.f32 %v7342, %v7378
      %v7409 = vadd.f32 %v7343, %v7379
      %v7410 = vadd.f32 %v7344, %v7380
      %v7411 = vadd.f32 %v7345, %v7381
      %v7412 = vadd.f32 %v7346, %v7382
      %v7413 = vadd.f32 %v7347, %v7383
      %v7414 = vadd.f32 %v7348, %v7384
      %v7415 = vadd.f32 %v7349, %v7385
      %v7416 = vadd.f32 %v7350, %v7386
      %v7417 = vadd.f32 %v7351, %v7387
      %v7418 = vadd.f32 %v7352, %v7388
      %v7419 = vadd.f32 %v7353, %v7389
      %v7420 = vadd.f32 %v7354, %v7390
      %v7421 = vadd.f32 %v7355, %v7391
      %v7422 = vadd.f32 %v7356, %v7392
      %v7423 = vadd.f32 %v7357, %v7393
      %v7424 = vadd.f32 %v7358, %v7394
      %v7425 = vadd.f32 %v7359, %v7395
      %v7426 = vadd.f32 %v7360, %v7396
      %v7427 = vadd.f32 %v7361, %v7397
      %v7428 = vadd.f32 %v7362, %v7398
      %v7429 = vadd.f32 %v7363, %v7399
      %v7430 = vadd.f32 %v7364, %v7400
      %v7431 = vadd.f32 %v7365, %v7401
      %v7432 = vadd.f32 %v7366, %v7402
      %v7433 = vadd.f32 %v7367, %v7403
      %v7434 = vadd.f32 %v7368, %v7404
      %v7435 = vadd.f32 %v7369, %v7403
      %v7436 = vadd.f32 %v7370, %v7404
      %v7437 = vlaneseq
      %v7438 = vshrl.u32 %v7437, 7
      %v7439 = vsub.s32 5, %v7438
      %v7440 = vrot.slane %v3256, %v7439
      %v7441 = vmul.f32 %v3223, %v7440
      %v7442 = vmul.f32 %v3130, %v7440
      %v7443 = vmul.f32 %v3240, %v7440
      %v7444 = vmul.f32 %v3224, %v7440
      %v7445 = vmul.f32 %v3133, %v7440
      %v7446 = vmul.f32 %v3241, %v7440
      %v7447 = vmul.f32 %v3225, %v7440
      %v7448 = vmul.f32 %v3136, %v7440
      %v7449 = vmul.f32 %v3242, %v7440
      %v7450 = vmul.f32 %v3226, %v7440
      %v7451 = vmul.f32 %v3139, %v7440
      %v7452 = vmul.f32 %v3243, %v7440
      %v7453 = vmul.f32 %v3227, %v7440
      %v7454 = vmul.f32 %v3142, %v7440
      %v7455 = vmul.f32 %v3244, %v7440
      %v7456 = vmul.f32 %v3228, %v7440
      %v7457 = vmul.f32 %v3145, %v7440
      %v7458 = vmul.f32 %v3245, %v7440
      %v7459 = vmul.f32 %v3229, %v7440
      %v7460 = vmul.f32 %v3148, %v7440
      %v7461 = vmul.f32 %v3246, %v7440
      %v7462 = vmul.f32 %v3230, %v7440
      %v7463 = vmul.f32 %v3151, %v7440
      %v7464 = vmul.f32 %v3247, %v7440
      %v7465 = vmul.f32 %v3231, %v7440
      %v7466 = vmul.f32 %v3154, %v7440
      %v7467 = vmul.f32 %v3248, %v7440
      %v7468 = vmul.f32 %v3232, %v7440
      %v7469 = vmul.f32 %v3157, %v7440
      %v7470 = vmul.f32 %v3249, %v7440
      %v7471 = vmul.f32 %v3233, %v7440
      %v7472 = vmul.f32 %v3160, %v7440
      %v7473 = vmul.f32 %v3250, %v7440
      %v7474 = vmul.f32 %v3234, %v7440
      %v7475 = vmul.f32 %v3163, %v7440
      %v7476 = vmul.f32 %v3251, %v7440
      %v7477 = vmul.f32 %v3235, %v7440
      %v7478 = vmul.f32 %v3166, %v7440
      %v7479 = vmul.f32 %v3252, %v7440
      %v7480 = vmul.f32 %v3236, %v7440
      %v7481 = vmul.f32 %v3169, %v7440
      %v7482 = vmul.f32 %v3253, %v7440
      %v7483 = vmul.f32 %v3220, %v7440
      %v7484 = vmul.f32 %v3121, %v7440
      %v7485 = vmul.f32 %v3237, %v7440
      %v7531 = vrot.slane %v7441, 1
      %v7532 = vrot.slane %v7442, 1
      %v7533 = vsel %vm1321, %v7531, %v7532
      %v7534 = vrot.slane %v7443, 1
      %v7535 = vsel %vm1321, %v7532, %v7534
      %v7536 = vrot.slane %v7444, 1
      %v7537 = vrot.slane %v7445, 1
      %v7538 = vsel %vm1321, %v7536, %v7537
      %v7539 = vrot.slane %v7446, 1
      %v7540 = vsel %vm1321, %v7537, %v7539
      %v7541 = vrot.slane %v7447, 1
      %v7542 = vrot.slane %v7448, 1
      %v7543 = vsel %vm1321, %v7541, %v7542
      %v7544 = vrot.slane %v7449, 1
      %v7545 = vsel %vm1321, %v7542, %v7544
      %v7546 = vrot.slane %v7450, 1
      %v7547 = vrot.slane %v7451, 1
      %v7548 = vsel %vm1321, %v7546, %v7547
      %v7549 = vrot.slane %v7452, 1
      %v7550 = vsel %vm1321, %v7547, %v7549
      %v7551 = vrot.slane %v7453, 1
      %v7552 = vrot.slane %v7454, 1
      %v7553 = vsel %vm1321, %v7551, %v7552
      %v7554 = vrot.slane %v7455, 1
      %v7555 = vsel %vm1321, %v7552, %v7554
      %v7556 = vrot.slane %v7456, 1
      %v7557 = vrot.slane %v7457, 1
      %v7558 = vsel %vm1321, %v7556, %v7557
      %v7559 = vrot.slane %v7458, 1
      %v7560 = vsel %vm1321, %v7557, %v7559
      %v7561 = vrot.slane %v7459, 1
      %v7562 = vrot.slane %v7460, 1
      %v7563 = vsel %vm1321, %v7561, %v7562
      %v7564 = vrot.slane %v7461, 1
      %v7565 = vsel %vm1321, %v7562, %v7564
      %v7566 = vrot.slane %v7462, 1
      %v7567 = vrot.slane %v7463, 1
      %v7568 = vsel %vm1321, %v7566, %v7567
      %v7569 = vrot.slane %v7464, 1
      %v7570 = vsel %vm1321, %v7567, %v7569
      %v7571 = vrot.slane %v7465, 1
      %v7572 = vrot.slane %v7466, 1
      %v7573 = vsel %vm1321, %v7571, %v7572
      %v7574 = vrot.slane %v7467, 1
      %v7575 = vsel %vm1321, %v7572, %v7574
      %v7576 = vrot.slane %v7468, 1
      %v7577 = vrot.slane %v7469, 1
      %v7578 = vsel %vm1321, %v7576, %v7577
      %v7579 = vrot.slane %v7470, 1
      %v7580 = vsel %vm1321, %v7577, %v7579
      %v7581 = vrot.slane %v7471, 1
      %v7582 = vrot.slane %v7472, 1
      %v7583 = vsel %vm1321, %v7581, %v7582
      %v7584 = vrot.slane %v7473, 1
      %v7585 = vsel %vm1321, %v7582, %v7584
      %v7586 = vrot.slane %v7474, 1
      %v7587 = vrot.slane %v7475, 1
      %v7588 = vsel %vm1321, %v7586, %v7587
      %v7589 = vrot.slane %v7476, 1
      %v7590 = vsel %vm1321, %v7587, %v7589
      %v7591 = vrot.slane %v7477, 1
      %v7592 = vrot.slane %v7478, 1
      %v7593 = vsel %vm1321, %v7591, %v7592
      %v7594 = vrot.slane %v7479, 1
      %v7595 = vsel %vm1321, %v7592, %v7594
      %v7596 = vrot.slane %v7480, 1
      %v7597 = vrot.slane %v7481, 1
      %v7598 = vsel %vm1321, %v7596, %v7597
      %v7599 = vrot.slane %v7482, 1
      %v7600 = vsel %vm1321, %v7597, %v7599
      %v7601 = vrot.slane %v7483, 1
      %v7602 = vrot.slane %v7484, 1
      %v7603 = vsel %vm1321, %v7601, %v7602
      %v7604 = vrot.slane %v7485, 1
      %v7605 = vsel %vm1321, %v7602, %v7604
      %v7636 = vadd.f32 %v7405, %v7533
      %v7637 = vadd.f32 %v7406, %v7535
      %v7638 = vadd.f32 %v7407, %v7538
      %v7639 = vadd.f32 %v7408, %v7540
      %v7640 = vadd.f32 %v7409, %v7543
      %v7641 = vadd.f32 %v7410, %v7545
      %v7642 = vadd.f32 %v7411, %v7548
      %v7643 = vadd.f32 %v7412, %v7550
      %v7644 = vadd.f32 %v7413, %v7553
      %v7645 = vadd.f32 %v7414, %v7555
      %v7646 = vadd.f32 %v7415, %v7558
      %v7647 = vadd.f32 %v7416, %v7560
      %v7648 = vadd.f32 %v7417, %v7563
      %v7649 = vadd.f32 %v7418, %v7565
      %v7650 = vadd.f32 %v7419, %v7568
      %v7651 = vadd.f32 %v7420, %v7570
      %v7652 = vadd.f32 %v7421, %v7573
      %v7653 = vadd.f32 %v7422, %v7575
      %v7654 = vadd.f32 %v7423, %v7578
      %v7655 = vadd.f32 %v7424, %v7580
      %v7656 = vadd.f32 %v7425, %v7583
      %v7657 = vadd.f32 %v7426, %v7585
      %v7658 = vadd.f32 %v7427, %v7588
      %v7659 = vadd.f32 %v7428, %v7590
      %v7660 = vadd.f32 %v7429, %v7593
      %v7661 = vadd.f32 %v7430, %v7595
      %v7662 = vadd.f32 %v7431, %v7598
      %v7663 = vadd.f32 %v7432, %v7600
      %v7664 = vadd.f32 %v7433, %v7603
      %v7665 = vadd.f32 %v7434, %v7605
      %v7666 = vadd.f32 %v7435, %v7603
      %v7667 = vadd.f32 %v7436, %v7605
      %v7668 = vlaneseq
      %v7669 = vshrl.u32 %v7668, 7
      %v7670 = vsub.s32 6, %v7669
      %v7671 = vrot.slane %v3256, %v7670
      %v7672 = vmul.f32 %v3223, %v7671
      %v7673 = vmul.f32 %v3130, %v7671
      %v7674 = vmul.f32 %v3240, %v7671
      %v7675 = vmul.f32 %v3224, %v7671
      %v7676 = vmul.f32 %v3133, %v7671
      %v7677 = vmul.f32 %v3241, %v7671
      %v7678 = vmul.f32 %v3225, %v7671
      %v7679 = vmul.f32 %v3136, %v7671
      %v7680 = vmul.f32 %v3242, %v7671
      %v7681 = vmul.f32 %v3226, %v7671
      %v7682 = vmul.f32 %v3139, %v7671
      %v7683 = vmul.f32 %v3243, %v7671
      %v7684 = vmul.f32 %v3227, %v7671
      %v7685 = vmul.f32 %v3142, %v7671
      %v7686 = vmul.f32 %v3244, %v7671
      %v7687 = vmul.f32 %v3228, %v7671
      %v7688 = vmul.f32 %v3145, %v7671
      %v7689 = vmul.f32 %v3245, %v7671
      %v7690 = vmul.f32 %v3229, %v7671
      %v7691 = vmul.f32 %v3148, %v7671
      %v7692 = vmul.f32 %v3246, %v7671
      %v7693 = vmul.f32 %v3230, %v7671
      %v7694 = vmul.f32 %v3151, %v7671
      %v7695 = vmul.f32 %v3247, %v7671
      %v7696 = vmul.f32 %v3231, %v7671
      %v7697 = vmul.f32 %v3154, %v7671
      %v7698 = vmul.f32 %v3248, %v7671
      %v7699 = vmul.f32 %v3232, %v7671
      %v7700 = vmul.f32 %v3157, %v7671
      %v7701 = vmul.f32 %v3249, %v7671
      %v7702 = vmul.f32 %v3233, %v7671
      %v7703 = vmul.f32 %v3160, %v7671
      %v7704 = vmul.f32 %v3250, %v7671
      %v7705 = vmul.f32 %v3234, %v7671
      %v7706 = vmul.f32 %v3163, %v7671
      %v7707 = vmul.f32 %v3251, %v7671
      %v7708 = vmul.f32 %v3235, %v7671
      %v7709 = vmul.f32 %v3166, %v7671
      %v7710 = vmul.f32 %v3252, %v7671
      %v7711 = vmul.f32 %v3236, %v7671
      %v7712 = vmul.f32 %v3169, %v7671
      %v7713 = vmul.f32 %v3253, %v7671
      %v7714 = vmul.f32 %v3220, %v7671
      %v7715 = vmul.f32 %v3121, %v7671
      %v7716 = vmul.f32 %v3237, %v7671
      %v7762 = vrot.slane %v7672, 2
      %v7763 = vrot.slane %v7673, 2
      %v7764 = vsel %vm1402, %v7762, %v7763
      %v7765 = vrot.slane %v7674, 2
      %v7766 = vsel %vm1402, %v7763, %v7765
      %v7767 = vrot.slane %v7675, 2
      %v7768 = vrot.slane %v7676, 2
      %v7769 = vsel %vm1402, %v7767, %v7768
      %v7770 = vrot.slane %v7677, 2
      %v7771 = vsel %vm1402, %v7768, %v7770
      %v7772 = vrot.slane %v7678, 2
      %v7773 = vrot.slane %v7679, 2
      %v7774 = vsel %vm1402, %v7772, %v7773
      %v7775 = vrot.slane %v7680, 2
      %v7776 = vsel %vm1402, %v7773, %v7775
      %v7777 = vrot.slane %v7681, 2
      %v7778 = vrot.slane %v7682, 2
      %v7779 = vsel %vm1402, %v7777, %v7778
      %v7780 = vrot.slane %v7683, 2
      %v7781 = vsel %vm1402, %v7778, %v7780
      %v7782 = vrot.slane %v7684, 2
      %v7783 = vrot.slane %v7685, 2
      %v7784 = vsel %vm1402, %v7782, %v7783
      %v7785 = vrot.slane %v7686, 2
      %v7786 = vsel %vm1402, %v7783, %v7785
      %v7787 = vrot.slane %v7687, 2
      %v7788 = vrot.slane %v7688, 2
      %v7789 = vsel %vm1402, %v7787, %v7788
      %v7790 = vrot.slane %v7689, 2
      %v7791 = vsel %vm1402, %v7788, %v7790
      %v7792 = vrot.slane %v7690, 2
      %v7793 = vrot.slane %v7691, 2
      %v7794 = vsel %vm1402, %v7792, %v7793
      %v7795 = vrot.slane %v7692, 2
      %v7796 = vsel %vm1402, %v7793, %v7795
      %v7797 = vrot.slane %v7693, 2
      %v7798 = vrot.slane %v7694, 2
      %v7799 = vsel %vm1402, %v7797, %v7798
      %v7800 = vrot.slane %v7695, 2
      %v7801 = vsel %vm1402, %v7798, %v7800
      %v7802 = vrot.slane %v7696, 2
      %v7803 = vrot.slane %v7697, 2
      %v7804 = vsel %vm1402, %v7802, %v7803
      %v7805 = vrot.slane %v7698, 2
      %v7806 = vsel %vm1402, %v7803, %v7805
      %v7807 = vrot.slane %v7699, 2
      %v7808 = vrot.slane %v7700, 2
      %v7809 = vsel %vm1402, %v7807, %v7808
      %v7810 = vrot.slane %v7701, 2
      %v7811 = vsel %vm1402, %v7808, %v7810
      %v7812 = vrot.slane %v7702, 2
      %v7813 = vrot.slane %v7703, 2
      %v7814 = vsel %vm1402, %v7812, %v7813
      %v7815 = vrot.slane %v7704, 2
      %v7816 = vsel %vm1402, %v7813, %v7815
      %v7817 = vrot.slane %v7705, 2
      %v7818 = vrot.slane %v7706, 2
      %v7819 = vsel %vm1402, %v7817, %v7818
      %v7820 = vrot.slane %v7707, 2
      %v7821 = vsel %vm1402, %v7818, %v7820
      %v7822 = vrot.slane %v7708, 2
      %v7823 = vrot.slane %v7709, 2
      %v7824 = vsel %vm1402, %v7822, %v7823
      %v7825 = vrot.slane %v7710, 2
      %v7826 = vsel %vm1402, %v7823, %v7825
      %v7827 = vrot.slane %v7711, 2
      %v7828 = vrot.slane %v7712, 2
      %v7829 = vsel %vm1402, %v7827, %v7828
      %v7830 = vrot.slane %v7713, 2
      %v7831 = vsel %vm1402, %v7828, %v7830
      %v7832 = vrot.slane %v7714, 2
      %v7833 = vrot.slane %v7715, 2
      %v7834 = vsel %vm1402, %v7832, %v7833
      %v7835 = vrot.slane %v7716, 2
      %v7836 = vsel %vm1402, %v7833, %v7835
      %v7867 = vadd.f32 %v7636, %v7764
      %v7868 = vadd.f32 %v7637, %v7766
      %v7869 = vadd.f32 %v7638, %v7769
      %v7870 = vadd.f32 %v7639, %v7771
      %v7871 = vadd.f32 %v7640, %v7774
      %v7872 = vadd.f32 %v7641, %v7776
      %v7873 = vadd.f32 %v7642, %v7779
      %v7874 = vadd.f32 %v7643, %v7781
      %v7875 = vadd.f32 %v7644, %v7784
      %v7876 = vadd.f32 %v7645, %v7786
      %v7877 = vadd.f32 %v7646, %v7789
      %v7878 = vadd.f32 %v7647, %v7791
      %v7879 = vadd.f32 %v7648, %v7794
      %v7880 = vadd.f32 %v7649, %v7796
      %v7881 = vadd.f32 %v7650, %v7799
      %v7882 = vadd.f32 %v7651, %v7801
      %v7883 = vadd.f32 %v7652, %v7804
      %v7884 = vadd.f32 %v7653, %v7806
      %v7885 = vadd.f32 %v7654, %v7809
      %v7886 = vadd.f32 %v7655, %v7811
      %v7887 = vadd.f32 %v7656, %v7814
      %v7888 = vadd.f32 %v7657, %v7816
      %v7889 = vadd.f32 %v7658, %v7819
      %v7890 = vadd.f32 %v7659, %v7821
      %v7891 = vadd.f32 %v7660, %v7824
      %v7892 = vadd.f32 %v7661, %v7826
      %v7893 = vadd.f32 %v7662, %v7829
      %v7894 = vadd.f32 %v7663, %v7831
      %v7895 = vadd.f32 %v7664, %v7834
      %v7896 = vadd.f32 %v7665, %v7836
      %v7897 = vadd.f32 %v7666, %v7834
      %v7898 = vadd.f32 %v7667, %v7836
      %v7899 = vlaneseq
      %v7900 = vshrl.u32 %v7899, 7
      %v7901 = vsub.s32 7, %v7900
      %v7902 = vrot.slane %v3256, %v7901
      %v7903 = vmul.f32 %v3223, %v7902
      %v7904 = vmul.f32 %v3130, %v7902
      %v7905 = vmul.f32 %v3240, %v7902
      %v7906 = vmul.f32 %v3224, %v7902
      %v7907 = vmul.f32 %v3133, %v7902
      %v7908 = vmul.f32 %v3241, %v7902
      %v7909 = vmul.f32 %v3225, %v7902
      %v7910 = vmul.f32 %v3136, %v7902
      %v7911 = vmul.f32 %v3242, %v7902
      %v7912 = vmul.f32 %v3226, %v7902
      %v7913 = vmul.f32 %v3139, %v7902
      %v7914 = vmul.f32 %v3243, %v7902
      %v7915 = vmul.f32 %v3227, %v7902
      %v7916 = vmul.f32 %v3142, %v7902
      %v7917 = vmul.f32 %v3244, %v7902
      %v7918 = vmul.f32 %v3228, %v7902
      %v7919 = vmul.f32 %v3145, %v7902
      %v7920 = vmul.f32 %v3245, %v7902
      %v7921 = vmul.f32 %v3229, %v7902
      %v7922 = vmul.f32 %v3148, %v7902
      %v7923 = vmul.f32 %v3246, %v7902
      %v7924 = vmul.f32 %v3230, %v7902
      %v7925 = vmul.f32 %v3151, %v7902
      %v7926 = vmul.f32 %v3247, %v7902
      %v7927 = vmul.f32 %v3231, %v7902
      %v7928 = vmul.f32 %v3154, %v7902
      %v7929 = vmul.f32 %v3248, %v7902
      %v7930 = vmul.f32 %v3232, %v7902
      %v7931 = vmul.f32 %v3157, %v7902
      %v7932 = vmul.f32 %v3249, %v7902
      %v7933 = vmul.f32 %v3233, %v7902
      %v7934 = vmul.f32 %v3160, %v7902
      %v7935 = vmul.f32 %v3250, %v7902
      %v7936 = vmul.f32 %v3234, %v7902
      %v7937 = vmul.f32 %v3163, %v7902
      %v7938 = vmul.f32 %v3251, %v7902
      %v7939 = vmul.f32 %v3235, %v7902
      %v7940 = vmul.f32 %v3166, %v7902
      %v7941 = vmul.f32 %v3252, %v7902
      %v7942 = vmul.f32 %v3236, %v7902
      %v7943 = vmul.f32 %v3169, %v7902
      %v7944 = vmul.f32 %v3253, %v7902
      %v7945 = vmul.f32 %v3220, %v7902
      %v7946 = vmul.f32 %v3121, %v7902
      %v7947 = vmul.f32 %v3237, %v7902
      %v7993 = vrot.slane %v7903, 3
      %v7994 = vrot.slane %v7904, 3
      %v7995 = vsel %vm3874, %v7993, %v7994
      %v7996 = vrot.slane %v7905, 3
      %v7997 = vsel %vm3874, %v7994, %v7996
      %v7998 = vrot.slane %v7906, 3
      %v7999 = vrot.slane %v7907, 3
      %v8000 = vsel %vm3874, %v7998, %v7999
      %v8001 = vrot.slane %v7908, 3
      %v8002 = vsel %vm3874, %v7999, %v8001
      %v8003 = vrot.slane %v7909, 3
      %v8004 = vrot.slane %v7910, 3
      %v8005 = vsel %vm3874, %v8003, %v8004
      %v8006 = vrot.slane %v7911, 3
      %v8007 = vsel %vm3874, %v8004, %v8006
      %v8008 = vrot.slane %v7912, 3
      %v8009 = vrot.slane %v7913, 3
      %v8010 = vsel %vm3874, %v8008, %v8009
      %v8011 = vrot.slane %v7914, 3
      %v8012 = vsel %vm3874, %v8009, %v8011
      %v8013 = vrot.slane %v7915, 3
      %v8014 = vrot.slane %v7916, 3
      %v8015 = vsel %vm3874, %v8013, %v8014
      %v8016 = vrot.slane %v7917, 3
      %v8017 = vsel %vm3874, %v8014, %v8016
      %v8018 = vrot.slane %v7918, 3
      %v8019 = vrot.slane %v7919, 3
      %v8020 = vsel %vm3874, %v8018, %v8019
      %v8021 = vrot.slane %v7920, 3
      %v8022 = vsel %vm3874, %v8019, %v8021
      %v8023 = vrot.slane %v7921, 3
      %v8024 = vrot.slane %v7922, 3
      %v8025 = vsel %vm3874, %v8023, %v8024
      %v8026 = vrot.slane %v7923, 3
      %v8027 = vsel %vm3874, %v8024, %v8026
      %v8028 = vrot.slane %v7924, 3
      %v8029 = vrot.slane %v7925, 3
      %v8030 = vsel %vm3874, %v8028, %v8029
      %v8031 = vrot.slane %v7926, 3
      %v8032 = vsel %vm3874, %v8029, %v8031
      %v8033 = vrot.slane %v7927, 3
      %v8034 = vrot.slane %v7928, 3
      %v8035 = vsel %vm3874, %v8033, %v8034
      %v8036 = vrot.slane %v7929, 3
      %v8037 = vsel %vm3874, %v8034, %v8036
      %v8038 = vrot.slane %v7930, 3
      %v8039 = vrot.slane %v7931, 3
      %v8040 = vsel %vm3874, %v8038, %v8039
      %v8041 = vrot.slane %v7932, 3
      %v8042 = vsel %vm3874, %v8039, %v8041
      %v8043 = vrot.slane %v7933, 3
      %v8044 = vrot.slane %v7934, 3
      %v8045 = vsel %vm3874, %v8043, %v8044
      %v8046 = vrot.slane %v7935, 3
      %v8047 = vsel %vm3874, %v8044, %v8046
      %v8048 = vrot.slane %v7936, 3
      %v8049 = vrot.slane %v7937, 3
      %v8050 = vsel %vm3874, %v8048, %v8049
      %v8051 = vrot.slane %v7938, 3
      %v8052 = vsel %vm3874, %v8049, %v8051
      %v8053 = vrot.slane %v7939, 3
      %v8054 = vrot.slane %v7940, 3
      %v8055 = vsel %vm3874, %v8053, %v8054
      %v8056 = vrot.slane %v7941, 3
      %v8057 = vsel %vm3874, %v8054, %v8056
      %v8058 = vrot.slane %v7942, 3
      %v8059 = vrot.slane %v7943, 3
      %v8060 = vsel %vm3874, %v8058, %v8059
      %v8061 = vrot.slane %v7944, 3
      %v8062 = vsel %vm3874, %v8059, %v8061
      %v8063 = vrot.slane %v7945, 3
      %v8064 = vrot.slane %v7946, 3
      %v8065 = vsel %vm3874, %v8063, %v8064
      %v8066 = vrot.slane %v7947, 3
      %v8067 = vsel %vm3874, %v8064, %v8066
      %v8098 = vadd.f32 %v7867, %v7995
      %v8099 = vadd.f32 %v7868, %v7997
      %v8100 = vadd.f32 %v7869, %v8000
      %v8101 = vadd.f32 %v7870, %v8002
      %v8102 = vadd.f32 %v7871, %v8005
      %v8103 = vadd.f32 %v7872, %v8007
      %v8104 = vadd.f32 %v7873, %v8010
      %v8105 = vadd.f32 %v7874, %v8012
      %v8106 = vadd.f32 %v7875, %v8015
      %v8107 = vadd.f32 %v7876, %v8017
      %v8108 = vadd.f32 %v7877, %v8020
      %v8109 = vadd.f32 %v7878, %v8022
      %v8110 = vadd.f32 %v7879, %v8025
      %v8111 = vadd.f32 %v7880, %v8027
      %v8112 = vadd.f32 %v7881, %v8030
      %v8113 = vadd.f32 %v7882, %v8032
      %v8114 = vadd.f32 %v7883, %v8035
      %v8115 = vadd.f32 %v7884, %v8037
      %v8116 = vadd.f32 %v7885, %v8040
      %v8117 = vadd.f32 %v7886, %v8042
      %v8118 = vadd.f32 %v7887, %v8045
      %v8119 = vadd.f32 %v7888, %v8047
      %v8120 = vadd.f32 %v7889, %v8050
      %v8121 = vadd.f32 %v7890, %v8052
      %v8122 = vadd.f32 %v7891, %v8055
      %v8123 = vadd.f32 %v7892, %v8057
      %v8124 = vadd.f32 %v7893, %v8060
      %v8125 = vadd.f32 %v7894, %v8062
      %v8126 = vadd.f32 %v7895, %v8065
      %v8127 = vadd.f32 %v7896, %v8067
      %v8128 = vadd.f32 %v7897, %v8065
      %v8129 = vadd.f32 %v7898, %v8067
      %v8130 = vlaneseq
      %v8131 = vshrl.u32 %v8130, 7
      %v8132 = vsub.s32 0, %v8131
      %v8133 = vrot.slane %v3257, %v8132
      %v8134 = vmul.f32 %v3223, %v8133
      %v8135 = vmul.f32 %v3130, %v8133
      %v8136 = vmul.f32 %v3240, %v8133
      %v8137 = vmul.f32 %v3224, %v8133
      %v8138 = vmul.f32 %v3133, %v8133
      %v8139 = vmul.f32 %v3241, %v8133
      %v8140 = vmul.f32 %v3225, %v8133
      %v8141 = vmul.f32 %v3136, %v8133
      %v8142 = vmul.f32 %v3242, %v8133
      %v8143 = vmul.f32 %v3226, %v8133
      %v8144 = vmul.f32 %v3139, %v8133
      %v8145 = vmul.f32 %v3243, %v8133
      %v8146 = vmul.f32 %v3227, %v8133
      %v8147 = vmul.f32 %v3142, %v8133
      %v8148 = vmul.f32 %v3244, %v8133
      %v8149 = vmul.f32 %v3228, %v8133
      %v8150 = vmul.f32 %v3145, %v8133
      %v8151 = vmul.f32 %v3245, %v8133
      %v8152 = vmul.f32 %v3229, %v8133
      %v8153 = vmul.f32 %v3148, %v8133
      %v8154 = vmul.f32 %v3246, %v8133
      %v8155 = vmul.f32 %v3230, %v8133
      %v8156 = vmul.f32 %v3151, %v8133
      %v8157 = vmul.f32 %v3247, %v8133
      %v8158 = vmul.f32 %v3231, %v8133
      %v8159 = vmul.f32 %v3154, %v8133
      %v8160 = vmul.f32 %v3248, %v8133
      %v8161 = vmul.f32 %v3232, %v8133
      %v8162 = vmul.f32 %v3157, %v8133
      %v8163 = vmul.f32 %v3249, %v8133
      %v8164 = vmul.f32 %v3233, %v8133
      %v8165 = vmul.f32 %v3160, %v8133
      %v8166 = vmul.f32 %v3250, %v8133
      %v8167 = vmul.f32 %v3234, %v8133
      %v8168 = vmul.f32 %v3163, %v8133
      %v8169 = vmul.f32 %v3251, %v8133
      %v8170 = vmul.f32 %v3235, %v8133
      %v8171 = vmul.f32 %v3166, %v8133
      %v8172 = vmul.f32 %v3252, %v8133
      %v8173 = vmul.f32 %v3236, %v8133
      %v8174 = vmul.f32 %v3169, %v8133
      %v8175 = vmul.f32 %v3253, %v8133
      %v8176 = vmul.f32 %v3220, %v8133
      %v8177 = vmul.f32 %v3121, %v8133
      %v8178 = vmul.f32 %v3237, %v8133
      %v8224 = vrot.slane %v8134, 4
      %v8225 = vrot.slane %v8135, 4
      %v8226 = vsel %vm605, %v8224, %v8225
      %v8227 = vrot.slane %v8136, 4
      %v8228 = vsel %vm605, %v8225, %v8227
      %v8229 = vrot.slane %v8137, 4
      %v8230 = vrot.slane %v8138, 4
      %v8231 = vsel %vm605, %v8229, %v8230
      %v8232 = vrot.slane %v8139, 4
      %v8233 = vsel %vm605, %v8230, %v8232
      %v8234 = vrot.slane %v8140, 4
      %v8235 = vrot.slane %v8141, 4
      %v8236 = vsel %vm605, %v8234, %v8235
      %v8237 = vrot.slane %v8142, 4
      %v8238 = vsel %vm605, %v8235, %v8237
      %v8239 = vrot.slane %v8143, 4
      %v8240 = vrot.slane %v8144, 4
      %v8241 = vsel %vm605, %v8239, %v8240
      %v8242 = vrot.slane %v8145, 4
      %v8243 = vsel %vm605, %v8240, %v8242
      %v8244 = vrot.slane %v8146, 4
      %v8245 = vrot.slane %v8147, 4
      %v8246 = vsel %vm605, %v8244, %v8245
      %v8247 = vrot.slane %v8148, 4
      %v8248 = vsel %vm605, %v8245, %v8247
      %v8249 = vrot.slane %v8149, 4
      %v8250 = vrot.slane %v8150, 4
      %v8251 = vsel %vm605, %v8249, %v8250
      %v8252 = vrot.slane %v8151, 4
      %v8253 = vsel %vm605, %v8250, %v8252
      %v8254 = vrot.slane %v8152, 4
      %v8255 = vrot.slane %v8153, 4
      %v8256 = vsel %vm605, %v8254, %v8255
      %v8257 = vrot.slane %v8154, 4
      %v8258 = vsel %vm605, %v8255, %v8257
      %v8259 = vrot.slane %v8155, 4
      %v8260 = vrot.slane %v8156, 4
      %v8261 = vsel %vm605, %v8259, %v8260
      %v8262 = vrot.slane %v8157, 4
      %v8263 = vsel %vm605, %v8260, %v8262
      %v8264 = vrot.slane %v8158, 4
      %v8265 = vrot.slane %v8159, 4
      %v8266 = vsel %vm605, %v8264, %v8265
      %v8267 = vrot.slane %v8160, 4
      %v8268 = vsel %vm605, %v8265, %v8267
      %v8269 = vrot.slane %v8161, 4
      %v8270 = vrot.slane %v8162, 4
      %v8271 = vsel %vm605, %v8269, %v8270
      %v8272 = vrot.slane %v8163, 4
      %v8273 = vsel %vm605, %v8270, %v8272
      %v8274 = vrot.slane %v8164, 4
      %v8275 = vrot.slane %v8165, 4
      %v8276 = vsel %vm605, %v8274, %v8275
      %v8277 = vrot.slane %v8166, 4
      %v8278 = vsel %vm605, %v8275, %v8277
      %v8279 = vrot.slane %v8167, 4
      %v8280 = vrot.slane %v8168, 4
      %v8281 = vsel %vm605, %v8279, %v8280
      %v8282 = vrot.slane %v8169, 4
      %v8283 = vsel %vm605, %v8280, %v8282
      %v8284 = vrot.slane %v8170, 4
      %v8285 = vrot.slane %v8171, 4
      %v8286 = vsel %vm605, %v8284, %v8285
      %v8287 = vrot.slane %v8172, 4
      %v8288 = vsel %vm605, %v8285, %v8287
      %v8289 = vrot.slane %v8173, 4
      %v8290 = vrot.slane %v8174, 4
      %v8291 = vsel %vm605, %v8289, %v8290
      %v8292 = vrot.slane %v8175, 4
      %v8293 = vsel %vm605, %v8290, %v8292
      %v8294 = vrot.slane %v8176, 4
      %v8295 = vrot.slane %v8177, 4
      %v8296 = vsel %vm605, %v8294, %v8295
      %v8297 = vrot.slane %v8178, 4
      %v8298 = vsel %vm605, %v8295, %v8297
      %v8329 = vadd.f32 %v8098, %v8226
      %v8330 = vadd.f32 %v8099, %v8228
      %v8331 = vadd.f32 %v8100, %v8231
      %v8332 = vadd.f32 %v8101, %v8233
      %v8333 = vadd.f32 %v8102, %v8236
      %v8334 = vadd.f32 %v8103, %v8238
      %v8335 = vadd.f32 %v8104, %v8241
      %v8336 = vadd.f32 %v8105, %v8243
      %v8337 = vadd.f32 %v8106, %v8246
      %v8338 = vadd.f32 %v8107, %v8248
      %v8339 = vadd.f32 %v8108, %v8251
      %v8340 = vadd.f32 %v8109, %v8253
      %v8341 = vadd.f32 %v8110, %v8256
      %v8342 = vadd.f32 %v8111, %v8258
      %v8343 = vadd.f32 %v8112, %v8261
      %v8344 = vadd.f32 %v8113, %v8263
      %v8345 = vadd.f32 %v8114, %v8266
      %v8346 = vadd.f32 %v8115, %v8268
      %v8347 = vadd.f32 %v8116, %v8271
      %v8348 = vadd.f32 %v8117, %v8273
      %v8349 = vadd.f32 %v8118, %v8276
      %v8350 = vadd.f32 %v8119, %v8278
      %v8351 = vadd.f32 %v8120, %v8281
      %v8352 = vadd.f32 %v8121, %v8283
      %v8353 = vadd.f32 %v8122, %v8286
      %v8354 = vadd.f32 %v8123, %v8288
      %v8355 = vadd.f32 %v8124, %v8291
      %v8356 = vadd.f32 %v8125, %v8293
      %v8357 = vadd.f32 %v8126, %v8296
      %v8358 = vadd.f32 %v8127, %v8298
      %v8359 = vadd.f32 %v8128, %v8296
      %v8360 = vadd.f32 %v8129, %v8298
      %v8361 = vld [vmem:[%s6] sm:$0x1]
      %v8363 = vlaneseq
      %v8364 = vshrl.u32 %v8363, 7
      %v8365 = vsub.s32 0, %v8364
      %v8366 = vrot.slane %v8361, %v8365
      %v8368 = vadd.f32 %v8329, %v8366
      %v8369 = vadd.f32 %v8330, %v8366
      %v8370 = vadd.f32 %v8331, %v8366
      %v8371 = vadd.f32 %v8332, %v8366
      %v8372 = vadd.f32 %v8333, %v8366
      %v8373 = vadd.f32 %v8334, %v8366
      %v8374 = vadd.f32 %v8335, %v8366
      %v8375 = vadd.f32 %v8336, %v8366
      %v8376 = vadd.f32 %v8337, %v8366
      %v8377 = vadd.f32 %v8338, %v8366
      %v8378 = vadd.f32 %v8339, %v8366
      %v8379 = vadd.f32 %v8340, %v8366
      %v8380 = vadd.f32 %v8341, %v8366
      %v8381 = vadd.f32 %v8342, %v8366
      %v8382 = vadd.f32 %v8343, %v8366
      %v8383 = vadd.f32 %v8344, %v8366
      %v8384 = vadd.f32 %v8345, %v8366
      %v8385 = vadd.f32 %v8346, %v8366
      %v8386 = vadd.f32 %v8347, %v8366
      %v8387 = vadd.f32 %v8348, %v8366
      %v8388 = vadd.f32 %v8349, %v8366
      %v8389 = vadd.f32 %v8350, %v8366
      %v8390 = vadd.f32 %v8351, %v8366
      %v8391 = vadd.f32 %v8352, %v8366
      %v8392 = vadd.f32 %v8353, %v8366
      %v8393 = vadd.f32 %v8354, %v8366
      %v8394 = vadd.f32 %v8355, %v8366
      %v8395 = vadd.f32 %v8356, %v8366
      %v8396 = vadd.f32 %v8357, %v8366
      %v8397 = vadd.f32 %v8358, %v8366
      %v8398 = vadd.f32 %v8359, %v8366
      %v8399 = vadd.f32 %v8360, %v8366
      %v8400 = vxor.u32 %v8368, 2147483648
      %v8401 = vxor.u32 %v8369, 2147483648
      %v8402 = vxor.u32 %v8370, 2147483648
      %v8403 = vxor.u32 %v8371, 2147483648
      %v8404 = vxor.u32 %v8372, 2147483648
      %v8405 = vxor.u32 %v8373, 2147483648
      %v8406 = vxor.u32 %v8374, 2147483648
      %v8407 = vxor.u32 %v8375, 2147483648
      %v8408 = vxor.u32 %v8376, 2147483648
      %v8409 = vxor.u32 %v8377, 2147483648
      %v8410 = vxor.u32 %v8378, 2147483648
      %v8411 = vxor.u32 %v8379, 2147483648
      %v8412 = vxor.u32 %v8380, 2147483648
      %v8413 = vxor.u32 %v8381, 2147483648
      %v8414 = vxor.u32 %v8382, 2147483648
      %v8415 = vxor.u32 %v8383, 2147483648
      %v8416 = vxor.u32 %v8384, 2147483648
      %v8417 = vxor.u32 %v8385, 2147483648
      %v8418 = vxor.u32 %v8386, 2147483648
      %v8419 = vxor.u32 %v8387, 2147483648
      %v8420 = vxor.u32 %v8388, 2147483648
      %v8421 = vxor.u32 %v8389, 2147483648
      %v8422 = vxor.u32 %v8390, 2147483648
      %v8423 = vxor.u32 %v8391, 2147483648
      %v8424 = vxor.u32 %v8392, 2147483648
      %v8425 = vxor.u32 %v8393, 2147483648
      %v8426 = vxor.u32 %v8394, 2147483648
      %v8427 = vxor.u32 %v8395, 2147483648
      %v8428 = vxor.u32 %v8396, 2147483648
      %v8429 = vxor.u32 %v8397, 2147483648
      %v8430 = vxor.u32 %v8398, 2147483648
      %v8431 = vxor.u32 %v8399, 2147483648
      %v8432 = vmul.f32 %v8400, 1.442695
      %v8433 = vpow.pop %v8432
      %v8434 = vmul.f32 %v8401, 1.442695
      %v8435 = vpow.pop %v8434
      %v8436 = vmul.f32 %v8402, 1.442695
      %v8437 = vpow.pop %v8436
      %v8438 = vmul.f32 %v8403, 1.442695
      %v8439 = vpow.pop %v8438
      %v8440 = vmul.f32 %v8404, 1.442695
      %v8441 = vpow.pop %v8440
      %v8442 = vmul.f32 %v8405, 1.442695
      %v8443 = vpow.pop %v8442
      %v8444 = vmul.f32 %v8406, 1.442695
      %v8445 = vpow.pop %v8444
      %v8446 = vmul.f32 %v8407, 1.442695
      %v8447 = vpow.pop %v8446
      %v8448 = vmul.f32 %v8408, 1.442695
      %v8449 = vpow.pop %v8448
      %v8450 = vmul.f32 %v8409, 1.442695
      %v8451 = vpow.pop %v8450
      %v8452 = vmul.f32 %v8410, 1.442695
      %v8453 = vpow.pop %v8452
      %v8454 = vmul.f32 %v8411, 1.442695
      %v8455 = vpow.pop %v8454
      %v8456 = vmul.f32 %v8412, 1.442695
      %v8457 = vpow.pop %v8456
      %v8458 = vmul.f32 %v8413, 1.442695
      %v8459 = vpow.pop %v8458
      %v8460 = vmul.f32 %v8414, 1.442695
      %v8461 = vpow.pop %v8460
      %v8462 = vmul.f32 %v8415, 1.442695
      %v8463 = vpow.pop %v8462
      %v8464 = vmul.f32 %v8416, 1.442695
      %v8465 = vpow.pop %v8464
      %v8466 = vmul.f32 %v8417, 1.442695
      %v8467 = vpow.pop %v8466
      %v8468 = vmul.f32 %v8418, 1.442695
      %v8469 = vpow.pop %v8468
      %v8470 = vmul.f32 %v8419, 1.442695
      %v8471 = vpow.pop %v8470
      %v8472 = vmul.f32 %v8420, 1.442695
      %v8473 = vpow.pop %v8472
      %v8474 = vmul.f32 %v8421, 1.442695
      %v8475 = vpow.pop %v8474
      %v8476 = vmul.f32 %v8422, 1.442695
      %v8477 = vpow.pop %v8476
      %v8478 = vmul.f32 %v8423, 1.442695
      %v8479 = vpow.pop %v8478
      %v8480 = vmul.f32 %v8424, 1.442695
      %v8481 = vpow.pop %v8480
      %v8482 = vmul.f32 %v8425, 1.442695
      %v8483 = vpow.pop %v8482
      %v8484 = vmul.f32 %v8426, 1.442695
      %v8485 = vpow.pop %v8484
      %v8486 = vmul.f32 %v8427, 1.442695
      %v8487 = vpow.pop %v8486
      %v8488 = vmul.f32 %v8428, 1.442695
      %v8489 = vpow.pop %v8488
      %v8490 = vmul.f32 %v8429, 1.442695
      %v8491 = vpow.pop %v8490
      %v8492 = vmul.f32 %v8430, 1.442695
      %v8493 = vpow.pop %v8492
      %v8494 = vmul.f32 %v8431, 1.442695
      %v8495 = vpow.pop %v8494
      %v8496 = vadd.f32 %v8433, 1.0
      %v8497 = vadd.f32 %v8435, 1.0
      %v8498 = vadd.f32 %v8437, 1.0
      %v8499 = vadd.f32 %v8439, 1.0
      %v8500 = vadd.f32 %v8441, 1.0
      %v8501 = vadd.f32 %v8443, 1.0
      %v8502 = vadd.f32 %v8445, 1.0
      %v8503 = vadd.f32 %v8447, 1.0
      %v8504 = vadd.f32 %v8449, 1.0
      %v8505 = vadd.f32 %v8451, 1.0
      %v8506 = vadd.f32 %v8453, 1.0
      %v8507 = vadd.f32 %v8455, 1.0
      %v8508 = vadd.f32 %v8457, 1.0
      %v8509 = vadd.f32 %v8459, 1.0
      %v8510 = vadd.f32 %v8461, 1.0
      %v8511 = vadd.f32 %v8463, 1.0
      %v8512 = vadd.f32 %v8465, 1.0
      %v8513 = vadd.f32 %v8467, 1.0
      %v8514 = vadd.f32 %v8469, 1.0
      %v8515 = vadd.f32 %v8471, 1.0
      %v8516 = vadd.f32 %v8473, 1.0
      %v8517 = vadd.f32 %v8475, 1.0
      %v8518 = vadd.f32 %v8477, 1.0
      %v8519 = vadd.f32 %v8479, 1.0
      %v8520 = vadd.f32 %v8481, 1.0
      %v8521 = vadd.f32 %v8483, 1.0
      %v8522 = vadd.f32 %v8485, 1.0
      %v8523 = vadd.f32 %v8487, 1.0
      %v8524 = vadd.f32 %v8489, 1.0
      %v8525 = vadd.f32 %v8491, 1.0
      %v8526 = vadd.f32 %v8493, 1.0
      %v8527 = vadd.f32 %v8495, 1.0
      %v8528 = vrcp.pop %v8496
      %v8529 = vmul.f32 1.0, %v8528
      %v8530 = vrcp.pop %v8497
      %v8531 = vmul.f32 1.0, %v8530
      %v8532 = vrcp.pop %v8498
      %v8533 = vmul.f32 1.0, %v8532
      %v8534 = vrcp.pop %v8499
      %v8535 = vmul.f32 1.0, %v8534
      %v8536 = vrcp.pop %v8500
      %v8537 = vmul.f32 1.0, %v8536
      %v8538 = vrcp.pop %v8501
      %v8539 = vmul.f32 1.0, %v8538
      %v8540 = vrcp.pop %v8502
      %v8541 = vmul.f32 1.0, %v8540
      %v8542 = vrcp.pop %v8503
      %v8543 = vmul.f32 1.0, %v8542
      %v8544 = vrcp.pop %v8504
      %v8545 = vmul.f32 1.0, %v8544
      %v8546 = vrcp.pop %v8505
      %v8547 = vmul.f32 1.0, %v8546
      %v8548 = vrcp.pop %v8506
      %v8549 = vmul.f32 1.0, %v8548
      %v8550 = vrcp.pop %v8507
      %v8551 = vmul.f32 1.0, %v8550
      %v8552 = vrcp.pop %v8508
      %v8553 = vmul.f32 1.0, %v8552
      %v8554 = vrcp.pop %v8509
      %v8555 = vmul.f32 1.0, %v8554
      %v8556 = vrcp.pop %v8510
      %v8557 = vmul.f32 1.0, %v8556
      %v8558 = vrcp.pop %v8511
      %v8559 = vmul.f32 1.0, %v8558
      %v8560 = vrcp.pop %v8512
      %v8561 = vmul.f32 1.0, %v8560
      %v8562 = vrcp.pop %v8513
      %v8563 = vmul.f32 1.0, %v8562
      %v8564 = vrcp.pop %v8514
      %v8565 = vmul.f32 1.0, %v8564
      %v8566 = vrcp.pop %v8515
      %v8567 = vmul.f32 1.0, %v8566
      %v8568 = vrcp.pop %v8516
      %v8569 = vmul.f32 1.0, %v8568
      %v8570 = vrcp.pop %v8517
      %v8571 = vmul.f32 1.0, %v8570
      %v8572 = vrcp.pop %v8518
      %v8573 = vmul.f32 1.0, %v8572
      %v8574 = vrcp.pop %v8519
      %v8575 = vmul.f32 1.0, %v8574
      %v8576 = vrcp.pop %v8520
      %v8577 = vmul.f32 1.0, %v8576
      %v8578 = vrcp.pop %v8521
      %v8579 = vmul.f32 1.0, %v8578
      %v8580 = vrcp.pop %v8522
      %v8581 = vmul.f32 1.0, %v8580
      %v8582 = vrcp.pop %v8523
      %v8583 = vmul.f32 1.0, %v8582
      %v8584 = vrcp.pop %v8524
      %v8585 = vmul.f32 1.0, %v8584
      %v8586 = vrcp.pop %v8525
      %v8587 = vmul.f32 1.0, %v8586
      %v8588 = vrcp.pop %v8526
      %v8589 = vmul.f32 1.0, %v8588
      %v8590 = vrcp.pop %v8527
      %v8591 = vmul.f32 1.0, %v8590
      %v8592 = vmul.f32 %v8368, %v8529
      %v8593 = vmul.f32 %v8369, %v8531
      %v8594 = vmul.f32 %v8370, %v8533
      %v8595 = vmul.f32 %v8371, %v8535
      %v8596 = vmul.f32 %v8372, %v8537
      %v8597 = vmul.f32 %v8373, %v8539
      %v8598 = vmul.f32 %v8374, %v8541
      %v8599 = vmul.f32 %v8375, %v8543
      %v8600 = vmul.f32 %v8376, %v8545
      %v8601 = vmul.f32 %v8377, %v8547
      %v8602 = vmul.f32 %v8378, %v8549
      %v8603 = vmul.f32 %v8379, %v8551
      %v8604 = vmul.f32 %v8380, %v8553
      %v8605 = vmul.f32 %v8381, %v8555
      %v8606 = vmul.f32 %v8382, %v8557
      %v8607 = vmul.f32 %v8383, %v8559
      %v8608 = vmul.f32 %v8384, %v8561
      %v8609 = vmul.f32 %v8385, %v8563
      %v8610 = vmul.f32 %v8386, %v8565
      %v8611 = vmul.f32 %v8387, %v8567
      %v8612 = vmul.f32 %v8388, %v8569
      %v8613 = vmul.f32 %v8389, %v8571
      %v8614 = vmul.f32 %v8390, %v8573
      %v8615 = vmul.f32 %v8391, %v8575
      %v8616 = vmul.f32 %v8392, %v8577
      %v8617 = vmul.f32 %v8393, %v8579
      %v8618 = vmul.f32 %v8394, %v8581
      %v8619 = vmul.f32 %v8395, %v8583
      %v8620 = vmul.f32 %v8396, %v8585
      %v8621 = vmul.f32 %v8397, %v8587
      %v8622 = vmul.f32 %v8398, %v8589
      %v8623 = vmul.f32 %v8399, %v8591
      %v8624 = vld [vmem:[%s7] sm:$0xf]
      %v8625 = vld [vmem:[%s8] sm:$0x1]
      %v8627 = vlaneseq
      %v8628 = vshrl.u32 %v8627, 7
      %v8629 = vsub.s32 0, %v8628
      %v8630 = vrot.slane %v8625, %v8629
      %v8633 = vsel %vm508, %v8592, 0
      %v8636 = vsel %vm508, %v8593, 0
      %v8639 = vsel %vm508, %v8594, 0
      %v8642 = vsel %vm508, %v8595, 0
      %v8645 = vsel %vm508, %v8596, 0
      %v8648 = vsel %vm508, %v8597, 0
      %v8651 = vsel %vm508, %v8598, 0
      %v8654 = vsel %vm508, %v8599, 0
      %v8657 = vsel %vm508, %v8600, 0
      %v8660 = vsel %vm508, %v8601, 0
      %v8663 = vsel %vm508, %v8602, 0
      %v8666 = vsel %vm508, %v8603, 0
      %v8669 = vsel %vm508, %v8604, 0
      %v8672 = vsel %vm508, %v8605, 0
      %v8675 = vsel %vm508, %v8606, 0
      %v8678 = vsel %vm508, %v8607, 0
      %v8681 = vsel %vm508, %v8608, 0
      %v8684 = vsel %vm508, %v8609, 0
      %v8687 = vsel %vm508, %v8610, 0
      %v8690 = vsel %vm508, %v8611, 0
      %v8693 = vsel %vm508, %v8612, 0
      %v8696 = vsel %vm508, %v8613, 0
      %v8699 = vsel %vm508, %v8614, 0
      %v8702 = vsel %vm508, %v8615, 0
      %v8705 = vsel %vm508, %v8616, 0
      %v8708 = vsel %vm508, %v8617, 0
      %v8711 = vsel %vm508, %v8618, 0
      %v8714 = vsel %vm508, %v8619, 0
      %v8717 = vsel %vm508, %v8620, 0
      %v8720 = vsel %vm508, %v8621, 0
      %v8723 = vsel %vm508, %v8622, 0
      %v8726 = vsel %vm508, %v8623, 0
      %v8729 = vsel %vm605, %v8624, 0
      %8731 = vmatprep.subr.mxu0 0.0
      %8732 = vmatpush1.msra.mxu0 0.0
      %8733 = vmatprep.subr.mxu0 0.0
      %8734 = vmatpush1.msra.mxu0 0.0
      %8735 = vmatprep.subr.mxu0 0.0
      %8736 = vmatpush1.msra.mxu0 0.0
      %8737 = vmatprep.subr.mxu0 0.0
      %8738 = vmatpush1.msra.mxu0 0.0
      %8739 = vmatprep.subr.mxu0 0.0
      %8740 = vmatpush1.msra.mxu0 0.0
      %8741 = vmatprep.subr.mxu0 0.0
      %8742 = vmatpush1.msra.mxu0 0.0
      %8743 = vmatprep.subr.mxu0 0.0
      %8744 = vmatpush1.msra.mxu0 0.0
      %8745 = vmatprep.subr.mxu0 0.0
      %8746 = vmatpush1.msra.mxu0 0.0
      %8747 = vmatprep.subr.mxu0 0.0
      %8748 = vmatpush1.msra.mxu0 0.0
      %8749 = vmatprep.subr.mxu0 0.0
      %8750 = vmatpush1.msra.mxu0 0.0
      %8751 = vmatprep.subr.mxu0 0.0
      %8752 = vmatpush1.msra.mxu0 0.0
      %8753 = vmatprep.subr.mxu0 0.0
      %8754 = vmatpush1.msra.mxu0 0.0
      %8755 = vmatprep.subr.mxu0 0.0
      %8756 = vmatpush1.msra.mxu0 0.0
      %8757 = vmatprep.subr.mxu0 0.0
      %8758 = vmatpush1.msra.mxu0 0.0
      %8759 = vmatprep.subr.mxu0 0.0
      %8760 = vmatpush1.msra.mxu0 0.0
      %8761 = vmatprep.subr.mxu0 0.0
      %8762 = vmatpush1.msra.mxu0 %v8729
      %8763 = vmatprep.subr.mxu0 0.0
      %8764 = vmatpush2.msra.mxu0 0.0
      %8765 = vmatprep.subr.mxu0 0.0
      %8766 = vmatpush2.msra.mxu0 0.0
      %8767 = vmatprep.subr.mxu0 0.0
      %8768 = vmatpush2.msra.mxu0 0.0
      %8769 = vmatprep.subr.mxu0 0.0
      %8770 = vmatpush2.msra.mxu0 0.0
      %8771 = vmatprep.subr.mxu0 0.0
      %8772 = vmatpush2.msra.mxu0 0.0
      %8773 = vmatprep.subr.mxu0 0.0
      %8774 = vmatpush2.msra.mxu0 0.0
      %8775 = vmatprep.subr.mxu0 0.0
      %8776 = vmatpush2.msra.mxu0 0.0
      %8777 = vmatprep.subr.mxu0 0.0
      %8778 = vmatpush2.msra.mxu0 0.0
      %8779 = vmatprep.subr.mxu0 0.0
      %8780 = vmatpush2.msra.mxu0 0.0
      %8781 = vmatprep.subr.mxu0 0.0
      %8782 = vmatpush2.msra.mxu0 0.0
      %8783 = vmatprep.subr.mxu0 0.0
      %8784 = vmatpush2.msra.mxu0 0.0
      %8785 = vmatprep.subr.mxu0 0.0
      %8786 = vmatpush2.msra.mxu0 0.0
      %8787 = vmatprep.subr.mxu0 0.0
      %8788 = vmatpush2.msra.mxu0 0.0
      %8789 = vmatprep.subr.mxu0 0.0
      %8790 = vmatpush2.msra.mxu0 0.0
      %8791 = vmatprep.subr.mxu0 0.0
      %8792 = vmatpush2.msra.mxu0 0.0
      %8793 = vmatprep.subr.mxu0 0.0
      %8794 = vmatpush2.msra.mxu0 0.0
      %8795 = vmatprep.mubr.f32.mxu0 0.0
      %8796 = vmatmul.mubr.f32.gmra.mxu0 %v8633
      %v8797 = vpop.f32.mrf.mxu0
      %v8798 = vadd.f32 %v8630, %v8797
      %v8799 = vpop.f32.mrf.mxu0
      %8800 = vmatprep.mubr.f32.mxu0 0.0
      %8801 = vmatmul.mubr.f32.gmra.mxu0 %v8636
      %v8802 = vpop.f32.mrf.mxu0
      %v8803 = vadd.f32 %v8630, %v8802
      %v8804 = vpop.f32.mrf.mxu0
      %8805 = vmatprep.mubr.f32.mxu0 0.0
      %8806 = vmatmul.mubr.f32.gmra.mxu0 %v8639
      %v8807 = vpop.f32.mrf.mxu0
      %v8808 = vadd.f32 %v8630, %v8807
      %v8809 = vpop.f32.mrf.mxu0
      %8810 = vmatprep.mubr.f32.mxu0 0.0
      %8811 = vmatmul.mubr.f32.gmra.mxu0 %v8642
      %v8812 = vpop.f32.mrf.mxu0
      %v8813 = vadd.f32 %v8630, %v8812
      %v8814 = vpop.f32.mrf.mxu0
      %8815 = vmatprep.mubr.f32.mxu0 0.0
      %8816 = vmatmul.mubr.f32.gmra.mxu0 %v8645
      %v8817 = vpop.f32.mrf.mxu0
      %v8818 = vadd.f32 %v8630, %v8817
      %v8819 = vpop.f32.mrf.mxu0
      %8820 = vmatprep.mubr.f32.mxu0 0.0
      %8821 = vmatmul.mubr.f32.gmra.mxu0 %v8648
      %v8822 = vpop.f32.mrf.mxu0
      %v8823 = vadd.f32 %v8630, %v8822
      %v8824 = vpop.f32.mrf.mxu0
      %8825 = vmatprep.mubr.f32.mxu0 0.0
      %8826 = vmatmul.mubr.f32.gmra.mxu0 %v8651
      %v8827 = vpop.f32.mrf.mxu0
      %v8828 = vadd.f32 %v8630, %v8827
      %v8829 = vpop.f32.mrf.mxu0
      %8830 = vmatprep.mubr.f32.mxu0 0.0
      %8831 = vmatmul.mubr.f32.gmra.mxu0 %v8654
      %v8832 = vpop.f32.mrf.mxu0
      %v8833 = vadd.f32 %v8630, %v8832
      %v8834 = vpop.f32.mrf.mxu0
      %8835 = vmatprep.mubr.f32.mxu0 0.0
      %8836 = vmatmul.mubr.f32.gmra.mxu0 %v8657
      %v8837 = vpop.f32.mrf.mxu0
      %v8838 = vadd.f32 %v8630, %v8837
      %v8839 = vpop.f32.mrf.mxu0
      %8840 = vmatprep.mubr.f32.mxu0 0.0
      %8841 = vmatmul.mubr.f32.gmra.mxu0 %v8660
      %v8842 = vpop.f32.mrf.mxu0
      %v8843 = vadd.f32 %v8630, %v8842
      %v8844 = vpop.f32.mrf.mxu0
      %8845 = vmatprep.mubr.f32.mxu0 0.0
      %8846 = vmatmul.mubr.f32.gmra.mxu0 %v8663
      %v8847 = vpop.f32.mrf.mxu0
      %v8848 = vadd.f32 %v8630, %v8847
      %v8849 = vpop.f32.mrf.mxu0
      %8850 = vmatprep.mubr.f32.mxu0 0.0
      %8851 = vmatmul.mubr.f32.gmra.mxu0 %v8666
      %v8852 = vpop.f32.mrf.mxu0
      %v8853 = vadd.f32 %v8630, %v8852
      %v8854 = vpop.f32.mrf.mxu0
      %8855 = vmatprep.mubr.f32.mxu0 0.0
      %8856 = vmatmul.mubr.f32.gmra.mxu0 %v8669
      %v8857 = vpop.f32.mrf.mxu0
      %v8858 = vadd.f32 %v8630, %v8857
      %v8859 = vpop.f32.mrf.mxu0
      %8860 = vmatprep.mubr.f32.mxu0 0.0
      %8861 = vmatmul.mubr.f32.gmra.mxu0 %v8672
      %v8862 = vpop.f32.mrf.mxu0
      %v8863 = vadd.f32 %v8630, %v8862
      %v8864 = vpop.f32.mrf.mxu0
      %8865 = vmatprep.mubr.f32.mxu0 0.0
      %8866 = vmatmul.mubr.f32.gmra.mxu0 %v8675
      %v8867 = vpop.f32.mrf.mxu0
      %v8868 = vadd.f32 %v8630, %v8867
      %v8869 = vpop.f32.mrf.mxu0
      %8870 = vmatprep.mubr.f32.mxu0 0.0
      %8871 = vmatmul.mubr.f32.gmra.mxu0 %v8678
      %v8872 = vpop.f32.mrf.mxu0
      %v8873 = vadd.f32 %v8630, %v8872
      %v8874 = vpop.f32.mrf.mxu0
      %8875 = vmatprep.mubr.f32.mxu0 0.0
      %8876 = vmatmul.mubr.f32.gmra.mxu0 %v8681
      %v8877 = vpop.f32.mrf.mxu0
      %v8878 = vadd.f32 %v8630, %v8877
      %v8879 = vpop.f32.mrf.mxu0
      %8880 = vmatprep.mubr.f32.mxu0 0.0
      %8881 = vmatmul.mubr.f32.gmra.mxu0 %v8684
      %v8882 = vpop.f32.mrf.mxu0
      %v8883 = vadd.f32 %v8630, %v8882
      %v8884 = vpop.f32.mrf.mxu0
      %8885 = vmatprep.mubr.f32.mxu0 0.0
      %8886 = vmatmul.mubr.f32.gmra.mxu0 %v8687
      %v8887 = vpop.f32.mrf.mxu0
      %v8888 = vadd.f32 %v8630, %v8887
      %v8889 = vpop.f32.mrf.mxu0
      %8890 = vmatprep.mubr.f32.mxu0 0.0
      %8891 = vmatmul.mubr.f32.gmra.mxu0 %v8690
      %v8892 = vpop.f32.mrf.mxu0
      %v8893 = vadd.f32 %v8630, %v8892
      %v8894 = vpop.f32.mrf.mxu0
      %8895 = vmatprep.mubr.f32.mxu0 0.0
      %8896 = vmatmul.mubr.f32.gmra.mxu0 %v8693
      %v8897 = vpop.f32.mrf.mxu0
      %v8898 = vadd.f32 %v8630, %v8897
      %v8899 = vpop.f32.mrf.mxu0
      %8900 = vmatprep.mubr.f32.mxu0 0.0
      %8901 = vmatmul.mubr.f32.gmra.mxu0 %v8696
      %v8902 = vpop.f32.mrf.mxu0
      %v8903 = vadd.f32 %v8630, %v8902
      %v8904 = vpop.f32.mrf.mxu0
      %8905 = vmatprep.mubr.f32.mxu0 0.0
      %8906 = vmatmul.mubr.f32.gmra.mxu0 %v8699
      %v8907 = vpop.f32.mrf.mxu0
      %v8908 = vadd.f32 %v8630, %v8907
      %v8909 = vpop.f32.mrf.mxu0
      %8910 = vmatprep.mubr.f32.mxu0 0.0
      %8911 = vmatmul.mubr.f32.gmra.mxu0 %v8702
      %v8912 = vpop.f32.mrf.mxu0
      %v8913 = vadd.f32 %v8630, %v8912
      %v8914 = vpop.f32.mrf.mxu0
      %8915 = vmatprep.mubr.f32.mxu0 0.0
      %8916 = vmatmul.mubr.f32.gmra.mxu0 %v8705
      %v8917 = vpop.f32.mrf.mxu0
      %v8918 = vadd.f32 %v8630, %v8917
      %v8919 = vpop.f32.mrf.mxu0
      %8920 = vmatprep.mubr.f32.mxu0 0.0
      %8921 = vmatmul.mubr.f32.gmra.mxu0 %v8708
      %v8922 = vpop.f32.mrf.mxu0
      %v8923 = vadd.f32 %v8630, %v8922
      %v8924 = vpop.f32.mrf.mxu0
      %8925 = vmatprep.mubr.f32.mxu0 0.0
      %8926 = vmatmul.mubr.f32.gmra.mxu0 %v8711
      %v8927 = vpop.f32.mrf.mxu0
      %v8928 = vadd.f32 %v8630, %v8927
      %v8929 = vpop.f32.mrf.mxu0
      %8930 = vmatprep.mubr.f32.mxu0 0.0
      %8931 = vmatmul.mubr.f32.gmra.mxu0 %v8714
      %v8932 = vpop.f32.mrf.mxu0
      %v8933 = vadd.f32 %v8630, %v8932
      %v8934 = vpop.f32.mrf.mxu0
      %8935 = vmatprep.mubr.f32.mxu0 0.0
      %8936 = vmatmul.mubr.f32.gmra.mxu0 %v8717
      %v8937 = vpop.f32.mrf.mxu0
      %v8938 = vadd.f32 %v8630, %v8937
      %v8939 = vpop.f32.mrf.mxu0
      %8940 = vmatprep.mubr.f32.mxu0 0.0
      %8941 = vmatmul.mubr.f32.gmra.mxu0 %v8720
      %v8942 = vpop.f32.mrf.mxu0
      %v8943 = vadd.f32 %v8630, %v8942
      %v8944 = vpop.f32.mrf.mxu0
      %8945 = vmatprep.mubr.f32.mxu0 0.0
      %8946 = vmatmul.mubr.f32.gmra.mxu0 %v8723
      %v8947 = vpop.f32.mrf.mxu0
      %v8948 = vadd.f32 %v8630, %v8947
      %v8949 = vpop.f32.mrf.mxu0
      %8950 = vmatprep.mubr.f32.mxu0 0.0
      %8951 = vmatmul.mubr.f32.gmra.mxu0 %v8726
      %v8952 = vpop.f32.mrf.mxu0
      %v8953 = vadd.f32 %v8630, %v8952
      %v8954 = vpop.f32.mrf.mxu0
      %8955 = vdwg.mxu0
      %v8956 = vxor.u32 %v8798, 2147483648
      %v8957 = vxor.u32 %v8803, 2147483648
      %v8958 = vxor.u32 %v8808, 2147483648
      %v8959 = vxor.u32 %v8813, 2147483648
      %v8960 = vxor.u32 %v8818, 2147483648
      %v8961 = vxor.u32 %v8823, 2147483648
      %v8962 = vxor.u32 %v8828, 2147483648
      %v8963 = vxor.u32 %v8833, 2147483648
      %v8964 = vxor.u32 %v8838, 2147483648
      %v8965 = vxor.u32 %v8843, 2147483648
      %v8966 = vxor.u32 %v8848, 2147483648
      %v8967 = vxor.u32 %v8853, 2147483648
      %v8968 = vxor.u32 %v8858, 2147483648
      %v8969 = vxor.u32 %v8863, 2147483648
      %v8970 = vxor.u32 %v8868, 2147483648
      %v8971 = vxor.u32 %v8873, 2147483648
      %v8972 = vxor.u32 %v8878, 2147483648
      %v8973 = vxor.u32 %v8883, 2147483648
      %v8974 = vxor.u32 %v8888, 2147483648
      %v8975 = vxor.u32 %v8893, 2147483648
      %v8976 = vxor.u32 %v8898, 2147483648
      %v8977 = vxor.u32 %v8903, 2147483648
      %v8978 = vxor.u32 %v8908, 2147483648
      %v8979 = vxor.u32 %v8913, 2147483648
      %v8980 = vxor.u32 %v8918, 2147483648
      %v8981 = vxor.u32 %v8923, 2147483648
      %v8982 = vxor.u32 %v8928, 2147483648
      %v8983 = vxor.u32 %v8933, 2147483648
      %v8984 = vxor.u32 %v8938, 2147483648
      %v8985 = vxor.u32 %v8943, 2147483648
      %v8986 = vxor.u32 %v8948, 2147483648
      %v8987 = vxor.u32 %v8953, 2147483648
      %v8988 = vmul.f32 %v8956, 1.442695
      %v8989 = vpow.pop %v8988
      %v8990 = vmul.f32 %v8957, 1.442695
      %v8991 = vpow.pop %v8990
      %v8992 = vmul.f32 %v8958, 1.442695
      %v8993 = vpow.pop %v8992
      %v8994 = vmul.f32 %v8959, 1.442695
      %v8995 = vpow.pop %v8994
      %v8996 = vmul.f32 %v8960, 1.442695
      %v8997 = vpow.pop %v8996
      %v8998 = vmul.f32 %v8961, 1.442695
      %v8999 = vpow.pop %v8998
      %v9000 = vmul.f32 %v8962, 1.442695
      %v9001 = vpow.pop %v9000
      %v9002 = vmul.f32 %v8963, 1.442695
      %v9003 = vpow.pop %v9002
      %v9004 = vmul.f32 %v8964, 1.442695
      %v9005 = vpow.pop %v9004
      %v9006 = vmul.f32 %v8965, 1.442695
      %v9007 = vpow.pop %v9006
      %v9008 = vmul.f32 %v8966, 1.442695
      %v9009 = vpow.pop %v9008
      %v9010 = vmul.f32 %v8967, 1.442695
      %v9011 = vpow.pop %v9010
      %v9012 = vmul.f32 %v8968, 1.442695
      %v9013 = vpow.pop %v9012
      %v9014 = vmul.f32 %v8969, 1.442695
      %v9015 = vpow.pop %v9014
      %v9016 = vmul.f32 %v8970, 1.442695
      %v9017 = vpow.pop %v9016
      %v9018 = vmul.f32 %v8971, 1.442695
      %v9019 = vpow.pop %v9018
      %v9020 = vmul.f32 %v8972, 1.442695
      %v9021 = vpow.pop %v9020
      %v9022 = vmul.f32 %v8973, 1.442695
      %v9023 = vpow.pop %v9022
      %v9024 = vmul.f32 %v8974, 1.442695
      %v9025 = vpow.pop %v9024
      %v9026 = vmul.f32 %v8975, 1.442695
      %v9027 = vpow.pop %v9026
      %v9028 = vmul.f32 %v8976, 1.442695
      %v9029 = vpow.pop %v9028
      %v9030 = vmul.f32 %v8977, 1.442695
      %v9031 = vpow.pop %v9030
      %v9032 = vmul.f32 %v8978, 1.442695
      %v9033 = vpow.pop %v9032
      %v9034 = vmul.f32 %v8979, 1.442695
      %v9035 = vpow.pop %v9034
      %v9036 = vmul.f32 %v8980, 1.442695
      %v9037 = vpow.pop %v9036
      %v9038 = vmul.f32 %v8981, 1.442695
      %v9039 = vpow.pop %v9038
      %v9040 = vmul.f32 %v8982, 1.442695
      %v9041 = vpow.pop %v9040
      %v9042 = vmul.f32 %v8983, 1.442695
      %v9043 = vpow.pop %v9042
      %v9044 = vmul.f32 %v8984, 1.442695
      %v9045 = vpow.pop %v9044
      %v9046 = vmul.f32 %v8985, 1.442695
      %v9047 = vpow.pop %v9046
      %v9048 = vmul.f32 %v8986, 1.442695
      %v9049 = vpow.pop %v9048
      %v9050 = vmul.f32 %v8987, 1.442695
      %v9051 = vpow.pop %v9050
      %v9052 = vadd.f32 %v8989, 1.0
      %v9053 = vadd.f32 %v8991, 1.0
      %v9054 = vadd.f32 %v8993, 1.0
      %v9055 = vadd.f32 %v8995, 1.0
      %v9056 = vadd.f32 %v8997, 1.0
      %v9057 = vadd.f32 %v8999, 1.0
      %v9058 = vadd.f32 %v9001, 1.0
      %v9059 = vadd.f32 %v9003, 1.0
      %v9060 = vadd.f32 %v9005, 1.0
      %v9061 = vadd.f32 %v9007, 1.0
      %v9062 = vadd.f32 %v9009, 1.0
      %v9063 = vadd.f32 %v9011, 1.0
      %v9064 = vadd.f32 %v9013, 1.0
      %v9065 = vadd.f32 %v9015, 1.0
      %v9066 = vadd.f32 %v9017, 1.0
      %v9067 = vadd.f32 %v9019, 1.0
      %v9068 = vadd.f32 %v9021, 1.0
      %v9069 = vadd.f32 %v9023, 1.0
      %v9070 = vadd.f32 %v9025, 1.0
      %v9071 = vadd.f32 %v9027, 1.0
      %v9072 = vadd.f32 %v9029, 1.0
      %v9073 = vadd.f32 %v9031, 1.0
      %v9074 = vadd.f32 %v9033, 1.0
      %v9075 = vadd.f32 %v9035, 1.0
      %v9076 = vadd.f32 %v9037, 1.0
      %v9077 = vadd.f32 %v9039, 1.0
      %v9078 = vadd.f32 %v9041, 1.0
      %v9079 = vadd.f32 %v9043, 1.0
      %v9080 = vadd.f32 %v9045, 1.0
      %v9081 = vadd.f32 %v9047, 1.0
      %v9082 = vadd.f32 %v9049, 1.0
      %v9083 = vadd.f32 %v9051, 1.0
      %v9084 = vrcp.pop %v9052
      %v9085 = vmul.f32 1.0, %v9084
      %v9086 = vrcp.pop %v9053
      %v9087 = vmul.f32 1.0, %v9086
      %v9088 = vrcp.pop %v9054
      %v9089 = vmul.f32 1.0, %v9088
      %v9090 = vrcp.pop %v9055
      %v9091 = vmul.f32 1.0, %v9090
      %v9092 = vrcp.pop %v9056
      %v9093 = vmul.f32 1.0, %v9092
      %v9094 = vrcp.pop %v9057
      %v9095 = vmul.f32 1.0, %v9094
      %v9096 = vrcp.pop %v9058
      %v9097 = vmul.f32 1.0, %v9096
      %v9098 = vrcp.pop %v9059
      %v9099 = vmul.f32 1.0, %v9098
      %v9100 = vrcp.pop %v9060
      %v9101 = vmul.f32 1.0, %v9100
      %v9102 = vrcp.pop %v9061
      %v9103 = vmul.f32 1.0, %v9102
      %v9104 = vrcp.pop %v9062
      %v9105 = vmul.f32 1.0, %v9104
      %v9106 = vrcp.pop %v9063
      %v9107 = vmul.f32 1.0, %v9106
      %v9108 = vrcp.pop %v9064
      %v9109 = vmul.f32 1.0, %v9108
      %v9110 = vrcp.pop %v9065
      %v9111 = vmul.f32 1.0, %v9110
      %v9112 = vrcp.pop %v9066
      %v9113 = vmul.f32 1.0, %v9112
      %v9114 = vrcp.pop %v9067
      %v9115 = vmul.f32 1.0, %v9114
      %v9116 = vrcp.pop %v9068
      %v9117 = vmul.f32 1.0, %v9116
      %v9118 = vrcp.pop %v9069
      %v9119 = vmul.f32 1.0, %v9118
      %v9120 = vrcp.pop %v9070
      %v9121 = vmul.f32 1.0, %v9120
      %v9122 = vrcp.pop %v9071
      %v9123 = vmul.f32 1.0, %v9122
      %v9124 = vrcp.pop %v9072
      %v9125 = vmul.f32 1.0, %v9124
      %v9126 = vrcp.pop %v9073
      %v9127 = vmul.f32 1.0, %v9126
      %v9128 = vrcp.pop %v9074
      %v9129 = vmul.f32 1.0, %v9128
      %v9130 = vrcp.pop %v9075
      %v9131 = vmul.f32 1.0, %v9130
      %v9132 = vrcp.pop %v9076
      %v9133 = vmul.f32 1.0, %v9132
      %v9134 = vrcp.pop %v9077
      %v9135 = vmul.f32 1.0, %v9134
      %v9136 = vrcp.pop %v9078
      %v9137 = vmul.f32 1.0, %v9136
      %v9138 = vrcp.pop %v9079
      %v9139 = vmul.f32 1.0, %v9138
      %v9140 = vrcp.pop %v9080
      %v9141 = vmul.f32 1.0, %v9140
      %v9142 = vrcp.pop %v9081
      %v9143 = vmul.f32 1.0, %v9142
      %v9144 = vrcp.pop %v9082
      %v9145 = vmul.f32 1.0, %v9144
      %v9146 = vrcp.pop %v9083
      %v9147 = vmul.f32 1.0, %v9146
      %v9148 = vmul.f32 %v8798, %v9085
      %v9149 = vmul.f32 %v8803, %v9087
      %v9150 = vmul.f32 %v8808, %v9089
      %v9151 = vmul.f32 %v8813, %v9091
      %v9152 = vmul.f32 %v8818, %v9093
      %v9153 = vmul.f32 %v8823, %v9095
      %v9154 = vmul.f32 %v8828, %v9097
      %v9155 = vmul.f32 %v8833, %v9099
      %v9156 = vmul.f32 %v8838, %v9101
      %v9157 = vmul.f32 %v8843, %v9103
      %v9158 = vmul.f32 %v8848, %v9105
      %v9159 = vmul.f32 %v8853, %v9107
      %v9160 = vmul.f32 %v8858, %v9109
      %v9161 = vmul.f32 %v8863, %v9111
      %v9162 = vmul.f32 %v8868, %v9113
      %v9163 = vmul.f32 %v8873, %v9115
      %v9164 = vmul.f32 %v8878, %v9117
      %v9165 = vmul.f32 %v8883, %v9119
      %v9166 = vmul.f32 %v8888, %v9121
      %v9167 = vmul.f32 %v8893, %v9123
      %v9168 = vmul.f32 %v8898, %v9125
      %v9169 = vmul.f32 %v8903, %v9127
      %v9170 = vmul.f32 %v8908, %v9129
      %v9171 = vmul.f32 %v8913, %v9131
      %v9172 = vmul.f32 %v8918, %v9133
      %v9173 = vmul.f32 %v8923, %v9135
      %v9174 = vmul.f32 %v8928, %v9137
      %v9175 = vmul.f32 %v8933, %v9139
      %v9176 = vmul.f32 %v8938, %v9141
      %v9177 = vmul.f32 %v8943, %v9143
      %v9178 = vmul.f32 %v8948, %v9145
      %v9179 = vmul.f32 %v8953, %v9147
      %v9180 = vadd.f32 %v9148, %v3055
      %v9181 = vadd.f32 %v9149, %v3056
      %v9182 = vadd.f32 %v9150, %v3057
      %v9183 = vadd.f32 %v9151, %v3058
      %v9184 = vadd.f32 %v9152, %v3059
      %v9185 = vadd.f32 %v9153, %v3060
      %v9186 = vadd.f32 %v9154, %v3061
      %v9187 = vadd.f32 %v9155, %v3062
      %v9188 = vadd.f32 %v9156, %v3063
      %v9189 = vadd.f32 %v9157, %v3064
      %v9190 = vadd.f32 %v9158, %v3065
      %v9191 = vadd.f32 %v9159, %v3066
      %v9192 = vadd.f32 %v9160, %v3067
      %v9193 = vadd.f32 %v9161, %v3068
      %v9194 = vadd.f32 %v9162, %v3069
      %v9195 = vadd.f32 %v9163, %v3070
      %v9196 = vadd.f32 %v9164, %v3071
      %v9197 = vadd.f32 %v9165, %v3072
      %v9198 = vadd.f32 %v9166, %v3073
      %v9199 = vadd.f32 %v9167, %v3074
      %v9200 = vadd.f32 %v9168, %v3075
      %v9201 = vadd.f32 %v9169, %v3076
      %v9202 = vadd.f32 %v9170, %v3077
      %v9203 = vadd.f32 %v9171, %v3078
      %v9204 = vadd.f32 %v9172, %v3079
      %v9205 = vadd.f32 %v9173, %v3080
      %v9206 = vadd.f32 %v9174, %v3081
      %v9207 = vadd.f32 %v9175, %v3082
      %v9208 = vadd.f32 %v9176, %v3083
      %v9209 = vadd.f32 %v9177, %v3084
      %v9210 = vadd.f32 %v9178, %v3085
      %v9211 = vadd.f32 %v9179, %v3086
      %v9244 = vadd.f32 %v9180, %v1091
      %v9245 = vadd.f32 %v9181, %v1093
      %v9246 = vadd.f32 %v9182, %v1095
      %v9247 = vadd.f32 %v9183, %v1097
      %v9248 = vadd.f32 %v9184, %v1099
      %v9249 = vadd.f32 %v9185, %v1101
      %v9250 = vadd.f32 %v9186, %v1103
      %v9251 = vadd.f32 %v9187, %v1105
      %v9252 = vadd.f32 %v9188, %v1107
      %v9253 = vadd.f32 %v9189, %v1109
      %v9254 = vadd.f32 %v9190, %v1111
      %v9255 = vadd.f32 %v9191, %v1113
      %v9256 = vadd.f32 %v9192, %v1115
      %v9257 = vadd.f32 %v9193, %v1117
      %v9258 = vadd.f32 %v9194, %v1119
      %v9259 = vadd.f32 %v9195, %v1121
      %v9260 = vadd.f32 %v9196, %v1123
      %v9261 = vadd.f32 %v9197, %v1125
      %v9262 = vadd.f32 %v9198, %v1127
      %v9263 = vadd.f32 %v9199, %v1129
      %v9264 = vadd.f32 %v9200, %v1131
      %v9265 = vadd.f32 %v9201, %v1133
      %v9266 = vadd.f32 %v9202, %v1135
      %v9267 = vadd.f32 %v9203, %v1137
      %v9268 = vadd.f32 %v9204, %v1139
      %v9269 = vadd.f32 %v9205, %v1141
      %v9270 = vadd.f32 %v9206, %v1143
      %v9271 = vadd.f32 %v9207, %v1145
      %v9272 = vadd.f32 %v9208, %v1147
      %v9273 = vadd.f32 %v9209, %v1149
      %v9274 = vadd.f32 %v9210, %v1151
      %v9275 = vadd.f32 %v9211, %v1153
      %v9276 = vsel %vm2295, %v1026, 0.0
      %v9277 = vsel %vm2295, %v1027, 0.0
      %v9278 = vadd.f32 %v9276, %v9277
      %v9279 = vsel %vm2295, %v1028, 0.0
      %v9280 = vadd.f32 %v9278, %v9279
      %v9281 = vsel %vm2295, %v1029, 0.0
      %v9282 = vadd.f32 %v9280, %v9281
      %v9283 = vsel %vm2295, %v1030, 0.0
      %v9284 = vadd.f32 %v9282, %v9283
      %v9285 = vsel %vm2295, %v1031, 0.0
      %v9286 = vadd.f32 %v9284, %v9285
      %v9287 = vsel %vm2295, %v1032, 0.0
      %v9288 = vadd.f32 %v9286, %v9287
      %v9289 = vsel %vm2295, %v1033, 0.0
      %v9290 = vadd.f32 %v9288, %v9289
      %v9291 = vsel %vm2295, %v1034, 0.0
      %v9292 = vadd.f32 %v9290, %v9291
      %v9293 = vsel %vm2295, %v1035, 0.0
      %v9294 = vadd.f32 %v9292, %v9293
      %v9295 = vsel %vm2295, %v1036, 0.0
      %v9296 = vadd.f32 %v9294, %v9295
      %v9297 = vsel %vm2295, %v1037, 0.0
      %v9298 = vadd.f32 %v9296, %v9297
      %v9299 = vsel %vm2295, %v1038, 0.0
      %v9300 = vadd.f32 %v9298, %v9299
      %v9301 = vsel %vm2295, %v1039, 0.0
      %v9302 = vadd.f32 %v9300, %v9301
      %v9303 = vsel %vm2295, %v1040, 0.0
      %v9304 = vadd.f32 %v9302, %v9303
      %v9305 = vsel %vm2295, %v1041, 0.0
      %v9306 = vadd.f32 %v9304, %v9305
      %v9307 = vsel %vm2295, %v1042, 0.0
      %v9308 = vadd.f32 %v9306, %v9307
      %v9309 = vsel %vm2295, %v1043, 0.0
      %v9310 = vadd.f32 %v9308, %v9309
      %v9311 = vsel %vm2295, %v1044, 0.0
      %v9312 = vadd.f32 %v9310, %v9311
      %v9313 = vsel %vm2295, %v1045, 0.0
      %v9314 = vadd.f32 %v9312, %v9313
      %v9315 = vsel %vm2295, %v1046, 0.0
      %v9316 = vadd.f32 %v9314, %v9315
      %v9317 = vsel %vm2295, %v1047, 0.0
      %v9318 = vadd.f32 %v9316, %v9317
      %v9319 = vsel %vm2295, %v1048, 0.0
      %v9320 = vadd.f32 %v9318, %v9319
      %v9321 = vsel %vm2295, %v1049, 0.0
      %v9322 = vadd.f32 %v9320, %v9321
      %v9323 = vsel %vm2295, %v1050, 0.0
      %v9324 = vadd.f32 %v9322, %v9323
      %v9325 = vsel %vm2295, %v1051, 0.0
      %v9326 = vadd.f32 %v9324, %v9325
      %v9327 = vsel %vm2295, %v1052, 0.0
      %v9328 = vadd.f32 %v9326, %v9327
      %v9329 = vsel %vm2295, %v1053, 0.0
      %v9330 = vadd.f32 %v9328, %v9329
      %v9331 = vsel %vm2295, %v1054, 0.0
      %v9332 = vadd.f32 %v9330, %v9331
      %v9333 = vsel %vm2295, %v1055, 0.0
      %v9334 = vadd.f32 %v9332, %v9333
      %v9335 = vsel %vm2295, %v1056, 0.0
      %v9336 = vadd.f32 %v9334, %v9335
      %v9337 = vsel %vm2295, %v1057, 0.0
      %v9338 = vadd.f32 %v9336, %v9337
      %v9339 = vrot.slane %v9338, 4
      %v9340 = vadd.f32 %v9338, %v9339
      %v9341 = vrot.slane %v9340, 2
      %v9342 = vadd.f32 %v9340, %v9341
      %v9343 = vrot.slane %v9342, 1
      %v9344 = vadd.f32 %v9342, %v9343
      %v9345 = vrcp.pop 256.0
      %v9346 = vmul.f32 %v9344, %v9345
      %v9347 = vsel %vm508, %v9244, 0.0
      %v9348 = vsel %vm508, %v9245, 0.0
      %v9349 = vadd.f32 %v9347, %v9348
      %v9350 = vsel %vm508, %v9246, 0.0
      %v9351 = vadd.f32 %v9349, %v9350
      %v9352 = vsel %vm508, %v9247, 0.0
      %v9353 = vadd.f32 %v9351, %v9352
      %v9354 = vsel %vm508, %v9248, 0.0
      %v9355 = vadd.f32 %v9353, %v9354
      %v9356 = vsel %vm508, %v9249, 0.0
      %v9357 = vadd.f32 %v9355, %v9356
      %v9358 = vsel %vm508, %v9250, 0.0
      %v9359 = vadd.f32 %v9357, %v9358
      %v9360 = vsel %vm508, %v9251, 0.0
      %v9361 = vadd.f32 %v9359, %v9360
      %v9362 = vsel %vm508, %v9252, 0.0
      %v9363 = vadd.f32 %v9361, %v9362
      %v9364 = vsel %vm508, %v9253, 0.0
      %v9365 = vadd.f32 %v9363, %v9364
      %v9366 = vsel %vm508, %v9254, 0.0
      %v9367 = vadd.f32 %v9365, %v9366
      %v9368 = vsel %vm508, %v9255, 0.0
      %v9369 = vadd.f32 %v9367, %v9368
      %v9370 = vsel %vm508, %v9256, 0.0
      %v9371 = vadd.f32 %v9369, %v9370
      %v9372 = vsel %vm508, %v9257, 0.0
      %v9373 = vadd.f32 %v9371, %v9372
      %v9374 = vsel %vm508, %v9258, 0.0
      %v9375 = vadd.f32 %v9373, %v9374
      %v9376 = vsel %vm508, %v9259, 0.0
      %v9377 = vadd.f32 %v9375, %v9376
      %v9378 = vsel %vm508, %v9260, 0.0
      %v9379 = vadd.f32 %v9377, %v9378
      %v9380 = vsel %vm508, %v9261, 0.0
      %v9381 = vadd.f32 %v9379, %v9380
      %v9382 = vsel %vm508, %v9262, 0.0
      %v9383 = vadd.f32 %v9381, %v9382
      %v9384 = vsel %vm508, %v9263, 0.0
      %v9385 = vadd.f32 %v9383, %v9384
      %v9386 = vsel %vm508, %v9264, 0.0
      %v9387 = vadd.f32 %v9385, %v9386
      %v9388 = vsel %vm508, %v9265, 0.0
      %v9389 = vadd.f32 %v9387, %v9388
      %v9390 = vsel %vm508, %v9266, 0.0
      %v9391 = vadd.f32 %v9389, %v9390
      %v9392 = vsel %vm508, %v9267, 0.0
      %v9393 = vadd.f32 %v9391, %v9392
      %v9394 = vsel %vm508, %v9268, 0.0
      %v9395 = vadd.f32 %v9393, %v9394
      %v9396 = vsel %vm508, %v9269, 0.0
      %v9397 = vadd.f32 %v9395, %v9396
      %v9398 = vsel %vm508, %v9270, 0.0
      %v9399 = vadd.f32 %v9397, %v9398
      %v9400 = vsel %vm508, %v9271, 0.0
      %v9401 = vadd.f32 %v9399, %v9400
      %v9402 = vsel %vm508, %v9272, 0.0
      %v9403 = vadd.f32 %v9401, %v9402
      %v9404 = vsel %vm508, %v9273, 0.0
      %v9405 = vadd.f32 %v9403, %v9404
      %v9406 = vsel %vm508, %v9274, 0.0
      %v9407 = vadd.f32 %v9405, %v9406
      %v9408 = vsel %vm508, %v9275, 0.0
      %v9409 = vadd.f32 %v9407, %v9408
      %v9410 = vrot.slane %v9409, 4
      %v9411 = vadd.f32 %v9409, %v9410
      %v9412 = vrot.slane %v9411, 2
      %v9413 = vadd.f32 %v9411, %v9412
      %v9414 = vrot.slane %v9413, 1
      %v9415 = vadd.f32 %v9413, %v9414
      %v9416 = vmul.f32 %v9415, %v9345
      %9418 = vrot.lane.b32.xlu0 %v9416, 8
      %v9419 = vpop.permute.xlu0 %9418
      %v9421 = vsel %vm2295, %v9346, %v9419
      %v9422 = vld [vmem:[%s9] sm:$0xff]
      %v9423 = vld [vmem:[%s9 + $0x8] sm:$0xf]
      %v9424 = vld [vmem:[%s10] sm:$0x1]
      %v9426 = vsel %vm2328, %v9421, 0
      %v9429 = vsel %vm605, %v9423, 0
      %9431 = vmatprep.subr.mxu0 0.0
      %9432 = vmatpush1.msra.mxu0 0.0
      %9433 = vmatprep.subr.mxu0 0.0
      %9434 = vmatpush1.msra.mxu0 0.0
      %9435 = vmatprep.subr.mxu0 0.0
      %9436 = vmatpush1.msra.mxu0 0.0
      %9437 = vmatprep.subr.mxu0 0.0
      %9438 = vmatpush1.msra.mxu0 0.0
      %9439 = vmatprep.subr.mxu0 0.0
      %9440 = vmatpush1.msra.mxu0 0.0
      %9441 = vmatprep.subr.mxu0 0.0
      %9442 = vmatpush1.msra.mxu0 0.0
      %9443 = vmatprep.subr.mxu0 0.0
      %9444 = vmatpush1.msra.mxu0 0.0
      %9445 = vmatprep.subr.mxu0 0.0
      %9446 = vmatpush1.msra.mxu0 0.0
      %9447 = vmatprep.subr.mxu0 0.0
      %9448 = vmatpush1.msra.mxu0 0.0
      %9449 = vmatprep.subr.mxu0 0.0
      %9450 = vmatpush1.msra.mxu0 0.0
      %9451 = vmatprep.subr.mxu0 0.0
      %9452 = vmatpush1.msra.mxu0 0.0
      %9453 = vmatprep.subr.mxu0 0.0
      %9454 = vmatpush1.msra.mxu0 0.0
      %9455 = vmatprep.subr.mxu0 0.0
      %9456 = vmatpush1.msra.mxu0 0.0
      %9457 = vmatprep.subr.mxu0 0.0
      %9458 = vmatpush1.msra.mxu0 0.0
      %9459 = vmatprep.subr.mxu0 0.0
      %9460 = vmatpush1.msra.mxu0 %v9429
      %9461 = vmatprep.subr.mxu0 0.0
      %9462 = vmatpush1.msra.mxu0 %v9422
      %9463 = vmatprep.subr.mxu0 0.0
      %9464 = vmatpush2.msra.mxu0 0.0
      %9465 = vmatprep.subr.mxu0 0.0
      %9466 = vmatpush2.msra.mxu0 0.0
      %9467 = vmatprep.subr.mxu0 0.0
      %9468 = vmatpush2.msra.mxu0 0.0
      %9469 = vmatprep.subr.mxu0 0.0
      %9470 = vmatpush2.msra.mxu0 0.0
      %9471 = vmatprep.subr.mxu0 0.0
      %9472 = vmatpush2.msra.mxu0 0.0
      %9473 = vmatprep.subr.mxu0 0.0
      %9474 = vmatpush2.msra.mxu0 0.0
      %9475 = vmatprep.subr.mxu0 0.0
      %9476 = vmatpush2.msra.mxu0 0.0
      %9477 = vmatprep.subr.mxu0 0.0
      %9478 = vmatpush2.msra.mxu0 0.0
      %9479 = vmatprep.subr.mxu0 0.0
      %9480 = vmatpush2.msra.mxu0 0.0
      %9481 = vmatprep.subr.mxu0 0.0
      %9482 = vmatpush2.msra.mxu0 0.0
      %9483 = vmatprep.subr.mxu0 0.0
      %9484 = vmatpush2.msra.mxu0 0.0
      %9485 = vmatprep.subr.mxu0 0.0
      %9486 = vmatpush2.msra.mxu0 0.0
      %9487 = vmatprep.subr.mxu0 0.0
      %9488 = vmatpush2.msra.mxu0 0.0
      %9489 = vmatprep.subr.mxu0 0.0
      %9490 = vmatpush2.msra.mxu0 0.0
      %9491 = vmatprep.subr.mxu0 0.0
      %9492 = vmatpush2.msra.mxu0 0.0
      %9493 = vmatprep.subr.mxu0 0.0
      %9494 = vmatpush2.msra.mxu0 0.0
      %9495 = vmatprep.mubr.f32.mxu0 0.0
      %9496 = vmatmul.mubr.f32.gmra.mxu0 %v9426
      %v9497 = vpop.f32.mrf.mxu0
      %v9498 = vadd.f32 %v9424, %v9497
      %v9499 = vpop.f32.mrf.mxu0
      %9500 = vdwg.mxu0
      %v9501 = vadd.f32 %v9498, 3.0
      %v9502 = vrcp.pop 6.0
      %v9503 = vmul.f32 %v9501, %v9502
      %v9504 = vmax.f32 %v9503, 0.0
      %v9505 = vmin.f32 %v9504, 1.0
      %v9506 = vlaneseq
      %v9507 = vshrl.u32 %v9506, 7
      %v9508 = vsub.s32 0, %v9507
      %v9509 = vrot.slane %v9505, %v9508
      %9511 = vbcast.lane.b32.xlu0 %v9509, 256
      %v9512 = vpop.permute.xlu0 %9511
      %s9514 = sor.u32 256, 8
      %9515 = vbcast.lane.b32.xlu0 %v9509, %s9514
      %v9516 = vpop.permute.xlu0 %9515
      %v9517 = vld [vmem:[%s11] sm:$0xff]
      %v9518 = vmul.f32 %v9517, %v9512
      %v9519 = vld [vmem:[%s12] sm:$0xf]
      %v9520 = vmul.f32 %v9519, %v9516
      %v9522 = vsel %vm508, %v9244, 0
      %v9525 = vsel %vm508, %v9245, 0
      %v9528 = vsel %vm508, %v9246, 0
      %v9531 = vsel %vm508, %v9247, 0
      %v9534 = vsel %vm508, %v9248, 0
      %v9537 = vsel %vm508, %v9249, 0
      %v9540 = vsel %vm508, %v9250, 0
      %v9543 = vsel %vm508, %v9251, 0
      %v9546 = vsel %vm508, %v9252, 0
      %v9549 = vsel %vm508, %v9253, 0
      %v9552 = vsel %vm508, %v9254, 0
      %v9555 = vsel %vm508, %v9255, 0
      %v9558 = vsel %vm508, %v9256, 0
      %v9561 = vsel %vm508, %v9257, 0
      %v9564 = vsel %vm508, %v9258, 0
      %v9567 = vsel %vm508, %v9259, 0
      %v9570 = vsel %vm508, %v9260, 0
      %v9573 = vsel %vm508, %v9261, 0
      %v9576 = vsel %vm508, %v9262, 0
      %v9579 = vsel %vm508, %v9263, 0
      %v9582 = vsel %vm508, %v9264, 0
      %v9585 = vsel %vm508, %v9265, 0
      %v9588 = vsel %vm508, %v9266, 0
      %v9591 = vsel %vm508, %v9267, 0
      %v9594 = vsel %vm508, %v9268, 0
      %v9597 = vsel %vm508, %v9269, 0
      %v9600 = vsel %vm508, %v9270, 0
      %v9603 = vsel %vm508, %v9271, 0
      %v9606 = vsel %vm508, %v9272, 0
      %v9609 = vsel %vm508, %v9273, 0
      %v9612 = vsel %vm508, %v9274, 0
      %v9615 = vsel %vm508, %v9275, 0
      %v9618 = vsel %vm605, %v9520, 0
      %9620 = vmatprep.subr.mxu0 0.0
      %9621 = vmatpush1.msra.mxu0 0.0
      %9622 = vmatprep.subr.mxu0 0.0
      %9623 = vmatpush1.msra.mxu0 0.0
      %9624 = vmatprep.subr.mxu0 0.0
      %9625 = vmatpush1.msra.mxu0 0.0
      %9626 = vmatprep.subr.mxu0 0.0
      %9627 = vmatpush1.msra.mxu0 0.0
      %9628 = vmatprep.subr.mxu0 0.0
      %9629 = vmatpush1.msra.mxu0 0.0
      %9630 = vmatprep.subr.mxu0 0.0
      %9631 = vmatpush1.msra.mxu0 0.0
      %9632 = vmatprep.subr.mxu0 0.0
      %9633 = vmatpush1.msra.mxu0 0.0
      %9634 = vmatprep.subr.mxu0 0.0
      %9635 = vmatpush1.msra.mxu0 0.0
      %9636 = vmatprep.subr.mxu0 0.0
      %9637 = vmatpush1.msra.mxu0 0.0
      %9638 = vmatprep.subr.mxu0 0.0
      %9639 = vmatpush1.msra.mxu0 0.0
      %9640 = vmatprep.subr.mxu0 0.0
      %9641 = vmatpush1.msra.mxu0 0.0
      %9642 = vmatprep.subr.mxu0 0.0
      %9643 = vmatpush1.msra.mxu0 0.0
      %9644 = vmatprep.subr.mxu0 0.0
      %9645 = vmatpush1.msra.mxu0 0.0
      %9646 = vmatprep.subr.mxu0 0.0
      %9647 = vmatpush1.msra.mxu0 0.0
      %9648 = vmatprep.subr.mxu0 0.0
      %9649 = vmatpush1.msra.mxu0 0.0
      %9650 = vmatprep.subr.mxu0 0.0
      %9651 = vmatpush1.msra.mxu0 %v9618
      %9652 = vmatprep.subr.mxu0 0.0
      %9653 = vmatpush2.msra.mxu0 0.0
      %9654 = vmatprep.subr.mxu0 0.0
      %9655 = vmatpush2.msra.mxu0 0.0
      %9656 = vmatprep.subr.mxu0 0.0
      %9657 = vmatpush2.msra.mxu0 0.0
      %9658 = vmatprep.subr.mxu0 0.0
      %9659 = vmatpush2.msra.mxu0 0.0
      %9660 = vmatprep.subr.mxu0 0.0
      %9661 = vmatpush2.msra.mxu0 0.0
      %9662 = vmatprep.subr.mxu0 0.0
      %9663 = vmatpush2.msra.mxu0 0.0
      %9664 = vmatprep.subr.mxu0 0.0
      %9665 = vmatpush2.msra.mxu0 0.0
      %9666 = vmatprep.subr.mxu0 0.0
      %9667 = vmatpush2.msra.mxu0 0.0
      %9668 = vmatprep.subr.mxu0 0.0
      %9669 = vmatpush2.msra.mxu0 0.0
      %9670 = vmatprep.subr.mxu0 0.0
      %9671 = vmatpush2.msra.mxu0 0.0
      %9672 = vmatprep.subr.mxu0 0.0
      %9673 = vmatpush2.msra.mxu0 0.0
      %9674 = vmatprep.subr.mxu0 0.0
      %9675 = vmatpush2.msra.mxu0 0.0
      %9676 = vmatprep.subr.mxu0 0.0
      %9677 = vmatpush2.msra.mxu0 0.0
      %9678 = vmatprep.subr.mxu0 0.0
      %9679 = vmatpush2.msra.mxu0 0.0
      %9680 = vmatprep.subr.mxu0 0.0
      %9681 = vmatpush2.msra.mxu0 0.0
      %9682 = vmatprep.subr.mxu0 0.0
      %9683 = vmatpush2.msra.mxu0 0.0
      %9684 = vmatprep.mubr.f32.mxu0 0.0
      %9685 = vmatmul.mubr.f32.gmra.mxu0 %v9522
      %v9686 = vpop.f32.mrf.mxu0
      %v9687 = vadd.f32 0.0, %v9686
      %v9688 = vpop.f32.mrf.mxu0
      %9689 = vmatprep.mubr.f32.mxu0 0.0
      %9690 = vmatmul.mubr.f32.gmra.mxu0 %v9525
      %v9691 = vpop.f32.mrf.mxu0
      %v9692 = vadd.f32 0.0, %v9691
      %v9693 = vpop.f32.mrf.mxu0
      %9694 = vmatprep.mubr.f32.mxu0 0.0
      %9695 = vmatmul.mubr.f32.gmra.mxu0 %v9528
      %v9696 = vpop.f32.mrf.mxu0
      %v9697 = vadd.f32 0.0, %v9696
      %v9698 = vpop.f32.mrf.mxu0
      %9699 = vmatprep.mubr.f32.mxu0 0.0
      %9700 = vmatmul.mubr.f32.gmra.mxu0 %v9531
      %v9701 = vpop.f32.mrf.mxu0
      %v9702 = vadd.f32 0.0, %v9701
      %v9703 = vpop.f32.mrf.mxu0
      %9704 = vmatprep.mubr.f32.mxu0 0.0
      %9705 = vmatmul.mubr.f32.gmra.mxu0 %v9534
      %v9706 = vpop.f32.mrf.mxu0
      %v9707 = vadd.f32 0.0, %v9706
      %v9708 = vpop.f32.mrf.mxu0
      %9709 = vmatprep.mubr.f32.mxu0 0.0
      %9710 = vmatmul.mubr.f32.gmra.mxu0 %v9537
      %v9711 = vpop.f32.mrf.mxu0
      %v9712 = vadd.f32 0.0, %v9711
      %v9713 = vpop.f32.mrf.mxu0
      %9714 = vmatprep.mubr.f32.mxu0 0.0
      %9715 = vmatmul.mubr.f32.gmra.mxu0 %v9540
      %v9716 = vpop.f32.mrf.mxu0
      %v9717 = vadd.f32 0.0, %v9716
      %v9718 = vpop.f32.mrf.mxu0
      %9719 = vmatprep.mubr.f32.mxu0 0.0
      %9720 = vmatmul.mubr.f32.gmra.mxu0 %v9543
      %v9721 = vpop.f32.mrf.mxu0
      %v9722 = vadd.f32 0.0, %v9721
      %v9723 = vpop.f32.mrf.mxu0
      %9724 = vmatprep.mubr.f32.mxu0 0.0
      %9725 = vmatmul.mubr.f32.gmra.mxu0 %v9546
      %v9726 = vpop.f32.mrf.mxu0
      %v9727 = vadd.f32 0.0, %v9726
      %v9728 = vpop.f32.mrf.mxu0
      %9729 = vmatprep.mubr.f32.mxu0 0.0
      %9730 = vmatmul.mubr.f32.gmra.mxu0 %v9549
      %v9731 = vpop.f32.mrf.mxu0
      %v9732 = vadd.f32 0.0, %v9731
      %v9733 = vpop.f32.mrf.mxu0
      %9734 = vmatprep.mubr.f32.mxu0 0.0
      %9735 = vmatmul.mubr.f32.gmra.mxu0 %v9552
      %v9736 = vpop.f32.mrf.mxu0
      %v9737 = vadd.f32 0.0, %v9736
      %v9738 = vpop.f32.mrf.mxu0
      %9739 = vmatprep.mubr.f32.mxu0 0.0
      %9740 = vmatmul.mubr.f32.gmra.mxu0 %v9555
      %v9741 = vpop.f32.mrf.mxu0
      %v9742 = vadd.f32 0.0, %v9741
      %v9743 = vpop.f32.mrf.mxu0
      %9744 = vmatprep.mubr.f32.mxu0 0.0
      %9745 = vmatmul.mubr.f32.gmra.mxu0 %v9558
      %v9746 = vpop.f32.mrf.mxu0
      %v9747 = vadd.f32 0.0, %v9746
      %v9748 = vpop.f32.mrf.mxu0
      %9749 = vmatprep.mubr.f32.mxu0 0.0
      %9750 = vmatmul.mubr.f32.gmra.mxu0 %v9561
      %v9751 = vpop.f32.mrf.mxu0
      %v9752 = vadd.f32 0.0, %v9751
      %v9753 = vpop.f32.mrf.mxu0
      %9754 = vmatprep.mubr.f32.mxu0 0.0
      %9755 = vmatmul.mubr.f32.gmra.mxu0 %v9564
      %v9756 = vpop.f32.mrf.mxu0
      %v9757 = vadd.f32 0.0, %v9756
      %v9758 = vpop.f32.mrf.mxu0
      %9759 = vmatprep.mubr.f32.mxu0 0.0
      %9760 = vmatmul.mubr.f32.gmra.mxu0 %v9567
      %v9761 = vpop.f32.mrf.mxu0
      %v9762 = vadd.f32 0.0, %v9761
      %v9763 = vpop.f32.mrf.mxu0
      %9764 = vmatprep.mubr.f32.mxu0 0.0
      %9765 = vmatmul.mubr.f32.gmra.mxu0 %v9570
      %v9766 = vpop.f32.mrf.mxu0
      %v9767 = vadd.f32 0.0, %v9766
      %v9768 = vpop.f32.mrf.mxu0
      %9769 = vmatprep.mubr.f32.mxu0 0.0
      %9770 = vmatmul.mubr.f32.gmra.mxu0 %v9573
      %v9771 = vpop.f32.mrf.mxu0
      %v9772 = vadd.f32 0.0, %v9771
      %v9773 = vpop.f32.mrf.mxu0
      %9774 = vmatprep.mubr.f32.mxu0 0.0
      %9775 = vmatmul.mubr.f32.gmra.mxu0 %v9576
      %v9776 = vpop.f32.mrf.mxu0
      %v9777 = vadd.f32 0.0, %v9776
      %v9778 = vpop.f32.mrf.mxu0
      %9779 = vmatprep.mubr.f32.mxu0 0.0
      %9780 = vmatmul.mubr.f32.gmra.mxu0 %v9579
      %v9781 = vpop.f32.mrf.mxu0
      %v9782 = vadd.f32 0.0, %v9781
      %v9783 = vpop.f32.mrf.mxu0
      %9784 = vmatprep.mubr.f32.mxu0 0.0
      %9785 = vmatmul.mubr.f32.gmra.mxu0 %v9582
      %v9786 = vpop.f32.mrf.mxu0
      %v9787 = vadd.f32 0.0, %v9786
      %v9788 = vpop.f32.mrf.mxu0
      %9789 = vmatprep.mubr.f32.mxu0 0.0
      %9790 = vmatmul.mubr.f32.gmra.mxu0 %v9585
      %v9791 = vpop.f32.mrf.mxu0
      %v9792 = vadd.f32 0.0, %v9791
      %v9793 = vpop.f32.mrf.mxu0
      %9794 = vmatprep.mubr.f32.mxu0 0.0
      %9795 = vmatmul.mubr.f32.gmra.mxu0 %v9588
      %v9796 = vpop.f32.mrf.mxu0
      %v9797 = vadd.f32 0.0, %v9796
      %v9798 = vpop.f32.mrf.mxu0
      %9799 = vmatprep.mubr.f32.mxu0 0.0
      %9800 = vmatmul.mubr.f32.gmra.mxu0 %v9591
      %v9801 = vpop.f32.mrf.mxu0
      %v9802 = vadd.f32 0.0, %v9801
      %v9803 = vpop.f32.mrf.mxu0
      %9804 = vmatprep.mubr.f32.mxu0 0.0
      %9805 = vmatmul.mubr.f32.gmra.mxu0 %v9594
      %v9806 = vpop.f32.mrf.mxu0
      %v9807 = vadd.f32 0.0, %v9806
      %v9808 = vpop.f32.mrf.mxu0
      %9809 = vmatprep.mubr.f32.mxu0 0.0
      %9810 = vmatmul.mubr.f32.gmra.mxu0 %v9597
      %v9811 = vpop.f32.mrf.mxu0
      %v9812 = vadd.f32 0.0, %v9811
      %v9813 = vpop.f32.mrf.mxu0
      %9814 = vmatprep.mubr.f32.mxu0 0.0
      %9815 = vmatmul.mubr.f32.gmra.mxu0 %v9600
      %v9816 = vpop.f32.mrf.mxu0
      %v9817 = vadd.f32 0.0, %v9816
      %v9818 = vpop.f32.mrf.mxu0
      %9819 = vmatprep.mubr.f32.mxu0 0.0
      %9820 = vmatmul.mubr.f32.gmra.mxu0 %v9603
      %v9821 = vpop.f32.mrf.mxu0
      %v9822 = vadd.f32 0.0, %v9821
      %v9823 = vpop.f32.mrf.mxu0
      %9824 = vmatprep.mubr.f32.mxu0 0.0
      %9825 = vmatmul.mubr.f32.gmra.mxu0 %v9606
      %v9826 = vpop.f32.mrf.mxu0
      %v9827 = vadd.f32 0.0, %v9826
      %v9828 = vpop.f32.mrf.mxu0
      %9829 = vmatprep.mubr.f32.mxu0 0.0
      %9830 = vmatmul.mubr.f32.gmra.mxu0 %v9609
      %v9831 = vpop.f32.mrf.mxu0
      %v9832 = vadd.f32 0.0, %v9831
      %v9833 = vpop.f32.mrf.mxu0
      %9834 = vmatprep.mubr.f32.mxu0 0.0
      %9835 = vmatmul.mubr.f32.gmra.mxu0 %v9612
      %v9836 = vpop.f32.mrf.mxu0
      %v9837 = vadd.f32 0.0, %v9836
      %v9838 = vpop.f32.mrf.mxu0
      %9839 = vmatprep.mubr.f32.mxu0 0.0
      %9840 = vmatmul.mubr.f32.gmra.mxu0 %v9615
      %v9841 = vpop.f32.mrf.mxu0
      %v9842 = vadd.f32 0.0, %v9841
      %v9843 = vpop.f32.mrf.mxu0
      %9844 = vdwg.mxu0
      %v9845 = vsel %vm2295, %v1026, 0
      %v9847 = vsel %vm2295, %v1027, 0
      %v9849 = vsel %vm2295, %v1028, 0
      %v9851 = vsel %vm2295, %v1029, 0
      %v9853 = vsel %vm2295, %v1030, 0
      %v9855 = vsel %vm2295, %v1031, 0
      %v9857 = vsel %vm2295, %v1032, 0
      %v9859 = vsel %vm2295, %v1033, 0
      %v9861 = vsel %vm2295, %v1034, 0
      %v9863 = vsel %vm2295, %v1035, 0
      %v9865 = vsel %vm2295, %v1036, 0
      %v9867 = vsel %vm2295, %v1037, 0
      %v9869 = vsel %vm2295, %v1038, 0
      %v9871 = vsel %vm2295, %v1039, 0
      %v9873 = vsel %vm2295, %v1040, 0
      %v9875 = vsel %vm2295, %v1041, 0
      %v9877 = vsel %vm2295, %v1042, 0
      %v9879 = vsel %vm2295, %v1043, 0
      %v9881 = vsel %vm2295, %v1044, 0
      %v9883 = vsel %vm2295, %v1045, 0
      %v9885 = vsel %vm2295, %v1046, 0
      %v9887 = vsel %vm2295, %v1047, 0
      %v9889 = vsel %vm2295, %v1048, 0
      %v9891 = vsel %vm2295, %v1049, 0
      %v9893 = vsel %vm2295, %v1050, 0
      %v9895 = vsel %vm2295, %v1051, 0
      %v9897 = vsel %vm2295, %v1052, 0
      %v9899 = vsel %vm2295, %v1053, 0
      %v9901 = vsel %vm2295, %v1054, 0
      %v9903 = vsel %vm2295, %v1055, 0
      %v9905 = vsel %vm2295, %v1056, 0
      %v9907 = vsel %vm2295, %v1057, 0
      %9909 = vmatprep.subr.mxu0 0.0
      %9910 = vmatpush1.msra.mxu0 0.0
      %9911 = vmatprep.subr.mxu0 0.0
      %9912 = vmatpush1.msra.mxu0 0.0
      %9913 = vmatprep.subr.mxu0 0.0
      %9914 = vmatpush1.msra.mxu0 0.0
      %9915 = vmatprep.subr.mxu0 0.0
      %9916 = vmatpush1.msra.mxu0 0.0
      %9917 = vmatprep.subr.mxu0 0.0
      %9918 = vmatpush1.msra.mxu0 0.0
      %9919 = vmatprep.subr.mxu0 0.0
      %9920 = vmatpush1.msra.mxu0 0.0
      %9921 = vmatprep.subr.mxu0 0.0
      %9922 = vmatpush1.msra.mxu0 0.0
      %9923 = vmatprep.subr.mxu0 0.0
      %9924 = vmatpush1.msra.mxu0 0.0
      %9925 = vmatprep.subr.mxu0 0.0
      %9926 = vmatpush1.msra.mxu0 0.0
      %9927 = vmatprep.subr.mxu0 0.0
      %9928 = vmatpush1.msra.mxu0 0.0
      %9929 = vmatprep.subr.mxu0 0.0
      %9930 = vmatpush1.msra.mxu0 0.0
      %9931 = vmatprep.subr.mxu0 0.0
      %9932 = vmatpush1.msra.mxu0 0.0
      %9933 = vmatprep.subr.mxu0 0.0
      %9934 = vmatpush1.msra.mxu0 0.0
      %9935 = vmatprep.subr.mxu0 0.0
      %9936 = vmatpush1.msra.mxu0 0.0
      %9937 = vmatprep.subr.mxu0 0.0
      %9938 = vmatpush1.msra.mxu0 0.0
      %9939 = vmatprep.subr.mxu0 0.0
      %9940 = vmatpush1.msra.mxu0 %v9518
      %9941 = vmatprep.subr.mxu0 0.0
      %9942 = vmatpush2.msra.mxu0 0.0
      %9943 = vmatprep.subr.mxu0 0.0
      %9944 = vmatpush2.msra.mxu0 0.0
      %9945 = vmatprep.subr.mxu0 0.0
      %9946 = vmatpush2.msra.mxu0 0.0
      %9947 = vmatprep.subr.mxu0 0.0
      %9948 = vmatpush2.msra.mxu0 0.0
      %9949 = vmatprep.subr.mxu0 0.0
      %9950 = vmatpush2.msra.mxu0 0.0
      %9951 = vmatprep.subr.mxu0 0.0
      %9952 = vmatpush2.msra.mxu0 0.0
      %9953 = vmatprep.subr.mxu0 0.0
      %9954 = vmatpush2.msra.mxu0 0.0
      %9955 = vmatprep.subr.mxu0 0.0
      %9956 = vmatpush2.msra.mxu0 0.0
      %9957 = vmatprep.subr.mxu0 0.0
      %9958 = vmatpush2.msra.mxu0 0.0
      %9959 = vmatprep.subr.mxu0 0.0
      %9960 = vmatpush2.msra.mxu0 0.0
      %9961 = vmatprep.subr.mxu0 0.0
      %9962 = vmatpush2.msra.mxu0 0.0
      %9963 = vmatprep.subr.mxu0 0.0
      %9964 = vmatpush2.msra.mxu0 0.0
      %9965 = vmatprep.subr.mxu0 0.0
      %9966 = vmatpush2.msra.mxu0 0.0
      %9967 = vmatprep.subr.mxu0 0.0
      %9968 = vmatpush2.msra.mxu0 0.0
      %9969 = vmatprep.subr.mxu0 0.0
      %9970 = vmatpush2.msra.mxu0 0.0
      %9971 = vmatprep.subr.mxu0 0.0
      %9972 = vmatpush2.msra.mxu0 0.0
      %9973 = vmatprep.mubr.f32.mxu0 0.0
      %9974 = vmatmul.mubr.f32.gmra.mxu0 %v9845
      %v9975 = vpop.f32.mrf.mxu0
      %v9976 = vadd.f32 %v9687, %v9975
      %v9977 = vpop.f32.mrf.mxu0
      %9978 = vmatprep.mubr.f32.mxu0 0.0
      %9979 = vmatmul.mubr.f32.gmra.mxu0 %v9847
      %v9980 = vpop.f32.mrf.mxu0
      %v9981 = vadd.f32 %v9692, %v9980
      %v9982 = vpop.f32.mrf.mxu0
      %9983 = vmatprep.mubr.f32.mxu0 0.0
      %9984 = vmatmul.mubr.f32.gmra.mxu0 %v9849
      %v9985 = vpop.f32.mrf.mxu0
      %v9986 = vadd.f32 %v9697, %v9985
      %v9987 = vpop.f32.mrf.mxu0
      %9988 = vmatprep.mubr.f32.mxu0 0.0
      %9989 = vmatmul.mubr.f32.gmra.mxu0 %v9851
      %v9990 = vpop.f32.mrf.mxu0
      %v9991 = vadd.f32 %v9702, %v9990
      %v9992 = vpop.f32.mrf.mxu0
      %9993 = vmatprep.mubr.f32.mxu0 0.0
      %9994 = vmatmul.mubr.f32.gmra.mxu0 %v9853
      %v9995 = vpop.f32.mrf.mxu0
      %v9996 = vadd.f32 %v9707, %v9995
      %v9997 = vpop.f32.mrf.mxu0
      %9998 = vmatprep.mubr.f32.mxu0 0.0
      %9999 = vmatmul.mubr.f32.gmra.mxu0 %v9855
      %v10000 = vpop.f32.mrf.mxu0
      %v10001 = vadd.f32 %v9712, %v10000
      %v10002 = vpop.f32.mrf.mxu0
      %10003 = vmatprep.mubr.f32.mxu0 0.0
      %10004 = vmatmul.mubr.f32.gmra.mxu0 %v9857
      %v10005 = vpop.f32.mrf.mxu0
      %v10006 = vadd.f32 %v9717, %v10005
      %v10007 = vpop.f32.mrf.mxu0
      %10008 = vmatprep.mubr.f32.mxu0 0.0
      %10009 = vmatmul.mubr.f32.gmra.mxu0 %v9859
      %v10010 = vpop.f32.mrf.mxu0
      %v10011 = vadd.f32 %v9722, %v10010
      %v10012 = vpop.f32.mrf.mxu0
      %10013 = vmatprep.mubr.f32.mxu0 0.0
      %10014 = vmatmul.mubr.f32.gmra.mxu0 %v9861
      %v10015 = vpop.f32.mrf.mxu0
      %v10016 = vadd.f32 %v9727, %v10015
      %v10017 = vpop.f32.mrf.mxu0
      %10018 = vmatprep.mubr.f32.mxu0 0.0
      %10019 = vmatmul.mubr.f32.gmra.mxu0 %v9863
      %v10020 = vpop.f32.mrf.mxu0
      %v10021 = vadd.f32 %v9732, %v10020
      %v10022 = vpop.f32.mrf.mxu0
      %10023 = vmatprep.mubr.f32.mxu0 0.0
      %10024 = vmatmul.mubr.f32.gmra.mxu0 %v9865
      %v10025 = vpop.f32.mrf.mxu0
      %v10026 = vadd.f32 %v9737, %v10025
      %v10027 = vpop.f32.mrf.mxu0
      %10028 = vmatprep.mubr.f32.mxu0 0.0
      %10029 = vmatmul.mubr.f32.gmra.mxu0 %v9867
      %v10030 = vpop.f32.mrf.mxu0
      %v10031 = vadd.f32 %v9742, %v10030
      %v10032 = vpop.f32.mrf.mxu0
      %10033 = vmatprep.mubr.f32.mxu0 0.0
      %10034 = vmatmul.mubr.f32.gmra.mxu0 %v9869
      %v10035 = vpop.f32.mrf.mxu0
      %v10036 = vadd.f32 %v9747, %v10035
      %v10037 = vpop.f32.mrf.mxu0
      %10038 = vmatprep.mubr.f32.mxu0 0.0
      %10039 = vmatmul.mubr.f32.gmra.mxu0 %v9871
      %v10040 = vpop.f32.mrf.mxu0
      %v10041 = vadd.f32 %v9752, %v10040
      %v10042 = vpop.f32.mrf.mxu0
      %10043 = vmatprep.mubr.f32.mxu0 0.0
      %10044 = vmatmul.mubr.f32.gmra.mxu0 %v9873
      %v10045 = vpop.f32.mrf.mxu0
      %v10046 = vadd.f32 %v9757, %v10045
      %v10047 = vpop.f32.mrf.mxu0
      %10048 = vmatprep.mubr.f32.mxu0 0.0
      %10049 = vmatmul.mubr.f32.gmra.mxu0 %v9875
      %v10050 = vpop.f32.mrf.mxu0
      %v10051 = vadd.f32 %v9762, %v10050
      %v10052 = vpop.f32.mrf.mxu0
      %10053 = vmatprep.mubr.f32.mxu0 0.0
      %10054 = vmatmul.mubr.f32.gmra.mxu0 %v9877
      %v10055 = vpop.f32.mrf.mxu0
      %v10056 = vadd.f32 %v9767, %v10055
      %v10057 = vpop.f32.mrf.mxu0
      %10058 = vmatprep.mubr.f32.mxu0 0.0
      %10059 = vmatmul.mubr.f32.gmra.mxu0 %v9879
      %v10060 = vpop.f32.mrf.mxu0
      %v10061 = vadd.f32 %v9772, %v10060
      %v10062 = vpop.f32.mrf.mxu0
      %10063 = vmatprep.mubr.f32.mxu0 0.0
      %10064 = vmatmul.mubr.f32.gmra.mxu0 %v9881
      %v10065 = vpop.f32.mrf.mxu0
      %v10066 = vadd.f32 %v9777, %v10065
      %v10067 = vpop.f32.mrf.mxu0
      %10068 = vmatprep.mubr.f32.mxu0 0.0
      %10069 = vmatmul.mubr.f32.gmra.mxu0 %v9883
      %v10070 = vpop.f32.mrf.mxu0
      %v10071 = vadd.f32 %v9782, %v10070
      %v10072 = vpop.f32.mrf.mxu0
      %10073 = vmatprep.mubr.f32.mxu0 0.0
      %10074 = vmatmul.mubr.f32.gmra.mxu0 %v9885
      %v10075 = vpop.f32.mrf.mxu0
      %v10076 = vadd.f32 %v9787, %v10075
      %v10077 = vpop.f32.mrf.mxu0
      %10078 = vmatprep.mubr.f32.mxu0 0.0
      %10079 = vmatmul.mubr.f32.gmra.mxu0 %v9887
      %v10080 = vpop.f32.mrf.mxu0
      %v10081 = vadd.f32 %v9792, %v10080
      %v10082 = vpop.f32.mrf.mxu0
      %10083 = vmatprep.mubr.f32.mxu0 0.0
      %10084 = vmatmul.mubr.f32.gmra.mxu0 %v9889
      %v10085 = vpop.f32.mrf.mxu0
      %v10086 = vadd.f32 %v9797, %v10085
      %v10087 = vpop.f32.mrf.mxu0
      %10088 = vmatprep.mubr.f32.mxu0 0.0
      %10089 = vmatmul.mubr.f32.gmra.mxu0 %v9891
      %v10090 = vpop.f32.mrf.mxu0
      %v10091 = vadd.f32 %v9802, %v10090
      %v10092 = vpop.f32.mrf.mxu0
      %10093 = vmatprep.mubr.f32.mxu0 0.0
      %10094 = vmatmul.mubr.f32.gmra.mxu0 %v9893
      %v10095 = vpop.f32.mrf.mxu0
      %v10096 = vadd.f32 %v9807, %v10095
      %v10097 = vpop.f32.mrf.mxu0
      %10098 = vmatprep.mubr.f32.mxu0 0.0
      %10099 = vmatmul.mubr.f32.gmra.mxu0 %v9895
      %v10100 = vpop.f32.mrf.mxu0
      %v10101 = vadd.f32 %v9812, %v10100
      %v10102 = vpop.f32.mrf.mxu0
      %10103 = vmatprep.mubr.f32.mxu0 0.0
      %10104 = vmatmul.mubr.f32.gmra.mxu0 %v9897
      %v10105 = vpop.f32.mrf.mxu0
      %v10106 = vadd.f32 %v9817, %v10105
      %v10107 = vpop.f32.mrf.mxu0
      %10108 = vmatprep.mubr.f32.mxu0 0.0
      %10109 = vmatmul.mubr.f32.gmra.mxu0 %v9899
      %v10110 = vpop.f32.mrf.mxu0
      %v10111 = vadd.f32 %v9822, %v10110
      %v10112 = vpop.f32.mrf.mxu0
      %10113 = vmatprep.mubr.f32.mxu0 0.0
      %10114 = vmatmul.mubr.f32.gmra.mxu0 %v9901
      %v10115 = vpop.f32.mrf.mxu0
      %v10116 = vadd.f32 %v9827, %v10115
      %v10117 = vpop.f32.mrf.mxu0
      %10118 = vmatprep.mubr.f32.mxu0 0.0
      %10119 = vmatmul.mubr.f32.gmra.mxu0 %v9903
      %v10120 = vpop.f32.mrf.mxu0
      %v10121 = vadd.f32 %v9832, %v10120
      %v10122 = vpop.f32.mrf.mxu0
      %10123 = vmatprep.mubr.f32.mxu0 0.0
      %10124 = vmatmul.mubr.f32.gmra.mxu0 %v9905
      %v10125 = vpop.f32.mrf.mxu0
      %v10126 = vadd.f32 %v9837, %v10125
      %v10127 = vpop.f32.mrf.mxu0
      %10128 = vmatprep.mubr.f32.mxu0 0.0
      %10129 = vmatmul.mubr.f32.gmra.mxu0 %v9907
      %v10130 = vpop.f32.mrf.mxu0
      %v10131 = vadd.f32 %v9842, %v10130
      %v10132 = vpop.f32.mrf.mxu0
      %10133 = vdwg.mxu0
      %v10134 = vld [vmem:[%s13] sm:$0x1]
      %v10136 = vlaneseq
      %v10137 = vshrl.u32 %v10136, 7
      %v10138 = vsub.s32 0, %v10137
      %v10139 = vrot.slane %v10134, %v10138
      %v10141 = vadd.f32 %v9976, %v10139
      %v10142 = vadd.f32 %v9981, %v10139
      %v10143 = vadd.f32 %v9986, %v10139
      %v10144 = vadd.f32 %v9991, %v10139
      %v10145 = vadd.f32 %v9996, %v10139
      %v10146 = vadd.f32 %v10001, %v10139
      %v10147 = vadd.f32 %v10006, %v10139
      %v10148 = vadd.f32 %v10011, %v10139
      %v10149 = vadd.f32 %v10016, %v10139
      %v10150 = vadd.f32 %v10021, %v10139
      %v10151 = vadd.f32 %v10026, %v10139
      %v10152 = vadd.f32 %v10031, %v10139
      %v10153 = vadd.f32 %v10036, %v10139
      %v10154 = vadd.f32 %v10041, %v10139
      %v10155 = vadd.f32 %v10046, %v10139
      %v10156 = vadd.f32 %v10051, %v10139
      %v10157 = vadd.f32 %v10056, %v10139
      %v10158 = vadd.f32 %v10061, %v10139
      %v10159 = vadd.f32 %v10066, %v10139
      %v10160 = vadd.f32 %v10071, %v10139
      %v10161 = vadd.f32 %v10076, %v10139
      %v10162 = vadd.f32 %v10081, %v10139
      %v10163 = vadd.f32 %v10086, %v10139
      %v10164 = vadd.f32 %v10091, %v10139
      %v10165 = vadd.f32 %v10096, %v10139
      %v10166 = vadd.f32 %v10101, %v10139
      %v10167 = vadd.f32 %v10106, %v10139
      %v10168 = vadd.f32 %v10111, %v10139
      %v10169 = vadd.f32 %v10116, %v10139
      %v10170 = vadd.f32 %v10121, %v10139
      %v10171 = vadd.f32 %v10126, %v10139
      %v10172 = vadd.f32 %v10131, %v10139
      %v10173 = vxor.u32 %v10141, 2147483648
      %v10174 = vxor.u32 %v10142, 2147483648
      %v10175 = vxor.u32 %v10143, 2147483648
      %v10176 = vxor.u32 %v10144, 2147483648
      %v10177 = vxor.u32 %v10145, 2147483648
      %v10178 = vxor.u32 %v10146, 2147483648
      %v10179 = vxor.u32 %v10147, 2147483648
      %v10180 = vxor.u32 %v10148, 2147483648
      %v10181 = vxor.u32 %v10149, 2147483648
      %v10182 = vxor.u32 %v10150, 2147483648
      %v10183 = vxor.u32 %v10151, 2147483648
      %v10184 = vxor.u32 %v10152, 2147483648
      %v10185 = vxor.u32 %v10153, 2147483648
      %v10186 = vxor.u32 %v10154, 2147483648
      %v10187 = vxor.u32 %v10155, 2147483648
      %v10188 = vxor.u32 %v10156, 2147483648
      %v10189 = vxor.u32 %v10157, 2147483648
      %v10190 = vxor.u32 %v10158, 2147483648
      %v10191 = vxor.u32 %v10159, 2147483648
      %v10192 = vxor.u32 %v10160, 2147483648
      %v10193 = vxor.u32 %v10161, 2147483648
      %v10194 = vxor.u32 %v10162, 2147483648
      %v10195 = vxor.u32 %v10163, 2147483648
      %v10196 = vxor.u32 %v10164, 2147483648
      %v10197 = vxor.u32 %v10165, 2147483648
      %v10198 = vxor.u32 %v10166, 2147483648
      %v10199 = vxor.u32 %v10167, 2147483648
      %v10200 = vxor.u32 %v10168, 2147483648
      %v10201 = vxor.u32 %v10169, 2147483648
      %v10202 = vxor.u32 %v10170, 2147483648
      %v10203 = vxor.u32 %v10171, 2147483648
      %v10204 = vxor.u32 %v10172, 2147483648
      %v10205 = vmul.f32 %v10173, 1.442695
      %v10206 = vpow.pop %v10205
      %v10207 = vmul.f32 %v10174, 1.442695
      %v10208 = vpow.pop %v10207
      %v10209 = vmul.f32 %v10175, 1.442695
      %v10210 = vpow.pop %v10209
      %v10211 = vmul.f32 %v10176, 1.442695
      %v10212 = vpow.pop %v10211
      %v10213 = vmul.f32 %v10177, 1.442695
      %v10214 = vpow.pop %v10213
      %v10215 = vmul.f32 %v10178, 1.442695
      %v10216 = vpow.pop %v10215
      %v10217 = vmul.f32 %v10179, 1.442695
      %v10218 = vpow.pop %v10217
      %v10219 = vmul.f32 %v10180, 1.442695
      %v10220 = vpow.pop %v10219
      %v10221 = vmul.f32 %v10181, 1.442695
      %v10222 = vpow.pop %v10221
      %v10223 = vmul.f32 %v10182, 1.442695
      %v10224 = vpow.pop %v10223
      %v10225 = vmul.f32 %v10183, 1.442695
      %v10226 = vpow.pop %v10225
      %v10227 = vmul.f32 %v10184, 1.442695
      %v10228 = vpow.pop %v10227
      %v10229 = vmul.f32 %v10185, 1.442695
      %v10230 = vpow.pop %v10229
      %v10231 = vmul.f32 %v10186, 1.442695
      %v10232 = vpow.pop %v10231
      %v10233 = vmul.f32 %v10187, 1.442695
      %v10234 = vpow.pop %v10233
      %v10235 = vmul.f32 %v10188, 1.442695
      %v10236 = vpow.pop %v10235
      %v10237 = vmul.f32 %v10189, 1.442695
      %v10238 = vpow.pop %v10237
      %v10239 = vmul.f32 %v10190, 1.442695
      %v10240 = vpow.pop %v10239
      %v10241 = vmul.f32 %v10191, 1.442695
      %v10242 = vpow.pop %v10241
      %v10243 = vmul.f32 %v10192, 1.442695
      %v10244 = vpow.pop %v10243
      %v10245 = vmul.f32 %v10193, 1.442695
      %v10246 = vpow.pop %v10245
      %v10247 = vmul.f32 %v10194, 1.442695
      %v10248 = vpow.pop %v10247
      %v10249 = vmul.f32 %v10195, 1.442695
      %v10250 = vpow.pop %v10249
      %v10251 = vmul.f32 %v10196, 1.442695
      %v10252 = vpow.pop %v10251
      %v10253 = vmul.f32 %v10197, 1.442695
      %v10254 = vpow.pop %v10253
      %v10255 = vmul.f32 %v10198, 1.442695
      %v10256 = vpow.pop %v10255
      %v10257 = vmul.f32 %v10199, 1.442695
      %v10258 = vpow.pop %v10257
      %v10259 = vmul.f32 %v10200, 1.442695
      %v10260 = vpow.pop %v10259
      %v10261 = vmul.f32 %v10201, 1.442695
      %v10262 = vpow.pop %v10261
      %v10263 = vmul.f32 %v10202, 1.442695
      %v10264 = vpow.pop %v10263
      %v10265 = vmul.f32 %v10203, 1.442695
      %v10266 = vpow.pop %v10265
      %v10267 = vmul.f32 %v10204, 1.442695
      %v10268 = vpow.pop %v10267
      %v10269 = vadd.f32 %v10206, 1.0
      %v10270 = vadd.f32 %v10208, 1.0
      %v10271 = vadd.f32 %v10210, 1.0
      %v10272 = vadd.f32 %v10212, 1.0
      %v10273 = vadd.f32 %v10214, 1.0
      %v10274 = vadd.f32 %v10216, 1.0
      %v10275 = vadd.f32 %v10218, 1.0
      %v10276 = vadd.f32 %v10220, 1.0
      %v10277 = vadd.f32 %v10222, 1.0
      %v10278 = vadd.f32 %v10224, 1.0
      %v10279 = vadd.f32 %v10226, 1.0
      %v10280 = vadd.f32 %v10228, 1.0
      %v10281 = vadd.f32 %v10230, 1.0
      %v10282 = vadd.f32 %v10232, 1.0
      %v10283 = vadd.f32 %v10234, 1.0
      %v10284 = vadd.f32 %v10236, 1.0
      %v10285 = vadd.f32 %v10238, 1.0
      %v10286 = vadd.f32 %v10240, 1.0
      %v10287 = vadd.f32 %v10242, 1.0
      %v10288 = vadd.f32 %v10244, 1.0
      %v10289 = vadd.f32 %v10246, 1.0
      %v10290 = vadd.f32 %v10248, 1.0
      %v10291 = vadd.f32 %v10250, 1.0
      %v10292 = vadd.f32 %v10252, 1.0
      %v10293 = vadd.f32 %v10254, 1.0
      %v10294 = vadd.f32 %v10256, 1.0
      %v10295 = vadd.f32 %v10258, 1.0
      %v10296 = vadd.f32 %v10260, 1.0
      %v10297 = vadd.f32 %v10262, 1.0
      %v10298 = vadd.f32 %v10264, 1.0
      %v10299 = vadd.f32 %v10266, 1.0
      %v10300 = vadd.f32 %v10268, 1.0
      %v10301 = vrcp.pop %v10269
      %v10302 = vmul.f32 1.0, %v10301
      %v10303 = vrcp.pop %v10270
      %v10304 = vmul.f32 1.0, %v10303
      %v10305 = vrcp.pop %v10271
      %v10306 = vmul.f32 1.0, %v10305
      %v10307 = vrcp.pop %v10272
      %v10308 = vmul.f32 1.0, %v10307
      %v10309 = vrcp.pop %v10273
      %v10310 = vmul.f32 1.0, %v10309
      %v10311 = vrcp.pop %v10274
      %v10312 = vmul.f32 1.0, %v10311
      %v10313 = vrcp.pop %v10275
      %v10314 = vmul.f32 1.0, %v10313
      %v10315 = vrcp.pop %v10276
      %v10316 = vmul.f32 1.0, %v10315
      %v10317 = vrcp.pop %v10277
      %v10318 = vmul.f32 1.0, %v10317
      %v10319 = vrcp.pop %v10278
      %v10320 = vmul.f32 1.0, %v10319
      %v10321 = vrcp.pop %v10279
      %v10322 = vmul.f32 1.0, %v10321
      %v10323 = vrcp.pop %v10280
      %v10324 = vmul.f32 1.0, %v10323
      %v10325 = vrcp.pop %v10281
      %v10326 = vmul.f32 1.0, %v10325
      %v10327 = vrcp.pop %v10282
      %v10328 = vmul.f32 1.0, %v10327
      %v10329 = vrcp.pop %v10283
      %v10330 = vmul.f32 1.0, %v10329
      %v10331 = vrcp.pop %v10284
      %v10332 = vmul.f32 1.0, %v10331
      %v10333 = vrcp.pop %v10285
      %v10334 = vmul.f32 1.0, %v10333
      %v10335 = vrcp.pop %v10286
      %v10336 = vmul.f32 1.0, %v10335
      %v10337 = vrcp.pop %v10287
      %v10338 = vmul.f32 1.0, %v10337
      %v10339 = vrcp.pop %v10288
      %v10340 = vmul.f32 1.0, %v10339
      %v10341 = vrcp.pop %v10289
      %v10342 = vmul.f32 1.0, %v10341
      %v10343 = vrcp.pop %v10290
      %v10344 = vmul.f32 1.0, %v10343
      %v10345 = vrcp.pop %v10291
      %v10346 = vmul.f32 1.0, %v10345
      %v10347 = vrcp.pop %v10292
      %v10348 = vmul.f32 1.0, %v10347
      %v10349 = vrcp.pop %v10293
      %v10350 = vmul.f32 1.0, %v10349
      %v10351 = vrcp.pop %v10294
      %v10352 = vmul.f32 1.0, %v10351
      %v10353 = vrcp.pop %v10295
      %v10354 = vmul.f32 1.0, %v10353
      %v10355 = vrcp.pop %v10296
      %v10356 = vmul.f32 1.0, %v10355
      %v10357 = vrcp.pop %v10297
      %v10358 = vmul.f32 1.0, %v10357
      %v10359 = vrcp.pop %v10298
      %v10360 = vmul.f32 1.0, %v10359
      %v10361 = vrcp.pop %v10299
      %v10362 = vmul.f32 1.0, %v10361
      %v10363 = vrcp.pop %v10300
      %v10364 = vmul.f32 1.0, %v10363
      %v10365 = vmul.f32 %v10141, %v10302
      %v10366 = vmul.f32 %v10142, %v10304
      %v10367 = vmul.f32 %v10143, %v10306
      %v10368 = vmul.f32 %v10144, %v10308
      %v10369 = vmul.f32 %v10145, %v10310
      %v10370 = vmul.f32 %v10146, %v10312
      %v10371 = vmul.f32 %v10147, %v10314
      %v10372 = vmul.f32 %v10148, %v10316
      %v10373 = vmul.f32 %v10149, %v10318
      %v10374 = vmul.f32 %v10150, %v10320
      %v10375 = vmul.f32 %v10151, %v10322
      %v10376 = vmul.f32 %v10152, %v10324
      %v10377 = vmul.f32 %v10153, %v10326
      %v10378 = vmul.f32 %v10154, %v10328
      %v10379 = vmul.f32 %v10155, %v10330
      %v10380 = vmul.f32 %v10156, %v10332
      %v10381 = vmul.f32 %v10157, %v10334
      %v10382 = vmul.f32 %v10158, %v10336
      %v10383 = vmul.f32 %v10159, %v10338
      %v10384 = vmul.f32 %v10160, %v10340
      %v10385 = vmul.f32 %v10161, %v10342
      %v10386 = vmul.f32 %v10162, %v10344
      %v10387 = vmul.f32 %v10163, %v10346
      %v10388 = vmul.f32 %v10164, %v10348
      %v10389 = vmul.f32 %v10165, %v10350
      %v10390 = vmul.f32 %v10166, %v10352
      %v10391 = vmul.f32 %v10167, %v10354
      %v10392 = vmul.f32 %v10168, %v10356
      %v10393 = vmul.f32 %v10169, %v10358
      %v10394 = vmul.f32 %v10170, %v10360
      %v10395 = vmul.f32 %v10171, %v10362
      %v10396 = vmul.f32 %v10172, %v10364
      %10397 = vst.msk [vmem:[%s467] sm:$0xff] %vm2295, %v10365
      %10398 = vst.msk [vmem:[%s467 + $0x8] sm:$0xff] %vm2295, %v10366
      %10399 = vst.msk [vmem:[%s467 + $0x10] sm:$0xff] %vm2295, %v10367
      %10400 = vst.msk [vmem:[%s467 + $0x18] sm:$0xff] %vm2295, %v10368
      %10401 = vst.msk [vmem:[%s467 + $0x20] sm:$0xff] %vm2295, %v10369
      %10402 = vst.msk [vmem:[%s467 + $0x28] sm:$0xff] %vm2295, %v10370
      %10403 = vst.msk [vmem:[%s467 + $0x30] sm:$0xff] %vm2295, %v10371
      %10404 = vst.msk [vmem:[%s467 + $0x38] sm:$0xff] %vm2295, %v10372
      %10405 = vst.msk [vmem:[%s467 + $0x40] sm:$0xff] %vm2295, %v10373
      %10406 = vst.msk [vmem:[%s467 + $0x48] sm:$0xff] %vm2295, %v10374
      %10407 = vst.msk [vmem:[%s467 + $0x50] sm:$0xff] %vm2295, %v10375
      %10408 = vst.msk [vmem:[%s467 + $0x58] sm:$0xff] %vm2295, %v10376
      %10409 = vst.msk [vmem:[%s467 + $0x60] sm:$0xff] %vm2295, %v10377
      %10410 = vst.msk [vmem:[%s467 + $0x68] sm:$0xff] %vm2295, %v10378
      %10411 = vst.msk [vmem:[%s467 + $0x70] sm:$0xff] %vm2295, %v10379
      %10412 = vst.msk [vmem:[%s467 + $0x78] sm:$0xff] %vm2295, %v10380
      %10413 = vst.msk [vmem:[%s467 + $0x80] sm:$0xff] %vm2295, %v10381
      %10414 = vst.msk [vmem:[%s467 + $0x88] sm:$0xff] %vm2295, %v10382
      %10415 = vst.msk [vmem:[%s467 + $0x90] sm:$0xff] %vm2295, %v10383
      %10416 = vst.msk [vmem:[%s467 + $0x98] sm:$0xff] %vm2295, %v10384
      %10417 = vst.msk [vmem:[%s467 + $0xa0] sm:$0xff] %vm2295, %v10385
      %10418 = vst.msk [vmem:[%s467 + $0xa8] sm:$0xff] %vm2295, %v10386
      %10419 = vst.msk [vmem:[%s467 + $0xb0] sm:$0xff] %vm2295, %v10387
      %10420 = vst.msk [vmem:[%s467 + $0xb8] sm:$0xff] %vm2295, %v10388
      %10421 = vst.msk [vmem:[%s467 + $0xc0] sm:$0xff] %vm2295, %v10389
      %10422 = vst.msk [vmem:[%s467 + $0xc8] sm:$0xff] %vm2295, %v10390
      %10423 = vst.msk [vmem:[%s467 + $0xd0] sm:$0xff] %vm2295, %v10391
      %10424 = vst.msk [vmem:[%s467 + $0xd8] sm:$0xff] %vm2295, %v10392
      %10425 = vst.msk [vmem:[%s467 + $0xe0] sm:$0xff] %vm2295, %v10393
      %10426 = vst.msk [vmem:[%s467 + $0xe8] sm:$0xff] %vm2295, %v10394
      %10427 = vst.msk [vmem:[%s467 + $0xf0] sm:$0xff] %vm2295, %v10395
      %10428 = vst.msk [vmem:[%s467 + $0xf8] sm:$0xff] %vm2295, %v10396
      %p10429 = scmp.lt.s32.totalorder %s25, 1
      %s10430 = scalar_select %p10429, %s25, 1
      %s10431 = smul.addr %s10430, 32
      %s10432 = smul.addr %s10431, 8
      %s10433 = scalar_lea.vmem %s14, %s10432
      // Predicated region
      $region77: #{tpu_custom_call.1} parent=75 // pred_check
        %p10434 = pneg %p342
      $region78: #{tpu_custom_call.1} parent=75 // pred_check_branch
        %10436 = sbr.rel (%p10434) target = $region80
      $region79: #{tpu_custom_call.1} parent=75 // pred_region
        _
      $region80: #{tpu_custom_call.1} parent=75 // pred_fallthru
        _
    $region76: #{tpu_custom_call.1} parent=5 // pred_fallthru
      _
    %p10437 = scmp.le.s32.totalorder 2, %s20
    // Predicated region
    $region81: #{tpu_custom_call.1} parent=5 // pred_check
      %p10438 = pneg %p10437
    $region82: #{tpu_custom_call.1} parent=5 // pred_check_branch
      %10440 = sbr.rel (%p10438) target = $region84
    $region83: #{tpu_custom_call.1} parent=5 // pred_region
      %s10441 = ssub.s32 %s20, 2
      // Predicated region
      $region85: #{tpu_custom_call.1} parent=83 // pred_check
        %p10442 = pneg %p348
      $region86: #{tpu_custom_call.1} parent=83 // pred_check_branch
        %10444 = sbr.rel (%p10442) target = $region88
      $region87: #{tpu_custom_call.1} parent=83 // pred_region
        %p10445 = scmp.lt.s32.totalorder %s26, 1
        %s10446 = scalar_select %p10445, %s26, 1
        %s10447 = smul.addr %s10446, 32
        %s10448 = smul.addr %s10447, 8
        %s10449 = scalar_lea.vmem %s14, %s10448
      $region88: #{tpu_custom_call.1} parent=83 // pred_fallthru
        _
    $region84: #{tpu_custom_call.1} parent=5 // pred_fallthru
      _
  $region6: #{tpu_custom_call.1} parent=0 // loop_footer
    %s24 = sadd.s32 1, %s20
  $region7: #{tpu_custom_call.1} parent=0 // loop_footer_branch
    %19 = sbr.rel target = $region3
  $region8: #{tpu_custom_call.1} parent=0 // loop_exit
    _

</llo_original>
